<compile_context>
chip_gen: v6e
topology: v6e:2x2x1
jax: 0.10.0
libtpu: 0.0.40
codegen_flags: <defaults>
</compile_context>

<pallas_src>
import functools

import jax
import jax.numpy as jnp
from jax.experimental import pallas as pl
from jax.experimental.pallas import tpu as pltpu

F32 = jnp.float32
BF16 = jnp.bfloat16

# ------------------------- model hyper-parameters -------------------------
RATIO = 8            # feat_ratio
FDIM = 128           # foutput_dim
HDIM = 128           # hidden dim (is_high=True)
CDIM = 32            # context dim
COST_DIM = 96        # raw update-block encoder width
ENC_PAD = 128        # encoder width padded to 128 lanes
HEAD_PAD = 128       # 64-wide head hidden padded to 128 lanes
SEQ_LEN = 4
ITERS = 12 // SEQ_LEN

_VMEM = pl.BlockSpec(memory_space=pltpu.MemorySpace.VMEM)


# =========================== Pallas kernels ===============================

def _mm_kernel(x_ref, w_ref, b_ref, o_ref, *, act):
    """matmul + bias + activation (bf16 MXU inputs, f32 accumulate)."""
    y = jnp.dot(x_ref[...], w_ref[...], preferred_element_type=jnp.float32) + b_ref[...]
    if act == "relu":
        y = jnp.maximum(y, 0.0)
    o_ref[...] = y


def matmul_bias_act(x_bf16, w_bf16, b_f32, act="none"):
    return pl.pallas_call(
        functools.partial(_mm_kernel, act=act),
        out_shape=jax.ShapeDtypeStruct((x_bf16.shape[0], w_bf16.shape[1]), F32),
        in_specs=[_VMEM] * 3, out_specs=_VMEM,
    )(x_bf16, w_bf16, b_f32)


def _depth_init_kernel(f_ref, w1, b1, w2, b2, d_ref):
    """Initial depth head: 2-layer MLP with sigmoid output."""
    fb = f_ref[...].astype(BF16)
    t = jnp.maximum(jnp.dot(fb, w1[...], preferred_element_type=jnp.float32) + b1[...], 0.0)
    d_ref[...] = jax.nn.sigmoid(
        jnp.dot(t.astype(BF16), w2[...], preferred_element_type=jnp.float32) + b2[...])


def depth_init(fmap1, P):
    hw = fmap1.shape[0]
    return pl.pallas_call(
        _depth_init_kernel,
        out_shape=jax.ShapeDtypeStruct((hw, 1), F32),
        in_specs=[_VMEM] * 5, out_specs=_VMEM,
    )(fmap1, P["dh_w1"], P["dh_b1"], P["dh_w2"], P["dh_b2"])


def _pose_init_kernel(f1_ref, fr_ref, wct, wcr, bc, wl, bl, o_ref):
    """Initial pose head: split-weight conv(relu) -> per-view mean -> linear, x0.01.

    The concat([fmap1, fmap_ref]) is expressed as two row-blocks of the first
    weight so no tiled fmap1 copy is built in XLA.
    """
    n_views, hw, fd = fr_ref.shape
    a = jnp.dot(f1_ref[...].astype(BF16), wct[...], preferred_element_type=jnp.float32)
    pooled_rows = []
    for v in range(n_views):
        bv = jnp.dot(fr_ref[v].astype(BF16), wcr[...], preferred_element_type=jnp.float32)
        yv = jnp.maximum(bv + a + bc[...], 0.0)                 # (hw, F)
        pooled_rows.append(jnp.mean(yv, axis=0, keepdims=True))  # (1, F)
    pooled = jnp.concatenate(pooled_rows, axis=0)                # (V, F)
    o_ref[...] = 0.01 * (jnp.dot(pooled.astype(BF16), wl[...],
                                 preferred_element_type=jnp.float32) + bl[...])


def pose_head_init(fmap1, fmaps_ref, P):
    V = fmaps_ref.shape[0]
    return pl.pallas_call(
        _pose_init_kernel,
        out_shape=jax.ShapeDtypeStruct((V, 6), F32),
        in_specs=[_VMEM] * 7, out_specs=_VMEM,
    )(fmap1, fmaps_ref, P["ph_wc_t"], P["ph_wc_r"], P["ph_bc"], P["ph_wl"], P["ph_bl"])


def _depth_step_kernel(fmap_ref, warped_ref, hid_ref, invd_ref, xc_ref, wxs_ref,
                       enc_w, enc_b, whzr, wx_mf, wqh, h1w, h1b, dw2, db2,
                       *rest, compute_mask):
    """Fused depth refinement step: cost -> encoder -> GRU -> delta (+ mask) heads."""
    if compute_mask:
        mw2, mb2, h_out, d_out, m_out = rest
    else:
        h_out, d_out = rest

    hdim = hid_ref.shape[1]
    f = fmap_ref[...]
    n_views = warped_ref.shape[0]

    # photometric cost, averaged over views (all in VMEM)
    acc = None
    for v in range(n_views):
        dv = warped_ref[v] - f
        acc = dv * dv if acc is None else acc + dv * dv
    cost = acc * (1.0 / n_views)

    mfeat = jnp.maximum(
        jnp.dot(cost.astype(BF16), enc_w[...], preferred_element_type=jnp.float32)
        + enc_b[...], 0.0)                                        # (hw, 128)

    # GRU input contributions: mfeat@Wx + hoisted(context@Wx + biases) + rank-1 inv_d term
    xzrq = (jnp.dot(mfeat.astype(BF16), wx_mf[...], preferred_element_type=jnp.float32)
            + xc_ref[...] + invd_ref[...] * wxs_ref[...])         # (hw, 3H)

    h = hid_ref[...]
    hzr = jnp.dot(h.astype(BF16), whzr[...], preferred_element_type=jnp.float32)
    z = jax.nn.sigmoid(hzr[:, :hdim] + xzrq[:, :hdim])
    r = jax.nn.sigmoid(hzr[:, hdim:] + xzrq[:, hdim:2 * hdim])
    q = jnp.tanh(jnp.dot((r * h).astype(BF16), wqh[...],
                         preferred_element_type=jnp.float32) + xzrq[:, 2 * hdim:])
    hn = (1.0 - z) * h + z * q
    h_out[...] = hn

    # delta-depth head (+ up-mask head on the final step only); first layers fused.
    t = jnp.maximum(jnp.dot(hn.astype(BF16), h1w[...],
                            preferred_element_type=jnp.float32) + h1b[...], 0.0)
    delta = jnp.dot(t[:, :HEAD_PAD].astype(BF16), dw2[...],
                    preferred_element_type=jnp.float32) + db2[...]
    d_out[...] = jnp.clip(invd_ref[...] + delta, 1e-3, 1.0)
    if compute_mask:
        m_out[...] = 0.25 * (jnp.dot(t[:, HEAD_PAD:].astype(BF16), mw2[...],
                                     preferred_element_type=jnp.float32) + mb2[...])


def depth_step(fmap1, warped, hidden, invd, xc, P, compute_mask):
    hw = fmap1.shape[0]
    G = P["ubd"]
    args = [fmap1, warped, hidden, invd, xc, G["wxsum"],
            G["enc_w"], G["enc_b"], G["whzr"], G["wx_mf"], G["wqh"]]
    if compute_mask:
        args += [G["dmh_w1"], G["dmh_b1"], G["dh_w2"], G["dh_b2"], G["mh_w2"], G["mh_b2"]]
        out_shape = (jax.ShapeDtypeStruct((hw, HDIM), F32),
                     jax.ShapeDtypeStruct((hw, 1), F32),
                     jax.ShapeDtypeStruct((hw, 9 * RATIO * RATIO), F32))
        out_specs = (_VMEM, _VMEM, _VMEM)
    else:
        args += [G["dh_w1"], G["dh_b1"], G["dh_w2"], G["dh_b2"]]
        out_shape = (jax.ShapeDtypeStruct((hw, HDIM), F32),
                     jax.ShapeDtypeStruct((hw, 1), F32))
        out_specs = (_VMEM, _VMEM)
    return pl.pallas_call(
        functools.partial(_depth_step_kernel, compute_mask=compute_mask),
        out_shape=out_shape,
        in_specs=[_VMEM] * len(args), out_specs=out_specs,
    )(*args)


def _pose_step_kernel(fmap_ref, warped_ref, hid_ref, pose_ref, xc_ref,
                      enc_w, enc_b, whzr, wx_mf, wx_pose, wqh,
                      p1w, p1b, p2w, p2b, h_out, pose_out):
    """Fused pose refinement step: per-view cost (stacked) -> encoder -> GRU -> pose head."""
    n_views, hw, fd = warped_ref.shape
    hdim = hid_ref.shape[1]
    f = fmap_ref[...]

    # stacked per-view squared photometric cost -> ONE (V*hw, F) matmul
    parts = []
    for v in range(n_views):
        dv = warped_ref[v] - f
        parts.append(dv * dv)
    dsq = jnp.concatenate(parts, axis=0)                           # (V*hw, F)
    mfeat = jnp.maximum(
        jnp.dot(dsq.astype(BF16), enc_w[...], preferred_element_type=jnp.float32)
        + enc_b[...], 0.0)                                         # (V*hw, 128)

    # per-view pose contribution, broadcast over pixels (replaces repeat((V,8),hw))
    pc = jnp.dot(pose_ref[...].astype(BF16), wx_pose[...],
                 preferred_element_type=jnp.float32)               # (V, 3H)
    pc_full = jnp.concatenate(
        [jnp.broadcast_to(pc[v:v + 1, :], (hw, 3 * hdim)) for v in range(n_views)], axis=0)

    xzrq = (jnp.dot(mfeat.astype(BF16), wx_mf[...], preferred_element_type=jnp.float32)
            + xc_ref[...] + pc_full)                               # (V*hw, 3H)

    h = hid_ref[...]
    hzr = jnp.dot(h.astype(BF16), whzr[...], preferred_element_type=jnp.float32)
    z = jax.nn.sigmoid(hzr[:, :hdim] + xzrq[:, :hdim])
    r = jax.nn.sigmoid(hzr[:, hdim:] + xzrq[:, hdim:2 * hdim])
    q = jnp.tanh(jnp.dot((r * h).astype(BF16), wqh[...],
                         preferred_element_type=jnp.float32) + xzrq[:, 2 * hdim:])
    hn = (1.0 - z) * h + z * q
    h_out[...] = hn

    # per-view spatial mean (sublane reduction, no f32 pooling matmul) -> MLP -> x0.01
    pooled_rows = [jnp.mean(hn[v * hw:(v + 1) * hw, :], axis=0, keepdims=True)
                   for v in range(n_views)]
    pooled = jnp.concatenate(pooled_rows, axis=0)                  # (V, H)
    t = jnp.maximum(jnp.dot(pooled.astype(BF16), p1w[...],
                            preferred_element_type=jnp.float32) + p1b[...], 0.0)
    dp = 0.01 * (jnp.dot(t.astype(BF16), p2w[...],
                         preferred_element_type=jnp.float32) + p2b[...])
    pose_out[...] = pose_ref[...] + dp


def pose_step(fmap1, warped, hidden, pose, xc, P):
    hw = fmap1.shape[0]
    V = warped.shape[0]
    G = P["ubp"]
    return pl.pallas_call(
        _pose_step_kernel,
        out_shape=(jax.ShapeDtypeStruct((V * hw, HDIM), F32),
                   jax.ShapeDtypeStruct((V, 6), F32)),
        in_specs=[_VMEM] * 15, out_specs=(_VMEM, _VMEM),
    )(fmap1, warped, hidden, pose, xc,
      G["enc_w"], G["enc_b"], G["whzr"], G["wx_mf"], G["wx_pose"], G["wqh"],
      G["ph_w1"], G["ph_b1"], G["ph_w2"], G["ph_b2"])


def _convex_kernel(m_ref, n_ref, o_ref):
    """Softmax over the 9 neighbors + convex combination (exact reciprocal)."""
    m = m_ref[...]
    m = m - jnp.max(m, axis=0, keepdims=True)
    e = jnp.exp(m)
    s = jnp.sum(e, axis=0, keepdims=True)
    o_ref[...] = jnp.sum(e * n_ref[...], axis=0, keepdims=True) / s


def convex_combine(mask_logits, neighbors):
    return pl.pallas_call(
        _convex_kernel,
        out_shape=jax.ShapeDtypeStruct((1, mask_logits.shape[1]), F32),
        in_specs=[_VMEM] * 2, out_specs=_VMEM,
    )(mask_logits, neighbors)


# ============================ JAX glue helpers =============================

def resize_bilinear_ac(x, out_hw):
    """align_corners=True bilinear resize of NCHW tensor (plain-JAX glue)."""
    N, C, H, W = x.shape
    oh, ow = int(out_hw[0]), int(out_hw[1])
    ys = jnp.linspace(0.0, H - 1.0, oh) if oh > 1 else jnp.zeros((1,), F32)
    xs = jnp.linspace(0.0, W - 1.0, ow) if ow > 1 else jnp.zeros((1,), F32)
    y0 = jnp.floor(ys).astype(jnp.int32)
    x0 = jnp.floor(xs).astype(jnp.int32)
    y1 = jnp.clip(y0 + 1, 0, H - 1)
    x1 = jnp.clip(x0 + 1, 0, W - 1)
    wy = (ys - y0)[None, None, :, None]
    wx = (xs - x0)
    a = x[:, :, y0][:, :, :, x0]
    b = x[:, :, y0][:, :, :, x1]
    c = x[:, :, y1][:, :, :, x0]
    d = x[:, :, y1][:, :, :, x1]
    top = a * (1.0 - wx) + b * wx
    bot = c * (1.0 - wx) + d * wx
    return top * (1.0 - wy) + bot * wy


def patch_embed(x_nchw, w, b, ratio, act):
    """stride-`ratio` patchify conv -> fused Pallas matmul (bf16 MXU input)."""
    N, C, H, W = x_nchw.shape
    h, wn = H // ratio, W // ratio
    xp = x_nchw.reshape(N, C, h, ratio, wn, ratio)
    xp = xp.transpose(0, 2, 4, 1, 3, 5).reshape(N * h * wn, C * ratio * ratio)
    y = matmul_bias_act(xp.astype(BF16), w, b, act)
    return y.reshape(N, h * wn, -1)


def unfold3x3(depth_hw):
    """F.unfold(depth, [3,3], padding=1) on a single-channel map -> (9, h*w)."""
    h, w = depth_hw.shape
    dp = jnp.pad(depth_hw, 1)
    rows = []
    for ky in range(3):
        for kx in range(3):
            rows.append(dp[ky:ky + h, kx:kx + w].reshape(-1))
    return jnp.stack(rows, axis=0)


def upsample_depth(inv_depth_flat, up_mask_flat, h, w, ratio, image_size):
    """Convex-combination upsampling (softmax + weighted sum in Pallas)."""
    depth_hw = inv_depth_flat.reshape(h, w)
    nb = unfold3x3(depth_hw)                                           # (9, h*w)
    nb = jnp.broadcast_to(nb.reshape(9, 1, 1, h, w),
                          (9, ratio, ratio, h, w)).reshape(9, -1)
    mask = up_mask_flat.reshape(h, w, 9, ratio, ratio)
    mask = mask.transpose(2, 3, 4, 0, 1).reshape(9, -1)
    out = convex_combine(mask, nb)                                     # (1, r*r*h*w)
    out = out.reshape(ratio, ratio, h, w).transpose(2, 0, 3, 1)
    out = out.reshape(1, 1, ratio * h, ratio * w)
    # TODO(synk): final F.interpolate(align_corners=True) kept in plain JAX.
    return resize_bilinear_ac(out, image_size)


def disp_to_depth(disp, min_depth, max_depth):
    min_disp = 1.0 / max_depth
    max_disp = 1.0 / min_depth
    scaled_disp = min_disp + (max_disp - min_disp) * disp
    depth = 1.0 / scaled_disp
    return scaled_disp, depth


def scale_K(K, s):
    K = K.astype(F32)
    return (K.at[0, 0].multiply(s).at[1, 1].multiply(s)
             .at[0, 2].multiply(s).at[1, 2].multiply(s))


def pose_vec_to_Rt(vec):
    """6-vec (tx,ty,tz,rx,ry,rz) -> (R 3x3, t 3x1) via Rodrigues."""
    t = vec[:3]
    r = vec[3:]
    theta = jnp.sqrt(jnp.sum(r * r) + 1e-12)
    k = r / theta
    zero = jnp.zeros((), F32)
    Km = jnp.stack([jnp.stack([zero, -k[2], k[1]]),
                    jnp.stack([k[2], zero, -k[0]]),
                    jnp.stack([-k[1], k[0], zero])])
    R = jnp.eye(3, dtype=F32) + jnp.sin(theta) * Km + (1.0 - jnp.cos(theta)) * (Km @ Km)
    return R, t[:, None]


def grid_sample_zeros_ac(fmap_hwc, coords):
    """bilinear grid_sample, zeros padding, align_corners=True (plain-JAX gather)."""
    # TODO(synk): gather-based grid_sample stays in plain JAX; an MXU
    # interpolation-matrix formulation is the next step at real resolutions.
    h, w, C = fmap_hwc.shape
    gx = (coords[..., 0] + 1.0) * 0.5 * (w - 1)
    gy = (coords[..., 1] + 1.0) * 0.5 * (h - 1)
    x0 = jnp.floor(gx)
    y0 = jnp.floor(gy)
    x1 = x0 + 1.0
    y1 = y0 + 1.0
    wx = gx - x0
    wy = gy - y0

    def gather(yy, xx):
        valid = (xx >= 0) & (xx <= w - 1) & (yy >= 0) & (yy <= h - 1)
        xi = jnp.clip(xx, 0, w - 1).astype(jnp.int32)
        yi = jnp.clip(yy, 0, h - 1).astype(jnp.int32)
        v = fmap_hwc[yi, xi]
        return v * valid[..., None].astype(F32)

    out = (gather(y0, x0) * ((1 - wx) * (1 - wy))[..., None]
           + gather(y0, x1) * (wx * (1 - wy))[..., None]
           + gather(y1, x0) * ((1 - wx) * wy)[..., None]
           + gather(y1, x1) * (wx * wy)[..., None])
    return out


def make_warper(fmaps_ref, K, refKs, sf, h, w):
    """Hoisted warping closure: intrinsics scaling, pixel rays computed once."""
    Ks = scale_K(K, sf)
    rKs = jax.vmap(lambda k: scale_K(k, sf))(refKs)
    ys, xs = jnp.meshgrid(jnp.arange(h, dtype=F32), jnp.arange(w, dtype=F32), indexing="ij")
    pix = jnp.stack([xs.reshape(-1), ys.reshape(-1), jnp.ones(h * w, F32)], axis=0)  # (3, hw)
    ray = jnp.linalg.inv(Ks) @ pix
    C = fmaps_ref.shape[-1]

    def warp_one(pose_vec, fmap_ref, rK, cam_pts):
        R, t = pose_vec_to_Rt(pose_vec)
        # TODO(synk): reference Camera/Pose (Twc) convention assumed: p_ref = R^T (p - t).
        ref_pts = R.T @ (cam_pts - t)
        z = ref_pts[2:3]
        z = jnp.where(jnp.abs(z) < 1e-6, 1e-6, z)
        uv = (rK @ ref_pts)[:2] / z
        un = 2.0 * uv[0].reshape(h, w) / (w - 1) - 1.0
        vn = 2.0 * uv[1].reshape(h, w) / (h - 1) - 1.0
        coords = jnp.stack([un, vn], axis=-1)
        return grid_sample_zeros_ac(fmap_ref.reshape(h, w, C), coords).reshape(h * w, C)

    def warp(poses, depth_flat):                       # poses (V,6), depth (hw,)
        cam_pts = ray * depth_flat[None, :]
        return jax.vmap(warp_one, in_axes=(0, 0, 0, None))(poses, fmaps_ref, rKs, cam_pts)

    return warp


# ============================ parameters ==================================

def _init(key, shape):
    scale = 1.0 / jnp.sqrt(jnp.asarray(shape[0], F32))
    return scale * jax.random.normal(key, shape, dtype=F32)


def _make_gru(keys, hdim, xdim):
    return {
        "wzh": _init(next(keys), (hdim, hdim)), "wzx": _init(next(keys), (xdim, hdim)),
        "bz": jnp.zeros((hdim,), F32),
        "wrh": _init(next(keys), (hdim, hdim)), "wrx": _init(next(keys), (xdim, hdim)),
        "br": jnp.zeros((hdim,), F32),
        "wqh": _init(next(keys), (hdim, hdim)), "wqx": _init(next(keys), (xdim, hdim)),
        "bq": jnp.zeros((hdim,), F32),
    }


def init_params(key):
    keys = iter(jax.random.split(key, 64))
    P = {}
    P["fnet_w"] = _init(next(keys), (3 * RATIO * RATIO, FDIM)); P["fnet_b"] = jnp.zeros((FDIM,), F32)
    P["cd_w"] = _init(next(keys), (3 * RATIO * RATIO, HDIM + CDIM)); P["cd_b"] = jnp.zeros((HDIM + CDIM,), F32)
    P["cp_w"] = _init(next(keys), (6 * RATIO * RATIO, HDIM + CDIM)); P["cp_b"] = jnp.zeros((HDIM + CDIM,), F32)
    P["ph_wc"] = _init(next(keys), (2 * FDIM, FDIM)); P["ph_bc"] = jnp.zeros((FDIM,), F32)
    P["ph_wl"] = _init(next(keys), (FDIM, 6)); P["ph_bl"] = jnp.zeros((6,), F32)
    P["dh_w1"] = _init(next(keys), (FDIM, FDIM)); P["dh_b1"] = jnp.zeros((FDIM,), F32)
    P["dh_w2"] = _init(next(keys), (FDIM, 1)); P["dh_b2"] = jnp.zeros((1,), F32)
    P["um_w"] = _init(next(keys), (FDIM, 9 * RATIO * RATIO)); P["um_b"] = jnp.zeros((9 * RATIO * RATIO,), F32)
    # depth update block
    P["ubd_enc_w"] = _init(next(keys), (FDIM, COST_DIM)); P["ubd_enc_b"] = jnp.zeros((COST_DIM,), F32)
    P["ubd_gru"] = _make_gru(keys, HDIM, COST_DIM + CDIM + 8)
    P["ubd_dh_w1"] = _init(next(keys), (HDIM, 64)); P["ubd_dh_b1"] = jnp.zeros((64,), F32)
    P["ubd_dh_w2"] = _init(next(keys), (64, 1)); P["ubd_dh_b2"] = jnp.zeros((1,), F32)
    P["ubd_mh_w1"] = _init(next(keys), (HDIM, 128)); P["ubd_mh_b1"] = jnp.zeros((128,), F32)
    P["ubd_mh_w2"] = _init(next(keys), (128, 9 * RATIO * RATIO)); P["ubd_mh_b2"] = jnp.zeros((9 * RATIO * RATIO,), F32)
    # pose update block
    P["ubp_enc_w"] = _init(next(keys), (FDIM, COST_DIM)); P["ubp_enc_b"] = jnp.zeros((COST_DIM,), F32)
    P["ubp_gru"] = _make_gru(keys, HDIM, COST_DIM + CDIM + 8)
    P["ubp_ph_w1"] = _init(next(keys), (HDIM, 64)); P["ubp_ph_b1"] = jnp.zeros((64,), F32)
    P["ubp_ph_w2"] = _init(next(keys), (64, 6)); P["ubp_ph_b2"] = jnp.zeros((6,), F32)
    return P


def pack_params(p):
    """Pack once: bf16 weights, (1,N) f32 biases, fused + 128-lane-padded blocks.

    GRU Wx is split by row-blocks so the cost / context / extra contributions
    can be handled separately (context term hoisted, extra term rank-1).
    Zero-padding (96->128 encoder, 64->128 head hidden) changes no math.
    """
    def w(x):
        return x.astype(BF16)

    def b(x):
        return x.reshape(1, -1).astype(F32)

    def pad_cols(x, n):
        return jnp.pad(x, ((0, 0), (0, n - x.shape[1])))

    def pad_rows(x, n):
        return jnp.pad(x, ((0, n - x.shape[0]), (0, 0)))

    def pad_vec(x, n):
        return jnp.pad(x, (0, n - x.shape[0]))

    P = {}
    for name in ("fnet", "cd", "cp"):
        P[name + "_w"] = w(p[name + "_w"]); P[name + "_b"] = b(p[name + "_b"])

    # initial pose head: first-layer weight split into fmap1 / fmap_ref row blocks
    P["ph_wc_t"] = w(p["ph_wc"][:FDIM]); P["ph_wc_r"] = w(p["ph_wc"][FDIM:])
    P["ph_bc"] = b(p["ph_bc"]); P["ph_wl"] = w(p["ph_wl"]); P["ph_bl"] = b(p["ph_bl"])
    # initial depth head (+ up-mask net; mask only needed when ITERS == 0)
    P["dh_w1"] = w(p["dh_w1"]); P["dh_b1"] = b(p["dh_b1"])
    P["dh_w2"] = w(p["dh_w2"]); P["dh_b2"] = b(p["dh_b2"])
    P["um_w"] = w(p["um_w"]); P["um_b"] = b(p["um_b"])

    def pack_update(prefix, gru):
        wx = jnp.concatenate([gru["wzx"], gru["wrx"], gru["wqx"]], axis=1)   # (136, 3H)
        d = {
            "enc_w": w(pad_cols(p[prefix + "_enc_w"], ENC_PAD)),
            "enc_b": b(pad_vec(p[prefix + "_enc_b"], ENC_PAD)),
            "whzr": w(jnp.concatenate([gru["wzh"], gru["wrh"]], axis=1)),
            "wqh": w(gru["wqh"]),
            "wx_mf": w(pad_rows(wx[:COST_DIM], ENC_PAD)),
            "wx_inp": w(wx[COST_DIM:COST_DIM + CDIM]),
            "bzrq": b(jnp.concatenate([gru["bz"], gru["br"], gru["bq"]])),
        }
        return d, wx

    # depth update block
    ubd, wx_d = pack_update("ubd", p["ubd_gru"])
    ubd["wxsum"] = jnp.sum(wx_d[COST_DIM + CDIM:], axis=0, keepdims=True).astype(F32)  # (1, 3H)
    dh_w1p = pad_cols(p["ubd_dh_w1"], HEAD_PAD)
    dh_b1p = pad_vec(p["ubd_dh_b1"], HEAD_PAD)
    ubd["dh_w1"] = w(dh_w1p); ubd["dh_b1"] = b(dh_b1p)
    ubd["dmh_w1"] = w(jnp.concatenate([dh_w1p, p["ubd_mh_w1"]], axis=1))     # (H, 256)
    ubd["dmh_b1"] = b(jnp.concatenate([dh_b1p, p["ubd_mh_b1"]]))
    ubd["dh_w2"] = w(pad_rows(p["ubd_dh_w2"], HEAD_PAD)); ubd["dh_b2"] = b(p["ubd_dh_b2"])
    ubd["mh_w2"] = w(p["ubd_mh_w2"]); ubd["mh_b2"] = b(p["ubd_mh_b2"])
    P["ubd"] = ubd

    # pose update block
    ubp, wx_p = pack_update("ubp", p["ubp_gru"])
    ubp["wx_pose"] = w(wx_p[COST_DIM + CDIM:COST_DIM + CDIM + 6])            # (6, 3H)
    ubp["ph_w1"] = w(pad_cols(p["ubp_ph_w1"], HEAD_PAD))
    ubp["ph_b1"] = b(pad_vec(p["ubp_ph_b1"], HEAD_PAD))
    ubp["ph_w2"] = w(pad_rows(p["ubp_ph_w2"], HEAD_PAD)); ubp["ph_b2"] = b(p["ubp_ph_b2"])
    P["ubp"] = ubp
    return P


# ============================== forward ===================================

def forward(P, target_image, ref_imgs, target_K, ref_Ks, *,
            min_depth=0.1, max_depth=100.0, scaled_shape=(32, 32)):
    """Eval-mode forward: returns (inv_depth_up, poses (B,V,6), fmap1 NCHW)."""
    V = ref_imgs.shape[0]
    B = target_image.shape[0]
    image_size = (int(target_image.shape[-2]), int(target_image.shape[-1]))
    sh, sw = int(scaled_shape[0]), int(scaled_shape[1])

    if sh > 0 and sw > 0:
        target_image = resize_bilinear_ac(target_image, (sh, sw))
        ref_imgs = resize_bilinear_ac(ref_imgs, (sh, sw))
        # matches the reference code literally: K[...,0] *= H ratio, K[...,1] *= W ratio
        target_K = target_K.at[..., 0].multiply(sh / image_size[0]).at[..., 1].multiply(sw / image_size[1])
        ref_Ks = ref_Ks.at[..., 0].multiply(sh / image_size[0]).at[..., 1].multiply(sw / image_size[1])

    def scale_inv_depth(x):
        return disp_to_depth(x, min_depth, max_depth)

    H, W = target_image.shape[-2:]
    h, w = H // RATIO, W // RATIO
    hw = h * w
    sf = 1.0 / RATIO

    # ---- fnet on all (1+V) images: one fused patchify matmul ----
    all_imgs = jnp.concatenate([target_image, ref_imgs], axis=0)
    feats = patch_embed(all_imgs, P["fnet_w"], P["fnet_b"], RATIO, "relu")    # (1+V, hw, F)
    fmap1 = feats[0]
    fmaps_ref = feats[1:]                                                     # (V, hw, F)

    # ---- initial pose head (fused, in-kernel pooling) ----
    poses = pose_head_init(fmap1, fmaps_ref, P)                               # (V, 6)

    # ---- initial inv depth ----
    inv_depth = depth_init(fmap1, P)                                          # (hw, 1)

    # ---- context nets ----
    cnet_d = patch_embed(target_image, P["cd_w"], P["cd_b"], RATIO, "none")[0]
    hidden_d = jnp.tanh(cnet_d[:, :HDIM])
    inp_d = jnp.maximum(cnet_d[:, HDIM:], 0.0)

    pairs = jnp.concatenate(
        [jnp.broadcast_to(target_image, (V,) + target_image.shape[1:]), ref_imgs], axis=1)  # (V,6,H,W)
    cnet_p = patch_embed(pairs, P["cp_w"], P["cp_b"], RATIO, "none")          # (V, hw, H+C)
    hidden_p = jnp.tanh(cnet_p[:, :, :HDIM]).reshape(V * hw, HDIM)
    inp_p = jnp.maximum(cnet_p[:, :, HDIM:], 0.0).reshape(V * hw, CDIM)

    # ---- loop-invariant GRU-input contributions (context @ Wx + z/r/q biases),
    #      hoisted out of all refinement steps ----
    xc_d = matmul_bias_act(inp_d.astype(BF16), P["ubd"]["wx_inp"], P["ubd"]["bzrq"])   # (hw, 3H)
    xc_p = matmul_bias_act(inp_p.astype(BF16), P["ubp"]["wx_inp"], P["ubp"]["bzrq"])   # (V*hw, 3H)

    warp = make_warper(fmaps_ref, target_K[0], ref_Ks[:, 0], sf, h, w)

    up_mask_last = None
    if ITERS == 0:  # initial prediction is the returned one only when there is no refinement
        up_mask_last = matmul_bias_act(fmap1.astype(BF16), P["um_w"], P["um_b"])

    # ---- iterative refinement (unrolled under the single outer jit) ----
    for itr in range(ITERS):
        poses_at_start = poses
        depth_fixed = (1.0 / scale_inv_depth(inv_depth)[0])[:, 0]            # (hw,)

        # -- depth update block: one fused pallas_call per step --
        inv_d = inv_depth
        for s in range(SEQ_LEN):
            d = (1.0 / scale_inv_depth(inv_d)[0])[:, 0]
            warped = warp(poses_at_start, d)                                  # (V, hw, F)
            want_mask = (itr == ITERS - 1) and (s == SEQ_LEN - 1)             # mask used once only
            outs = depth_step(fmap1, warped, hidden_d, inv_d, xc_d, P, want_mask)
            if want_mask:
                hidden_d, inv_d, up_mask_last = outs
            else:
                hidden_d, inv_d = outs
        inv_depth = inv_d

        # -- pose update block (all V views batched): one fused pallas_call per step --
        pose_cur = poses_at_start
        for s in range(SEQ_LEN):
            warped = warp(pose_cur, depth_fixed)                              # (V, hw, F)
            hidden_p, pose_cur = pose_step(fmap1, warped, hidden_p, pose_cur, xc_p, P)
        poses = pose_cur

    # ---- single final upsample (eval mode returns only the last prediction) ----
    inv_depth_up = upsample_depth(inv_depth, up_mask_last, h, w, RATIO, image_size)
    inv_depth_final = scale_inv_depth(inv_depth_up)[0]

    poses_out = poses.reshape(B, V, 6)
    fmap1_nchw = fmap1.reshape(h, w, FDIM).transpose(2, 0, 1)[None]
    return inv_depth_final, poses_out, fmap1_nchw


# ================================ main ====================================

if __name__ == "__main__":
    key = jax.random.PRNGKey(0)
    k1, k2, kp = jax.random.split(key, 3)

    B, V, H, W = 1, 2, 32, 32
    target_image = jax.random.normal(k1, (B, 3, H, W), F32)
    ref_imgs = jax.random.normal(k2, (V, 3, H, W), F32)

    Kmat = jnp.array([[float(W), 0.0, W / 2.0],
                      [0.0, float(H), H / 2.0],
                      [0.0, 0.0, 1.0]], F32)
    target_K = Kmat[None]                                  # (B, 3, 3)
    ref_Ks = jnp.broadcast_to(Kmat, (V, 3, 3))[:, None]    # (V, B, 3, 3)

    params = init_params(kp)
    packed = pack_params(params)

    fwd = jax.jit(functools.partial(forward, min_depth=0.1, max_depth=100.0,
                                    scaled_shape=(32, 32)))

    inv_depth, poses, fmap1 = fwd(packed, target_image, ref_imgs, target_K, ref_Ks)
    jax.block_until_ready((inv_depth, poses, fmap1))

    assert inv_depth.shape == (1, 1, 32, 32)
    assert poses.shape == (1, 2, 6)
    assert fmap1.shape == (1, 128, 4, 4)
    assert bool(jnp.all(jnp.isfinite(inv_depth))) and bool(jnp.all(jnp.isfinite(poses)))

    print("KERNEL_OK")
</pallas_src>

<mosaic_0001>
module attributes {stable_mosaic.version = 11 : i64} {
  func.func @_mm_kernel(%arg0: memref<48x192xbf16, #tpu.memory_space<vmem>>, %arg1: memref<192x128xbf16, #tpu.memory_space<vmem>>, %arg2: memref<1x128xf32, #tpu.memory_space<vmem>>, %arg3: memref<48x128xf32, #tpu.memory_space<vmem>>) attributes {dimension_semantics = [], scalar_prefetch = 0 : i64, scratch_operands = 0 : i64, tpu.core_type = #tpu.core_type<tc>} {
    %c0 = arith.constant 0 : index
    %c0_0 = arith.constant 0 : index
    %0 = vector.load %arg0[%c0, %c0_0] : memref<48x192xbf16, #tpu.memory_space<vmem>>, vector<48x192xbf16>
    %c0_1 = arith.constant 0 : index
    %c0_2 = arith.constant 0 : index
    %1 = vector.load %arg1[%c0_1, %c0_2] : memref<192x128xbf16, #tpu.memory_space<vmem>>, vector<192x128xbf16>
    %cst = arith.constant dense<0.000000e+00> : vector<48x128xf32>
    %2 = tpu.matmul %0, %1, %cst {dimension_numbers = #tpu.dot_dimension_numbers<[1], [0], [0], [1], [0, 0, 1, 1], [], []>} : vector<48x192xbf16>, vector<192x128xbf16>, vector<48x128xf32> -> vector<48x128xf32>
    %c0_3 = arith.constant 0 : index
    %c0_4 = arith.constant 0 : index
    %3 = vector.load %arg2[%c0_3, %c0_4] : memref<1x128xf32, #tpu.memory_space<vmem>>, vector<1x128xf32>
    %4 = vector.broadcast %3 : vector<1x128xf32> to vector<48x128xf32>
    %5 = arith.addf %2, %4 : vector<48x128xf32>
    %cst_5 = arith.constant 0.000000e+00 : f32
    %6 = vector.broadcast %cst_5 : f32 to vector<48x128xf32>
    %7 = arith.maximumf %5, %6 : vector<48x128xf32>
    %c0_6 = arith.constant 0 : index
    %c0_7 = arith.constant 0 : index
    %8 = vector.load %arg3[%c0_6, %c0_7] : memref<48x128xf32, #tpu.memory_space<vmem>>, vector<48x128xf32>
    tpu.vector_store %arg3[%c0_6, %c0_7], %7 {strides = array<i32>} : memref<48x128xf32, #tpu.memory_space<vmem>>, vector<48x128xf32>,
    return
  }
}

module attributes {stable_mosaic.version = 11 : i64} {
  func.func @_pose_init_kernel(%arg0: memref<16x128xf32, #tpu.memory_space<vmem>>, %arg1: memref<2x16x128xf32, #tpu.memory_space<vmem>>, %arg2: memref<128x128xbf16, #tpu.memory_space<vmem>>, %arg3: memref<128x128xbf16, #tpu.memory_space<vmem>>, %arg4: memref<1x128xf32, #tpu.memory_space<vmem>>, %arg5: memref<128x6xbf16, #tpu.memory_space<vmem>>, %arg6: memref<1x6xf32, #tpu.memory_space<vmem>>, %arg7: memref<2x6xf32, #tpu.memory_space<vmem>>) attributes {dimension_semantics = [], scalar_prefetch = 0 : i64, scratch_operands = 0 : i64, tpu.core_type = #tpu.core_type<tc>} {
    %c0 = arith.constant 0 : index
    %c0_0 = arith.constant 0 : index
    %0 = vector.load %arg0[%c0, %c0_0] : memref<16x128xf32, #tpu.memory_space<vmem>>, vector<16x128xf32>
    %1 = arith.truncf %0 : vector<16x128xf32> to vector<16x128xbf16>
    %c0_1 = arith.constant 0 : index
    %c0_2 = arith.constant 0 : index
    %2 = vector.load %arg2[%c0_1, %c0_2] : memref<128x128xbf16, #tpu.memory_space<vmem>>, vector<128x128xbf16>
    %cst = arith.constant dense<0.000000e+00> : vector<16x128xf32>
    %3 = tpu.matmul %1, %2, %cst {dimension_numbers = #tpu.dot_dimension_numbers<[1], [0], [0], [1], [0, 0, 1, 1], [], []>} : vector<16x128xbf16>, vector<128x128xbf16>, vector<16x128xf32> -> vector<16x128xf32>
    %c0_3 = arith.constant 0 : index
    %c0_4 = arith.constant 0 : index
    %c0_5 = arith.constant 0 : index
    %4 = vector.load %arg1[%c0_3, %c0_4, %c0_5] : memref<2x16x128xf32, #tpu.memory_space<vmem>>, vector<1x16x128xf32>
    %5 = vector.shape_cast %4 : vector<1x16x128xf32> to vector<16x128xf32>
    %6 = arith.truncf %5 : vector<16x128xf32> to vector<16x128xbf16>
    %c0_6 = arith.constant 0 : index
    %c0_7 = arith.constant 0 : index
    %7 = vector.load %arg3[%c0_6, %c0_7] : memref<128x128xbf16, #tpu.memory_space<vmem>>, vector<128x128xbf16>
    %cst_8 = arith.constant dense<0.000000e+00> : vector<16x128xf32>
    %8 = tpu.matmul %6, %7, %cst_8 {dimension_numbers = #tpu.dot_dimension_numbers<[1], [0], [0], [1], [0, 0, 1, 1], [], []>} : vector<16x128xbf16>, vector<128x128xbf16>, vector<16x128xf32> -> vector<16x128xf32>
    %9 = arith.addf %8, %3 : vector<16x128xf32>
    %c0_9 = arith.constant 0 : index
    %c0_10 = arith.constant 0 : index
    %10 = vector.load %arg4[%c0_9, %c0_10] : memref<1x128xf32, #tpu.memory_space<vmem>>, vector<1x128xf32>
    %11 = vector.broadcast %10 : vector<1x128xf32> to vector<16x128xf32>
    %12 = arith.addf %9, %11 : vector<16x128xf32>
    %cst_11 = arith.constant 0.000000e+00 : f32
    %13 = vector.broadcast %cst_11 : f32 to vector<16x128xf32>
    %14 = arith.maximumf %12, %13 : vector<16x128xf32>
    %cst_12 = arith.constant dense<0.000000e+00> : vector<128xf32>
    %15 = vector.multi_reduction <add>, %14, %cst_12 [0] : vector<16x128xf32> to vector<128xf32>
    %16 = vector.shape_cast %15 : vector<128xf32> to vector<1x128xf32>
    %cst_13 = arith.constant 1.600000e+01 : f32
    %17 = vector.broadcast %cst_13 : f32 to vector<1x128xf32>
    %18 = arith.divf %16, %17 : vector<1x128xf32>
    %c1 = arith.constant 1 : index
    %c0_14 = arith.constant 0 : index
    %c0_15 = arith.constant 0 : index
    %19 = vector.load %arg1[%c1, %c0_14, %c0_15] : memref<2x16x128xf32, #tpu.memory_space<vmem>>, vector<1x16x128xf32>
    %20 = vector.shape_cast %19 : vector<1x16x128xf32> to vector<16x128xf32>
    %21 = arith.truncf %20 : vector<16x128xf32> to vector<16x128xbf16>
    %c0_16 = arith.constant 0 : index
    %c0_17 = arith.constant 0 : index
    %22 = vector.load %arg3[%c0_16, %c0_17] : memref<128x128xbf16, #tpu.memory_space<vmem>>, vector<128x128xbf16>
    %cst_18 = arith.constant dense<0.000000e+00> : vector<16x128xf32>
    %23 = tpu.matmul %21, %22, %cst_18 {dimension_numbers = #tpu.dot_dimension_numbers<[1], [0], [0], [1], [0, 0, 1, 1], [], []>} : vector<16x128xbf16>, vector<128x128xbf16>, vector<16x128xf32> -> vector<16x128xf32>
    %24 = arith.addf %23, %3 : vector<16x128xf32>
    %c0_19 = arith.constant 0 : index
    %c0_20 = arith.constant 0 : index
    %25 = vector.load %arg4[%c0_19, %c0_20] : memref<1x128xf32, #tpu.memory_space<vmem>>, vector<1x128xf32>
    %26 = vector.broadcast %25 : vector<1x128xf32> to vector<16x128xf32>
    %27 = arith.addf %24, %26 : vector<16x128xf32>
    %cst_21 = arith.constant 0.000000e+00 : f32
    %28 = vector.broadcast %cst_21 : f32 to vector<16x128xf32>
    %29 = arith.maximumf %27, %28 : vector<16x128xf32>
    %cst_22 = arith.constant dense<0.000000e+00> : vector<128xf32>
    %30 = vector.multi_reduction <add>, %29, %cst_22 [0] : vector<16x128xf32> to vector<128xf32>
    %31 = vector.shape_cast %30 : vector<128xf32> to vector<1x128xf32>
    %cst_23 = arith.constant 1.600000e+01 : f32
    %32 = vector.broadcast %cst_23 : f32 to vector<1x128xf32>
    %33 = arith.divf %31, %32 : vector<1x128xf32>
    %34 = tpu.concatenate %18, %33 in 0 : vector<1x128xf32>, vector<1x128xf32> -> vector<2x128xf32>
    %35 = arith.truncf %34 : vector<2x128xf32> to vector<2x128xbf16>
    %c0_24 = arith.constant 0 : index
    %c0_25 = arith.constant 0 : index
    %36 = vector.load %arg5[%c0_24, %c0_25] : memref<128x6xbf16, #tpu.memory_space<vmem>>, vector<128x6xbf16>
    %cst_26 = arith.constant dense<0.000000e+00> : vector<2x6xf32>
    %37 = tpu.matmul %35, %36, %cst_26 {dimension_numbers = #tpu.dot_dimension_numbers<[1], [0], [0], [1], [0, 0, 1, 1], [], []>} : vector<2x128xbf16>, vector<128x6xbf16>, vector<2x6xf32> -> vector<2x6xf32>
    %c0_27 = arith.constant 0 : index
    %c0_28 = arith.constant 0 : index
    %38 = vector.load %arg6[%c0_27, %c0_28] : memref<1x6xf32, #tpu.memory_space<vmem>>, vector<1x6xf32>
    %39 = vector.broadcast %38 : vector<1x6xf32> to vector<2x6xf32>
    %40 = arith.addf %37, %39 : vector<2x6xf32>
    %cst_29 = arith.constant 0.00999999977 : f32
    %41 = vector.broadcast %cst_29 : f32 to vector<2x6xf32>
    %42 = arith.mulf %41, %40 : vector<2x6xf32>
    %c0_30 = arith.constant 0 : index
    %c0_31 = arith.constant 0 : index
    %43 = vector.load %arg7[%c0_30, %c0_31] : memref<2x6xf32, #tpu.memory_space<vmem>>, vector<2x6xf32>
    tpu.vector_store %arg7[%c0_30, %c0_31], %42 {strides = array<i32>} : memref<2x6xf32, #tpu.memory_space<vmem>>, vector<2x6xf32>,
    return
  }
}

module attributes {stable_mosaic.version = 11 : i64} {
  func.func @_depth_init_kernel(%arg0: memref<16x128xf32, #tpu.memory_space<vmem>>, %arg1: memref<128x128xbf16, #tpu.memory_space<vmem>>, %arg2: memref<1x128xf32, #tpu.memory_space<vmem>>, %arg3: memref<128x1xbf16, #tpu.memory_space<vmem>>, %arg4: memref<1x1xf32, #tpu.memory_space<vmem>>, %arg5: memref<16x1xf32, #tpu.memory_space<vmem>>) attributes {dimension_semantics = [], scalar_prefetch = 0 : i64, scratch_operands = 0 : i64, tpu.core_type = #tpu.core_type<tc>} {
    %c0 = arith.constant 0 : index
    %c0_0 = arith.constant 0 : index
    %0 = vector.load %arg0[%c0, %c0_0] : memref<16x128xf32, #tpu.memory_space<vmem>>, vector<16x128xf32>
    %1 = arith.truncf %0 : vector<16x128xf32> to vector<16x128xbf16>
    %c0_1 = arith.constant 0 : index
    %c0_2 = arith.constant 0 : index
    %2 = vector.load %arg1[%c0_1, %c0_2] : memref<128x128xbf16, #tpu.memory_space<vmem>>, vector<128x128xbf16>
    %cst = arith.constant dense<0.000000e+00> : vector<16x128xf32>
    %3 = tpu.matmul %1, %2, %cst {dimension_numbers = #tpu.dot_dimension_numbers<[1], [0], [0], [1], [0, 0, 1, 1], [], []>} : vector<16x128xbf16>, vector<128x128xbf16>, vector<16x128xf32> -> vector<16x128xf32>
    %c0_3 = arith.constant 0 : index
    %c0_4 = arith.constant 0 : index
    %4 = vector.load %arg2[%c0_3, %c0_4] : memref<1x128xf32, #tpu.memory_space<vmem>>, vector<1x128xf32>
    %5 = vector.broadcast %4 : vector<1x128xf32> to vector<16x128xf32>
    %6 = arith.addf %3, %5 : vector<16x128xf32>
    %cst_5 = arith.constant 0.000000e+00 : f32
    %7 = vector.broadcast %cst_5 : f32 to vector<16x128xf32>
    %8 = arith.maximumf %6, %7 : vector<16x128xf32>
    %9 = arith.truncf %8 : vector<16x128xf32> to vector<16x128xbf16>
    %c0_6 = arith.constant 0 : index
    %c0_7 = arith.constant 0 : index
    %10 = vector.load %arg3[%c0_6, %c0_7] : memref<128x1xbf16, #tpu.memory_space<vmem>>, vector<128x1xbf16>
    %cst_8 = arith.constant dense<0.000000e+00> : vector<16x1xf32>
    %11 = tpu.matmul %9, %10, %cst_8 {dimension_numbers = #tpu.dot_dimension_numbers<[1], [0], [0], [1], [0, 0, 1, 1], [], []>} : vector<16x128xbf16>, vector<128x1xbf16>, vector<16x1xf32> -> vector<16x1xf32>
    %c0_9 = arith.constant 0 : index
    %c0_10 = arith.constant 0 : index
    %12 = vector.load %arg4[%c0_9, %c0_10] : memref<1x1xf32, #tpu.memory_space<vmem>>, vector<1x1xf32>
    %13 = vector.broadcast %12 : vector<1x1xf32> to vector<16x1xf32>
    %14 = arith.addf %11, %13 : vector<16x1xf32>
    %15 = arith.negf %14 : vector<16x1xf32>
    %16 = math.exp %15 : vector<16x1xf32>
    %cst_11 = arith.constant 1.000000e+00 : f32
    %17 = vector.broadcast %cst_11 : f32 to vector<16x1xf32>
    %18 = arith.addf %17, %16 : vector<16x1xf32>
    %19 = arith.divf %17, %18 : vector<16x1xf32>
    %c0_12 = arith.constant 0 : index
    %c0_13 = arith.constant 0 : index
    %20 = vector.load %arg5[%c0_12, %c0_13] : memref<16x1xf32, #tpu.memory_space<vmem>>, vector<16x1xf32>
    tpu.vector_store %arg5[%c0_12, %c0_13], %19 {strides = array<i32>} : memref<16x1xf32, #tpu.memory_space<vmem>>, vector<16x1xf32>,
    return
  }
}

module attributes {stable_mosaic.version = 11 : i64} {
  func.func @_mm_kernel(%arg0: memref<32x384xbf16, #tpu.memory_space<vmem>>, %arg1: memref<384x160xbf16, #tpu.memory_space<vmem>>, %arg2: memref<1x160xf32, #tpu.memory_space<vmem>>, %arg3: memref<32x160xf32, #tpu.memory_space<vmem>>) attributes {dimension_semantics = [], scalar_prefetch = 0 : i64, scratch_operands = 0 : i64, tpu.core_type = #tpu.core_type<tc>} {
    %c0 = arith.constant 0 : index
    %c0_0 = arith.constant 0 : index
    %0 = vector.load %arg0[%c0, %c0_0] : memref<32x384xbf16, #tpu.memory_space<vmem>>, vector<32x384xbf16>
    %c0_1 = arith.constant 0 : index
    %c0_2 = arith.constant 0 : index
    %1 = vector.load %arg1[%c0_1, %c0_2] : memref<384x160xbf16, #tpu.memory_space<vmem>>, vector<384x160xbf16>
    %cst = arith.constant dense<0.000000e+00> : vector<32x160xf32>
    %2 = tpu.matmul %0, %1, %cst {dimension_numbers = #tpu.dot_dimension_numbers<[1], [0], [0], [1], [0, 0, 1, 1], [], []>} : vector<32x384xbf16>, vector<384x160xbf16>, vector<32x160xf32> -> vector<32x160xf32>
    %c0_3 = arith.constant 0 : index
    %c0_4 = arith.constant 0 : index
    %3 = vector.load %arg2[%c0_3, %c0_4] : memref<1x160xf32, #tpu.memory_space<vmem>>, vector<1x160xf32>
    %4 = vector.broadcast %3 : vector<1x160xf32> to vector<32x160xf32>
    %5 = arith.addf %2, %4 : vector<32x160xf32>
    %c0_5 = arith.constant 0 : index
    %c0_6 = arith.constant 0 : index
    %6 = vector.load %arg3[%c0_5, %c0_6] : memref<32x160xf32, #tpu.memory_space<vmem>>, vector<32x160xf32>
    tpu.vector_store %arg3[%c0_5, %c0_6], %5 {strides = array<i32>} : memref<32x160xf32, #tpu.memory_space<vmem>>, vector<32x160xf32>,
    return
  }
}

module attributes {stable_mosaic.version = 11 : i64} {
  func.func @_mm_kernel(%arg0: memref<32x32xbf16, #tpu.memory_space<vmem>>, %arg1: memref<32x384xbf16, #tpu.memory_space<vmem>>, %arg2: memref<1x384xf32, #tpu.memory_space<vmem>>, %arg3: memref<32x384xf32, #tpu.memory_space<vmem>>) attributes {dimension_semantics = [], scalar_prefetch = 0 : i64, scratch_operands = 0 : i64, tpu.core_type = #tpu.core_type<tc>} {
    %c0 = arith.constant 0 : index
    %c0_0 = arith.constant 0 : index
    %0 = vector.load %arg0[%c0, %c0_0] : memref<32x32xbf16, #tpu.memory_space<vmem>>, vector<32x32xbf16>
    %c0_1 = arith.constant 0 : index
    %c0_2 = arith.constant 0 : index
    %1 = vector.load %arg1[%c0_1, %c0_2] : memref<32x384xbf16, #tpu.memory_space<vmem>>, vector<32x384xbf16>
    %cst = arith.constant dense<0.000000e+00> : vector<32x384xf32>
    %2 = tpu.matmul %0, %1, %cst {dimension_numbers = #tpu.dot_dimension_numbers<[1], [0], [0], [1], [0, 0, 1, 1], [], []>} : vector<32x32xbf16>, vector<32x384xbf16>, vector<32x384xf32> -> vector<32x384xf32>
    %c0_3 = arith.constant 0 : index
    %c0_4 = arith.constant 0 : index
    %3 = vector.load %arg2[%c0_3, %c0_4] : memref<1x384xf32, #tpu.memory_space<vmem>>, vector<1x384xf32>
    %4 = vector.broadcast %3 : vector<1x384xf32> to vector<32x384xf32>
    %5 = arith.addf %2, %4 : vector<32x384xf32>
    %c0_5 = arith.constant 0 : index
    %c0_6 = arith.constant 0 : index
    %6 = vector.load %arg3[%c0_5, %c0_6] : memref<32x384xf32, #tpu.memory_space<vmem>>, vector<32x384xf32>
    tpu.vector_store %arg3[%c0_5, %c0_6], %5 {strides = array<i32>} : memref<32x384xf32, #tpu.memory_space<vmem>>, vector<32x384xf32>,
    return
  }
}

module attributes {stable_mosaic.version = 11 : i64} {
  func.func @_pose_step_kernel(%arg0: memref<16x128xf32, #tpu.memory_space<vmem>>, %arg1: memref<2x16x128xf32, #tpu.memory_space<vmem>>, %arg2: memref<32x128xf32, #tpu.memory_space<vmem>>, %arg3: memref<2x6xf32, #tpu.memory_space<vmem>>, %arg4: memref<32x384xf32, #tpu.memory_space<vmem>>, %arg5: memref<128x128xbf16, #tpu.memory_space<vmem>>, %arg6: memref<1x128xf32, #tpu.memory_space<vmem>>, %arg7: memref<128x256xbf16, #tpu.memory_space<vmem>>, %arg8: memref<128x384xbf16, #tpu.memory_space<vmem>>, %arg9: memref<6x384xbf16, #tpu.memory_space<vmem>>, %arg10: memref<128x128xbf16, #tpu.memory_space<vmem>>, %arg11: memref<128x128xbf16, #tpu.memory_space<vmem>>, %arg12: memref<1x128xf32, #tpu.memory_space<vmem>>, %arg13: memref<128x6xbf16, #tpu.memory_space<vmem>>, %arg14: memref<1x6xf32, #tpu.memory_space<vmem>>, %arg15: memref<32x128xf32, #tpu.memory_space<vmem>>, %arg16: memref<2x6xf32, #tpu.memory_space<vmem>>) attributes {dimension_semantics = [], scalar_prefetch = 0 : i64, scratch_operands = 0 : i64, tpu.core_type = #tpu.core_type<tc>} {
    %c0 = arith.constant 0 : index
    %c0_0 = arith.constant 0 : index
    %0 = vector.load %arg0[%c0, %c0_0] : memref<16x128xf32, #tpu.memory_space<vmem>>, vector<16x128xf32>
    %c0_1 = arith.constant 0 : index
    %c0_2 = arith.constant 0 : index
    %c0_3 = arith.constant 0 : index
    %1 = vector.load %arg1[%c0_1, %c0_2, %c0_3] : memref<2x16x128xf32, #tpu.memory_space<vmem>>, vector<1x16x128xf32>
    %2 = vector.shape_cast %1 : vector<1x16x128xf32> to vector<16x128xf32>
    %3 = arith.subf %2, %0 : vector<16x128xf32>
    %4 = arith.mulf %3, %3 : vector<16x128xf32>
    %c1 = arith.constant 1 : index
    %c0_4 = arith.constant 0 : index
    %c0_5 = arith.constant 0 : index
    %5 = vector.load %arg1[%c1, %c0_4, %c0_5] : memref<2x16x128xf32, #tpu.memory_space<vmem>>, vector<1x16x128xf32>
    %6 = vector.shape_cast %5 : vector<1x16x128xf32> to vector<16x128xf32>
    %7 = arith.subf %6, %0 : vector<16x128xf32>
    %8 = arith.mulf %7, %7 : vector<16x128xf32>
    %9 = tpu.concatenate %4, %8 in 0 : vector<16x128xf32>, vector<16x128xf32> -> vector<32x128xf32>
    %10 = arith.truncf %9 : vector<32x128xf32> to vector<32x128xbf16>
    %c0_6 = arith.constant 0 : index
    %c0_7 = arith.constant 0 : index
    %11 = vector.load %arg5[%c0_6, %c0_7] : memref<128x128xbf16, #tpu.memory_space<vmem>>, vector<128x128xbf16>
    %cst = arith.constant dense<0.000000e+00> : vector<32x128xf32>
    %12 = tpu.matmul %10, %11, %cst {dimension_numbers = #tpu.dot_dimension_numbers<[1], [0], [0], [1], [0, 0, 1, 1], [], []>} : vector<32x128xbf16>, vector<128x128xbf16>, vector<32x128xf32> -> vector<32x128xf32>
    %c0_8 = arith.constant 0 : index
    %c0_9 = arith.constant 0 : index
    %13 = vector.load %arg6[%c0_8, %c0_9] : memref<1x128xf32, #tpu.memory_space<vmem>>, vector<1x128xf32>
    %14 = vector.broadcast %13 : vector<1x128xf32> to vector<32x128xf32>
    %15 = arith.addf %12, %14 : vector<32x128xf32>
    %cst_10 = arith.constant 0.000000e+00 : f32
    %16 = vector.broadcast %cst_10 : f32 to vector<32x128xf32>
    %17 = arith.maximumf %15, %16 : vector<32x128xf32>
    %c0_11 = arith.constant 0 : index
    %c0_12 = arith.constant 0 : index
    %18 = vector.load %arg3[%c0_11, %c0_12] : memref<2x6xf32, #tpu.memory_space<vmem>>, vector<2x6xf32>
    %19 = arith.truncf %18 : vector<2x6xf32> to vector<2x6xbf16>
    %c0_13 = arith.constant 0 : index
    %c0_14 = arith.constant 0 : index
    %20 = vector.load %arg9[%c0_13, %c0_14] : memref<6x384xbf16, #tpu.memory_space<vmem>>, vector<6x384xbf16>
    %cst_15 = arith.constant dense<0.000000e+00> : vector<2x384xf32>
    %21 = tpu.matmul %19, %20, %cst_15 {dimension_numbers = #tpu.dot_dimension_numbers<[1], [0], [0], [1], [0, 0, 1, 1], [], []>} : vector<2x6xbf16>, vector<6x384xbf16>, vector<2x384xf32> -> vector<2x384xf32>
    %22 = vector.extract_strided_slice %21 {offsets = [0, 0], sizes = [1, 384], strides = [1, 1]} : vector<2x384xf32> to vector<1x384xf32>
    %23 = vector.shape_cast %22 : vector<1x384xf32> to vector<1x384xf32>
    %24 = vector.broadcast %23 : vector<1x384xf32> to vector<16x384xf32>
    %25 = vector.extract_strided_slice %21 {offsets = [1, 0], sizes = [1, 384], strides = [1, 1]} : vector<2x384xf32> to vector<1x384xf32>
    %26 = vector.shape_cast %25 : vector<1x384xf32> to vector<1x384xf32>
    %27 = vector.broadcast %26 : vector<1x384xf32> to vector<16x384xf32>
    %28 = tpu.concatenate %24, %27 in 0 : vector<16x384xf32>, vector<16x384xf32> -> vector<32x384xf32>
    %29 = arith.truncf %17 : vector<32x128xf32> to vector<32x128xbf16>
    %c0_16 = arith.constant 0 : index
    %c0_17 = arith.constant 0 : index
    %30 = vector.load %arg8[%c0_16, %c0_17] : memref<128x384xbf16, #tpu.memory_space<vmem>>, vector<128x384xbf16>
    %cst_18 = arith.constant dense<0.000000e+00> : vector<32x384xf32>
    %31 = tpu.matmul %29, %30, %cst_18 {dimension_numbers = #tpu.dot_dimension_numbers<[1], [0], [0], [1], [0, 0, 1, 1], [], []>} : vector<32x128xbf16>, vector<128x384xbf16>, vector<32x384xf32> -> vector<32x384xf32>
    %c0_19 = arith.constant 0 : index
    %c0_20 = arith.constant 0 : index
    %32 = vector.load %arg4[%c0_19, %c0_20] : memref<32x384xf32, #tpu.memory_space<vmem>>, vector<32x384xf32>
    %33 = arith.addf %31, %32 : vector<32x384xf32>
    %34 = arith.addf %33, %28 : vector<32x384xf32>
    %c0_21 = arith.constant 0 : index
    %c0_22 = arith.constant 0 : index
    %35 = vector.load %arg2[%c0_21, %c0_22] : memref<32x128xf32, #tpu.memory_space<vmem>>, vector<32x128xf32>
    %36 = arith.truncf %35 : vector<32x128xf32> to vector<32x128xbf16>
    %c0_23 = arith.constant 0 : index
    %c0_24 = arith.constant 0 : index
    %37 = vector.load %arg7[%c0_23, %c0_24] : memref<128x256xbf16, #tpu.memory_space<vmem>>, vector<128x256xbf16>
    %cst_25 = arith.constant dense<0.000000e+00> : vector<32x256xf32>
    %38 = tpu.matmul %36, %37, %cst_25 {dimension_numbers = #tpu.dot_dimension_numbers<[1], [0], [0], [1], [0, 0, 1, 1], [], []>} : vector<32x128xbf16>, vector<128x256xbf16>, vector<32x256xf32> -> vector<32x256xf32>
    %39 = vector.extract_strided_slice %38 {offsets = [0, 0], sizes = [32, 128], strides = [1, 1]} : vector<32x256xf32> to vector<32x128xf32>
    %40 = vector.extract_strided_slice %34 {offsets = [0, 0], sizes = [32, 128], strides = [1, 1]} : vector<32x384xf32> to vector<32x128xf32>
    %41 = arith.addf %39, %40 : vector<32x128xf32>
    %42 = arith.negf %41 : vector<32x128xf32>
    %43 = math.exp %42 : vector<32x128xf32>
    %cst_26 = arith.constant 1.000000e+00 : f32
    %44 = vector.broadcast %cst_26 : f32 to vector<32x128xf32>
    %45 = arith.addf %44, %43 : vector<32x128xf32>
    %46 = arith.divf %44, %45 : vector<32x128xf32>
    %47 = vector.extract_strided_slice %38 {offsets = [0, 128], sizes = [32, 128], strides = [1, 1]} : vector<32x256xf32> to vector<32x128xf32>
    %48 = vector.extract_strided_slice %34 {offsets = [0, 128], sizes = [32, 128], strides = [1, 1]} : vector<32x384xf32> to vector<32x128xf32>
    %49 = arith.addf %47, %48 : vector<32x128xf32>
    %50 = arith.negf %49 : vector<32x128xf32>
    %51 = math.exp %50 : vector<32x128xf32>
    %cst_27 = arith.constant 1.000000e+00 : f32
    %52 = vector.broadcast %cst_27 : f32 to vector<32x128xf32>
    %53 = arith.addf %52, %51 : vector<32x128xf32>
    %54 = arith.divf %52, %53 : vector<32x128xf32>
    %55 = arith.mulf %54, %35 : vector<32x128xf32>
    %56 = arith.truncf %55 : vector<32x128xf32> to vector<32x128xbf16>
    %c0_28 = arith.constant 0 : index
    %c0_29 = arith.constant 0 : index
    %57 = vector.load %arg10[%c0_28, %c0_29] : memref<128x128xbf16, #tpu.memory_space<vmem>>, vector<128x128xbf16>
    %cst_30 = arith.constant dense<0.000000e+00> : vector<32x128xf32>
    %58 = tpu.matmul %56, %57, %cst_30 {dimension_numbers = #tpu.dot_dimension_numbers<[1], [0], [0], [1], [0, 0, 1, 1], [], []>} : vector<32x128xbf16>, vector<128x128xbf16>, vector<32x128xf32> -> vector<32x128xf32>
    %59 = vector.extract_strided_slice %34 {offsets = [0, 256], sizes = [32, 128], strides = [1, 1]} : vector<32x384xf32> to vector<32x128xf32>
    %60 = arith.addf %58, %59 : vector<32x128xf32>
    %61 = math.tanh %60 : vector<32x128xf32>
    %cst_31 = arith.constant 1.000000e+00 : f32
    %62 = vector.broadcast %cst_31 : f32 to vector<32x128xf32>
    %63 = arith.subf %62, %46 : vector<32x128xf32>
    %64 = arith.mulf %63, %35 : vector<32x128xf32>
    %65 = arith.mulf %46, %61 : vector<32x128xf32>
    %66 = arith.addf %64, %65 : vector<32x128xf32>
    %c0_32 = arith.constant 0 : index
    %c0_33 = arith.constant 0 : index
    %67 = vector.load %arg15[%c0_32, %c0_33] : memref<32x128xf32, #tpu.memory_space<vmem>>, vector<32x128xf32>
    tpu.vector_store %arg15[%c0_32, %c0_33], %66 {strides = array<i32>} : memref<32x128xf32, #tpu.memory_space<vmem>>, vector<32x128xf32>,
    %68 = vector.extract_strided_slice %66 {offsets = [0, 0], sizes = [16, 128], strides = [1, 1]} : vector<32x128xf32> to vector<16x128xf32>
    %cst_34 = arith.constant dense<0.000000e+00> : vector<128xf32>
    %69 = vector.multi_reduction <add>, %68, %cst_34 [0] : vector<16x128xf32> to vector<128xf32>
    %70 = vector.shape_cast %69 : vector<128xf32> to vector<1x128xf32>
    %cst_35 = arith.constant 1.600000e+01 : f32
    %71 = vector.broadcast %cst_35 : f32 to vector<1x128xf32>
    %72 = arith.divf %70, %71 : vector<1x128xf32>
    %73 = vector.extract_strided_slice %66 {offsets = [16, 0], sizes = [16, 128], strides = [1, 1]} : vector<32x128xf32> to vector<16x128xf32>
    %cst_36 = arith.constant dense<0.000000e+00> : vector<128xf32>
    %74 = vector.multi_reduction <add>, %73, %cst_36 [0] : vector<16x128xf32> to vector<128xf32>
    %75 = vector.shape_cast %74 : vector<128xf32> to vector<1x128xf32>
    %cst_37 = arith.constant 1.600000e+01 : f32
    %76 = vector.broadcast %cst_37 : f32 to vector<1x128xf32>
    %77 = arith.divf %75, %76 : vector<1x128xf32>
    %78 = tpu.concatenate %72, %77 in 0 : vector<1x128xf32>, vector<1x128xf32> -> vector<2x128xf32>
    %79 = arith.truncf %78 : vector<2x128xf32> to vector<2x128xbf16>
    %c0_38 = arith.constant 0 : index
    %c0_39 = arith.constant 0 : index
    %80 = vector.load %arg11[%c0_38, %c0_39] : memref<128x128xbf16, #tpu.memory_space<vmem>>, vector<128x128xbf16>
    %cst_40 = arith.constant dense<0.000000e+00> : vector<2x128xf32>
    %81 = tpu.matmul %79, %80, %cst_40 {dimension_numbers = #tpu.dot_dimension_numbers<[1], [0], [0], [1], [0, 0, 1, 1], [], []>} : vector<2x128xbf16>, vector<128x128xbf16>, vector<2x128xf32> -> vector<2x128xf32>
    %c0_41 = arith.constant 0 : index
    %c0_42 = arith.constant 0 : index
    %82 = vector.load %arg12[%c0_41, %c0_42] : memref<1x128xf32, #tpu.memory_space<vmem>>, vector<1x128xf32>
    %83 = vector.broadcast %82 : vector<1x128xf32> to vector<2x128xf32>
    %84 = arith.addf %81, %83 : vector<2x128xf32>
    %cst_43 = arith.constant 0.000000e+00 : f32
    %85 = vector.broadcast %cst_43 : f32 to vector<2x128xf32>
    %86 = arith.maximumf %84, %85 : vector<2x128xf32>
    %87 = arith.truncf %86 : vector<2x128xf32> to vector<2x128xbf16>
    %c0_44 = arith.constant 0 : index
    %c0_45 = arith.constant 0 : index
    %88 = vector.load %arg13[%c0_44, %c0_45] : memref<128x6xbf16, #tpu.memory_space<vmem>>, vector<128x6xbf16>
    %cst_46 = arith.constant dense<0.000000e+00> : vector<2x6xf32>
    %89 = tpu.matmul %87, %88, %cst_46 {dimension_numbers = #tpu.dot_dimension_numbers<[1], [0], [0], [1], [0, 0, 1, 1], [], []>} : vector<2x128xbf16>, vector<128x6xbf16>, vector<2x6xf32> -> vector<2x6xf32>
    %c0_47 = arith.constant 0 : index
    %c0_48 = arith.constant 0 : index
    %90 = vector.load %arg14[%c0_47, %c0_48] : memref<1x6xf32, #tpu.memory_space<vmem>>, vector<1x6xf32>
    %91 = vector.broadcast %90 : vector<1x6xf32> to vector<2x6xf32>
    %92 = arith.addf %89, %91 : vector<2x6xf32>
    %cst_49 = arith.constant 0.00999999977 : f32
    %93 = vector.broadcast %cst_49 : f32 to vector<2x6xf32>
    %94 = arith.mulf %93, %92 : vector<2x6xf32>
    %c0_50 = arith.constant 0 : index
    %c0_51 = arith.constant 0 : index
    %95 = vector.load %arg3[%c0_50, %c0_51] : memref<2x6xf32, #tpu.memory_space<vmem>>, vector<2x6xf32>
    %96 = arith.addf %95, %94 : vector<2x6xf32>
    %c0_52 = arith.constant 0 : index
    %c0_53 = arith.constant 0 : index
    %97 = vector.load %arg16[%c0_52, %c0_53] : memref<2x6xf32, #tpu.memory_space<vmem>>, vector<2x6xf32>
    tpu.vector_store %arg16[%c0_52, %c0_53], %96 {strides = array<i32>} : memref<2x6xf32, #tpu.memory_space<vmem>>, vector<2x6xf32>,
    return
  }
}

module attributes {stable_mosaic.version = 11 : i64} {
  func.func @_mm_kernel(%arg0: memref<16x192xbf16, #tpu.memory_space<vmem>>, %arg1: memref<192x160xbf16, #tpu.memory_space<vmem>>, %arg2: memref<1x160xf32, #tpu.memory_space<vmem>>, %arg3: memref<16x160xf32, #tpu.memory_space<vmem>>) attributes {dimension_semantics = [], scalar_prefetch = 0 : i64, scratch_operands = 0 : i64, tpu.core_type = #tpu.core_type<tc>} {
    %c0 = arith.constant 0 : index
    %c0_0 = arith.constant 0 : index
    %0 = vector.load %arg0[%c0, %c0_0] : memref<16x192xbf16, #tpu.memory_space<vmem>>, vector<16x192xbf16>
    %c0_1 = arith.constant 0 : index
    %c0_2 = arith.constant 0 : index
    %1 = vector.load %arg1[%c0_1, %c0_2] : memref<192x160xbf16, #tpu.memory_space<vmem>>, vector<192x160xbf16>
    %cst = arith.constant dense<0.000000e+00> : vector<16x160xf32>
    %2 = tpu.matmul %0, %1, %cst {dimension_numbers = #tpu.dot_dimension_numbers<[1], [0], [0], [1], [0, 0, 1, 1], [], []>} : vector<16x192xbf16>, vector<192x160xbf16>, vector<16x160xf32> -> vector<16x160xf32>
    %c0_3 = arith.constant 0 : index
    %c0_4 = arith.constant 0 : index
    %3 = vector.load %arg2[%c0_3, %c0_4] : memref<1x160xf32, #tpu.memory_space<vmem>>, vector<1x160xf32>
    %4 = vector.broadcast %3 : vector<1x160xf32> to vector<16x160xf32>
    %5 = arith.addf %2, %4 : vector<16x160xf32>
    %c0_5 = arith.constant 0 : index
    %c0_6 = arith.constant 0 : index
    %6 = vector.load %arg3[%c0_5, %c0_6] : memref<16x160xf32, #tpu.memory_space<vmem>>, vector<16x160xf32>
    tpu.vector_store %arg3[%c0_5, %c0_6], %5 {strides = array<i32>} : memref<16x160xf32, #tpu.memory_space<vmem>>, vector<16x160xf32>,
    return
  }
}

module attributes {stable_mosaic.version = 11 : i64} {
  func.func @_mm_kernel(%arg0: memref<16x32xbf16, #tpu.memory_space<vmem>>, %arg1: memref<32x384xbf16, #tpu.memory_space<vmem>>, %arg2: memref<1x384xf32, #tpu.memory_space<vmem>>, %arg3: memref<16x384xf32, #tpu.memory_space<vmem>>) attributes {dimension_semantics = [], scalar_prefetch = 0 : i64, scratch_operands = 0 : i64, tpu.core_type = #tpu.core_type<tc>} {
    %c0 = arith.constant 0 : index
    %c0_0 = arith.constant 0 : index
    %0 = vector.load %arg0[%c0, %c0_0] : memref<16x32xbf16, #tpu.memory_space<vmem>>, vector<16x32xbf16>
    %c0_1 = arith.constant 0 : index
    %c0_2 = arith.constant 0 : index
    %1 = vector.load %arg1[%c0_1, %c0_2] : memref<32x384xbf16, #tpu.memory_space<vmem>>, vector<32x384xbf16>
    %cst = arith.constant dense<0.000000e+00> : vector<16x384xf32>
    %2 = tpu.matmul %0, %1, %cst {dimension_numbers = #tpu.dot_dimension_numbers<[1], [0], [0], [1], [0, 0, 1, 1], [], []>} : vector<16x32xbf16>, vector<32x384xbf16>, vector<16x384xf32> -> vector<16x384xf32>
    %c0_3 = arith.constant 0 : index
    %c0_4 = arith.constant 0 : index
    %3 = vector.load %arg2[%c0_3, %c0_4] : memref<1x384xf32, #tpu.memory_space<vmem>>, vector<1x384xf32>
    %4 = vector.broadcast %3 : vector<1x384xf32> to vector<16x384xf32>
    %5 = arith.addf %2, %4 : vector<16x384xf32>
    %c0_5 = arith.constant 0 : index
    %c0_6 = arith.constant 0 : index
    %6 = vector.load %arg3[%c0_5, %c0_6] : memref<16x384xf32, #tpu.memory_space<vmem>>, vector<16x384xf32>
    tpu.vector_store %arg3[%c0_5, %c0_6], %5 {strides = array<i32>} : memref<16x384xf32, #tpu.memory_space<vmem>>, vector<16x384xf32>,
    return
  }
}

module attributes {stable_mosaic.version = 11 : i64} {
  func.func @_depth_step_kernel(%arg0: memref<16x128xf32, #tpu.memory_space<vmem>>, %arg1: memref<2x16x128xf32, #tpu.memory_space<vmem>>, %arg2: memref<16x128xf32, #tpu.memory_space<vmem>>, %arg3: memref<16x1xf32, #tpu.memory_space<vmem>>, %arg4: memref<16x384xf32, #tpu.memory_space<vmem>>, %arg5: memref<1x384xf32, #tpu.memory_space<vmem>>, %arg6: memref<128x128xbf16, #tpu.memory_space<vmem>>, %arg7: memref<1x128xf32, #tpu.memory_space<vmem>>, %arg8: memref<128x256xbf16, #tpu.memory_space<vmem>>, %arg9: memref<128x384xbf16, #tpu.memory_space<vmem>>, %arg10: memref<128x128xbf16, #tpu.memory_space<vmem>>, %arg11: memref<128x128xbf16, #tpu.memory_space<vmem>>, %arg12: memref<1x128xf32, #tpu.memory_space<vmem>>, %arg13: memref<128x1xbf16, #tpu.memory_space<vmem>>, %arg14: memref<1x1xf32, #tpu.memory_space<vmem>>, %arg15: memref<16x128xf32, #tpu.memory_space<vmem>>, %arg16: memref<16x1xf32, #tpu.memory_space<vmem>>) attributes {dimension_semantics = [], scalar_prefetch = 0 : i64, scratch_operands = 0 : i64, tpu.core_type = #tpu.core_type<tc>} {
    %c0 = arith.constant 0 : index
    %c0_0 = arith.constant 0 : index
    %0 = vector.load %arg0[%c0, %c0_0] : memref<16x128xf32, #tpu.memory_space<vmem>>, vector<16x128xf32>
    %c0_1 = arith.constant 0 : index
    %c0_2 = arith.constant 0 : index
    %c0_3 = arith.constant 0 : index
    %1 = vector.load %arg1[%c0_1, %c0_2, %c0_3] : memref<2x16x128xf32, #tpu.memory_space<vmem>>, vector<1x16x128xf32>
    %2 = vector.shape_cast %1 : vector<1x16x128xf32> to vector<16x128xf32>
    %3 = arith.subf %2, %0 : vector<16x128xf32>
    %4 = arith.mulf %3, %3 : vector<16x128xf32>
    %c1 = arith.constant 1 : index
    %c0_4 = arith.constant 0 : index
    %c0_5 = arith.constant 0 : index
    %5 = vector.load %arg1[%c1, %c0_4, %c0_5] : memref<2x16x128xf32, #tpu.memory_space<vmem>>, vector<1x16x128xf32>
    %6 = vector.shape_cast %5 : vector<1x16x128xf32> to vector<16x128xf32>
    %7 = arith.subf %6, %0 : vector<16x128xf32>
    %8 = arith.mulf %7, %7 : vector<16x128xf32>
    %9 = arith.addf %4, %8 : vector<16x128xf32>
    %cst = arith.constant 5.000000e-01 : f32
    %10 = vector.broadcast %cst : f32 to vector<16x128xf32>
    %11 = arith.mulf %9, %10 : vector<16x128xf32>
    %12 = arith.truncf %11 : vector<16x128xf32> to vector<16x128xbf16>
    %c0_6 = arith.constant 0 : index
    %c0_7 = arith.constant 0 : index
    %13 = vector.load %arg6[%c0_6, %c0_7] : memref<128x128xbf16, #tpu.memory_space<vmem>>, vector<128x128xbf16>
    %cst_8 = arith.constant dense<0.000000e+00> : vector<16x128xf32>
    %14 = tpu.matmul %12, %13, %cst_8 {dimension_numbers = #tpu.dot_dimension_numbers<[1], [0], [0], [1], [0, 0, 1, 1], [], []>} : vector<16x128xbf16>, vector<128x128xbf16>, vector<16x128xf32> -> vector<16x128xf32>
    %c0_9 = arith.constant 0 : index
    %c0_10 = arith.constant 0 : index
    %15 = vector.load %arg7[%c0_9, %c0_10] : memref<1x128xf32, #tpu.memory_space<vmem>>, vector<1x128xf32>
    %16 = vector.broadcast %15 : vector<1x128xf32> to vector<16x128xf32>
    %17 = arith.addf %14, %16 : vector<16x128xf32>
    %cst_11 = arith.constant 0.000000e+00 : f32
    %18 = vector.broadcast %cst_11 : f32 to vector<16x128xf32>
    %19 = arith.maximumf %17, %18 : vector<16x128xf32>
    %20 = arith.truncf %19 : vector<16x128xf32> to vector<16x128xbf16>
    %c0_12 = arith.constant 0 : index
    %c0_13 = arith.constant 0 : index
    %21 = vector.load %arg9[%c0_12, %c0_13] : memref<128x384xbf16, #tpu.memory_space<vmem>>, vector<128x384xbf16>
    %cst_14 = arith.constant dense<0.000000e+00> : vector<16x384xf32>
    %22 = tpu.matmul %20, %21, %cst_14 {dimension_numbers = #tpu.dot_dimension_numbers<[1], [0], [0], [1], [0, 0, 1, 1], [], []>} : vector<16x128xbf16>, vector<128x384xbf16>, vector<16x384xf32> -> vector<16x384xf32>
    %c0_15 = arith.constant 0 : index
    %c0_16 = arith.constant 0 : index
    %23 = vector.load %arg4[%c0_15, %c0_16] : memref<16x384xf32, #tpu.memory_space<vmem>>, vector<16x384xf32>
    %24 = arith.addf %22, %23 : vector<16x384xf32>
    %c0_17 = arith.constant 0 : index
    %c0_18 = arith.constant 0 : index
    %25 = vector.load %arg3[%c0_17, %c0_18] : memref<16x1xf32, #tpu.memory_space<vmem>>, vector<16x1xf32>
    %c0_19 = arith.constant 0 : index
    %c0_20 = arith.constant 0 : index
    %26 = vector.load %arg5[%c0_19, %c0_20] : memref<1x384xf32, #tpu.memory_space<vmem>>, vector<1x384xf32>
    %27 = vector.broadcast %25 : vector<16x1xf32> to vector<16x384xf32>
    %28 = vector.broadcast %26 : vector<1x384xf32> to vector<16x384xf32>
    %29 = arith.mulf %27, %28 : vector<16x384xf32>
    %30 = arith.addf %24, %29 : vector<16x384xf32>
    %c0_21 = arith.constant 0 : index
    %c0_22 = arith.constant 0 : index
    %31 = vector.load %arg2[%c0_21, %c0_22] : memref<16x128xf32, #tpu.memory_space<vmem>>, vector<16x128xf32>
    %32 = arith.truncf %31 : vector<16x128xf32> to vector<16x128xbf16>
    %c0_23 = arith.constant 0 : index
    %c0_24 = arith.constant 0 : index
    %33 = vector.load %arg8[%c0_23, %c0_24] : memref<128x256xbf16, #tpu.memory_space<vmem>>, vector<128x256xbf16>
    %cst_25 = arith.constant dense<0.000000e+00> : vector<16x256xf32>
    %34 = tpu.matmul %32, %33, %cst_25 {dimension_numbers = #tpu.dot_dimension_numbers<[1], [0], [0], [1], [0, 0, 1, 1], [], []>} : vector<16x128xbf16>, vector<128x256xbf16>, vector<16x256xf32> -> vector<16x256xf32>
    %35 = vector.extract_strided_slice %34 {offsets = [0, 0], sizes = [16, 128], strides = [1, 1]} : vector<16x256xf32> to vector<16x128xf32>
    %36 = vector.extract_strided_slice %30 {offsets = [0, 0], sizes = [16, 128], strides = [1, 1]} : vector<16x384xf32> to vector<16x128xf32>
    %37 = arith.addf %35, %36 : vector<16x128xf32>
    %38 = arith.negf %37 : vector<16x128xf32>
    %39 = math.exp %38 : vector<16x128xf32>
    %cst_26 = arith.constant 1.000000e+00 : f32
    %40 = vector.broadcast %cst_26 : f32 to vector<16x128xf32>
    %41 = arith.addf %40, %39 : vector<16x128xf32>
    %42 = arith.divf %40, %41 : vector<16x128xf32>
    %43 = vector.extract_strided_slice %34 {offsets = [0, 128], sizes = [16, 128], strides = [1, 1]} : vector<16x256xf32> to vector<16x128xf32>
    %44 = vector.extract_strided_slice %30 {offsets = [0, 128], sizes = [16, 128], strides = [1, 1]} : vector<16x384xf32> to vector<16x128xf32>
    %45 = arith.addf %43, %44 : vector<16x128xf32>
    %46 = arith.negf %45 : vector<16x128xf32>
    %47 = math.exp %46 : vector<16x128xf32>
    %cst_27 = arith.constant 1.000000e+00 : f32
    %48 = vector.broadcast %cst_27 : f32 to vector<16x128xf32>
    %49 = arith.addf %48, %47 : vector<16x128xf32>
    %50 = arith.divf %48, %49 : vector<16x128xf32>
    %51 = arith.mulf %50, %31 : vector<16x128xf32>
    %52 = arith.truncf %51 : vector<16x128xf32> to vector<16x128xbf16>
    %c0_28 = arith.constant 0 : index
    %c0_29 = arith.constant 0 : index
    %53 = vector.load %arg10[%c0_28, %c0_29] : memref<128x128xbf16, #tpu.memory_space<vmem>>, vector<128x128xbf16>
    %cst_30 = arith.constant dense<0.000000e+00> : vector<16x128xf32>
    %54 = tpu.matmul %52, %53, %cst_30 {dimension_numbers = #tpu.dot_dimension_numbers<[1], [0], [0], [1], [0, 0, 1, 1], [], []>} : vector<16x128xbf16>, vector<128x128xbf16>, vector<16x128xf32> -> vector<16x128xf32>
    %55 = vector.extract_strided_slice %30 {offsets = [0, 256], sizes = [16, 128], strides = [1, 1]} : vector<16x384xf32> to vector<16x128xf32>
    %56 = arith.addf %54, %55 : vector<16x128xf32>
    %57 = math.tanh %56 : vector<16x128xf32>
    %cst_31 = arith.constant 1.000000e+00 : f32
    %58 = vector.broadcast %cst_31 : f32 to vector<16x128xf32>
    %59 = arith.subf %58, %42 : vector<16x128xf32>
    %60 = arith.mulf %59, %31 : vector<16x128xf32>
    %61 = arith.mulf %42, %57 : vector<16x128xf32>
    %62 = arith.addf %60, %61 : vector<16x128xf32>
    %c0_32 = arith.constant 0 : index
    %c0_33 = arith.constant 0 : index
    %63 = vector.load %arg15[%c0_32, %c0_33] : memref<16x128xf32, #tpu.memory_space<vmem>>, vector<16x128xf32>
    tpu.vector_store %arg15[%c0_32, %c0_33], %62 {strides = array<i32>} : memref<16x128xf32, #tpu.memory_space<vmem>>, vector<16x128xf32>,
    %64 = arith.truncf %62 : vector<16x128xf32> to vector<16x128xbf16>
    %c0_34 = arith.constant 0 : index
    %c0_35 = arith.constant 0 : index
    %65 = vector.load %arg11[%c0_34, %c0_35] : memref<128x128xbf16, #tpu.memory_space<vmem>>, vector<128x128xbf16>
    %cst_36 = arith.constant dense<0.000000e+00> : vector<16x128xf32>
    %66 = tpu.matmul %64, %65, %cst_36 {dimension_numbers = #tpu.dot_dimension_numbers<[1], [0], [0], [1], [0, 0, 1, 1], [], []>} : vector<16x128xbf16>, vector<128x128xbf16>, vector<16x128xf32> -> vector<16x128xf32>
    %c0_37 = arith.constant 0 : index
    %c0_38 = arith.constant 0 : index
    %67 = vector.load %arg12[%c0_37, %c0_38] : memref<1x128xf32, #tpu.memory_space<vmem>>, vector<1x128xf32>
    %68 = vector.broadcast %67 : vector<1x128xf32> to vector<16x128xf32>
    %69 = arith.addf %66, %68 : vector<16x128xf32>
    %cst_39 = arith.constant 0.000000e+00 : f32
    %70 = vector.broadcast %cst_39 : f32 to vector<16x128xf32>
    %71 = arith.maximumf %69, %70 : vector<16x128xf32>
    %72 = arith.truncf %71 : vector<16x128xf32> to vector<16x128xbf16>
    %c0_40 = arith.constant 0 : index
    %c0_41 = arith.constant 0 : index
    %73 = vector.load %arg13[%c0_40, %c0_41] : memref<128x1xbf16, #tpu.memory_space<vmem>>, vector<128x1xbf16>
    %cst_42 = arith.constant dense<0.000000e+00> : vector<16x1xf32>
    %74 = tpu.matmul %72, %73, %cst_42 {dimension_numbers = #tpu.dot_dimension_numbers<[1], [0], [0], [1], [0, 0, 1, 1], [], []>} : vector<16x128xbf16>, vector<128x1xbf16>, vector<16x1xf32> -> vector<16x1xf32>
    %c0_43 = arith.constant 0 : index
    %c0_44 = arith.constant 0 : index
    %75 = vector.load %arg14[%c0_43, %c0_44] : memref<1x1xf32, #tpu.memory_space<vmem>>, vector<1x1xf32>
    %76 = vector.broadcast %75 : vector<1x1xf32> to vector<16x1xf32>
    %77 = arith.addf %74, %76 : vector<16x1xf32>
    %c0_45 = arith.constant 0 : index
    %c0_46 = arith.constant 0 : index
    %78 = vector.load %arg3[%c0_45, %c0_46] : memref<16x1xf32, #tpu.memory_space<vmem>>, vector<16x1xf32>
    %79 = arith.addf %78, %77 : vector<16x1xf32>
    %cst_47 = arith.constant 1.000000e-03 : f32
    %cst_48 = arith.constant 1.000000e+00 : f32
    %80 = vector.broadcast %cst_47 : f32 to vector<16x1xf32>
    %81 = arith.maximumf %80, %79 : vector<16x1xf32>
    %82 = vector.broadcast %cst_48 : f32 to vector<16x1xf32>
    %83 = arith.minimumf %82, %81 : vector<16x1xf32>
    %c0_49 = arith.constant 0 : index
    %c0_50 = arith.constant 0 : index
    %84 = vector.load %arg16[%c0_49, %c0_50] : memref<16x1xf32, #tpu.memory_space<vmem>>, vector<16x1xf32>
    tpu.vector_store %arg16[%c0_49, %c0_50], %83 {strides = array<i32>} : memref<16x1xf32, #tpu.memory_space<vmem>>, vector<16x1xf32>,
    return
  }
}

module attributes {stable_mosaic.version = 11 : i64} {
  func.func @_depth_step_kernel(%arg0: memref<16x128xf32, #tpu.memory_space<vmem>>, %arg1: memref<2x16x128xf32, #tpu.memory_space<vmem>>, %arg2: memref<16x128xf32, #tpu.memory_space<vmem>>, %arg3: memref<16x1xf32, #tpu.memory_space<vmem>>, %arg4: memref<16x384xf32, #tpu.memory_space<vmem>>, %arg5: memref<1x384xf32, #tpu.memory_space<vmem>>, %arg6: memref<128x128xbf16, #tpu.memory_space<vmem>>, %arg7: memref<1x128xf32, #tpu.memory_space<vmem>>, %arg8: memref<128x256xbf16, #tpu.memory_space<vmem>>, %arg9: memref<128x384xbf16, #tpu.memory_space<vmem>>, %arg10: memref<128x128xbf16, #tpu.memory_space<vmem>>, %arg11: memref<128x256xbf16, #tpu.memory_space<vmem>>, %arg12: memref<1x256xf32, #tpu.memory_space<vmem>>, %arg13: memref<128x1xbf16, #tpu.memory_space<vmem>>, %arg14: memref<1x1xf32, #tpu.memory_space<vmem>>, %arg15: memref<128x576xbf16, #tpu.memory_space<vmem>>, %arg16: memref<1x576xf32, #tpu.memory_space<vmem>>, %arg17: memref<16x128xf32, #tpu.memory_space<vmem>>, %arg18: memref<16x1xf32, #tpu.memory_space<vmem>>, %arg19: memref<16x576xf32, #tpu.memory_space<vmem>>) attributes {dimension_semantics = [], scalar_prefetch = 0 : i64, scratch_operands = 0 : i64, tpu.core_type = #tpu.core_type<tc>} {
    %c0 = arith.constant 0 : index
    %c0_0 = arith.constant 0 : index
    %0 = vector.load %arg0[%c0, %c0_0] : memref<16x128xf32, #tpu.memory_space<vmem>>, vector<16x128xf32>
    %c0_1 = arith.constant 0 : index
    %c0_2 = arith.constant 0 : index
    %c0_3 = arith.constant 0 : index
    %1 = vector.load %arg1[%c0_1, %c0_2, %c0_3] : memref<2x16x128xf32, #tpu.memory_space<vmem>>, vector<1x16x128xf32>
    %2 = vector.shape_cast %1 : vector<1x16x128xf32> to vector<16x128xf32>
    %3 = arith.subf %2, %0 : vector<16x128xf32>
    %4 = arith.mulf %3, %3 : vector<16x128xf32>
    %c1 = arith.constant 1 : index
    %c0_4 = arith.constant 0 : index
    %c0_5 = arith.constant 0 : index
    %5 = vector.load %arg1[%c1, %c0_4, %c0_5] : memref<2x16x128xf32, #tpu.memory_space<vmem>>, vector<1x16x128xf32>
    %6 = vector.shape_cast %5 : vector<1x16x128xf32> to vector<16x128xf32>
    %7 = arith.subf %6, %0 : vector<16x128xf32>
    %8 = arith.mulf %7, %7 : vector<16x128xf32>
    %9 = arith.addf %4, %8 : vector<16x128xf32>
    %cst = arith.constant 5.000000e-01 : f32
    %10 = vector.broadcast %cst : f32 to vector<16x128xf32>
    %11 = arith.mulf %9, %10 : vector<16x128xf32>
    %12 = arith.truncf %11 : vector<16x128xf32> to vector<16x128xbf16>
    %c0_6 = arith.constant 0 : index
    %c0_7 = arith.constant 0 : index
    %13 = vector.load %arg6[%c0_6, %c0_7] : memref<128x128xbf16, #tpu.memory_space<vmem>>, vector<128x128xbf16>
    %cst_8 = arith.constant dense<0.000000e+00> : vector<16x128xf32>
    %14 = tpu.matmul %12, %13, %cst_8 {dimension_numbers = #tpu.dot_dimension_numbers<[1], [0], [0], [1], [0, 0, 1, 1], [], []>} : vector<16x128xbf16>, vector<128x128xbf16>, vector<16x128xf32> -> vector<16x128xf32>
    %c0_9 = arith.constant 0 : index
    %c0_10 = arith.constant 0 : index
    %15 = vector.load %arg7[%c0_9, %c0_10] : memref<1x128xf32, #tpu.memory_space<vmem>>, vector<1x128xf32>
    %16 = vector.broadcast %15 : vector<1x128xf32> to vector<16x128xf32>
    %17 = arith.addf %14, %16 : vector<16x128xf32>
    %cst_11 = arith.constant 0.000000e+00 : f32
    %18 = vector.broadcast %cst_11 : f32 to vector<16x128xf32>
    %19 = arith.maximumf %17, %18 : vector<16x128xf32>
    %20 = arith.truncf %19 : vector<16x128xf32> to vector<16x128xbf16>
    %c0_12 = arith.constant 0 : index
    %c0_13 = arith.constant 0 : index
    %21 = vector.load %arg9[%c0_12, %c0_13] : memref<128x384xbf16, #tpu.memory_space<vmem>>, vector<128x384xbf16>
    %cst_14 = arith.constant dense<0.000000e+00> : vector<16x384xf32>
    %22 = tpu.matmul %20, %21, %cst_14 {dimension_numbers = #tpu.dot_dimension_numbers<[1], [0], [0], [1], [0, 0, 1, 1], [], []>} : vector<16x128xbf16>, vector<128x384xbf16>, vector<16x384xf32> -> vector<16x384xf32>
    %c0_15 = arith.constant 0 : index
    %c0_16 = arith.constant 0 : index
    %23 = vector.load %arg4[%c0_15, %c0_16] : memref<16x384xf32, #tpu.memory_space<vmem>>, vector<16x384xf32>
    %24 = arith.addf %22, %23 : vector<16x384xf32>
    %c0_17 = arith.constant 0 : index
    %c0_18 = arith.constant 0 : index
    %25 = vector.load %arg3[%c0_17, %c0_18] : memref<16x1xf32, #tpu.memory_space<vmem>>, vector<16x1xf32>
    %c0_19 = arith.constant 0 : index
    %c0_20 = arith.constant 0 : index
    %26 = vector.load %arg5[%c0_19, %c0_20] : memref<1x384xf32, #tpu.memory_space<vmem>>, vector<1x384xf32>
    %27 = vector.broadcast %25 : vector<16x1xf32> to vector<16x384xf32>
    %28 = vector.broadcast %26 : vector<1x384xf32> to vector<16x384xf32>
    %29 = arith.mulf %27, %28 : vector<16x384xf32>
    %30 = arith.addf %24, %29 : vector<16x384xf32>
    %c0_21 = arith.constant 0 : index
    %c0_22 = arith.constant 0 : index
    %31 = vector.load %arg2[%c0_21, %c0_22] : memref<16x128xf32, #tpu.memory_space<vmem>>, vector<16x128xf32>
    %32 = arith.truncf %31 : vector<16x128xf32> to vector<16x128xbf16>
    %c0_23 = arith.constant 0 : index
    %c0_24 = arith.constant 0 : index
    %33 = vector.load %arg8[%c0_23, %c0_24] : memref<128x256xbf16, #tpu.memory_space<vmem>>, vector<128x256xbf16>
    %cst_25 = arith.constant dense<0.000000e+00> : vector<16x256xf32>
    %34 = tpu.matmul %32, %33, %cst_25 {dimension_numbers = #tpu.dot_dimension_numbers<[1], [0], [0], [1], [0, 0, 1, 1], [], []>} : vector<16x128xbf16>, vector<128x256xbf16>, vector<16x256xf32> -> vector<16x256xf32>
    %35 = vector.extract_strided_slice %34 {offsets = [0, 0], sizes = [16, 128], strides = [1, 1]} : vector<16x256xf32> to vector<16x128xf32>
    %36 = vector.extract_strided_slice %30 {offsets = [0, 0], sizes = [16, 128], strides = [1, 1]} : vector<16x384xf32> to vector<16x128xf32>
    %37 = arith.addf %35, %36 : vector<16x128xf32>
    %38 = arith.negf %37 : vector<16x128xf32>
    %39 = math.exp %38 : vector<16x128xf32>
    %cst_26 = arith.constant 1.000000e+00 : f32
    %40 = vector.broadcast %cst_26 : f32 to vector<16x128xf32>
    %41 = arith.addf %40, %39 : vector<16x128xf32>
    %42 = arith.divf %40, %41 : vector<16x128xf32>
    %43 = vector.extract_strided_slice %34 {offsets = [0, 128], sizes = [16, 128], strides = [1, 1]} : vector<16x256xf32> to vector<16x128xf32>
    %44 = vector.extract_strided_slice %30 {offsets = [0, 128], sizes = [16, 128], strides = [1, 1]} : vector<16x384xf32> to vector<16x128xf32>
    %45 = arith.addf %43, %44 : vector<16x128xf32>
    %46 = arith.negf %45 : vector<16x128xf32>
    %47 = math.exp %46 : vector<16x128xf32>
    %cst_27 = arith.constant 1.000000e+00 : f32
    %48 = vector.broadcast %cst_27 : f32 to vector<16x128xf32>
    %49 = arith.addf %48, %47 : vector<16x128xf32>
    %50 = arith.divf %48, %49 : vector<16x128xf32>
    %51 = arith.mulf %50, %31 : vector<16x128xf32>
    %52 = arith.truncf %51 : vector<16x128xf32> to vector<16x128xbf16>
    %c0_28 = arith.constant 0 : index
    %c0_29 = arith.constant 0 : index
    %53 = vector.load %arg10[%c0_28, %c0_29] : memref<128x128xbf16, #tpu.memory_space<vmem>>, vector<128x128xbf16>
    %cst_30 = arith.constant dense<0.000000e+00> : vector<16x128xf32>
    %54 = tpu.matmul %52, %53, %cst_30 {dimension_numbers = #tpu.dot_dimension_numbers<[1], [0], [0], [1], [0, 0, 1, 1], [], []>} : vector<16x128xbf16>, vector<128x128xbf16>, vector<16x128xf32> -> vector<16x128xf32>
    %55 = vector.extract_strided_slice %30 {offsets = [0, 256], sizes = [16, 128], strides = [1, 1]} : vector<16x384xf32> to vector<16x128xf32>
    %56 = arith.addf %54, %55 : vector<16x128xf32>
    %57 = math.tanh %56 : vector<16x128xf32>
    %cst_31 = arith.constant 1.000000e+00 : f32
    %58 = vector.broadcast %cst_31 : f32 to vector<16x128xf32>
    %59 = arith.subf %58, %42 : vector<16x128xf32>
    %60 = arith.mulf %59, %31 : vector<16x128xf32>
    %61 = arith.mulf %42, %57 : vector<16x128xf32>
    %62 = arith.addf %60, %61 : vector<16x128xf32>
    %c0_32 = arith.constant 0 : index
    %c0_33 = arith.constant 0 : index
    %63 = vector.load %arg17[%c0_32, %c0_33] : memref<16x128xf32, #tpu.memory_space<vmem>>, vector<16x128xf32>
    tpu.vector_store %arg17[%c0_32, %c0_33], %62 {strides = array<i32>} : memref<16x128xf32, #tpu.memory_space<vmem>>, vector<16x128xf32>,
    %64 = arith.truncf %62 : vector<16x128xf32> to vector<16x128xbf16>
    %c0_34 = arith.constant 0 : index
    %c0_35 = arith.constant 0 : index
    %65 = vector.load %arg11[%c0_34, %c0_35] : memref<128x256xbf16, #tpu.memory_space<vmem>>, vector<128x256xbf16>
    %cst_36 = arith.constant dense<0.000000e+00> : vector<16x256xf32>
    %66 = tpu.matmul %64, %65, %cst_36 {dimension_numbers = #tpu.dot_dimension_numbers<[1], [0], [0], [1], [0, 0, 1, 1], [], []>} : vector<16x128xbf16>, vector<128x256xbf16>, vector<16x256xf32> -> vector<16x256xf32>
    %c0_37 = arith.constant 0 : index
    %c0_38 = arith.constant 0 : index
    %67 = vector.load %arg12[%c0_37, %c0_38] : memref<1x256xf32, #tpu.memory_space<vmem>>, vector<1x256xf32>
    %68 = vector.broadcast %67 : vector<1x256xf32> to vector<16x256xf32>
    %69 = arith.addf %66, %68 : vector<16x256xf32>
    %cst_39 = arith.constant 0.000000e+00 : f32
    %70 = vector.broadcast %cst_39 : f32 to vector<16x256xf32>
    %71 = arith.maximumf %69, %70 : vector<16x256xf32>
    %72 = vector.extract_strided_slice %71 {offsets = [0, 0], sizes = [16, 128], strides = [1, 1]} : vector<16x256xf32> to vector<16x128xf32>
    %73 = arith.truncf %72 : vector<16x128xf32> to vector<16x128xbf16>
    %c0_40 = arith.constant 0 : index
    %c0_41 = arith.constant 0 : index
    %74 = vector.load %arg13[%c0_40, %c0_41] : memref<128x1xbf16, #tpu.memory_space<vmem>>, vector<128x1xbf16>
    %cst_42 = arith.constant dense<0.000000e+00> : vector<16x1xf32>
    %75 = tpu.matmul %73, %74, %cst_42 {dimension_numbers = #tpu.dot_dimension_numbers<[1], [0], [0], [1], [0, 0, 1, 1], [], []>} : vector<16x128xbf16>, vector<128x1xbf16>, vector<16x1xf32> -> vector<16x1xf32>
    %c0_43 = arith.constant 0 : index
    %c0_44 = arith.constant 0 : index
    %76 = vector.load %arg14[%c0_43, %c0_44] : memref<1x1xf32, #tpu.memory_space<vmem>>, vector<1x1xf32>
    %77 = vector.broadcast %76 : vector<1x1xf32> to vector<16x1xf32>
    %78 = arith.addf %75, %77 : vector<16x1xf32>
    %c0_45 = arith.constant 0 : index
    %c0_46 = arith.constant 0 : index
    %79 = vector.load %arg3[%c0_45, %c0_46] : memref<16x1xf32, #tpu.memory_space<vmem>>, vector<16x1xf32>
    %80 = arith.addf %79, %78 : vector<16x1xf32>
    %cst_47 = arith.constant 1.000000e-03 : f32
    %cst_48 = arith.constant 1.000000e+00 : f32
    %81 = vector.broadcast %cst_47 : f32 to vector<16x1xf32>
    %82 = arith.maximumf %81, %80 : vector<16x1xf32>
    %83 = vector.broadcast %cst_48 : f32 to vector<16x1xf32>
    %84 = arith.minimumf %83, %82 : vector<16x1xf32>
    %c0_49 = arith.constant 0 : index
    %c0_50 = arith.constant 0 : index
    %85 = vector.load %arg18[%c0_49, %c0_50] : memref<16x1xf32, #tpu.memory_space<vmem>>, vector<16x1xf32>
    tpu.vector_store %arg18[%c0_49, %c0_50], %84 {strides = array<i32>} : memref<16x1xf32, #tpu.memory_space<vmem>>, vector<16x1xf32>,
    %86 = vector.extract_strided_slice %71 {offsets = [0, 128], sizes = [16, 128], strides = [1, 1]} : vector<16x256xf32> to vector<16x128xf32>
    %87 = arith.truncf %86 : vector<16x128xf32> to vector<16x128xbf16>
    %c0_51 = arith.constant 0 : index
    %c0_52 = arith.constant 0 : index
    %88 = vector.load %arg15[%c0_51, %c0_52] : memref<128x576xbf16, #tpu.memory_space<vmem>>, vector<128x576xbf16>
    %cst_53 = arith.constant dense<0.000000e+00> : vector<16x576xf32>
    %89 = tpu.matmul %87, %88, %cst_53 {dimension_numbers = #tpu.dot_dimension_numbers<[1], [0], [0], [1], [0, 0, 1, 1], [], []>} : vector<16x128xbf16>, vector<128x576xbf16>, vector<16x576xf32> -> vector<16x576xf32>
    %c0_54 = arith.constant 0 : index
    %c0_55 = arith.constant 0 : index
    %90 = vector.load %arg16[%c0_54, %c0_55] : memref<1x576xf32, #tpu.memory_space<vmem>>, vector<1x576xf32>
    %91 = vector.broadcast %90 : vector<1x576xf32> to vector<16x576xf32>
    %92 = arith.addf %89, %91 : vector<16x576xf32>
    %cst_56 = arith.constant 2.500000e-01 : f32
    %93 = vector.broadcast %cst_56 : f32 to vector<16x576xf32>
    %94 = arith.mulf %93, %92 : vector<16x576xf32>
    %c0_57 = arith.constant 0 : index
    %c0_58 = arith.constant 0 : index
    %95 = vector.load %arg19[%c0_57, %c0_58] : memref<16x576xf32, #tpu.memory_space<vmem>>, vector<16x576xf32>
    tpu.vector_store %arg19[%c0_57, %c0_58], %94 {strides = array<i32>} : memref<16x576xf32, #tpu.memory_space<vmem>>, vector<16x576xf32>,
    return
  }
}

module attributes {stable_mosaic.version = 11 : i64} {
  func.func @_convex_kernel(%arg0: memref<9x1024xf32, #tpu.memory_space<vmem>>, %arg1: memref<9x1024xf32, #tpu.memory_space<vmem>>, %arg2: memref<1x1024xf32, #tpu.memory_space<vmem>>) attributes {dimension_semantics = [], scalar_prefetch = 0 : i64, scratch_operands = 0 : i64, tpu.core_type = #tpu.core_type<tc>} {
    %c0 = arith.constant 0 : index
    %c0_0 = arith.constant 0 : index
    %0 = vector.load %arg0[%c0, %c0_0] : memref<9x1024xf32, #tpu.memory_space<vmem>>, vector<9x1024xf32>
    %cst = arith.constant dense<0xFF800000> : vector<1024xf32>
    %1 = vector.multi_reduction <maximumf>, %0, %cst [0] : vector<9x1024xf32> to vector<1024xf32>
    %2 = vector.shape_cast %1 : vector<1024xf32> to vector<1x1024xf32>
    %3 = vector.broadcast %2 : vector<1x1024xf32> to vector<9x1024xf32>
    %4 = arith.subf %0, %3 : vector<9x1024xf32>
    %5 = math.exp %4 : vector<9x1024xf32>
    %cst_1 = arith.constant dense<0.000000e+00> : vector<1024xf32>
    %6 = vector.multi_reduction <add>, %5, %cst_1 [0] : vector<9x1024xf32> to vector<1024xf32>
    %7 = vector.shape_cast %6 : vector<1024xf32> to vector<1x1024xf32>
    %c0_2 = arith.constant 0 : index
    %c0_3 = arith.constant 0 : index
    %8 = vector.load %arg1[%c0_2, %c0_3] : memref<9x1024xf32, #tpu.memory_space<vmem>>, vector<9x1024xf32>
    %9 = arith.mulf %5, %8 : vector<9x1024xf32>
    %cst_4 = arith.constant dense<0.000000e+00> : vector<1024xf32>
    %10 = vector.multi_reduction <add>, %9, %cst_4 [0] : vector<9x1024xf32> to vector<1024xf32>
    %11 = vector.shape_cast %10 : vector<1024xf32> to vector<1x1024xf32>
    %12 = arith.divf %11, %7 : vector<1x1024xf32>
    %c0_5 = arith.constant 0 : index
    %c0_6 = arith.constant 0 : index
    %13 = vector.load %arg2[%c0_5, %c0_6] : memref<1x1024xf32, #tpu.memory_space<vmem>>, vector<1x1024xf32>
    tpu.vector_store %arg2[%c0_5, %c0_6], %12 {strides = array<i32>} : memref<1x1024xf32, #tpu.memory_space<vmem>>, vector<1x1024xf32>,
    return
  }
}

module attributes {stable_mosaic.version = 11 : i64} {
  func.func @_pose_step_kernel(%arg0: memref<16x128xf32, #tpu.memory_space<vmem>>, %arg1: memref<2x16x128xf32, #tpu.memory_space<vmem>>, %arg2: memref<32x128xf32, #tpu.memory_space<vmem>>, %arg3: memref<2x6xf32, #tpu.memory_space<vmem>>, %arg4: memref<32x384xf32, #tpu.memory_space<vmem>>, %arg5: memref<128x128xbf16, #tpu.memory_space<vmem>>, %arg6: memref<1x128xf32, #tpu.memory_space<vmem>>, %arg7: memref<128x256xbf16, #tpu.memory_space<vmem>>, %arg8: memref<128x384xbf16, #tpu.memory_space<vmem>>, %arg9: memref<6x384xbf16, #tpu.memory_space<vmem>>, %arg10: memref<128x128xbf16, #tpu.memory_space<vmem>>, %arg11: memref<128x128xbf16, #tpu.memory_space<vmem>>, %arg12: memref<1x128xf32, #tpu.memory_space<vmem>>, %arg13: memref<128x6xbf16, #tpu.memory_space<vmem>>, %arg14: memref<1x6xf32, #tpu.memory_space<vmem>>, %arg15: memref<32x128xf32, #tpu.memory_space<vmem>>, %arg16: memref<2x6xf32, #tpu.memory_space<vmem>>) attributes {dimension_semantics = [], scalar_prefetch = 0 : i64, scratch_operands = 0 : i64, tpu.core_type = #tpu.core_type<tc>} {
    %c0 = arith.constant 0 : index
    %c0_0 = arith.constant 0 : index
    %0 = vector.load %arg0[%c0, %c0_0] : memref<16x128xf32, #tpu.memory_space<vmem>>, vector<16x128xf32>
    %c0_1 = arith.constant 0 : index
    %c0_2 = arith.constant 0 : index
    %c0_3 = arith.constant 0 : index
    %1 = vector.load %arg1[%c0_1, %c0_2, %c0_3] : memref<2x16x128xf32, #tpu.memory_space<vmem>>, vector<1x16x128xf32>
    %2 = vector.shape_cast %1 : vector<1x16x128xf32> to vector<16x128xf32>
    %3 = arith.subf %2, %0 : vector<16x128xf32>
    %4 = arith.mulf %3, %3 : vector<16x128xf32>
    %c1 = arith.constant 1 : index
    %c0_4 = arith.constant 0 : index
    %c0_5 = arith.constant 0 : index
    %5 = vector.load %arg1[%c1, %c0_4, %c0_5] : memref<2x16x128xf32, #tpu.memory_space<vmem>>, vector<1x16x128xf32>
    %6 = vector.shape_cast %5 : vector<1x16x128xf32> to vector<16x128xf32>
    %7 = arith.subf %6, %0 : vector<16x128xf32>
    %8 = arith.mulf %7, %7 : vector<16x128xf32>
    %9 = tpu.concatenate %4, %8 in 0 : vector<16x128xf32>, vector<16x128xf32> -> vector<32x128xf32>
    %10 = arith.truncf %9 : vector<32x128xf32> to vector<32x128xbf16>
    %c0_6 = arith.constant 0 : index
    %c0_7 = arith.constant 0 : index
    %11 = vector.load %arg5[%c0_6, %c0_7] : memref<128x128xbf16, #tpu.memory_space<vmem>>, vector<128x128xbf16>
    %cst = arith.constant dense<0.000000e+00> : vector<32x128xf32>
    %12 = tpu.matmul %10, %11, %cst {dimension_numbers = #tpu.dot_dimension_numbers<[1], [0], [0], [1], [0, 0, 1, 1], [], []>} : vector<32x128xbf16>, vector<128x128xbf16>, vector<32x128xf32> -> vector<32x128xf32>
    %c0_8 = arith.constant 0 : index
    %c0_9 = arith.constant 0 : index
    %13 = vector.load %arg6[%c0_8, %c0_9] : memref<1x128xf32, #tpu.memory_space<vmem>>, vector<1x128xf32>
    %14 = vector.broadcast %13 : vector<1x128xf32> to vector<32x128xf32>
    %15 = arith.addf %12, %14 : vector<32x128xf32>
    %cst_10 = arith.constant 0.000000e+00 : f32
    %16 = vector.broadcast %cst_10 : f32 to vector<32x128xf32>
    %17 = arith.maximumf %15, %16 : vector<32x128xf32>
    %c0_11 = arith.constant 0 : index
    %c0_12 = arith.constant 0 : index
    %18 = vector.load %arg3[%c0_11, %c0_12] : memref<2x6xf32, #tpu.memory_space<vmem>>, vector<2x6xf32>
    %19 = arith.truncf %18 : vector<2x6xf32> to vector<2x6xbf16>
    %c0_13 = arith.constant 0 : index
    %c0_14 = arith.constant 0 : index
    %20 = vector.load %arg9[%c0_13, %c0_14] : memref<6x384xbf16, #tpu.memory_space<vmem>>, vector<6x384xbf16>
    %cst_15 = arith.constant dense<0.000000e+00> : vector<2x384xf32>
    %21 = tpu.matmul %19, %20, %cst_15 {dimension_numbers = #tpu.dot_dimension_numbers<[1], [0], [0], [1], [0, 0, 1, 1], [], []>} : vector<2x6xbf16>, vector<6x384xbf16>, vector<2x384xf32> -> vector<2x384xf32>
    %22 = vector.extract_strided_slice %21 {offsets = [0, 0], sizes = [1, 384], strides = [1, 1]} : vector<2x384xf32> to vector<1x384xf32>
    %23 = vector.shape_cast %22 : vector<1x384xf32> to vector<1x384xf32>
    %24 = vector.broadcast %23 : vector<1x384xf32> to vector<16x384xf32>
    %25 = vector.extract_strided_slice %21 {offsets = [1, 0], sizes = [1, 384], strides = [1, 1]} : vector<2x384xf32> to vector<1x384xf32>
    %26 = vector.shape_cast %25 : vector<1x384xf32> to vector<1x384xf32>
    %27 = vector.broadcast %26 : vector<1x384xf32> to vector<16x384xf32>
    %28 = tpu.concatenate %24, %27 in 0 : vector<16x384xf32>, vector<16x384xf32> -> vector<32x384xf32>
    %29 = arith.truncf %17 : vector<32x128xf32> to vector<32x128xbf16>
    %c0_16 = arith.constant 0 : index
    %c0_17 = arith.constant 0 : index
    %30 = vector.load %arg8[%c0_16, %c0_17] : memref<128x384xbf16, #tpu.memory_space<vmem>>, vector<128x384xbf16>
    %cst_18 = arith.constant dense<0.000000e+00> : vector<32x384xf32>
    %31 = tpu.matmul %29, %30, %cst_18 {dimension_numbers = #tpu.dot_dimension_numbers<[1], [0], [0], [1], [0, 0, 1, 1], [], []>} : vector<32x128xbf16>, vector<128x384xbf16>, vector<32x384xf32> -> vector<32x384xf32>
    %c0_19 = arith.constant 0 : index
    %c0_20 = arith.constant 0 : index
    %32 = vector.load %arg4[%c0_19, %c0_20] : memref<32x384xf32, #tpu.memory_space<vmem>>, vector<32x384xf32>
    %33 = arith.addf %31, %32 : vector<32x384xf32>
    %34 = arith.addf %33, %28 : vector<32x384xf32>
    %c0_21 = arith.constant 0 : index
    %c0_22 = arith.constant 0 : index
    %35 = vector.load %arg2[%c0_21, %c0_22] : memref<32x128xf32, #tpu.memory_space<vmem>>, vector<32x128xf32>
    %36 = arith.truncf %35 : vector<32x128xf32> to vector<32x128xbf16>
    %c0_23 = arith.constant 0 : index
    %c0_24 = arith.constant 0 : index
    %37 = vector.load %arg7[%c0_23, %c0_24] : memref<128x256xbf16, #tpu.memory_space<vmem>>, vector<128x256xbf16>
    %cst_25 = arith.constant dense<0.000000e+00> : vector<32x256xf32>
    %38 = tpu.matmul %36, %37, %cst_25 {dimension_numbers = #tpu.dot_dimension_numbers<[1], [0], [0], [1], [0, 0, 1, 1], [], []>} : vector<32x128xbf16>, vector<128x256xbf16>, vector<32x256xf32> -> vector<32x256xf32>
    %39 = vector.extract_strided_slice %38 {offsets = [0, 0], sizes = [32, 128], strides = [1, 1]} : vector<32x256xf32> to vector<32x128xf32>
    %40 = vector.extract_strided_slice %34 {offsets = [0, 0], sizes = [32, 128], strides = [1, 1]} : vector<32x384xf32> to vector<32x128xf32>
    %41 = arith.addf %39, %40 : vector<32x128xf32>
    %42 = arith.negf %41 : vector<32x128xf32>
    %43 = math.exp %42 : vector<32x128xf32>
    %cst_26 = arith.constant 1.000000e+00 : f32
    %44 = vector.broadcast %cst_26 : f32 to vector<32x128xf32>
    %45 = arith.addf %44, %43 : vector<32x128xf32>
    %46 = arith.divf %44, %45 : vector<32x128xf32>
    %47 = vector.extract_strided_slice %38 {offsets = [0, 128], sizes = [32, 128], strides = [1, 1]} : vector<32x256xf32> to vector<32x128xf32>
    %48 = vector.extract_strided_slice %34 {offsets = [0, 128], sizes = [32, 128], strides = [1, 1]} : vector<32x384xf32> to vector<32x128xf32>
    %49 = arith.addf %47, %48 : vector<32x128xf32>
    %50 = arith.negf %49 : vector<32x128xf32>
    %51 = math.exp %50 : vector<32x128xf32>
    %cst_27 = arith.constant 1.000000e+00 : f32
    %52 = vector.broadcast %cst_27 : f32 to vector<32x128xf32>
    %53 = arith.addf %52, %51 : vector<32x128xf32>
    %54 = arith.divf %52, %53 : vector<32x128xf32>
    %55 = arith.mulf %54, %35 : vector<32x128xf32>
    %56 = arith.truncf %55 : vector<32x128xf32> to vector<32x128xbf16>
    %c0_28 = arith.constant 0 : index
    %c0_29 = arith.constant 0 : index
    %57 = vector.load %arg10[%c0_28, %c0_29] : memref<128x128xbf16, #tpu.memory_space<vmem>>, vector<128x128xbf16>
    %cst_30 = arith.constant dense<0.000000e+00> : vector<32x128xf32>
    %58 = tpu.matmul %56, %57, %cst_30 {dimension_numbers = #tpu.dot_dimension_numbers<[1], [0], [0], [1], [0, 0, 1, 1], [], []>} : vector<32x128xbf16>, vector<128x128xbf16>, vector<32x128xf32> -> vector<32x128xf32>
    %59 = vector.extract_strided_slice %34 {offsets = [0, 256], sizes = [32, 128], strides = [1, 1]} : vector<32x384xf32> to vector<32x128xf32>
    %60 = arith.addf %58, %59 : vector<32x128xf32>
    %61 = math.tanh %60 : vector<32x128xf32>
    %cst_31 = arith.constant 1.000000e+00 : f32
    %62 = vector.broadcast %cst_31 : f32 to vector<32x128xf32>
    %63 = arith.subf %62, %46 : vector<32x128xf32>
    %64 = arith.mulf %63, %35 : vector<32x128xf32>
    %65 = arith.mulf %46, %61 : vector<32x128xf32>
    %66 = arith.addf %64, %65 : vector<32x128xf32>
    %c0_32 = arith.constant 0 : index
    %c0_33 = arith.constant 0 : index
    %67 = vector.load %arg15[%c0_32, %c0_33] : memref<32x128xf32, #tpu.memory_space<vmem>>, vector<32x128xf32>
    tpu.vector_store %arg15[%c0_32, %c0_33], %66 {strides = array<i32>} : memref<32x128xf32, #tpu.memory_space<vmem>>, vector<32x128xf32>,
    %68 = vector.extract_strided_slice %66 {offsets = [0, 0], sizes = [16, 128], strides = [1, 1]} : vector<32x128xf32> to vector<16x128xf32>
    %cst_34 = arith.constant dense<0.000000e+00> : vector<128xf32>
    %69 = vector.multi_reduction <add>, %68, %cst_34 [0] : vector<16x128xf32> to vector<128xf32>
    %70 = vector.shape_cast %69 : vector<128xf32> to vector<1x128xf32>
    %cst_35 = arith.constant 1.600000e+01 : f32
    %71 = vector.broadcast %cst_35 : f32 to vector<1x128xf32>
    %72 = arith.divf %70, %71 : vector<1x128xf32>
    %73 = vector.extract_strided_slice %66 {offsets = [16, 0], sizes = [16, 128], strides = [1, 1]} : vector<32x128xf32> to vector<16x128xf32>
    %cst_36 = arith.constant dense<0.000000e+00> : vector<128xf32>
    %74 = vector.multi_reduction <add>, %73, %cst_36 [0] : vector<16x128xf32> to vector<128xf32>
    %75 = vector.shape_cast %74 : vector<128xf32> to vector<1x128xf32>
    %cst_37 = arith.constant 1.600000e+01 : f32
    %76 = vector.broadcast %cst_37 : f32 to vector<1x128xf32>
    %77 = arith.divf %75, %76 : vector<1x128xf32>
    %78 = tpu.concatenate %72, %77 in 0 : vector<1x128xf32>, vector<1x128xf32> -> vector<2x128xf32>
    %79 = arith.truncf %78 : vector<2x128xf32> to vector<2x128xbf16>
    %c0_38 = arith.constant 0 : index
    %c0_39 = arith.constant 0 : index
    %80 = vector.load %arg11[%c0_38, %c0_39] : memref<128x128xbf16, #tpu.memory_space<vmem>>, vector<128x128xbf16>
    %cst_40 = arith.constant dense<0.000000e+00> : vector<2x128xf32>
    %81 = tpu.matmul %79, %80, %cst_40 {dimension_numbers = #tpu.dot_dimension_numbers<[1], [0], [0], [1], [0, 0, 1, 1], [], []>} : vector<2x128xbf16>, vector<128x128xbf16>, vector<2x128xf32> -> vector<2x128xf32>
    %c0_41 = arith.constant 0 : index
    %c0_42 = arith.constant 0 : index
    %82 = vector.load %arg12[%c0_41, %c0_42] : memref<1x128xf32, #tpu.memory_space<vmem>>, vector<1x128xf32>
    %83 = vector.broadcast %82 : vector<1x128xf32> to vector<2x128xf32>
    %84 = arith.addf %81, %83 : vector<2x128xf32>
    %cst_43 = arith.constant 0.000000e+00 : f32
    %85 = vector.broadcast %cst_43 : f32 to vector<2x128xf32>
    %86 = arith.maximumf %84, %85 : vector<2x128xf32>
    %87 = arith.truncf %86 : vector<2x128xf32> to vector<2x128xbf16>
    %c0_44 = arith.constant 0 : index
    %c0_45 = arith.constant 0 : index
    %88 = vector.load %arg13[%c0_44, %c0_45] : memref<128x6xbf16, #tpu.memory_space<vmem>>, vector<128x6xbf16>
    %cst_46 = arith.constant dense<0.000000e+00> : vector<2x6xf32>
    %89 = tpu.matmul %87, %88, %cst_46 {dimension_numbers = #tpu.dot_dimension_numbers<[1], [0], [0], [1], [0, 0, 1, 1], [], []>} : vector<2x128xbf16>, vector<128x6xbf16>, vector<2x6xf32> -> vector<2x6xf32>
    %c0_47 = arith.constant 0 : index
    %c0_48 = arith.constant 0 : index
    %90 = vector.load %arg14[%c0_47, %c0_48] : memref<1x6xf32, #tpu.memory_space<vmem>>, vector<1x6xf32>
    %91 = vector.broadcast %90 : vector<1x6xf32> to vector<2x6xf32>
    %92 = arith.addf %89, %91 : vector<2x6xf32>
    %cst_49 = arith.constant 0.00999999977 : f32
    %93 = vector.broadcast %cst_49 : f32 to vector<2x6xf32>
    %94 = arith.mulf %93, %92 : vector<2x6xf32>
    %c0_50 = arith.constant 0 : index
    %c0_51 = arith.constant 0 : index
    %95 = vector.load %arg3[%c0_50, %c0_51] : memref<2x6xf32, #tpu.memory_space<vmem>>, vector<2x6xf32>
    %96 = arith.addf %95, %94 : vector<2x6xf32>
    %c0_52 = arith.constant 0 : index
    %c0_53 = arith.constant 0 : index
    %97 = vector.load %arg16[%c0_52, %c0_53] : memref<2x6xf32, #tpu.memory_space<vmem>>, vector<2x6xf32>
    tpu.vector_store %arg16[%c0_52, %c0_53], %96 {strides = array<i32>} : memref<2x6xf32, #tpu.memory_space<vmem>>, vector<2x6xf32>,
    return
  }
}

</mosaic_0001>

<llo_original>
// kernel: forward.32
$region0: #{forward.32}
  #allocation0 [shape = 'u32[]', space=smem, size = 0x4, offset = 0x4, fixed_abs, tag = 'smem constant byte address 0x4 - core index']
  #allocation1 [shape = 'u32[144,128]{1,0:T(1,128)}', space=vmem, size = 0x12000, scoped, tag = 'internal scratch']
  %s0 = inlined_call_operand.vmem [shape: bf16[48,192], index: 0, kind: input, shape index: {}]
  %s1 = inlined_call_operand.vmem [shape: bf16[192,128], index: 1, kind: input, shape index: {}]
  %s2 = inlined_call_operand.vmem [shape: f32[1,128], index: 2, kind: input, shape index: {}]
  %s3 = inlined_call_operand.vmem [shape: f32[48,128], index: 3, kind: output, shape index: {}]
  %s4 = sld [smem:[#allocation0]]
  $region22: #{forward.32} parent=0
    _
  %s6 = ssub.s32 1, %s4
  %s7 = scalar_select 0, %s6, %s4
  // Predicated region
  $region2: #{forward.32} parent=0 // pred_check
    _
  $region3: #{forward.32} parent=0 // pred_check_branch
    %9 = sbr.rel (0) target = $region5
  $region4: #{forward.32} parent=0 // pred_region
    _
  $region5: #{forward.32} parent=0 // pred_fallthru
    _
  // Predicated region
  $region6: #{forward.32} parent=0 // pred_check
    _
  $region7: #{forward.32} parent=0 // pred_check_branch
    %11 = sbr.rel (0) target = $region9
  $region8: #{forward.32} parent=0 // pred_region
    _
  $region9: #{forward.32} parent=0 // pred_fallthru
    _
  // Predicated region
  $region10: #{forward.32} parent=0 // pred_check
    _
  $region11: #{forward.32} parent=0 // pred_check_branch
    %13 = sbr.rel (0) target = $region13
  $region12: #{forward.32} parent=0 // pred_region
    _
  $region13: #{forward.32} parent=0 // pred_fallthru
    _
  %v15 = vld [vmem:[%s0] sm:$0xff]
  %v16 = vld [vmem:[%s0 + $0x8] sm:$0xff]
  %v17 = vld [vmem:[%s0 + $0x10] sm:$0xff]
  %v18 = vld [vmem:[%s0 + $0x18] sm:$0xff]
  %v19 = vld [vmem:[%s0 + $0x20] sm:$0xff]
  %v20 = vld [vmem:[%s0 + $0x28] sm:$0xff]
  %v21 = vld [vmem:[%s1] sm:$0xf]
  %v22 = vld [vmem:[%s1 + $0x4] sm:$0xf]
  %v23 = vld [vmem:[%s1 + $0x8] sm:$0xf]
  %v24 = vld [vmem:[%s1 + $0xc] sm:$0xf]
  %v25 = vld [vmem:[%s1 + $0x10] sm:$0xf]
  %v26 = vld [vmem:[%s1 + $0x14] sm:$0xf]
  %v27 = vld [vmem:[%s1 + $0x18] sm:$0xf]
  %v28 = vld [vmem:[%s1 + $0x1c] sm:$0xf]
  %v29 = vld [vmem:[%s1 + $0x20] sm:$0xf]
  %v30 = vld [vmem:[%s1 + $0x24] sm:$0xf]
  %v31 = vld [vmem:[%s1 + $0x28] sm:$0xf]
  %v32 = vld [vmem:[%s1 + $0x2c] sm:$0xf]
  %v33 = vld [vmem:[%s1 + $0x30] sm:$0xf]
  %v34 = vld [vmem:[%s1 + $0x34] sm:$0xf]
  %v35 = vld [vmem:[%s1 + $0x38] sm:$0xf]
  %v36 = vld [vmem:[%s1 + $0x3c] sm:$0xf]
  %v37 = vld [vmem:[%s1 + $0x40] sm:$0xf]
  %v38 = vld [vmem:[%s1 + $0x44] sm:$0xf]
  %v39 = vld [vmem:[%s1 + $0x48] sm:$0xf]
  %v40 = vld [vmem:[%s1 + $0x4c] sm:$0xf]
  %v41 = vld [vmem:[%s1 + $0x50] sm:$0xf]
  %v42 = vld [vmem:[%s1 + $0x54] sm:$0xf]
  %v43 = vld [vmem:[%s1 + $0x58] sm:$0xf]
  %v44 = vld [vmem:[%s1 + $0x5c] sm:$0xf]
  %v45 = vld [vmem:[%s2] sm:$0x1]
  %v47 = vlaneseq
  %v48 = vshrl.u32 %v47, 7
  %v49 = vsub.s32 0, %v48
  %v50 = vrot.slane %v45, %v49
  %v58 = vunpack.c.l.b16 %v15
  %v59 = vunpack.c.h.b16 %v15
  %v60 = vunpack.c.l.b16 %v16
  %v61 = vunpack.c.h.b16 %v16
  %v62 = vunpack.c.l.b16 %v17
  %v63 = vunpack.c.h.b16 %v17
  %v64 = vunpack.c.l.b16 %v18
  %v65 = vunpack.c.h.b16 %v18
  %v66 = vunpack.c.l.b16 %v19
  %v67 = vunpack.c.h.b16 %v19
  %v68 = vunpack.c.l.b16 %v20
  %v69 = vunpack.c.h.b16 %v20
  %v70 = vpack.c.b16 %v60, %v58
  %v71 = vpack.c.b16 %v61, %v59
  %v72 = vpack.c.b16 %v64, %v62
  %v73 = vpack.c.b16 %v65, %v63
  %v74 = vpack.c.b16 %v68, %v66
  %v75 = vpack.c.b16 %v69, %v67
  %v103 = vunpack.c.l.b16 %v21
  %v104 = vunpack.c.l.b16 %v22
  %v105 = vunpack.c.l.b16 %v23
  %v106 = vunpack.c.l.b16 %v24
  %v107 = vunpack.c.l.b16 %v25
  %v108 = vunpack.c.l.b16 %v26
  %v109 = vunpack.c.l.b16 %v27
  %v110 = vunpack.c.l.b16 %v28
  %v111 = vunpack.c.l.b16 %v29
  %v112 = vunpack.c.l.b16 %v30
  %v113 = vunpack.c.l.b16 %v31
  %v114 = vunpack.c.l.b16 %v32
  %v115 = vunpack.c.l.b16 %v33
  %v116 = vunpack.c.l.b16 %v34
  %v117 = vunpack.c.l.b16 %v35
  %v118 = vunpack.c.l.b16 %v36
  %v119 = vunpack.c.l.b16 %v37
  %v120 = vunpack.c.l.b16 %v38
  %v121 = vunpack.c.l.b16 %v39
  %v122 = vunpack.c.l.b16 %v40
  %v123 = vunpack.c.l.b16 %v41
  %v124 = vunpack.c.l.b16 %v42
  %v125 = vunpack.c.l.b16 %v43
  %v126 = vunpack.c.l.b16 %v44
  %v127 = vpack.c.b16 %v104, %v103
  %v128 = vpack.c.b16 %v106, %v105
  %v129 = vpack.c.b16 %v108, %v107
  %v130 = vpack.c.b16 %v110, %v109
  %v131 = vpack.c.b16 %v112, %v111
  %v132 = vpack.c.b16 %v114, %v113
  %v133 = vpack.c.b16 %v116, %v115
  %v134 = vpack.c.b16 %v118, %v117
  %v135 = vpack.c.b16 %v120, %v119
  %v136 = vpack.c.b16 %v122, %v121
  %v137 = vpack.c.b16 %v124, %v123
  %v138 = vpack.c.b16 %v126, %v125
  %vm151 = vcmask 523264
  %v153 = vsel %vm151, %v71, 0
  %v156 = vsel %vm151, %v73, 0
  %v159 = vsel %vm151, %v75, 0
  %161 = vmatprep.subr.bf16.mxu0 0
  %162 = vmatpush1.bf16.msra.mxu0 %v134
  %163 = vmatprep.subr.bf16.mxu0 0
  %164 = vmatpush1.bf16.msra.mxu0 %v133
  %165 = vmatprep.subr.bf16.mxu0 0
  %166 = vmatpush1.bf16.msra.mxu0 %v132
  %167 = vmatprep.subr.bf16.mxu0 0
  %168 = vmatpush1.bf16.msra.mxu0 %v131
  %169 = vmatprep.subr.bf16.mxu0 0
  %170 = vmatpush1.bf16.msra.mxu0 %v130
  %171 = vmatprep.subr.bf16.mxu0 0
  %172 = vmatpush1.bf16.msra.mxu0 %v129
  %173 = vmatprep.subr.bf16.mxu0 0
  %174 = vmatpush1.bf16.msra.mxu0 %v128
  %175 = vmatprep.subr.bf16.mxu0 0
  %176 = vmatpush1.bf16.msra.mxu0 %v127
  %177 = vmatprep.subr.bf16.mxu0 0
  %178 = vmatpush2.bf16.msra.mxu0 0
  %179 = vmatprep.subr.bf16.mxu0 0
  %180 = vmatpush2.bf16.msra.mxu0 0
  %181 = vmatprep.subr.bf16.mxu0 0
  %182 = vmatpush2.bf16.msra.mxu0 0
  %183 = vmatprep.subr.bf16.mxu0 0
  %184 = vmatpush2.bf16.msra.mxu0 0
  %185 = vmatprep.subr.bf16.mxu0 0
  %186 = vmatpush2.bf16.msra.mxu0 %v138
  %187 = vmatprep.subr.bf16.mxu0 0
  %188 = vmatpush2.bf16.msra.mxu0 %v137
  %189 = vmatprep.subr.bf16.mxu0 0
  %190 = vmatpush2.bf16.msra.mxu0 %v136
  %191 = vmatprep.subr.bf16.mxu0 0
  %192 = vmatpush2.bf16.msra.mxu0 %v135
  %193 = vmatprep.mubr.bf16.mxu0 %v153
  %194 = vmatmul.mubr.bf16.gmra.mxu0 %v70
  %v195 = vpop.f32.mrf.mxu0
  %v196 = vadd.f32 %v50, %v195
  %v197 = vpop.f32.mrf.mxu0
  %v198 = vpop.f32.mrf.mxu0
  %v199 = vadd.f32 %v50, %v198
  %v200 = vpop.f32.mrf.mxu0
  %201 = vmatprep.mubr.bf16.mxu0 %v156
  %202 = vmatmul.mubr.bf16.gmra.mxu0 %v72
  %v203 = vpop.f32.mrf.mxu0
  %v204 = vadd.f32 %v50, %v203
  %v205 = vpop.f32.mrf.mxu0
  %v206 = vpop.f32.mrf.mxu0
  %v207 = vadd.f32 %v50, %v206
  %v208 = vpop.f32.mrf.mxu0
  %209 = vmatprep.mubr.bf16.mxu0 %v159
  %210 = vmatmul.mubr.bf16.gmra.mxu0 %v74
  %v211 = vpop.f32.mrf.mxu0
  %v212 = vadd.f32 %v50, %v211
  %v213 = vpop.f32.mrf.mxu0
  %v214 = vpop.f32.mrf.mxu0
  %v215 = vadd.f32 %v50, %v214
  %v216 = vpop.f32.mrf.mxu0
  %217 = vdwg.mxu0
  %v218 = vmax.f32 %v196, 0.0
  %v219 = vmax.f32 %v199, 0.0
  %v220 = vmax.f32 %v204, 0.0
  %v221 = vmax.f32 %v207, 0.0
  %v222 = vmax.f32 %v212, 0.0
  %v223 = vmax.f32 %v215, 0.0
  %224 = vst [vmem:[%s3] sm:$0xff] %v218
  %225 = vst [vmem:[%s3 + $0x8] sm:$0xff] %v219
  %226 = vst [vmem:[%s3 + $0x10] sm:$0xff] %v220
  %227 = vst [vmem:[%s3 + $0x18] sm:$0xff] %v221
  %228 = vst [vmem:[%s3 + $0x20] sm:$0xff] %v222
  %229 = vst [vmem:[%s3 + $0x28] sm:$0xff] %v223
  // Predicated region
  $region14: #{forward.32} parent=0 // pred_check
    _
  $region15: #{forward.32} parent=0 // pred_check_branch
    %231 = sbr.rel (0) target = $region17
  $region16: #{forward.32} parent=0 // pred_region
    _
  $region17: #{forward.32} parent=0 // pred_fallthru
    _
  // Predicated region
  $region18: #{forward.32} parent=0 // pred_check
    _
  $region19: #{forward.32} parent=0 // pred_check_branch
    %233 = sbr.rel (0) target = $region21
  $region20: #{forward.32} parent=0 // pred_region
    _
  $region21: #{forward.32} parent=0 // pred_fallthru
    _

// kernel: forward.33
$region0: #{forward.33}
  #allocation0 [shape = 'u32[]', space=smem, size = 0x4, offset = 0x4, fixed_abs, tag = 'smem constant byte address 0x4 - core index']
  #allocation1 [shape = 'u32[144,128]{1,0:T(1,128)}', space=vmem, size = 0x12000, scoped, tag = 'internal scratch']
  %s0 = inlined_call_operand.vmem [shape: f32[16,128], index: 0, kind: input, shape index: {}]
  %s1 = inlined_call_operand.vmem [shape: f32[2,16,128], index: 1, kind: input, shape index: {}]
  %s2 = inlined_call_operand.vmem [shape: bf16[128,128], index: 2, kind: input, shape index: {}]
  %s3 = inlined_call_operand.vmem [shape: bf16[128,128], index: 3, kind: input, shape index: {}]
  %s4 = inlined_call_operand.vmem [shape: f32[1,128], index: 4, kind: input, shape index: {}]
  %s5 = inlined_call_operand.vmem [shape: bf16[128,6], index: 5, kind: input, shape index: {}]
  %s6 = inlined_call_operand.vmem [shape: f32[1,6], index: 6, kind: input, shape index: {}]
  %s7 = inlined_call_operand.vmem [shape: f32[2,6], index: 7, kind: output, shape index: {}]
  %s8 = sld [smem:[#allocation0]]
  $region38: #{forward.33} parent=0
    _
  %s10 = ssub.s32 1, %s8
  %s11 = scalar_select 0, %s10, %s8
  // Predicated region
  $region2: #{forward.33} parent=0 // pred_check
    _
  $region3: #{forward.33} parent=0 // pred_check_branch
    %13 = sbr.rel (0) target = $region5
  $region4: #{forward.33} parent=0 // pred_region
    _
  $region5: #{forward.33} parent=0 // pred_fallthru
    _
  // Predicated region
  $region6: #{forward.33} parent=0 // pred_check
    _
  $region7: #{forward.33} parent=0 // pred_check_branch
    %15 = sbr.rel (0) target = $region9
  $region8: #{forward.33} parent=0 // pred_region
    _
  $region9: #{forward.33} parent=0 // pred_fallthru
    _
  // Predicated region
  $region10: #{forward.33} parent=0 // pred_check
    _
  $region11: #{forward.33} parent=0 // pred_check_branch
    %17 = sbr.rel (0) target = $region13
  $region12: #{forward.33} parent=0 // pred_region
    _
  $region13: #{forward.33} parent=0 // pred_fallthru
    _
  // Predicated region
  $region14: #{forward.33} parent=0 // pred_check
    _
  $region15: #{forward.33} parent=0 // pred_check_branch
    %19 = sbr.rel (0) target = $region17
  $region16: #{forward.33} parent=0 // pred_region
    _
  $region17: #{forward.33} parent=0 // pred_fallthru
    _
  // Predicated region
  $region18: #{forward.33} parent=0 // pred_check
    _
  $region19: #{forward.33} parent=0 // pred_check_branch
    %21 = sbr.rel (0) target = $region21
  $region20: #{forward.33} parent=0 // pred_region
    _
  $region21: #{forward.33} parent=0 // pred_fallthru
    _
  // Predicated region
  $region22: #{forward.33} parent=0 // pred_check
    _
  $region23: #{forward.33} parent=0 // pred_check_branch
    %23 = sbr.rel (0) target = $region25
  $region24: #{forward.33} parent=0 // pred_region
    _
  $region25: #{forward.33} parent=0 // pred_fallthru
    _
  // Predicated region
  $region26: #{forward.33} parent=0 // pred_check
    _
  $region27: #{forward.33} parent=0 // pred_check_branch
    %25 = sbr.rel (0) target = $region29
  $region28: #{forward.33} parent=0 // pred_region
    _
  $region29: #{forward.33} parent=0 // pred_fallthru
    _
  %v27 = vld [vmem:[%s0] sm:$0xff]
  %v28 = vld [vmem:[%s0 + $0x8] sm:$0xff]
  %v29 = vpack.c.bf16 %v28, %v27
  %v30 = vld [vmem:[%s2] sm:$0xf]
  %v31 = vld [vmem:[%s2 + $0x4] sm:$0xf]
  %v32 = vld [vmem:[%s2 + $0x8] sm:$0xf]
  %v33 = vld [vmem:[%s2 + $0xc] sm:$0xf]
  %v34 = vld [vmem:[%s2 + $0x10] sm:$0xf]
  %v35 = vld [vmem:[%s2 + $0x14] sm:$0xf]
  %v36 = vld [vmem:[%s2 + $0x18] sm:$0xf]
  %v37 = vld [vmem:[%s2 + $0x1c] sm:$0xf]
  %v38 = vld [vmem:[%s2 + $0x20] sm:$0xf]
  %v39 = vld [vmem:[%s2 + $0x24] sm:$0xf]
  %v40 = vld [vmem:[%s2 + $0x28] sm:$0xf]
  %v41 = vld [vmem:[%s2 + $0x2c] sm:$0xf]
  %v42 = vld [vmem:[%s2 + $0x30] sm:$0xf]
  %v43 = vld [vmem:[%s2 + $0x34] sm:$0xf]
  %v44 = vld [vmem:[%s2 + $0x38] sm:$0xf]
  %v45 = vld [vmem:[%s2 + $0x3c] sm:$0xf]
  %v62 = vunpack.c.l.b16 %v30
  %v63 = vunpack.c.l.b16 %v31
  %v64 = vunpack.c.l.b16 %v32
  %v65 = vunpack.c.l.b16 %v33
  %v66 = vunpack.c.l.b16 %v34
  %v67 = vunpack.c.l.b16 %v35
  %v68 = vunpack.c.l.b16 %v36
  %v69 = vunpack.c.l.b16 %v37
  %v70 = vunpack.c.l.b16 %v38
  %v71 = vunpack.c.l.b16 %v39
  %v72 = vunpack.c.l.b16 %v40
  %v73 = vunpack.c.l.b16 %v41
  %v74 = vunpack.c.l.b16 %v42
  %v75 = vunpack.c.l.b16 %v43
  %v76 = vunpack.c.l.b16 %v44
  %v77 = vunpack.c.l.b16 %v45
  %v78 = vpack.c.b16 %v63, %v62
  %v79 = vpack.c.b16 %v65, %v64
  %v80 = vpack.c.b16 %v67, %v66
  %v81 = vpack.c.b16 %v69, %v68
  %v82 = vpack.c.b16 %v71, %v70
  %v83 = vpack.c.b16 %v73, %v72
  %v84 = vpack.c.b16 %v75, %v74
  %v85 = vpack.c.b16 %v77, %v76
  %94 = vmatprep.subr.bf16.mxu0 0
  %95 = vmatpush1.bf16.msra.mxu0 %v85
  %96 = vmatprep.subr.bf16.mxu0 0
  %97 = vmatpush1.bf16.msra.mxu0 %v84
  %98 = vmatprep.subr.bf16.mxu0 0
  %99 = vmatpush1.bf16.msra.mxu0 %v83
  %100 = vmatprep.subr.bf16.mxu0 0
  %101 = vmatpush1.bf16.msra.mxu0 %v82
  %102 = vmatprep.subr.bf16.mxu0 0
  %103 = vmatpush1.bf16.msra.mxu0 %v81
  %104 = vmatprep.subr.bf16.mxu0 0
  %105 = vmatpush1.bf16.msra.mxu0 %v80
  %106 = vmatprep.subr.bf16.mxu0 0
  %107 = vmatpush1.bf16.msra.mxu0 %v79
  %108 = vmatprep.subr.bf16.mxu0 0
  %109 = vmatpush1.bf16.msra.mxu0 %v78
  %110 = vmatprep.subr.bf16.mxu0 0
  %111 = vmatpush2.bf16.msra.mxu0 0
  %112 = vmatprep.subr.bf16.mxu0 0
  %113 = vmatpush2.bf16.msra.mxu0 0
  %114 = vmatprep.subr.bf16.mxu0 0
  %115 = vmatpush2.bf16.msra.mxu0 0
  %116 = vmatprep.subr.bf16.mxu0 0
  %117 = vmatpush2.bf16.msra.mxu0 0
  %118 = vmatprep.subr.bf16.mxu0 0
  %119 = vmatpush2.bf16.msra.mxu0 0
  %120 = vmatprep.subr.bf16.mxu0 0
  %121 = vmatpush2.bf16.msra.mxu0 0
  %122 = vmatprep.subr.bf16.mxu0 0
  %123 = vmatpush2.bf16.msra.mxu0 0
  %124 = vmatprep.subr.bf16.mxu0 0
  %125 = vmatpush2.bf16.msra.mxu0 0
  %126 = vmatprep.mubr.bf16.mxu0 0
  %127 = vmatmul.mubr.bf16.gmra.mxu0 %v29
  %v128 = vpop.f32.mrf.mxu0
  %v129 = vadd.f32 0.0, %v128
  %v130 = vpop.f32.mrf.mxu0
  %v131 = vpop.f32.mrf.mxu0
  %v132 = vadd.f32 0.0, %v131
  %v133 = vpop.f32.mrf.mxu0
  %134 = vdwg.mxu0
  %v135 = vld [vmem:[%s1] sm:$0xff]
  %v136 = vld [vmem:[%s1 + $0x8] sm:$0xff]
  %v137 = vpack.c.bf16 %v136, %v135
  %v138 = vld [vmem:[%s3] sm:$0xf]
  %v139 = vld [vmem:[%s3 + $0x4] sm:$0xf]
  %v140 = vld [vmem:[%s3 + $0x8] sm:$0xf]
  %v141 = vld [vmem:[%s3 + $0xc] sm:$0xf]
  %v142 = vld [vmem:[%s3 + $0x10] sm:$0xf]
  %v143 = vld [vmem:[%s3 + $0x14] sm:$0xf]
  %v144 = vld [vmem:[%s3 + $0x18] sm:$0xf]
  %v145 = vld [vmem:[%s3 + $0x1c] sm:$0xf]
  %v146 = vld [vmem:[%s3 + $0x20] sm:$0xf]
  %v147 = vld [vmem:[%s3 + $0x24] sm:$0xf]
  %v148 = vld [vmem:[%s3 + $0x28] sm:$0xf]
  %v149 = vld [vmem:[%s3 + $0x2c] sm:$0xf]
  %v150 = vld [vmem:[%s3 + $0x30] sm:$0xf]
  %v151 = vld [vmem:[%s3 + $0x34] sm:$0xf]
  %v152 = vld [vmem:[%s3 + $0x38] sm:$0xf]
  %v153 = vld [vmem:[%s3 + $0x3c] sm:$0xf]
  %v170 = vunpack.c.l.b16 %v138
  %v171 = vunpack.c.l.b16 %v139
  %v172 = vunpack.c.l.b16 %v140
  %v173 = vunpack.c.l.b16 %v141
  %v174 = vunpack.c.l.b16 %v142
  %v175 = vunpack.c.l.b16 %v143
  %v176 = vunpack.c.l.b16 %v144
  %v177 = vunpack.c.l.b16 %v145
  %v178 = vunpack.c.l.b16 %v146
  %v179 = vunpack.c.l.b16 %v147
  %v180 = vunpack.c.l.b16 %v148
  %v181 = vunpack.c.l.b16 %v149
  %v182 = vunpack.c.l.b16 %v150
  %v183 = vunpack.c.l.b16 %v151
  %v184 = vunpack.c.l.b16 %v152
  %v185 = vunpack.c.l.b16 %v153
  %v186 = vpack.c.b16 %v171, %v170
  %v187 = vpack.c.b16 %v173, %v172
  %v188 = vpack.c.b16 %v175, %v174
  %v189 = vpack.c.b16 %v177, %v176
  %v190 = vpack.c.b16 %v179, %v178
  %v191 = vpack.c.b16 %v181, %v180
  %v192 = vpack.c.b16 %v183, %v182
  %v193 = vpack.c.b16 %v185, %v184
  %202 = vmatprep.subr.bf16.mxu0 0
  %203 = vmatpush1.bf16.msra.mxu0 %v193
  %204 = vmatprep.subr.bf16.mxu0 0
  %205 = vmatpush1.bf16.msra.mxu0 %v192
  %206 = vmatprep.subr.bf16.mxu0 0
  %207 = vmatpush1.bf16.msra.mxu0 %v191
  %208 = vmatprep.subr.bf16.mxu0 0
  %209 = vmatpush1.bf16.msra.mxu0 %v190
  %210 = vmatprep.subr.bf16.mxu0 0
  %211 = vmatpush1.bf16.msra.mxu0 %v189
  %212 = vmatprep.subr.bf16.mxu0 0
  %213 = vmatpush1.bf16.msra.mxu0 %v188
  %214 = vmatprep.subr.bf16.mxu0 0
  %215 = vmatpush1.bf16.msra.mxu0 %v187
  %216 = vmatprep.subr.bf16.mxu0 0
  %217 = vmatpush1.bf16.msra.mxu0 %v186
  %218 = vmatprep.subr.bf16.mxu0 0
  %219 = vmatpush2.bf16.msra.mxu0 0
  %220 = vmatprep.subr.bf16.mxu0 0
  %221 = vmatpush2.bf16.msra.mxu0 0
  %222 = vmatprep.subr.bf16.mxu0 0
  %223 = vmatpush2.bf16.msra.mxu0 0
  %224 = vmatprep.subr.bf16.mxu0 0
  %225 = vmatpush2.bf16.msra.mxu0 0
  %226 = vmatprep.subr.bf16.mxu0 0
  %227 = vmatpush2.bf16.msra.mxu0 0
  %228 = vmatprep.subr.bf16.mxu0 0
  %229 = vmatpush2.bf16.msra.mxu0 0
  %230 = vmatprep.subr.bf16.mxu0 0
  %231 = vmatpush2.bf16.msra.mxu0 0
  %232 = vmatprep.subr.bf16.mxu0 0
  %233 = vmatpush2.bf16.msra.mxu0 0
  %234 = vmatprep.mubr.bf16.mxu0 0
  %235 = vmatmul.mubr.bf16.gmra.mxu0 %v137
  %v236 = vpop.f32.mrf.mxu0
  %v237 = vadd.f32 %v129, %v236
  %v238 = vpop.f32.mrf.mxu0
  %v239 = vpop.f32.mrf.mxu0
  %v240 = vadd.f32 %v132, %v239
  %v241 = vpop.f32.mrf.mxu0
  %242 = vdwg.mxu0
  %v243 = vld [vmem:[%s4] sm:$0x1]
  %v245 = vlaneseq
  %v246 = vshrl.u32 %v245, 7
  %v247 = vsub.s32 0, %v246
  %v248 = vrot.slane %v243, %v247
  %v250 = vadd.f32 %v237, %v248
  %v251 = vadd.f32 %v240, %v248
  %v252 = vmax.f32 %v250, 0.0
  %v253 = vmax.f32 %v251, 0.0
  %v254 = vadd.f32 %v252, %v253
  %v255 = vrot.slane %v254, 4
  %v256 = vadd.f32 %v254, %v255
  %v257 = vrot.slane %v256, 2
  %v258 = vadd.f32 %v256, %v257
  %v259 = vrot.slane %v258, 1
  %v260 = vadd.f32 %v258, %v259
  %v261 = vrcp.pop 16.0
  %v262 = vmul.f32 %v260, %v261
  %s263 = scalar_lea.vmem %s1, 16
  %v264 = vld [vmem:[%s263] sm:$0xff]
  %v265 = vld [vmem:[%s263 + $0x8] sm:$0xff]
  %v266 = vpack.c.bf16 %v265, %v264
  %267 = vmatprep.subr.bf16.mxu0 0
  %268 = vmatpush1.bf16.msra.mxu0 %v193
  %269 = vmatprep.subr.bf16.mxu0 0
  %270 = vmatpush1.bf16.msra.mxu0 %v192
  %271 = vmatprep.subr.bf16.mxu0 0
  %272 = vmatpush1.bf16.msra.mxu0 %v191
  %273 = vmatprep.subr.bf16.mxu0 0
  %274 = vmatpush1.bf16.msra.mxu0 %v190
  %275 = vmatprep.subr.bf16.mxu0 0
  %276 = vmatpush1.bf16.msra.mxu0 %v189
  %277 = vmatprep.subr.bf16.mxu0 0
  %278 = vmatpush1.bf16.msra.mxu0 %v188
  %279 = vmatprep.subr.bf16.mxu0 0
  %280 = vmatpush1.bf16.msra.mxu0 %v187
  %281 = vmatprep.subr.bf16.mxu0 0
  %282 = vmatpush1.bf16.msra.mxu0 %v186
  %283 = vmatprep.subr.bf16.mxu0 0
  %284 = vmatpush2.bf16.msra.mxu0 0
  %285 = vmatprep.subr.bf16.mxu0 0
  %286 = vmatpush2.bf16.msra.mxu0 0
  %287 = vmatprep.subr.bf16.mxu0 0
  %288 = vmatpush2.bf16.msra.mxu0 0
  %289 = vmatprep.subr.bf16.mxu0 0
  %290 = vmatpush2.bf16.msra.mxu0 0
  %291 = vmatprep.subr.bf16.mxu0 0
  %292 = vmatpush2.bf16.msra.mxu0 0
  %293 = vmatprep.subr.bf16.mxu0 0
  %294 = vmatpush2.bf16.msra.mxu0 0
  %295 = vmatprep.subr.bf16.mxu0 0
  %296 = vmatpush2.bf16.msra.mxu0 0
  %297 = vmatprep.subr.bf16.mxu0 0
  %298 = vmatpush2.bf16.msra.mxu0 0
  %299 = vmatprep.mubr.bf16.mxu0 0
  %300 = vmatmul.mubr.bf16.gmra.mxu0 %v266
  %v301 = vpop.f32.mrf.mxu0
  %v302 = vadd.f32 %v129, %v301
  %v303 = vpop.f32.mrf.mxu0
  %v304 = vpop.f32.mrf.mxu0
  %v305 = vadd.f32 %v132, %v304
  %v306 = vpop.f32.mrf.mxu0
  %307 = vdwg.mxu0
  %v308 = vadd.f32 %v302, %v248
  %v309 = vadd.f32 %v305, %v248
  %v310 = vmax.f32 %v308, 0.0
  %v311 = vmax.f32 %v309, 0.0
  %v312 = vadd.f32 %v310, %v311
  %v313 = vrot.slane %v312, 4
  %v314 = vadd.f32 %v312, %v313
  %v315 = vrot.slane %v314, 2
  %v316 = vadd.f32 %v314, %v315
  %v317 = vrot.slane %v316, 1
  %v318 = vadd.f32 %v316, %v317
  %v319 = vmul.f32 %v318, %v261
  %vm320 = vcmask 1040384
  %v321 = vsel %vm320, %v262, %v319
  %v322 = vpack.c.bf16 %v321, %v321
  %v323 = vld [vmem:[%s5] sm:$0xf]
  %v324 = vld [vmem:[%s5 + $0x4] sm:$0xf]
  %v325 = vld [vmem:[%s5 + $0x8] sm:$0xf]
  %v326 = vld [vmem:[%s5 + $0xc] sm:$0xf]
  %v327 = vld [vmem:[%s5 + $0x10] sm:$0xf]
  %v328 = vld [vmem:[%s5 + $0x14] sm:$0xf]
  %v329 = vld [vmem:[%s5 + $0x18] sm:$0xf]
  %v330 = vld [vmem:[%s5 + $0x1c] sm:$0xf]
  %v331 = vld [vmem:[%s5 + $0x20] sm:$0xf]
  %v332 = vld [vmem:[%s5 + $0x24] sm:$0xf]
  %v333 = vld [vmem:[%s5 + $0x28] sm:$0xf]
  %v334 = vld [vmem:[%s5 + $0x2c] sm:$0xf]
  %v335 = vld [vmem:[%s5 + $0x30] sm:$0xf]
  %v336 = vld [vmem:[%s5 + $0x34] sm:$0xf]
  %v337 = vld [vmem:[%s5 + $0x38] sm:$0xf]
  %v338 = vld [vmem:[%s5 + $0x3c] sm:$0xf]
  %v339 = vld [vmem:[%s6] sm:$0x1]
  %v341 = vlaneseq
  %v342 = vshrl.u32 %v341, 7
  %v343 = vsub.s32 0, %v342
  %v344 = vrot.slane %v339, %v343
  %v362 = vunpack.c.l.b16 %v323
  %v363 = vunpack.c.l.b16 %v324
  %v364 = vunpack.c.l.b16 %v325
  %v365 = vunpack.c.l.b16 %v326
  %v366 = vunpack.c.l.b16 %v327
  %v367 = vunpack.c.l.b16 %v328
  %v368 = vunpack.c.l.b16 %v329
  %v369 = vunpack.c.l.b16 %v330
  %v370 = vunpack.c.l.b16 %v331
  %v371 = vunpack.c.l.b16 %v332
  %v372 = vunpack.c.l.b16 %v333
  %v373 = vunpack.c.l.b16 %v334
  %v374 = vunpack.c.l.b16 %v335
  %v375 = vunpack.c.l.b16 %v336
  %v376 = vunpack.c.l.b16 %v337
  %v377 = vunpack.c.l.b16 %v338
  %v378 = vpack.c.b16 %v363, %v362
  %v379 = vpack.c.b16 %v365, %v364
  %v380 = vpack.c.b16 %v367, %v366
  %v381 = vpack.c.b16 %v369, %v368
  %v382 = vpack.c.b16 %v371, %v370
  %v383 = vpack.c.b16 %v373, %v372
  %v384 = vpack.c.b16 %v375, %v374
  %v385 = vpack.c.b16 %v377, %v376
  %394 = vmatprep.subr.bf16.mxu0 0
  %395 = vmatpush1.bf16.msra.mxu0 %v385
  %396 = vmatprep.subr.bf16.mxu0 0
  %397 = vmatpush1.bf16.msra.mxu0 %v384
  %398 = vmatprep.subr.bf16.mxu0 0
  %399 = vmatpush1.bf16.msra.mxu0 %v383
  %400 = vmatprep.subr.bf16.mxu0 0
  %401 = vmatpush1.bf16.msra.mxu0 %v382
  %402 = vmatprep.subr.bf16.mxu0 0
  %403 = vmatpush1.bf16.msra.mxu0 %v381
  %404 = vmatprep.subr.bf16.mxu0 0
  %405 = vmatpush1.bf16.msra.mxu0 %v380
  %406 = vmatprep.subr.bf16.mxu0 0
  %407 = vmatpush1.bf16.msra.mxu0 %v379
  %408 = vmatprep.subr.bf16.mxu0 0
  %409 = vmatpush1.bf16.msra.mxu0 %v378
  %410 = vmatprep.subr.bf16.mxu0 0
  %411 = vmatpush2.bf16.msra.mxu0 0
  %412 = vmatprep.subr.bf16.mxu0 0
  %413 = vmatpush2.bf16.msra.mxu0 0
  %414 = vmatprep.subr.bf16.mxu0 0
  %415 = vmatpush2.bf16.msra.mxu0 0
  %416 = vmatprep.subr.bf16.mxu0 0
  %417 = vmatpush2.bf16.msra.mxu0 0
  %418 = vmatprep.subr.bf16.mxu0 0
  %419 = vmatpush2.bf16.msra.mxu0 0
  %420 = vmatprep.subr.bf16.mxu0 0
  %421 = vmatpush2.bf16.msra.mxu0 0
  %422 = vmatprep.subr.bf16.mxu0 0
  %423 = vmatpush2.bf16.msra.mxu0 0
  %424 = vmatprep.subr.bf16.mxu0 0
  %425 = vmatpush2.bf16.msra.mxu0 0
  %426 = vmatprep.mubr.bf16.mxu0 0
  %427 = vmatmul.mubr.bf16.gmra.mxu0 %v322
  %v428 = vpop.f32.mrf.mxu0
  %v429 = vadd.f32 %v344, %v428
  %v430 = vpop.f32.mrf.mxu0
  %v431 = vpop.f32.mrf.mxu0
  %v432 = vpop.f32.mrf.mxu0
  %433 = vdwg.mxu0
  %v434 = vmul.f32 %v429, 0.01
  %vm435 = vcmask 41984
  %436 = vst.msk [vmem:[%s7] sm:$0x3] %vm435, %v434
  // Predicated region
  $region30: #{forward.33} parent=0 // pred_check
    _
  $region31: #{forward.33} parent=0 // pred_check_branch
    %438 = sbr.rel (0) target = $region33
  $region32: #{forward.33} parent=0 // pred_region
    _
  $region33: #{forward.33} parent=0 // pred_fallthru
    _
  // Predicated region
  $region34: #{forward.33} parent=0 // pred_check
    _
  $region35: #{forward.33} parent=0 // pred_check_branch
    %440 = sbr.rel (0) target = $region37
  $region36: #{forward.33} parent=0 // pred_region
    _
  $region37: #{forward.33} parent=0 // pred_fallthru
    _

// kernel: forward.34
$region0: #{forward.34}
  #allocation0 [shape = 'u32[]', space=smem, size = 0x4, offset = 0x4, fixed_abs, tag = 'smem constant byte address 0x4 - core index']
  #allocation1 [shape = 'u32[144,128]{1,0:T(1,128)}', space=vmem, size = 0x12000, scoped, tag = 'internal scratch']
  #allocation2 [shape = 'f32[1,1]{1,0:T(1,128)S(1)}', space=vmem, size = 0x200, scoped, tag = 'scoped memory for forward.34']
  %s0 = inlined_call_operand.vmem [shape: f32[16,128], index: 0, kind: input, shape index: {}]
  %s1 = inlined_call_operand.vmem [shape: bf16[128,128], index: 1, kind: input, shape index: {}]
  %s2 = inlined_call_operand.vmem [shape: f32[1,128], index: 2, kind: input, shape index: {}]
  %s3 = inlined_call_operand.vmem [shape: bf16[128,1], index: 3, kind: input, shape index: {}]
  %s4 = inlined_call_operand.<no memory space> [shape: f32[1,1], index: 4, kind: input, shape index: {}]
  %s5 = inlined_call_operand.vmem [shape: f32[16,1], index: 5, kind: output, shape index: {}]
  %s6 = sld [smem:[#allocation0]]
  $region30: #{forward.34} parent=0
    _
  %s8 = ssub.s32 1, %s6
  %s9 = scalar_select 0, %s8, %s6
  %v10 = vstv %s4
  %11 = vst [vmem:[#allocation2] sm:$0x1] %v10
  // Predicated region
  $region2: #{forward.34} parent=0 // pred_check
    _
  $region3: #{forward.34} parent=0 // pred_check_branch
    %13 = sbr.rel (0) target = $region5
  $region4: #{forward.34} parent=0 // pred_region
    _
  $region5: #{forward.34} parent=0 // pred_fallthru
    _
  // Predicated region
  $region6: #{forward.34} parent=0 // pred_check
    _
  $region7: #{forward.34} parent=0 // pred_check_branch
    %15 = sbr.rel (0) target = $region9
  $region8: #{forward.34} parent=0 // pred_region
    _
  $region9: #{forward.34} parent=0 // pred_fallthru
    _
  // Predicated region
  $region10: #{forward.34} parent=0 // pred_check
    _
  $region11: #{forward.34} parent=0 // pred_check_branch
    %17 = sbr.rel (0) target = $region13
  $region12: #{forward.34} parent=0 // pred_region
    _
  $region13: #{forward.34} parent=0 // pred_fallthru
    _
  // Predicated region
  $region14: #{forward.34} parent=0 // pred_check
    _
  $region15: #{forward.34} parent=0 // pred_check_branch
    %19 = sbr.rel (0) target = $region17
  $region16: #{forward.34} parent=0 // pred_region
    _
  $region17: #{forward.34} parent=0 // pred_fallthru
    _
  // Predicated region
  $region18: #{forward.34} parent=0 // pred_check
    _
  $region19: #{forward.34} parent=0 // pred_check_branch
    %21 = sbr.rel (0) target = $region21
  $region20: #{forward.34} parent=0 // pred_region
    _
  $region21: #{forward.34} parent=0 // pred_fallthru
    _
  %v23 = vld [vmem:[%s0] sm:$0xff]
  %v24 = vld [vmem:[%s0 + $0x8] sm:$0xff]
  %v25 = vpack.c.bf16 %v24, %v23
  %v26 = vld [vmem:[%s1] sm:$0xf]
  %v27 = vld [vmem:[%s1 + $0x4] sm:$0xf]
  %v28 = vld [vmem:[%s1 + $0x8] sm:$0xf]
  %v29 = vld [vmem:[%s1 + $0xc] sm:$0xf]
  %v30 = vld [vmem:[%s1 + $0x10] sm:$0xf]
  %v31 = vld [vmem:[%s1 + $0x14] sm:$0xf]
  %v32 = vld [vmem:[%s1 + $0x18] sm:$0xf]
  %v33 = vld [vmem:[%s1 + $0x1c] sm:$0xf]
  %v34 = vld [vmem:[%s1 + $0x20] sm:$0xf]
  %v35 = vld [vmem:[%s1 + $0x24] sm:$0xf]
  %v36 = vld [vmem:[%s1 + $0x28] sm:$0xf]
  %v37 = vld [vmem:[%s1 + $0x2c] sm:$0xf]
  %v38 = vld [vmem:[%s1 + $0x30] sm:$0xf]
  %v39 = vld [vmem:[%s1 + $0x34] sm:$0xf]
  %v40 = vld [vmem:[%s1 + $0x38] sm:$0xf]
  %v41 = vld [vmem:[%s1 + $0x3c] sm:$0xf]
  %v42 = vld [vmem:[%s2] sm:$0x1]
  %v44 = vlaneseq
  %v45 = vshrl.u32 %v44, 7
  %v46 = vsub.s32 0, %v45
  %v47 = vrot.slane %v42, %v46
  %v65 = vunpack.c.l.b16 %v26
  %v66 = vunpack.c.l.b16 %v27
  %v67 = vunpack.c.l.b16 %v28
  %v68 = vunpack.c.l.b16 %v29
  %v69 = vunpack.c.l.b16 %v30
  %v70 = vunpack.c.l.b16 %v31
  %v71 = vunpack.c.l.b16 %v32
  %v72 = vunpack.c.l.b16 %v33
  %v73 = vunpack.c.l.b16 %v34
  %v74 = vunpack.c.l.b16 %v35
  %v75 = vunpack.c.l.b16 %v36
  %v76 = vunpack.c.l.b16 %v37
  %v77 = vunpack.c.l.b16 %v38
  %v78 = vunpack.c.l.b16 %v39
  %v79 = vunpack.c.l.b16 %v40
  %v80 = vunpack.c.l.b16 %v41
  %v81 = vpack.c.b16 %v66, %v65
  %v82 = vpack.c.b16 %v68, %v67
  %v83 = vpack.c.b16 %v70, %v69
  %v84 = vpack.c.b16 %v72, %v71
  %v85 = vpack.c.b16 %v74, %v73
  %v86 = vpack.c.b16 %v76, %v75
  %v87 = vpack.c.b16 %v78, %v77
  %v88 = vpack.c.b16 %v80, %v79
  %97 = vmatprep.subr.bf16.mxu0 0
  %98 = vmatpush1.bf16.msra.mxu0 %v88
  %99 = vmatprep.subr.bf16.mxu0 0
  %100 = vmatpush1.bf16.msra.mxu0 %v87
  %101 = vmatprep.subr.bf16.mxu0 0
  %102 = vmatpush1.bf16.msra.mxu0 %v86
  %103 = vmatprep.subr.bf16.mxu0 0
  %104 = vmatpush1.bf16.msra.mxu0 %v85
  %105 = vmatprep.subr.bf16.mxu0 0
  %106 = vmatpush1.bf16.msra.mxu0 %v84
  %107 = vmatprep.subr.bf16.mxu0 0
  %108 = vmatpush1.bf16.msra.mxu0 %v83
  %109 = vmatprep.subr.bf16.mxu0 0
  %110 = vmatpush1.bf16.msra.mxu0 %v82
  %111 = vmatprep.subr.bf16.mxu0 0
  %112 = vmatpush1.bf16.msra.mxu0 %v81
  %113 = vmatprep.subr.bf16.mxu0 0
  %114 = vmatpush2.bf16.msra.mxu0 0
  %115 = vmatprep.subr.bf16.mxu0 0
  %116 = vmatpush2.bf16.msra.mxu0 0
  %117 = vmatprep.subr.bf16.mxu0 0
  %118 = vmatpush2.bf16.msra.mxu0 0
  %119 = vmatprep.subr.bf16.mxu0 0
  %120 = vmatpush2.bf16.msra.mxu0 0
  %121 = vmatprep.subr.bf16.mxu0 0
  %122 = vmatpush2.bf16.msra.mxu0 0
  %123 = vmatprep.subr.bf16.mxu0 0
  %124 = vmatpush2.bf16.msra.mxu0 0
  %125 = vmatprep.subr.bf16.mxu0 0
  %126 = vmatpush2.bf16.msra.mxu0 0
  %127 = vmatprep.subr.bf16.mxu0 0
  %128 = vmatpush2.bf16.msra.mxu0 0
  %129 = vmatprep.mubr.bf16.mxu0 0
  %130 = vmatmul.mubr.bf16.gmra.mxu0 %v25
  %v131 = vpop.f32.mrf.mxu0
  %v132 = vadd.f32 %v47, %v131
  %v133 = vpop.f32.mrf.mxu0
  %v134 = vpop.f32.mrf.mxu0
  %v135 = vadd.f32 %v47, %v134
  %v136 = vpop.f32.mrf.mxu0
  %137 = vdwg.mxu0
  %v138 = vmax.f32 %v132, 0.0
  %v139 = vmax.f32 %v135, 0.0
  %v140 = vpack.c.bf16 %v139, %v138
  %v141 = vld [vmem:[%s3] sm:$0xf]
  %v142 = vld [vmem:[%s3 + $0x4] sm:$0xf]
  %v143 = vld [vmem:[%s3 + $0x8] sm:$0xf]
  %v144 = vld [vmem:[%s3 + $0xc] sm:$0xf]
  %v145 = vld [vmem:[%s3 + $0x10] sm:$0xf]
  %v146 = vld [vmem:[%s3 + $0x14] sm:$0xf]
  %v147 = vld [vmem:[%s3 + $0x18] sm:$0xf]
  %v148 = vld [vmem:[%s3 + $0x1c] sm:$0xf]
  %v149 = vld [vmem:[%s3 + $0x20] sm:$0xf]
  %v150 = vld [vmem:[%s3 + $0x24] sm:$0xf]
  %v151 = vld [vmem:[%s3 + $0x28] sm:$0xf]
  %v152 = vld [vmem:[%s3 + $0x2c] sm:$0xf]
  %v153 = vld [vmem:[%s3 + $0x30] sm:$0xf]
  %v154 = vld [vmem:[%s3 + $0x34] sm:$0xf]
  %v155 = vld [vmem:[%s3 + $0x38] sm:$0xf]
  %v156 = vld [vmem:[%s3 + $0x3c] sm:$0xf]
  %v157 = vld [vmem:[#allocation2] sm:$0x1]
  %v159 = vlaneseq
  %v160 = vshrl.u32 %v159, 7
  %v161 = vsub.s32 0, %v160
  %v162 = vrot.slane %v157, %v161
  %v180 = vunpack.c.l.b16 %v141
  %v181 = vunpack.c.l.b16 %v142
  %v182 = vunpack.c.l.b16 %v143
  %v183 = vunpack.c.l.b16 %v144
  %v184 = vunpack.c.l.b16 %v145
  %v185 = vunpack.c.l.b16 %v146
  %v186 = vunpack.c.l.b16 %v147
  %v187 = vunpack.c.l.b16 %v148
  %v188 = vunpack.c.l.b16 %v149
  %v189 = vunpack.c.l.b16 %v150
  %v190 = vunpack.c.l.b16 %v151
  %v191 = vunpack.c.l.b16 %v152
  %v192 = vunpack.c.l.b16 %v153
  %v193 = vunpack.c.l.b16 %v154
  %v194 = vunpack.c.l.b16 %v155
  %v195 = vunpack.c.l.b16 %v156
  %v196 = vpack.c.b16 %v181, %v180
  %v197 = vpack.c.b16 %v183, %v182
  %v198 = vpack.c.b16 %v185, %v184
  %v199 = vpack.c.b16 %v187, %v186
  %v200 = vpack.c.b16 %v189, %v188
  %v201 = vpack.c.b16 %v191, %v190
  %v202 = vpack.c.b16 %v193, %v192
  %v203 = vpack.c.b16 %v195, %v194
  %212 = vmatprep.subr.bf16.mxu0 0
  %213 = vmatpush1.bf16.msra.mxu0 %v203
  %214 = vmatprep.subr.bf16.mxu0 0
  %215 = vmatpush1.bf16.msra.mxu0 %v202
  %216 = vmatprep.subr.bf16.mxu0 0
  %217 = vmatpush1.bf16.msra.mxu0 %v201
  %218 = vmatprep.subr.bf16.mxu0 0
  %219 = vmatpush1.bf16.msra.mxu0 %v200
  %220 = vmatprep.subr.bf16.mxu0 0
  %221 = vmatpush1.bf16.msra.mxu0 %v199
  %222 = vmatprep.subr.bf16.mxu0 0
  %223 = vmatpush1.bf16.msra.mxu0 %v198
  %224 = vmatprep.subr.bf16.mxu0 0
  %225 = vmatpush1.bf16.msra.mxu0 %v197
  %226 = vmatprep.subr.bf16.mxu0 0
  %227 = vmatpush1.bf16.msra.mxu0 %v196
  %228 = vmatprep.subr.bf16.mxu0 0
  %229 = vmatpush2.bf16.msra.mxu0 0
  %230 = vmatprep.subr.bf16.mxu0 0
  %231 = vmatpush2.bf16.msra.mxu0 0
  %232 = vmatprep.subr.bf16.mxu0 0
  %233 = vmatpush2.bf16.msra.mxu0 0
  %234 = vmatprep.subr.bf16.mxu0 0
  %235 = vmatpush2.bf16.msra.mxu0 0
  %236 = vmatprep.subr.bf16.mxu0 0
  %237 = vmatpush2.bf16.msra.mxu0 0
  %238 = vmatprep.subr.bf16.mxu0 0
  %239 = vmatpush2.bf16.msra.mxu0 0
  %240 = vmatprep.subr.bf16.mxu0 0
  %241 = vmatpush2.bf16.msra.mxu0 0
  %242 = vmatprep.subr.bf16.mxu0 0
  %243 = vmatpush2.bf16.msra.mxu0 0
  %244 = vmatprep.mubr.bf16.mxu0 0
  %245 = vmatmul.mubr.bf16.gmra.mxu0 %v140
  %v246 = vpop.f32.mrf.mxu0
  %v247 = vadd.f32 %v162, %v246
  %v248 = vpop.f32.mrf.mxu0
  %v249 = vpop.f32.mrf.mxu0
  %v250 = vadd.f32 %v162, %v249
  %v251 = vpop.f32.mrf.mxu0
  %252 = vdwg.mxu0
  %v253 = vxor.u32 %v247, 2147483648
  %v254 = vxor.u32 %v250, 2147483648
  %v255 = vmul.f32 %v253, 1.442695
  %v256 = vpow.pop %v255
  %v257 = vmul.f32 %v254, 1.442695
  %v258 = vpow.pop %v257
  %v259 = vadd.f32 %v256, 1.0
  %v260 = vadd.f32 %v258, 1.0
  %v261 = vrcp.pop %v259
  %v262 = vmul.f32 1.0, %v261
  %v263 = vrcp.pop %v260
  %v264 = vmul.f32 1.0, %v263
  %vm265 = vcmask 7168
  %266 = vst.msk [vmem:[%s5] sm:$0xff] %vm265, %v262
  %267 = vst.msk [vmem:[%s5 + $0x8] sm:$0xff] %vm265, %v264
  // Predicated region
  $region22: #{forward.34} parent=0 // pred_check
    _
  $region23: #{forward.34} parent=0 // pred_check_branch
    %269 = sbr.rel (0) target = $region25
  $region24: #{forward.34} parent=0 // pred_region
    _
  $region25: #{forward.34} parent=0 // pred_fallthru
    _
  // Predicated region
  $region26: #{forward.34} parent=0 // pred_check
    _
  $region27: #{forward.34} parent=0 // pred_check_branch
    %271 = sbr.rel (0) target = $region29
  $region28: #{forward.34} parent=0 // pred_region
    _
  $region29: #{forward.34} parent=0 // pred_fallthru
    _

// kernel: custom-call.11
$region0: #{custom-call.11}
  %s0 = inlined_call_operand.vmem [shape: f32[3,3], index: 0, kind: input, shape index: {}]
  %s1 = inlined_call_operand.vmem [shape: f32[3,3], index: 1, kind: output, shape index: {0}]
  %s2 = inlined_call_operand.hbm [shape: s32[3], index: 2, kind: output, shape index: {1}]
  %s3 = inlined_call_operand.vmem [shape: s32[3], index: 3, kind: output, shape index: {2}]
  %4 = xla_tuple %s1, %s2, %s3
  $region1: #{custom-call.11} parent=0
    #allocation0 [shape = 'u8[4096]{0}', space=vmem, size = 0x1000, scoped, tag = 'operand span for operand 0']
    #allocation1 [shape = 'u8[2048]{0}', space=vmem, size = 0x800, scoped, tag = 'packed  for operand 0']
    #allocation2 [shape = 'u8[4096]{0}', space=vmem, size = 0x1000, scoped, tag = 'operand span for operand 1']
    #allocation3 [shape = 'u8[2048]{0}', space=vmem, size = 0x800, scoped, tag = 'packed  for operand 1']
    #allocation4 [shape = 'u8[4096]{0}', space=vmem, size = 0x1000, scoped, tag = 'operand span for operand 2']
    #allocation5 [shape = 'u8[512]{0}', space=vmem, size = 0x400, scoped, tag = 'packed  for operand 2']
    #allocation6 [shape = 's32[1]{0}', space=sflag, size = 0x4, scoped, tag = 'scoped memory for custom-call.11']
    #allocation7 [shape = 'u8[4096]{0}', space=vmem, size = 0x1000, scoped, tag = 'operand span for operand 3']
    #allocation8 [shape = 'u8[512]{0}', space=vmem, size = 0x400, scoped, tag = 'packed  for operand 3']
    #allocation9 [shape = 's32[3,128]{1,0}', space=vmem, size = 0x1000, scoped, tag = 'scratch for permutations']
    %5 = vsyncpa [#allocation6], 0
    %p7 = scmp.gt.s32.totalorder 4, 0
    // Predicated region
    $region2: #{custom-call.11} parent=1 // pred_check
      %p8 = pneg %p7
    $region3: #{custom-call.11} parent=1 // pred_check_branch
      %10 = sbr.rel (%p8) target = $region5
    $region4: #{custom-call.11} parent=1 // pred_region
      %s11 = sshra.s32 4, 3
      %p12 = scmp.gt.s32.totalorder %s11, 0
      // Predicated region
      $region6: #{custom-call.11} parent=4 // pred_check
        %p13 = pneg %p12
      $region7: #{custom-call.11} parent=4 // pred_check_branch
        %15 = sbr.rel (%p13) target = $region9
      $region8: #{custom-call.11} parent=4 // pred_region
        %s16 = ssub.s32 %s11, 1
        %s17 = smul.u32 %s16, 128
        %s18 = sshra.s32 %s17, 4
        %s19 = scalar_lea.vmem %s0, %s18
        %v20 = vld [vmem:[%s0] sm:$0xff]
        // While loop
        $region10: #{custom-call.11} parent=8 // loop_pre_header
          _
        $region11: #{custom-call.11} parent=8 // loop_header
          %s21 = sphi %s0, %s43
          %s22 = sphi [#allocation1], %s44
          %v23 = vphi %v20, %v45
          %s24 = ssub.s32 %s19, 64
          %p25 = scmp.gt.s32.totalorder %s21, %s24
        $region12: #{custom-call.11} parent=8 // loop_header_branch
          %27 = sbr.rel (%p25) target = $region16
        $region13: #{custom-call.11} parent=8 // loop_body
          %28 = vst [vmem:[%s22] sm:$0xff] %v23
          %v29 = vld [vmem:[%s21 + $0x8] sm:$0xff]
          %30 = vst [vmem:[%s22 + $0x8] sm:$0xff] %v29
          %v31 = vld [vmem:[%s21 + $0x10] sm:$0xff]
          %32 = vst [vmem:[%s22 + $0x10] sm:$0xff] %v31
          %v33 = vld [vmem:[%s21 + $0x18] sm:$0xff]
          %34 = vst [vmem:[%s22 + $0x18] sm:$0xff] %v33
          %v35 = vld [vmem:[%s21 + $0x20] sm:$0xff]
          %36 = vst [vmem:[%s22 + $0x20] sm:$0xff] %v35
          %v37 = vld [vmem:[%s21 + $0x28] sm:$0xff]
          %38 = vst [vmem:[%s22 + $0x28] sm:$0xff] %v37
          %v39 = vld [vmem:[%s21 + $0x30] sm:$0xff]
          %40 = vst [vmem:[%s22 + $0x30] sm:$0xff] %v39
          %v41 = vld [vmem:[%s21 + $0x38] sm:$0xff]
          %42 = vst [vmem:[%s22 + $0x38] sm:$0xff] %v41
        $region14: #{custom-call.11} parent=8 // loop_footer
          %s43 = scalar_lea.vmem %s21, 64
          %s44 = scalar_lea.vmem %s22, 64
          %v45 = vld [vmem:[%s21 + $0x40] sm:$0xff]
        $region15: #{custom-call.11} parent=8 // loop_footer_branch
          %46 = sbr.rel target = $region11
        $region16: #{custom-call.11} parent=8 // loop_exit
          _
        // While loop
        $region17: #{custom-call.11} parent=8 // loop_pre_header
          _
        $region18: #{custom-call.11} parent=8 // loop_header
          %s47 = sphi %s21, %s55
          %s48 = sphi %s22, %s56
          %v49 = vphi %v23, %v49
          %p50 = scmp.gt.s32.totalorder %s47, %s19
        $region19: #{custom-call.11} parent=8 // loop_header_branch
          %52 = sbr.rel (%p50) target = $region23
        $region20: #{custom-call.11} parent=8 // loop_body
          %v53 = vld [vmem:[%s47] sm:$0xff]
          %54 = vst [vmem:[%s48] sm:$0xff] %v53
        $region21: #{custom-call.11} parent=8 // loop_footer
          %s55 = scalar_lea.vmem %s47, 8
          %s56 = scalar_lea.vmem %s48, 8
        $region22: #{custom-call.11} parent=8 // loop_footer_branch
          %57 = sbr.rel target = $region18
        $region23: #{custom-call.11} parent=8 // loop_exit
          _
      $region9: #{custom-call.11} parent=4 // pred_fallthru
        _
      %s58 = sand.u32 4, 7
      %s59 = sshll.u32 1, %s58
      %s60 = ssub.s32 %s59, 1
      %s61 = smul.u32 %s11, 128
      %s62 = sshra.s32 %s61, 4
      %s63 = scalar_lea.vmem [#allocation1], %s62
      %s64 = smul.u32 %s11, 128
      %s65 = sshra.s32 %s64, 4
      %s66 = scalar_lea.vmem %s0, %s65
      %v67 = vld [vmem:[%s66] sm:%s60]
      %68 = vst [vmem:[%s63] sm:%s60] %v67
    $region5: #{custom-call.11} parent=1 // pred_fallthru
      _
    %s70 = sshll.u32 1, 4
    %s71 = ssub.s32 %s70, 1
    %v72 = vld [vmem:[#allocation1] sm:%s71]
    %73 = vst [vmem:[#allocation0] sm:%s71] %v72
    %v74 = vld [vmem:[#allocation0] sm:$0xff]
    %75 = vst [vmem:[#allocation2] sm:$0xff] %v74
    %76 = vst [vmem:[#allocation4] sm:$0x1] 0
    %v77 = vlaneseq
    %v78 = vshrl.u32 %v77, 7
    %v79 = vmov %v78
    %81 = vst [vmem:[#allocation9] sm:$0xff] %v79
    loop: start=0, step=1, limit=3
    $region25: #{custom-call.11} parent=1 // loop_pre_header
      _
    $region26: #{custom-call.11} parent=1 // loop_header
      %s83 = sphi 0, %s87
      %p84 = scmp.ge.s32.totalorder %s83, 3
    $region27: #{custom-call.11} parent=1 // loop_header_branch
      %86 = sbr.rel (%p84) target = $region31
    $region28: #{custom-call.11} parent=1 // loop_body
      %v88 = vstv %s83
      %v89 = vlaneseq
      %v90 = vshrl.u32 %v89, 7
      %v91 = vmov %v90
      %v92 = vld [vmem:[#allocation2] sm:$0xff]
      %v93 = vand.u32 2147483647, %v92
      %v95 = vstv %s83
      %vm96 = vcmp.ge.s32.totalorder %v91, %v95
      %vm97 = vcmp.lt.s32.totalorder %v91, 3
      %vm98 = vmand %vm96, %vm97
      %vm99 = vcmp.lt.f32.partialorder -inf, %v93
      %vm100 = vmand %vm98, %vm99
      %v101 = vsel %vm100, %v91, %v88
      %v102 = vsel %vm100, %v93, -inf
      %v103 = vrot.slane %v102, 1
      %v104 = vrot.slane %v101, 1
      %vm105 = vcmp.ge.f32.partialorder %v103, %v102
      %v106 = vsel %vm105, %v103, %v102
      %v107 = vsel %vm105, %v104, %v101
      %v108 = vrot.slane %v103, 1
      %v109 = vrot.slane %v104, 1
      %vm110 = vcmp.ge.f32.partialorder %v108, %v106
      %v111 = vsel %vm110, %v108, %v106
      %v112 = vsel %vm110, %v109, %v107
      %v113 = vrot.slane %v108, 1
      %v114 = vrot.slane %v109, 1
      %vm115 = vcmp.ge.f32.partialorder %v113, %v111
      %v116 = vsel %vm115, %v113, %v111
      %v117 = vsel %vm115, %v114, %v112
      %v118 = vrot.slane %v113, 1
      %v119 = vrot.slane %v114, 1
      %vm120 = vcmp.ge.f32.partialorder %v118, %v116
      %v121 = vsel %vm120, %v118, %v116
      %v122 = vsel %vm120, %v119, %v117
      %v123 = vrot.slane %v118, 1
      %v124 = vrot.slane %v119, 1
      %vm125 = vcmp.ge.f32.partialorder %v123, %v121
      %v126 = vsel %vm125, %v123, %v121
      %v127 = vsel %vm125, %v124, %v122
      %v128 = vrot.slane %v123, 1
      %v129 = vrot.slane %v124, 1
      %vm130 = vcmp.ge.f32.partialorder %v128, %v126
      %v131 = vsel %vm130, %v128, %v126
      %v132 = vsel %vm130, %v129, %v127
      %v133 = vrot.slane %v128, 1
      %v134 = vrot.slane %v129, 1
      %vm135 = vcmp.ge.f32.partialorder %v133, %v131
      %v136 = vsel %vm135, %v133, %v131
      %v137 = vsel %vm135, %v134, %v132
      %s138 = ssub.s32 128, %s83
      %139 = vrot.lane.b32.xlu0 %v137, %s138
      %v140 = vpop.permute.xlu0 %139
      %s141 = vtos %v140
      %v142 = vstv %s83
      %v143 = vlaneseq
      %v144 = vand.u32 %v143, 127
      %vm145 = vcmp.eq.s32.totalorder %v144, %v142
      %v146 = vstv %s141
      %v147 = vld [vmem:[#allocation4] ss:$0 sm:$0xff]
      %v148 = vsel %vm145, %v146, %v147
      %149 = vst [vmem:[#allocation4] sm:$0x1] %v148
      %s150 = scalar_lea.vmem [#allocation2], %s83
      %s151 = scalar_lea.vmem [#allocation2], %s141
      %v152 = vld [vmem:[%s150] ss:$0 sm:$0xff]
      %v153 = vld [vmem:[%s151] ss:$0 sm:$0xff]
      %154 = vst [vmem:[%s151] sm:$0x1] %v152
      %155 = vst [vmem:[%s150] sm:$0x1] %v153
      %s156 = scalar_lea.vmem [#allocation9], %s83
      %s157 = scalar_lea.vmem [#allocation9], %s141
      %v158 = vld [vmem:[%s156] ss:$0 sm:$0xff]
      %v159 = vld [vmem:[%s157] ss:$0 sm:$0xff]
      %160 = vst [vmem:[%s157] sm:$0x1] %v158
      %161 = vst [vmem:[%s156] sm:$0x1] %v159
      %vm162 = vcmp.ne.f32.partialorder %v153, 0.0
      %vm163 = vmand %vm145, %vm162
      %v164 = vsel %vm163, %v153, 1.0
      %v165 = vlaneseq
      %v166 = vand.u32 %v165, 127
      %v167 = vstv %s83
      %vm168 = vcmp.gt.s32.totalorder %v166, %v167
      %v169 = vsel %vm168, %v153, 0.0
      %v170 = vlaneseq
      %v171 = vshrl.u32 %v170, 7
      %v172 = vmov %v171
      %v173 = vld [vmem:[#allocation2] sm:$0xff]
      %v175 = vstv %s83
      %vm176 = vcmp.gt.s32.totalorder %v172, %v175
      %v177 = vsel %vm176, %v164, 1.0
      %v178 = vrcp.pop %v177
      %v179 = vmul.f32 %v173, %v178
      %vm180 = vmand %vm176, %vm145
      %v181 = vsel %vm180, %v179, 0.0
      %182 = vadd.xlane.f32.xlu0 %v181
      %v183 = vpop.xlane.xlu0 %182
      %v184 = vmul.f32 %v183, %v169
      %v185 = vsub.f32 %v179, %v184
      %186 = vst [vmem:[#allocation2] sm:$0xff] %v185
    $region29: #{custom-call.11} parent=1 // loop_footer
      %s87 = sadd.s32 1, %s83
    $region30: #{custom-call.11} parent=1 // loop_footer_branch
      %82 = sbr.rel target = $region26
    $region31: #{custom-call.11} parent=1 // loop_exit
      _
    %v187 = vld [vmem:[#allocation9] sm:$0xff]
    %s188 = scalar_lea.vmem [#allocation9], 8
    %s189 = scalar_lea.vmem [#allocation9], 16
    %s190 = scalar_lea.vmem [#allocation9], 24
    %s191 = scalar_lea.vmem [#allocation9], 32
    %s192 = scalar_lea.vmem [#allocation9], 40
    %s193 = scalar_lea.vmem [#allocation9], 48
    %s194 = scalar_lea.vmem [#allocation9], 56
    %s195 = scalar_lea.vmem [#allocation9], 64
    %s196 = scalar_lea.vmem [#allocation9], 72
    %s197 = scalar_lea.vmem [#allocation9], 80
    %s198 = scalar_lea.vmem [#allocation9], 88
    %s199 = scalar_lea.vmem [#allocation9], 96
    %s200 = scalar_lea.vmem [#allocation9], 104
    %s201 = scalar_lea.vmem [#allocation9], 112
    %s202 = scalar_lea.vmem [#allocation9], 120
    %203 = vxpose.xlu0.b32.start [1/16] %v187, 128
    %204 = vxpose.xlu0.b32.cont [2/16] 0, 128
    %205 = vxpose.xlu0.b32.cont [3/16] 0, 128
    %206 = vxpose.xlu0.b32.cont [4/16] 0, 128
    %207 = vxpose.xlu0.b32.cont [5/16] 0, 128
    %208 = vxpose.xlu0.b32.cont [6/16] 0, 128
    %209 = vxpose.xlu0.b32.cont [7/16] 0, 128
    %210 = vxpose.xlu0.b32.cont [8/16] 0, 128
    %211 = vxpose.xlu0.b32.cont [9/16] 0, 128
    %212 = vxpose.xlu0.b32.cont [10/16] 0, 128
    %213 = vxpose.xlu0.b32.cont [11/16] 0, 128
    %214 = vxpose.xlu0.b32.cont [12/16] 0, 128
    %215 = vxpose.xlu0.b32.cont [13/16] 0, 128
    %216 = vxpose.xlu0.b32.cont [14/16] 0, 128
    %217 = vxpose.xlu0.b32.cont [15/16] 0, 128
    %218 = vxpose.xlu0.b32.end [16/16] 0, 128
    %v219 = vpop.trf.xlu0
    %v220 = vpop.trf.xlu0
    %v221 = vpop.trf.xlu0
    %v222 = vpop.trf.xlu0
    %v223 = vpop.trf.xlu0
    %v224 = vpop.trf.xlu0
    %v225 = vpop.trf.xlu0
    %v226 = vpop.trf.xlu0
    %v227 = vpop.trf.xlu0
    %v228 = vpop.trf.xlu0
    %v229 = vpop.trf.xlu0
    %v230 = vpop.trf.xlu0
    %v231 = vpop.trf.xlu0
    %v232 = vpop.trf.xlu0
    %v233 = vpop.trf.xlu0
    %v234 = vpop.trf.xlu0
    %235 = vst [vmem:[#allocation7] sm:$0x1] %v219
    %s237 = sshll.u32 1, 4
    %s238 = ssub.s32 %s237, 1
    %v240 = vld [vmem:[#allocation2] sm:%s238]
    %s241 = sshll.u32 1, 4
    %s242 = ssub.s32 %s241, 1
    %243 = vst [vmem:[#allocation3] sm:%s242] %v240
    %s245 = sshll.u32 1, 1
    %s246 = ssub.s32 %s245, 1
    %v248 = vld [vmem:[#allocation4] sm:%s246]
    %s249 = sshll.u32 1, 1
    %s250 = ssub.s32 %s249, 1
    %251 = vst [vmem:[#allocation5] sm:%s250] %v248
    %s253 = sshll.u32 1, 1
    %s254 = ssub.s32 %s253, 1
    %v256 = vld [vmem:[#allocation7] sm:%s254]
    %s257 = sshll.u32 1, 1
    %s258 = ssub.s32 %s257, 1
    %259 = vst [vmem:[#allocation8] sm:%s258] %v256
    %p261 = scmp.gt.s32.totalorder 4, 0
    // Predicated region
    $region32: #{custom-call.11} parent=1 // pred_check
      %p262 = pneg %p261
    $region33: #{custom-call.11} parent=1 // pred_check_branch
      %264 = sbr.rel (%p262) target = $region35
    $region34: #{custom-call.11} parent=1 // pred_region
      %s265 = sshra.s32 4, 3
      %p266 = scmp.gt.s32.totalorder %s265, 0
      // Predicated region
      $region36: #{custom-call.11} parent=34 // pred_check
        %p267 = pneg %p266
      $region37: #{custom-call.11} parent=34 // pred_check_branch
        %269 = sbr.rel (%p267) target = $region39
      $region38: #{custom-call.11} parent=34 // pred_region
        %s270 = ssub.s32 %s265, 1
        %s271 = smul.u32 %s270, 128
        %s272 = sshra.s32 %s271, 4
        %s273 = scalar_lea.vmem [#allocation3], %s272
        %v274 = vld [vmem:[#allocation3] sm:$0xff]
        // While loop
        $region40: #{custom-call.11} parent=38 // loop_pre_header
          _
        $region41: #{custom-call.11} parent=38 // loop_header
          %s275 = sphi [#allocation3], %s297
          %s276 = sphi %s1, %s298
          %v277 = vphi %v274, %v299
          %s278 = ssub.s32 %s273, 64
          %p279 = scmp.gt.s32.totalorder %s275, %s278
        $region42: #{custom-call.11} parent=38 // loop_header_branch
          %281 = sbr.rel (%p279) target = $region46
        $region43: #{custom-call.11} parent=38 // loop_body
          %282 = vst [vmem:[%s276] sm:$0xff] %v277
          %v283 = vld [vmem:[%s275 + $0x8] sm:$0xff]
          %284 = vst [vmem:[%s276 + $0x8] sm:$0xff] %v283
          %v285 = vld [vmem:[%s275 + $0x10] sm:$0xff]
          %286 = vst [vmem:[%s276 + $0x10] sm:$0xff] %v285
          %v287 = vld [vmem:[%s275 + $0x18] sm:$0xff]
          %288 = vst [vmem:[%s276 + $0x18] sm:$0xff] %v287
          %v289 = vld [vmem:[%s275 + $0x20] sm:$0xff]
          %290 = vst [vmem:[%s276 + $0x20] sm:$0xff] %v289
          %v291 = vld [vmem:[%s275 + $0x28] sm:$0xff]
          %292 = vst [vmem:[%s276 + $0x28] sm:$0xff] %v291
          %v293 = vld [vmem:[%s275 + $0x30] sm:$0xff]
          %294 = vst [vmem:[%s276 + $0x30] sm:$0xff] %v293
          %v295 = vld [vmem:[%s275 + $0x38] sm:$0xff]
          %296 = vst [vmem:[%s276 + $0x38] sm:$0xff] %v295
        $region44: #{custom-call.11} parent=38 // loop_footer
          %s297 = scalar_lea.vmem %s275, 64
          %s298 = scalar_lea.vmem %s276, 64
          %v299 = vld [vmem:[%s275 + $0x40] sm:$0xff]
        $region45: #{custom-call.11} parent=38 // loop_footer_branch
          %300 = sbr.rel target = $region41
        $region46: #{custom-call.11} parent=38 // loop_exit
          _
        // While loop
        $region47: #{custom-call.11} parent=38 // loop_pre_header
          _
        $region48: #{custom-call.11} parent=38 // loop_header
          %s301 = sphi %s275, %s309
          %s302 = sphi %s276, %s310
          %v303 = vphi %v277, %v303
          %p304 = scmp.gt.s32.totalorder %s301, %s273
        $region49: #{custom-call.11} parent=38 // loop_header_branch
          %306 = sbr.rel (%p304) target = $region53
        $region50: #{custom-call.11} parent=38 // loop_body
          %v307 = vld [vmem:[%s301] sm:$0xff]
          %308 = vst [vmem:[%s302] sm:$0xff] %v307
        $region51: #{custom-call.11} parent=38 // loop_footer
          %s309 = scalar_lea.vmem %s301, 8
          %s310 = scalar_lea.vmem %s302, 8
        $region52: #{custom-call.11} parent=38 // loop_footer_branch
          %311 = sbr.rel target = $region48
        $region53: #{custom-call.11} parent=38 // loop_exit
          _
      $region39: #{custom-call.11} parent=34 // pred_fallthru
        _
      %s312 = sand.u32 4, 7
      %s313 = sshll.u32 1, %s312
      %s314 = ssub.s32 %s313, 1
      %s315 = smul.u32 %s265, 128
      %s316 = sshra.s32 %s315, 4
      %s317 = scalar_lea.vmem %s1, %s316
      %s318 = smul.u32 %s265, 128
      %s319 = sshra.s32 %s318, 4
      %s320 = scalar_lea.vmem [#allocation3], %s319
      %v321 = vld [vmem:[%s320] sm:%s314]
      %322 = vst [vmem:[%s317] sm:%s314] %v321
    $region35: #{custom-call.11} parent=1 // pred_fallthru
      _
    // Predicated region
    $region54: #{custom-call.11} parent=1 // pred_check
      _
    $region55: #{custom-call.11} parent=1 // pred_check_branch
      %324 = sbr.rel (0) target = $region57
    $region56: #{custom-call.11} parent=1 // pred_region
      %s326 = ssub.s32 16, 16
      %327 = vsyncadd [#allocation6], %s326
      %s328 = sshll.u32 [#allocation5], 4
      %s329 = int_to_ptr.vmem [resolvable:$true] %s328
      %331 = dma.vmem_to_hbm [thread:$0]  %s329, 16, %s2, [#allocation6]
    $region57: #{custom-call.11} parent=1 // pred_fallthru
      _
    // Predicated region
    $region58: #{custom-call.11} parent=1 // pred_check
      _
    $region59: #{custom-call.11} parent=1 // pred_check_branch
      %333 = sbr.rel (0) target = $region61
    $region60: #{custom-call.11} parent=1 // pred_region
      %p335 = scmp.gt.s32.totalorder 1, 0
      // Predicated region
      $region62: #{custom-call.11} parent=60 // pred_check
        %p336 = pneg %p335
      $region63: #{custom-call.11} parent=60 // pred_check_branch
        %338 = sbr.rel (%p336) target = $region65
      $region64: #{custom-call.11} parent=60 // pred_region
        %s339 = sshra.s32 1, 3
        %p340 = scmp.gt.s32.totalorder %s339, 0
        // Predicated region
        $region66: #{custom-call.11} parent=64 // pred_check
          %p341 = pneg %p340
        $region67: #{custom-call.11} parent=64 // pred_check_branch
          %343 = sbr.rel (%p341) target = $region69
        $region68: #{custom-call.11} parent=64 // pred_region
          %s344 = ssub.s32 %s339, 1
          %s345 = smul.u32 %s344, 128
          %s346 = sshra.s32 %s345, 4
          %s347 = scalar_lea.vmem [#allocation8], %s346
          %v348 = vld [vmem:[#allocation8] sm:$0xff]
          // While loop
          $region70: #{custom-call.11} parent=68 // loop_pre_header
            _
          $region71: #{custom-call.11} parent=68 // loop_header
            %s349 = sphi [#allocation8], %s371
            %s350 = sphi %s3, %s372
            %v351 = vphi %v348, %v373
            %s352 = ssub.s32 %s347, 64
            %p353 = scmp.gt.s32.totalorder %s349, %s352
          $region72: #{custom-call.11} parent=68 // loop_header_branch
            %355 = sbr.rel (%p353) target = $region76
          $region73: #{custom-call.11} parent=68 // loop_body
            %356 = vst [vmem:[%s350] sm:$0xff] %v351
            %v357 = vld [vmem:[%s349 + $0x8] sm:$0xff]
            %358 = vst [vmem:[%s350 + $0x8] sm:$0xff] %v357
            %v359 = vld [vmem:[%s349 + $0x10] sm:$0xff]
            %360 = vst [vmem:[%s350 + $0x10] sm:$0xff] %v359
            %v361 = vld [vmem:[%s349 + $0x18] sm:$0xff]
            %362 = vst [vmem:[%s350 + $0x18] sm:$0xff] %v361
            %v363 = vld [vmem:[%s349 + $0x20] sm:$0xff]
            %364 = vst [vmem:[%s350 + $0x20] sm:$0xff] %v363
            %v365 = vld [vmem:[%s349 + $0x28] sm:$0xff]
            %366 = vst [vmem:[%s350 + $0x28] sm:$0xff] %v365
            %v367 = vld [vmem:[%s349 + $0x30] sm:$0xff]
            %368 = vst [vmem:[%s350 + $0x30] sm:$0xff] %v367
            %v369 = vld [vmem:[%s349 + $0x38] sm:$0xff]
            %370 = vst [vmem:[%s350 + $0x38] sm:$0xff] %v369
          $region74: #{custom-call.11} parent=68 // loop_footer
            %s371 = scalar_lea.vmem %s349, 64
            %s372 = scalar_lea.vmem %s350, 64
            %v373 = vld [vmem:[%s349 + $0x40] sm:$0xff]
          $region75: #{custom-call.11} parent=68 // loop_footer_branch
            %374 = sbr.rel target = $region71
          $region76: #{custom-call.11} parent=68 // loop_exit
            _
          // While loop
          $region77: #{custom-call.11} parent=68 // loop_pre_header
            _
          $region78: #{custom-call.11} parent=68 // loop_header
            %s375 = sphi %s349, %s383
            %s376 = sphi %s350, %s384
            %v377 = vphi %v351, %v377
            %p378 = scmp.gt.s32.totalorder %s375, %s347
          $region79: #{custom-call.11} parent=68 // loop_header_branch
            %380 = sbr.rel (%p378) target = $region83
          $region80: #{custom-call.11} parent=68 // loop_body
            %v381 = vld [vmem:[%s375] sm:$0xff]
            %382 = vst [vmem:[%s376] sm:$0xff] %v381
          $region81: #{custom-call.11} parent=68 // loop_footer
            %s383 = scalar_lea.vmem %s375, 8
            %s384 = scalar_lea.vmem %s376, 8
          $region82: #{custom-call.11} parent=68 // loop_footer_branch
            %385 = sbr.rel target = $region78
          $region83: #{custom-call.11} parent=68 // loop_exit
            _
        $region69: #{custom-call.11} parent=64 // pred_fallthru
          _
        %s386 = sand.u32 1, 7
        %s387 = sshll.u32 1, %s386
        %s388 = ssub.s32 %s387, 1
        %s389 = smul.u32 %s339, 128
        %s390 = sshra.s32 %s389, 4
        %s391 = scalar_lea.vmem %s3, %s390
        %s392 = smul.u32 %s339, 128
        %s393 = sshra.s32 %s392, 4
        %s394 = scalar_lea.vmem [#allocation8], %s393
        %v395 = vld [vmem:[%s394] sm:%s388]
        %396 = vst [vmem:[%s391] sm:%s388] %v395
      $region65: #{custom-call.11} parent=60 // pred_fallthru
        _
    $region61: #{custom-call.11} parent=1 // pred_fallthru
      _
    // Predicated region
    $region84: #{custom-call.11} parent=1 // pred_check
      _
    $region85: #{custom-call.11} parent=1 // pred_check_branch
      %398 = sbr.rel (0) target = $region87
    $region86: #{custom-call.11} parent=1 // pred_region
      %399 = dma.done [#allocation6], 16
    $region87: #{custom-call.11} parent=1 // pred_fallthru
      _
    // Predicated region
    $region88: #{custom-call.11} parent=1 // pred_check
      _
    $region89: #{custom-call.11} parent=1 // pred_check_branch
      %401 = sbr.rel (0) target = $region91
    $region90: #{custom-call.11} parent=1 // pred_region
      _
    $region91: #{custom-call.11} parent=1 // pred_fallthru
      _
    %402 = vsyncpa [#allocation6], 1

// kernel: custom-call.13
$region0: #{custom-call.13}
  %s0 = inlined_call_operand.vmem [shape: f32[1,3,3], index: 0, kind: input, shape index: {}]
  %s1 = inlined_call_operand.vmem [shape: f32[1,3,3], index: 1, kind: output, shape index: {}]
  $region1: #{custom-call.13} parent=0
    #allocation0 [shape = 'u8[4096]{0}', space=vmem, size = 0x1000, scoped, tag = 'operand span for operand 0']
    #allocation1 [shape = 'u8[2048]{0}', space=vmem, size = 0x800, scoped, tag = 'packed  for operand 0']
    #allocation2 [shape = 'u8[4096]{0}', space=vmem, size = 0x1000, scoped, tag = 'operand span for operand 1']
    #allocation3 [shape = 'u8[2048]{0}', space=vmem, size = 0x800, scoped, tag = 'packed  for operand 1']
    #allocation4 [shape = 'f32[3,3]{1,0}', space=vmem, size = 0x1000, scoped, tag = 'rescaled input a']
    // Predicated region
    $region2: #{custom-call.13} parent=1 // pred_check
      _
    $region3: #{custom-call.13} parent=1 // pred_check_branch
      %3 = sbr.rel (0) target = $region5
    $region4: #{custom-call.13} parent=1 // pred_region
      // Predicated region
      $region6: #{custom-call.13} parent=4 // pred_check
        _
      $region7: #{custom-call.13} parent=4 // pred_check_branch
        %5 = sbr.rel target = $region9
      $region8: #{custom-call.13} parent=4 // pred_region
        // Predicated region
        $region21: #{custom-call.13} parent=8 // pred_check
          _
        $region22: #{custom-call.13} parent=8 // pred_check_branch
          %21 = sbr.rel (0) target = $region24
        $region23: #{custom-call.13} parent=8 // pred_region
          %s23 = ssub.s32 16, 1
          loop: start=0, step=1, limit=1
          $region25: #{custom-call.13} parent=23 // loop_pre_header
            _
          $region26: #{custom-call.13} parent=23 // loop_header
            %s25 = sphi 0, %s29
            %p26 = scmp.ge.s32.totalorder %s25, 1
            %s30 = sphi %s0, %s0
            %s31 = sphi [#allocation1], [#allocation1]
          $region27: #{custom-call.13} parent=23 // loop_header_branch
            %28 = sbr.rel (%p26) target = $region31
          $region28: #{custom-call.13} parent=23 // loop_body
            %v32 = vld [vmem:[%s30] sm:%s23]
            %33 = vst [vmem:[%s31] sm:%s23] %v32
          $region29: #{custom-call.13} parent=23 // loop_footer
            %s29 = sadd.s32 1, %s25
          $region30: #{custom-call.13} parent=23 // loop_footer_branch
            %24 = sbr.rel target = $region26
          $region31: #{custom-call.13} parent=23 // loop_exit
            _
        $region24: #{custom-call.13} parent=8 // pred_fallthru
          _
      $region9: #{custom-call.13} parent=4 // pred_fallthru
        _
      // Predicated region
      $region10: #{custom-call.13} parent=4 // pred_check
        _
      $region11: #{custom-call.13} parent=4 // pred_check_branch
        %7 = sbr.rel (0) target = $region13
      $region12: #{custom-call.13} parent=4 // pred_region
        %s9 = ssub.s32 16, 1
        loop: start=0, step=1, limit=1
        $region14: #{custom-call.13} parent=12 // loop_pre_header
          _
        $region15: #{custom-call.13} parent=12 // loop_header
          %s11 = sphi 0, %s15
          %p12 = scmp.ge.s32.totalorder %s11, 1
          %s16 = sphi %s0, %s0
          %s17 = sphi [#allocation1], [#allocation1]
        $region16: #{custom-call.13} parent=12 // loop_header_branch
          %14 = sbr.rel (%p12) target = $region20
        $region17: #{custom-call.13} parent=12 // loop_body
          %v18 = vld [vmem:[%s16] sm:%s9]
          %19 = vst [vmem:[%s17] sm:%s9] %v18
        $region18: #{custom-call.13} parent=12 // loop_footer
          %s15 = sadd.s32 1, %s11
        $region19: #{custom-call.13} parent=12 // loop_footer_branch
          %10 = sbr.rel target = $region15
        $region20: #{custom-call.13} parent=12 // loop_exit
          _
      $region13: #{custom-call.13} parent=4 // pred_fallthru
        _
    $region5: #{custom-call.13} parent=1 // pred_fallthru
      _
    %34 = vnop
    %s36 = sshll.u32 1, 4
    %s37 = ssub.s32 %s36, 1
    %v38 = vld [vmem:[#allocation1] sm:%s37]
    %39 = vst [vmem:[#allocation0] sm:%s37] %v38
    %v40 = vlaneseq
    %v41 = vand.u32 %v40, 127
    %vm42 = vcmp.lt.s32.totalorder %v41, 3
    %v43 = vlaneseq
    %v44 = vshrl.u32 %v43, 7
    %vm46 = vcmp.eq.s32.totalorder %v44, %v41
    %v47 = vld [vmem:[#allocation0] sm:$0xff]
    %v48 = vsel %vm46, %v47, 0.0
    %49 = vadd.xlane.f32.xlu0 %v48
    %v50 = vpop.xlane.xlu0 %49
    %vm51 = vcmp.ge.s32.totalorder %v44, %v41
    %vm52 = vmand %vm51, %vm42
    %v53 = vsel %vm52, %v47, 0.0
    %v54 = vrcp.pop %v50
    %v55 = vmul.f32 %v53, %v54
    %56 = vst [vmem:[#allocation4] sm:$0xff] %v55
    %v57 = vlaneseq
    %v58 = vand.u32 %v57, 127
    %v59 = vlaneseq
    %v60 = vshrl.u32 %v59, 7
    %vm62 = vcmp.eq.s32.totalorder %v58, %v60
    %v63 = vlaneseq
    %v64 = vand.u32 %v63, 127
    %vm65 = vcmp.eq.s32.totalorder %v64, 0
    %v66 = vsel %vm65, 1.0, -1.0
    %v67 = vsel %vm62, %v66, 0.0
    %s68 = scalar_lea.vmem [#allocation4], 1
    %v69 = vld [vmem:[%s68] ss:$0 sm:$0xff]
    %v70 = vxor.u32 %v69, 2147483648
    %v71 = vlaneseq
    %v72 = vand.u32 %v71, 127
    %vm73 = vcmp.eq.s32.totalorder %v72, 1
    %v74 = vmul.f32 %v70, %v67
    %75 = vadd.xlane.f32.xlu0 %v74
    %v76 = vpop.xlane.xlu0 %75
    %v77 = vsel %vm73, %v76, %v67
    %s78 = scalar_lea.vmem [#allocation4], 2
    %v79 = vld [vmem:[%s78] ss:$0 sm:$0xff]
    %v80 = vxor.u32 %v79, 2147483648
    %v81 = vlaneseq
    %v82 = vand.u32 %v81, 127
    %vm83 = vcmp.eq.s32.totalorder %v82, 2
    %v84 = vmul.f32 %v80, %v77
    %85 = vadd.xlane.f32.xlu0 %v84
    %v86 = vpop.xlane.xlu0 %85
    %v87 = vsel %vm83, %v86, %v77
    %v88 = vrcp.pop %v50
    %v89 = vmul.f32 %v87, %v88
    %vm90 = vweird.f32 %v50
    %v91 = vsel %vm90, %v87, %v89
    %92 = vst [vmem:[#allocation2] sm:$0xff] %v91
    %s94 = sshll.u32 1, 4
    %s95 = ssub.s32 %s94, 1
    %v97 = vld [vmem:[#allocation2] sm:%s95]
    %s98 = sshll.u32 1, 4
    %s99 = ssub.s32 %s98, 1
    %100 = vst [vmem:[#allocation3] sm:%s99] %v97
    // Predicated region
    $region32: #{custom-call.13} parent=1 // pred_check
      _
    $region33: #{custom-call.13} parent=1 // pred_check_branch
      %102 = sbr.rel (0) target = $region35
    $region34: #{custom-call.13} parent=1 // pred_region
      // Predicated region
      $region36: #{custom-call.13} parent=34 // pred_check
        _
      $region37: #{custom-call.13} parent=34 // pred_check_branch
        %104 = sbr.rel target = $region39
      $region38: #{custom-call.13} parent=34 // pred_region
        // Predicated region
        $region51: #{custom-call.13} parent=38 // pred_check
          _
        $region52: #{custom-call.13} parent=38 // pred_check_branch
          %120 = sbr.rel (0) target = $region54
        $region53: #{custom-call.13} parent=38 // pred_region
          %s122 = ssub.s32 16, 1
          loop: start=0, step=1, limit=1
          $region55: #{custom-call.13} parent=53 // loop_pre_header
            _
          $region56: #{custom-call.13} parent=53 // loop_header
            %s124 = sphi 0, %s128
            %p125 = scmp.ge.s32.totalorder %s124, 1
            %s129 = sphi [#allocation3], [#allocation3]
            %s130 = sphi %s1, %s1
          $region57: #{custom-call.13} parent=53 // loop_header_branch
            %127 = sbr.rel (%p125) target = $region61
          $region58: #{custom-call.13} parent=53 // loop_body
            %v131 = vld [vmem:[%s129] sm:%s122]
            %132 = vst [vmem:[%s130] sm:%s122] %v131
          $region59: #{custom-call.13} parent=53 // loop_footer
            %s128 = sadd.s32 1, %s124
          $region60: #{custom-call.13} parent=53 // loop_footer_branch
            %123 = sbr.rel target = $region56
          $region61: #{custom-call.13} parent=53 // loop_exit
            _
        $region54: #{custom-call.13} parent=38 // pred_fallthru
          _
      $region39: #{custom-call.13} parent=34 // pred_fallthru
        _
      // Predicated region
      $region40: #{custom-call.13} parent=34 // pred_check
        _
      $region41: #{custom-call.13} parent=34 // pred_check_branch
        %106 = sbr.rel (0) target = $region43
      $region42: #{custom-call.13} parent=34 // pred_region
        %s108 = ssub.s32 16, 1
        loop: start=0, step=1, limit=1
        $region44: #{custom-call.13} parent=42 // loop_pre_header
          _
        $region45: #{custom-call.13} parent=42 // loop_header
          %s110 = sphi 0, %s114
          %p111 = scmp.ge.s32.totalorder %s110, 1
          %s115 = sphi [#allocation3], [#allocation3]
          %s116 = sphi %s1, %s1
        $region46: #{custom-call.13} parent=42 // loop_header_branch
          %113 = sbr.rel (%p111) target = $region50
        $region47: #{custom-call.13} parent=42 // loop_body
          %v117 = vld [vmem:[%s115] sm:%s108]
          %118 = vst [vmem:[%s116] sm:%s108] %v117
        $region48: #{custom-call.13} parent=42 // loop_footer
          %s114 = sadd.s32 1, %s110
        $region49: #{custom-call.13} parent=42 // loop_footer_branch
          %109 = sbr.rel target = $region45
        $region50: #{custom-call.13} parent=42 // loop_exit
          _
      $region43: #{custom-call.13} parent=34 // pred_fallthru
        _
    $region35: #{custom-call.13} parent=1 // pred_fallthru
      _
    %133 = vnop

// kernel: custom-call.12
$region0: #{custom-call.12}
  %s0 = inlined_call_operand.vmem [shape: f32[1,3,3], index: 0, kind: input, shape index: {}]
  %s1 = inlined_call_operand.vmem [shape: f32[1,3,3], index: 1, kind: output, shape index: {}]
  $region1: #{custom-call.12} parent=0
    #allocation0 [shape = 'u8[4096]{0}', space=vmem, size = 0x1000, scoped, tag = 'operand span for operand 0']
    #allocation1 [shape = 'u8[2048]{0}', space=vmem, size = 0x800, scoped, tag = 'packed  for operand 0']
    #allocation2 [shape = 'u8[4096]{0}', space=vmem, size = 0x1000, scoped, tag = 'operand span for operand 1']
    #allocation3 [shape = 'u8[2048]{0}', space=vmem, size = 0x800, scoped, tag = 'packed  for operand 1']
    #allocation4 [shape = 'f32[3,3]{1,0}', space=vmem, size = 0x1000, scoped, tag = 'rescaled input a']
    // Predicated region
    $region2: #{custom-call.12} parent=1 // pred_check
      _
    $region3: #{custom-call.12} parent=1 // pred_check_branch
      %3 = sbr.rel (0) target = $region5
    $region4: #{custom-call.12} parent=1 // pred_region
      // Predicated region
      $region6: #{custom-call.12} parent=4 // pred_check
        _
      $region7: #{custom-call.12} parent=4 // pred_check_branch
        %5 = sbr.rel target = $region9
      $region8: #{custom-call.12} parent=4 // pred_region
        // Predicated region
        $region21: #{custom-call.12} parent=8 // pred_check
          _
        $region22: #{custom-call.12} parent=8 // pred_check_branch
          %21 = sbr.rel (0) target = $region24
        $region23: #{custom-call.12} parent=8 // pred_region
          %s23 = ssub.s32 16, 1
          loop: start=0, step=1, limit=1
          $region25: #{custom-call.12} parent=23 // loop_pre_header
            _
          $region26: #{custom-call.12} parent=23 // loop_header
            %s25 = sphi 0, %s29
            %p26 = scmp.ge.s32.totalorder %s25, 1
            %s30 = sphi %s0, %s0
            %s31 = sphi [#allocation1], [#allocation1]
          $region27: #{custom-call.12} parent=23 // loop_header_branch
            %28 = sbr.rel (%p26) target = $region31
          $region28: #{custom-call.12} parent=23 // loop_body
            %v32 = vld [vmem:[%s30] sm:%s23]
            %33 = vst [vmem:[%s31] sm:%s23] %v32
          $region29: #{custom-call.12} parent=23 // loop_footer
            %s29 = sadd.s32 1, %s25
          $region30: #{custom-call.12} parent=23 // loop_footer_branch
            %24 = sbr.rel target = $region26
          $region31: #{custom-call.12} parent=23 // loop_exit
            _
        $region24: #{custom-call.12} parent=8 // pred_fallthru
          _
      $region9: #{custom-call.12} parent=4 // pred_fallthru
        _
      // Predicated region
      $region10: #{custom-call.12} parent=4 // pred_check
        _
      $region11: #{custom-call.12} parent=4 // pred_check_branch
        %7 = sbr.rel (0) target = $region13
      $region12: #{custom-call.12} parent=4 // pred_region
        %s9 = ssub.s32 16, 1
        loop: start=0, step=1, limit=1
        $region14: #{custom-call.12} parent=12 // loop_pre_header
          _
        $region15: #{custom-call.12} parent=12 // loop_header
          %s11 = sphi 0, %s15
          %p12 = scmp.ge.s32.totalorder %s11, 1
          %s16 = sphi %s0, %s0
          %s17 = sphi [#allocation1], [#allocation1]
        $region16: #{custom-call.12} parent=12 // loop_header_branch
          %14 = sbr.rel (%p12) target = $region20
        $region17: #{custom-call.12} parent=12 // loop_body
          %v18 = vld [vmem:[%s16] sm:%s9]
          %19 = vst [vmem:[%s17] sm:%s9] %v18
        $region18: #{custom-call.12} parent=12 // loop_footer
          %s15 = sadd.s32 1, %s11
        $region19: #{custom-call.12} parent=12 // loop_footer_branch
          %10 = sbr.rel target = $region15
        $region20: #{custom-call.12} parent=12 // loop_exit
          _
      $region13: #{custom-call.12} parent=4 // pred_fallthru
        _
    $region5: #{custom-call.12} parent=1 // pred_fallthru
      _
    %34 = vnop
    %s36 = sshll.u32 1, 4
    %s37 = ssub.s32 %s36, 1
    %v38 = vld [vmem:[#allocation1] sm:%s37]
    %39 = vst [vmem:[#allocation0] sm:%s37] %v38
    %v40 = vlaneseq
    %v41 = vand.u32 %v40, 127
    %vm42 = vcmp.lt.s32.totalorder %v41, 3
    %v43 = vlaneseq
    %v44 = vshrl.u32 %v43, 7
    %vm46 = vcmp.eq.s32.totalorder %v44, %v41
    %v47 = vld [vmem:[#allocation0] sm:$0xff]
    %v48 = vsel %vm46, %v47, 0.0
    %49 = vadd.xlane.f32.xlu0 %v48
    %v50 = vpop.xlane.xlu0 %49
    %vm51 = vcmp.le.s32.totalorder %v44, %v41
    %vm52 = vmand %vm51, %vm42
    %v53 = vsel %vm52, %v47, 0.0
    %v54 = vrcp.pop %v50
    %v55 = vmul.f32 %v53, %v54
    %56 = vst [vmem:[#allocation4] sm:$0xff] %v55
    %v57 = vlaneseq
    %v58 = vand.u32 %v57, 127
    %v59 = vlaneseq
    %v60 = vshrl.u32 %v59, 7
    %vm62 = vcmp.eq.s32.totalorder %v58, %v60
    %v63 = vlaneseq
    %v64 = vand.u32 %v63, 127
    %vm65 = vcmp.eq.s32.totalorder %v64, 2
    %v66 = vsel %vm65, 1.0, -1.0
    %v67 = vsel %vm62, %v66, 0.0
    %s68 = scalar_lea.vmem [#allocation4], 1
    %v69 = vld [vmem:[%s68] ss:$0 sm:$0xff]
    %v70 = vxor.u32 %v69, 2147483648
    %v71 = vlaneseq
    %v72 = vand.u32 %v71, 127
    %vm73 = vcmp.eq.s32.totalorder %v72, 1
    %v74 = vmul.f32 %v70, %v67
    %75 = vadd.xlane.f32.xlu0 %v74
    %v76 = vpop.xlane.xlu0 %75
    %v77 = vsel %vm73, %v76, %v67
    %v78 = vld [vmem:[#allocation4] ss:$0 sm:$0xff]
    %v79 = vxor.u32 %v78, 2147483648
    %v80 = vlaneseq
    %v81 = vand.u32 %v80, 127
    %vm82 = vcmp.eq.s32.totalorder %v81, 0
    %v83 = vmul.f32 %v79, %v77
    %84 = vadd.xlane.f32.xlu0 %v83
    %v85 = vpop.xlane.xlu0 %84
    %v86 = vsel %vm82, %v85, %v77
    %v87 = vrcp.pop %v50
    %v88 = vmul.f32 %v86, %v87
    %vm89 = vweird.f32 %v50
    %v90 = vsel %vm89, %v86, %v88
    %91 = vst [vmem:[#allocation2] sm:$0xff] %v90
    %s93 = sshll.u32 1, 4
    %s94 = ssub.s32 %s93, 1
    %v96 = vld [vmem:[#allocation2] sm:%s94]
    %s97 = sshll.u32 1, 4
    %s98 = ssub.s32 %s97, 1
    %99 = vst [vmem:[#allocation3] sm:%s98] %v96
    // Predicated region
    $region32: #{custom-call.12} parent=1 // pred_check
      _
    $region33: #{custom-call.12} parent=1 // pred_check_branch
      %101 = sbr.rel (0) target = $region35
    $region34: #{custom-call.12} parent=1 // pred_region
      // Predicated region
      $region36: #{custom-call.12} parent=34 // pred_check
        _
      $region37: #{custom-call.12} parent=34 // pred_check_branch
        %103 = sbr.rel target = $region39
      $region38: #{custom-call.12} parent=34 // pred_region
        // Predicated region
        $region51: #{custom-call.12} parent=38 // pred_check
          _
        $region52: #{custom-call.12} parent=38 // pred_check_branch
          %119 = sbr.rel (0) target = $region54
        $region53: #{custom-call.12} parent=38 // pred_region
          %s121 = ssub.s32 16, 1
          loop: start=0, step=1, limit=1
          $region55: #{custom-call.12} parent=53 // loop_pre_header
            _
          $region56: #{custom-call.12} parent=53 // loop_header
            %s123 = sphi 0, %s127
            %p124 = scmp.ge.s32.totalorder %s123, 1
            %s128 = sphi [#allocation3], [#allocation3]
            %s129 = sphi %s1, %s1
          $region57: #{custom-call.12} parent=53 // loop_header_branch
            %126 = sbr.rel (%p124) target = $region61
          $region58: #{custom-call.12} parent=53 // loop_body
            %v130 = vld [vmem:[%s128] sm:%s121]
            %131 = vst [vmem:[%s129] sm:%s121] %v130
          $region59: #{custom-call.12} parent=53 // loop_footer
            %s127 = sadd.s32 1, %s123
          $region60: #{custom-call.12} parent=53 // loop_footer_branch
            %122 = sbr.rel target = $region56
          $region61: #{custom-call.12} parent=53 // loop_exit
            _
        $region54: #{custom-call.12} parent=38 // pred_fallthru
          _
      $region39: #{custom-call.12} parent=34 // pred_fallthru
        _
      // Predicated region
      $region40: #{custom-call.12} parent=34 // pred_check
        _
      $region41: #{custom-call.12} parent=34 // pred_check_branch
        %105 = sbr.rel (0) target = $region43
      $region42: #{custom-call.12} parent=34 // pred_region
        %s107 = ssub.s32 16, 1
        loop: start=0, step=1, limit=1
        $region44: #{custom-call.12} parent=42 // loop_pre_header
          _
        $region45: #{custom-call.12} parent=42 // loop_header
          %s109 = sphi 0, %s113
          %p110 = scmp.ge.s32.totalorder %s109, 1
          %s114 = sphi [#allocation3], [#allocation3]
          %s115 = sphi %s1, %s1
        $region46: #{custom-call.12} parent=42 // loop_header_branch
          %112 = sbr.rel (%p110) target = $region50
        $region47: #{custom-call.12} parent=42 // loop_body
          %v116 = vld [vmem:[%s114] sm:%s107]
          %117 = vst [vmem:[%s115] sm:%s107] %v116
        $region48: #{custom-call.12} parent=42 // loop_footer
          %s113 = sadd.s32 1, %s109
        $region49: #{custom-call.12} parent=42 // loop_footer_branch
          %108 = sbr.rel target = $region45
        $region50: #{custom-call.12} parent=42 // loop_exit
          _
      $region43: #{custom-call.12} parent=34 // pred_fallthru
        _
    $region35: #{custom-call.12} parent=1 // pred_fallthru
      _
    %132 = vnop

// kernel: forward.36
$region0: #{forward.36}
  #allocation0 [shape = 'u32[]', space=smem, size = 0x4, offset = 0x4, fixed_abs, tag = 'smem constant byte address 0x4 - core index']
  #allocation1 [shape = 'u32[144,128]{1,0:T(1,128)}', space=vmem, size = 0x12000, scoped, tag = 'internal scratch']
  %s0 = inlined_call_operand.vmem [shape: bf16[32,384], index: 0, kind: input, shape index: {}]
  %s1 = inlined_call_operand.vmem [shape: bf16[384,160], index: 1, kind: input, shape index: {}]
  %s2 = inlined_call_operand.vmem [shape: f32[1,160], index: 2, kind: input, shape index: {}]
  %s3 = inlined_call_operand.vmem [shape: f32[32,160], index: 3, kind: output, shape index: {}]
  %s4 = sld [smem:[#allocation0]]
  $region22: #{forward.36} parent=0
    _
  %s6 = ssub.s32 1, %s4
  %s7 = scalar_select 0, %s6, %s4
  // Predicated region
  $region2: #{forward.36} parent=0 // pred_check
    _
  $region3: #{forward.36} parent=0 // pred_check_branch
    %9 = sbr.rel (0) target = $region5
  $region4: #{forward.36} parent=0 // pred_region
    _
  $region5: #{forward.36} parent=0 // pred_fallthru
    _
  // Predicated region
  $region6: #{forward.36} parent=0 // pred_check
    _
  $region7: #{forward.36} parent=0 // pred_check_branch
    %11 = sbr.rel (0) target = $region9
  $region8: #{forward.36} parent=0 // pred_region
    _
  $region9: #{forward.36} parent=0 // pred_fallthru
    _
  // Predicated region
  $region10: #{forward.36} parent=0 // pred_check
    _
  $region11: #{forward.36} parent=0 // pred_check_branch
    %13 = sbr.rel (0) target = $region13
  $region12: #{forward.36} parent=0 // pred_region
    _
  $region13: #{forward.36} parent=0 // pred_fallthru
    _
  %v15 = vld [vmem:[%s0] sm:$0xff]
  %v16 = vld [vmem:[%s0 + $0x8] sm:$0xf]
  %v17 = vld [vmem:[%s0 + $0xc] sm:$0xff]
  %v18 = vld [vmem:[%s0 + $0x14] sm:$0xf]
  %v19 = vld [vmem:[%s0 + $0x18] sm:$0xff]
  %v20 = vld [vmem:[%s0 + $0x20] sm:$0xf]
  %v21 = vld [vmem:[%s0 + $0x24] sm:$0xff]
  %v22 = vld [vmem:[%s0 + $0x2c] sm:$0xf]
  %v23 = vld [vmem:[%s1] sm:$0xff]
  %v24 = vld [vmem:[%s1 + $0x8] sm:$0xff]
  %v25 = vld [vmem:[%s1 + $0x10] sm:$0xff]
  %v26 = vld [vmem:[%s1 + $0x18] sm:$0xff]
  %v27 = vld [vmem:[%s1 + $0x20] sm:$0xff]
  %v28 = vld [vmem:[%s1 + $0x28] sm:$0xff]
  %v29 = vld [vmem:[%s1 + $0x30] sm:$0xff]
  %v30 = vld [vmem:[%s1 + $0x38] sm:$0xff]
  %v31 = vld [vmem:[%s1 + $0x40] sm:$0xff]
  %v32 = vld [vmem:[%s1 + $0x48] sm:$0xff]
  %v33 = vld [vmem:[%s1 + $0x50] sm:$0xff]
  %v34 = vld [vmem:[%s1 + $0x58] sm:$0xff]
  %v35 = vld [vmem:[%s1 + $0x60] sm:$0xff]
  %v36 = vld [vmem:[%s1 + $0x68] sm:$0xff]
  %v37 = vld [vmem:[%s1 + $0x70] sm:$0xff]
  %v38 = vld [vmem:[%s1 + $0x78] sm:$0xff]
  %v39 = vld [vmem:[%s1 + $0x80] sm:$0xff]
  %v40 = vld [vmem:[%s1 + $0x88] sm:$0xff]
  %v41 = vld [vmem:[%s1 + $0x90] sm:$0xff]
  %v42 = vld [vmem:[%s1 + $0x98] sm:$0xff]
  %v43 = vld [vmem:[%s1 + $0xa0] sm:$0xff]
  %v44 = vld [vmem:[%s1 + $0xa8] sm:$0xff]
  %v45 = vld [vmem:[%s1 + $0xb0] sm:$0xff]
  %v46 = vld [vmem:[%s1 + $0xb8] sm:$0xff]
  %v47 = vld [vmem:[%s1 + $0xc0] sm:$0xff]
  %v48 = vld [vmem:[%s1 + $0xc8] sm:$0xff]
  %v49 = vld [vmem:[%s1 + $0xd0] sm:$0xff]
  %v50 = vld [vmem:[%s1 + $0xd8] sm:$0xff]
  %v51 = vld [vmem:[%s1 + $0xe0] sm:$0xff]
  %v52 = vld [vmem:[%s1 + $0xe8] sm:$0xff]
  %v53 = vld [vmem:[%s1 + $0xf0] sm:$0xff]
  %v54 = vld [vmem:[%s1 + $0xf8] sm:$0xff]
  %v55 = vld [vmem:[%s1 + $0x100] sm:$0xff]
  %v56 = vld [vmem:[%s1 + $0x108] sm:$0xff]
  %v57 = vld [vmem:[%s1 + $0x110] sm:$0xff]
  %v58 = vld [vmem:[%s1 + $0x118] sm:$0xff]
  %v59 = vld [vmem:[%s1 + $0x120] sm:$0xff]
  %v60 = vld [vmem:[%s1 + $0x128] sm:$0xff]
  %v61 = vld [vmem:[%s1 + $0x130] sm:$0xff]
  %v62 = vld [vmem:[%s1 + $0x138] sm:$0xff]
  %v63 = vld [vmem:[%s1 + $0x140] sm:$0xff]
  %v64 = vld [vmem:[%s1 + $0x148] sm:$0xff]
  %v65 = vld [vmem:[%s1 + $0x150] sm:$0xff]
  %v66 = vld [vmem:[%s1 + $0x158] sm:$0xff]
  %v67 = vld [vmem:[%s1 + $0x160] sm:$0xff]
  %v68 = vld [vmem:[%s1 + $0x168] sm:$0xff]
  %v69 = vld [vmem:[%s1 + $0x170] sm:$0xff]
  %v70 = vld [vmem:[%s1 + $0x178] sm:$0xff]
  %v71 = vld [vmem:[%s2] sm:$0x3]
  %v73 = vlaneseq
  %v74 = vshrl.u32 %v73, 7
  %v75 = vsub.s32 0, %v74
  %v76 = vrot.slane %v71, %v75
  %v77 = vlaneseq
  %v78 = vshrl.u32 %v77, 7
  %v79 = vsub.s32 1, %v78
  %v80 = vrot.slane %v71, %v79
  %v91 = vunpack.c.l.b16 %v15
  %v92 = vunpack.c.h.b16 %v15
  %v93 = vunpack.c.l.b16 %v16
  %v94 = vunpack.c.l.b16 %v17
  %v95 = vunpack.c.h.b16 %v17
  %v96 = vunpack.c.l.b16 %v18
  %v97 = vunpack.c.l.b16 %v19
  %v98 = vunpack.c.h.b16 %v19
  %v99 = vunpack.c.l.b16 %v20
  %v100 = vunpack.c.l.b16 %v21
  %v101 = vunpack.c.h.b16 %v21
  %v102 = vunpack.c.l.b16 %v22
  %v103 = vpack.c.b16 %v94, %v91
  %v104 = vpack.c.b16 %v95, %v92
  %v105 = vpack.c.b16 %v96, %v93
  %v106 = vpack.c.b16 %v100, %v97
  %v107 = vpack.c.b16 %v101, %v98
  %v108 = vpack.c.b16 %v102, %v99
  %v163 = vunpack.c.l.b16 %v23
  %v164 = vunpack.c.h.b16 %v23
  %v165 = vunpack.c.l.b16 %v24
  %v166 = vunpack.c.h.b16 %v24
  %v167 = vunpack.c.l.b16 %v25
  %v168 = vunpack.c.h.b16 %v25
  %v169 = vunpack.c.l.b16 %v26
  %v170 = vunpack.c.h.b16 %v26
  %v171 = vunpack.c.l.b16 %v27
  %v172 = vunpack.c.h.b16 %v27
  %v173 = vunpack.c.l.b16 %v28
  %v174 = vunpack.c.h.b16 %v28
  %v175 = vunpack.c.l.b16 %v29
  %v176 = vunpack.c.h.b16 %v29
  %v177 = vunpack.c.l.b16 %v30
  %v178 = vunpack.c.h.b16 %v30
  %v179 = vunpack.c.l.b16 %v31
  %v180 = vunpack.c.h.b16 %v31
  %v181 = vunpack.c.l.b16 %v32
  %v182 = vunpack.c.h.b16 %v32
  %v183 = vunpack.c.l.b16 %v33
  %v184 = vunpack.c.h.b16 %v33
  %v185 = vunpack.c.l.b16 %v34
  %v186 = vunpack.c.h.b16 %v34
  %v187 = vunpack.c.l.b16 %v35
  %v188 = vunpack.c.h.b16 %v35
  %v189 = vunpack.c.l.b16 %v36
  %v190 = vunpack.c.h.b16 %v36
  %v191 = vunpack.c.l.b16 %v37
  %v192 = vunpack.c.h.b16 %v37
  %v193 = vunpack.c.l.b16 %v38
  %v194 = vunpack.c.h.b16 %v38
  %v195 = vunpack.c.l.b16 %v39
  %v196 = vunpack.c.h.b16 %v39
  %v197 = vunpack.c.l.b16 %v40
  %v198 = vunpack.c.h.b16 %v40
  %v199 = vunpack.c.l.b16 %v41
  %v200 = vunpack.c.h.b16 %v41
  %v201 = vunpack.c.l.b16 %v42
  %v202 = vunpack.c.h.b16 %v42
  %v203 = vunpack.c.l.b16 %v43
  %v204 = vunpack.c.h.b16 %v43
  %v205 = vunpack.c.l.b16 %v44
  %v206 = vunpack.c.h.b16 %v44
  %v207 = vunpack.c.l.b16 %v45
  %v208 = vunpack.c.h.b16 %v45
  %v209 = vunpack.c.l.b16 %v46
  %v210 = vunpack.c.h.b16 %v46
  %v211 = vunpack.c.l.b16 %v47
  %v212 = vunpack.c.h.b16 %v47
  %v213 = vunpack.c.l.b16 %v48
  %v214 = vunpack.c.h.b16 %v48
  %v215 = vunpack.c.l.b16 %v49
  %v216 = vunpack.c.h.b16 %v49
  %v217 = vunpack.c.l.b16 %v50
  %v218 = vunpack.c.h.b16 %v50
  %v219 = vunpack.c.l.b16 %v51
  %v220 = vunpack.c.h.b16 %v51
  %v221 = vunpack.c.l.b16 %v52
  %v222 = vunpack.c.h.b16 %v52
  %v223 = vunpack.c.l.b16 %v53
  %v224 = vunpack.c.h.b16 %v53
  %v225 = vunpack.c.l.b16 %v54
  %v226 = vunpack.c.h.b16 %v54
  %v227 = vunpack.c.l.b16 %v55
  %v228 = vunpack.c.h.b16 %v55
  %v229 = vunpack.c.l.b16 %v56
  %v230 = vunpack.c.h.b16 %v56
  %v231 = vunpack.c.l.b16 %v57
  %v232 = vunpack.c.h.b16 %v57
  %v233 = vunpack.c.l.b16 %v58
  %v234 = vunpack.c.h.b16 %v58
  %v235 = vunpack.c.l.b16 %v59
  %v236 = vunpack.c.h.b16 %v59
  %v237 = vunpack.c.l.b16 %v60
  %v238 = vunpack.c.h.b16 %v60
  %v239 = vunpack.c.l.b16 %v61
  %v240 = vunpack.c.h.b16 %v61
  %v241 = vunpack.c.l.b16 %v62
  %v242 = vunpack.c.h.b16 %v62
  %v243 = vunpack.c.l.b16 %v63
  %v244 = vunpack.c.h.b16 %v63
  %v245 = vunpack.c.l.b16 %v64
  %v246 = vunpack.c.h.b16 %v64
  %v247 = vunpack.c.l.b16 %v65
  %v248 = vunpack.c.h.b16 %v65
  %v249 = vunpack.c.l.b16 %v66
  %v250 = vunpack.c.h.b16 %v66
  %v251 = vunpack.c.l.b16 %v67
  %v252 = vunpack.c.h.b16 %v67
  %v253 = vunpack.c.l.b16 %v68
  %v254 = vunpack.c.h.b16 %v68
  %v255 = vunpack.c.l.b16 %v69
  %v256 = vunpack.c.h.b16 %v69
  %v257 = vunpack.c.l.b16 %v70
  %v258 = vunpack.c.h.b16 %v70
  %v259 = vpack.c.b16 %v165, %v163
  %v260 = vpack.c.b16 %v166, %v164
  %v261 = vpack.c.b16 %v169, %v167
  %v262 = vpack.c.b16 %v170, %v168
  %v263 = vpack.c.b16 %v173, %v171
  %v264 = vpack.c.b16 %v174, %v172
  %v265 = vpack.c.b16 %v177, %v175
  %v266 = vpack.c.b16 %v178, %v176
  %v267 = vpack.c.b16 %v181, %v179
  %v268 = vpack.c.b16 %v182, %v180
  %v269 = vpack.c.b16 %v185, %v183
  %v270 = vpack.c.b16 %v186, %v184
  %v271 = vpack.c.b16 %v189, %v187
  %v272 = vpack.c.b16 %v190, %v188
  %v273 = vpack.c.b16 %v193, %v191
  %v274 = vpack.c.b16 %v194, %v192
  %v275 = vpack.c.b16 %v197, %v195
  %v276 = vpack.c.b16 %v198, %v196
  %v277 = vpack.c.b16 %v201, %v199
  %v278 = vpack.c.b16 %v202, %v200
  %v279 = vpack.c.b16 %v205, %v203
  %v280 = vpack.c.b16 %v206, %v204
  %v281 = vpack.c.b16 %v209, %v207
  %v282 = vpack.c.b16 %v210, %v208
  %v283 = vpack.c.b16 %v213, %v211
  %v284 = vpack.c.b16 %v214, %v212
  %v285 = vpack.c.b16 %v217, %v215
  %v286 = vpack.c.b16 %v218, %v216
  %v287 = vpack.c.b16 %v221, %v219
  %v288 = vpack.c.b16 %v222, %v220
  %v289 = vpack.c.b16 %v225, %v223
  %v290 = vpack.c.b16 %v226, %v224
  %v291 = vpack.c.b16 %v229, %v227
  %v292 = vpack.c.b16 %v230, %v228
  %v293 = vpack.c.b16 %v233, %v231
  %v294 = vpack.c.b16 %v234, %v232
  %v295 = vpack.c.b16 %v237, %v235
  %v296 = vpack.c.b16 %v238, %v236
  %v297 = vpack.c.b16 %v241, %v239
  %v298 = vpack.c.b16 %v242, %v240
  %v299 = vpack.c.b16 %v245, %v243
  %v300 = vpack.c.b16 %v246, %v244
  %v301 = vpack.c.b16 %v249, %v247
  %v302 = vpack.c.b16 %v250, %v248
  %v303 = vpack.c.b16 %v253, %v251
  %v304 = vpack.c.b16 %v254, %v252
  %v305 = vpack.c.b16 %v257, %v255
  %v306 = vpack.c.b16 %v258, %v256
  %355 = vmatprep.subr.bf16.mxu0 %v274
  %356 = vmatpush1.bf16.msra.mxu0 %v273
  %357 = vmatprep.subr.bf16.mxu0 %v272
  %358 = vmatpush1.bf16.msra.mxu0 %v271
  %359 = vmatprep.subr.bf16.mxu0 %v270
  %360 = vmatpush1.bf16.msra.mxu0 %v269
  %361 = vmatprep.subr.bf16.mxu0 %v268
  %362 = vmatpush1.bf16.msra.mxu0 %v267
  %363 = vmatprep.subr.bf16.mxu0 %v266
  %364 = vmatpush1.bf16.msra.mxu0 %v265
  %365 = vmatprep.subr.bf16.mxu0 %v264
  %366 = vmatpush1.bf16.msra.mxu0 %v263
  %367 = vmatprep.subr.bf16.mxu0 %v262
  %368 = vmatpush1.bf16.msra.mxu0 %v261
  %369 = vmatprep.subr.bf16.mxu0 %v260
  %370 = vmatpush1.bf16.msra.mxu0 %v259
  %371 = vmatprep.subr.bf16.mxu0 %v290
  %372 = vmatpush2.bf16.msra.mxu0 %v289
  %373 = vmatprep.subr.bf16.mxu0 %v288
  %374 = vmatpush2.bf16.msra.mxu0 %v287
  %375 = vmatprep.subr.bf16.mxu0 %v286
  %376 = vmatpush2.bf16.msra.mxu0 %v285
  %377 = vmatprep.subr.bf16.mxu0 %v284
  %378 = vmatpush2.bf16.msra.mxu0 %v283
  %379 = vmatprep.subr.bf16.mxu0 %v282
  %380 = vmatpush2.bf16.msra.mxu0 %v281
  %381 = vmatprep.subr.bf16.mxu0 %v280
  %382 = vmatpush2.bf16.msra.mxu0 %v279
  %383 = vmatprep.subr.bf16.mxu0 %v278
  %384 = vmatpush2.bf16.msra.mxu0 %v277
  %385 = vmatprep.subr.bf16.mxu0 %v276
  %386 = vmatpush2.bf16.msra.mxu0 %v275
  %387 = vmatprep.mubr.bf16.mxu0 %v104
  %388 = vmatmul.mubr.bf16.gmra.mxu0 %v103
  %v389 = vpop.f32.mrf.mxu0
  %v390 = vadd.f32 %v76, %v389
  %v391 = vpop.f32.mrf.mxu0
  %v392 = vadd.f32 %v80, %v391
  %v393 = vpop.f32.mrf.mxu0
  %v394 = vadd.f32 %v76, %v393
  %v395 = vpop.f32.mrf.mxu0
  %v396 = vadd.f32 %v80, %v395
  %397 = vmatprep.mubr.bf16.mxu0 %v107
  %398 = vmatmul.mubr.bf16.gmra.mxu0 %v106
  %v399 = vpop.f32.mrf.mxu0
  %v400 = vadd.f32 %v76, %v399
  %v401 = vpop.f32.mrf.mxu0
  %v402 = vadd.f32 %v80, %v401
  %v403 = vpop.f32.mrf.mxu0
  %v404 = vadd.f32 %v76, %v403
  %v405 = vpop.f32.mrf.mxu0
  %v406 = vadd.f32 %v80, %v405
  %407 = vdwg.mxu0
  %408 = vmatprep.subr.bf16.mxu0 %v306
  %409 = vmatpush1.bf16.msra.mxu0 %v305
  %410 = vmatprep.subr.bf16.mxu0 %v304
  %411 = vmatpush1.bf16.msra.mxu0 %v303
  %412 = vmatprep.subr.bf16.mxu0 %v302
  %413 = vmatpush1.bf16.msra.mxu0 %v301
  %414 = vmatprep.subr.bf16.mxu0 %v300
  %415 = vmatpush1.bf16.msra.mxu0 %v299
  %416 = vmatprep.subr.bf16.mxu0 %v298
  %417 = vmatpush1.bf16.msra.mxu0 %v297
  %418 = vmatprep.subr.bf16.mxu0 %v296
  %419 = vmatpush1.bf16.msra.mxu0 %v295
  %420 = vmatprep.subr.bf16.mxu0 %v294
  %421 = vmatpush1.bf16.msra.mxu0 %v293
  %422 = vmatprep.subr.bf16.mxu0 %v292
  %423 = vmatpush1.bf16.msra.mxu0 %v291
  %424 = vmatprep.subr.bf16.mxu0 0
  %425 = vmatpush2.bf16.msra.mxu0 0
  %426 = vmatprep.subr.bf16.mxu0 0
  %427 = vmatpush2.bf16.msra.mxu0 0
  %428 = vmatprep.subr.bf16.mxu0 0
  %429 = vmatpush2.bf16.msra.mxu0 0
  %430 = vmatprep.subr.bf16.mxu0 0
  %431 = vmatpush2.bf16.msra.mxu0 0
  %432 = vmatprep.subr.bf16.mxu0 0
  %433 = vmatpush2.bf16.msra.mxu0 0
  %434 = vmatprep.subr.bf16.mxu0 0
  %435 = vmatpush2.bf16.msra.mxu0 0
  %436 = vmatprep.subr.bf16.mxu0 0
  %437 = vmatpush2.bf16.msra.mxu0 0
  %438 = vmatprep.subr.bf16.mxu0 0
  %439 = vmatpush2.bf16.msra.mxu0 0
  %440 = vmatprep.mubr.bf16.mxu0 0
  %441 = vmatmul.mubr.bf16.gmra.mxu0 %v105
  %v442 = vpop.f32.mrf.mxu0
  %v443 = vadd.f32 %v390, %v442
  %v444 = vpop.f32.mrf.mxu0
  %v445 = vadd.f32 %v392, %v444
  %v446 = vpop.f32.mrf.mxu0
  %v447 = vadd.f32 %v394, %v446
  %v448 = vpop.f32.mrf.mxu0
  %v449 = vadd.f32 %v396, %v448
  %450 = vmatprep.mubr.bf16.mxu0 0
  %451 = vmatmul.mubr.bf16.gmra.mxu0 %v108
  %v452 = vpop.f32.mrf.mxu0
  %v453 = vadd.f32 %v400, %v452
  %v454 = vpop.f32.mrf.mxu0
  %v455 = vadd.f32 %v402, %v454
  %v456 = vpop.f32.mrf.mxu0
  %v457 = vadd.f32 %v404, %v456
  %v458 = vpop.f32.mrf.mxu0
  %v459 = vadd.f32 %v406, %v458
  %460 = vdwg.mxu0
  %461 = vst [vmem:[%s3] sm:$0xff] %v443
  %vm462 = vcmask 261120
  %463 = vst.msk [vmem:[%s3 + $0x8] sm:$0xff] %vm462, %v445
  %464 = vst [vmem:[%s3 + $0x10] sm:$0xff] %v447
  %465 = vst.msk [vmem:[%s3 + $0x18] sm:$0xff] %vm462, %v449
  %466 = vst [vmem:[%s3 + $0x20] sm:$0xff] %v453
  %467 = vst.msk [vmem:[%s3 + $0x28] sm:$0xff] %vm462, %v455
  %468 = vst [vmem:[%s3 + $0x30] sm:$0xff] %v457
  %469 = vst.msk [vmem:[%s3 + $0x38] sm:$0xff] %vm462, %v459
  // Predicated region
  $region14: #{forward.36} parent=0 // pred_check
    _
  $region15: #{forward.36} parent=0 // pred_check_branch
    %471 = sbr.rel (0) target = $region17
  $region16: #{forward.36} parent=0 // pred_region
    _
  $region17: #{forward.36} parent=0 // pred_fallthru
    _
  // Predicated region
  $region18: #{forward.36} parent=0 // pred_check
    _
  $region19: #{forward.36} parent=0 // pred_check_branch
    %473 = sbr.rel (0) target = $region21
  $region20: #{forward.36} parent=0 // pred_region
    _
  $region21: #{forward.36} parent=0 // pred_fallthru
    _

// kernel: forward.38
$region0: #{forward.38}
  #allocation0 [shape = 'u32[]', space=smem, size = 0x4, offset = 0x4, fixed_abs, tag = 'smem constant byte address 0x4 - core index']
  #allocation1 [shape = 'u32[144,128]{1,0:T(1,128)}', space=vmem, size = 0x12000, scoped, tag = 'internal scratch']
  %s0 = inlined_call_operand.vmem [shape: bf16[32,32], index: 0, kind: input, shape index: {}]
  %s1 = inlined_call_operand.vmem [shape: bf16[32,384], index: 1, kind: input, shape index: {}]
  %s2 = inlined_call_operand.vmem [shape: f32[1,384], index: 2, kind: input, shape index: {}]
  %s3 = inlined_call_operand.vmem [shape: f32[32,384], index: 3, kind: output, shape index: {}]
  %s4 = sld [smem:[#allocation0]]
  $region22: #{forward.38} parent=0
    _
  %s6 = ssub.s32 1, %s4
  %s7 = scalar_select 0, %s6, %s4
  // Predicated region
  $region2: #{forward.38} parent=0 // pred_check
    _
  $region3: #{forward.38} parent=0 // pred_check_branch
    %9 = sbr.rel (0) target = $region5
  $region4: #{forward.38} parent=0 // pred_region
    _
  $region5: #{forward.38} parent=0 // pred_fallthru
    _
  // Predicated region
  $region6: #{forward.38} parent=0 // pred_check
    _
  $region7: #{forward.38} parent=0 // pred_check_branch
    %11 = sbr.rel (0) target = $region9
  $region8: #{forward.38} parent=0 // pred_region
    _
  $region9: #{forward.38} parent=0 // pred_fallthru
    _
  // Predicated region
  $region10: #{forward.38} parent=0 // pred_check
    _
  $region11: #{forward.38} parent=0 // pred_check_branch
    %13 = sbr.rel (0) target = $region13
  $region12: #{forward.38} parent=0 // pred_region
    _
  $region13: #{forward.38} parent=0 // pred_fallthru
    _
  %v15 = vld [vmem:[%s0] sm:$0xf]
  %v16 = vld [vmem:[%s0 + $0x4] sm:$0xf]
  %v17 = vld [vmem:[%s0 + $0x8] sm:$0xf]
  %v18 = vld [vmem:[%s0 + $0xc] sm:$0xf]
  %v19 = vld [vmem:[%s1] sm:$0xff]
  %v20 = vld [vmem:[%s1 + $0x8] sm:$0xf]
  %v21 = vld [vmem:[%s1 + $0xc] sm:$0xff]
  %v22 = vld [vmem:[%s1 + $0x14] sm:$0xf]
  %v23 = vld [vmem:[%s1 + $0x18] sm:$0xff]
  %v24 = vld [vmem:[%s1 + $0x20] sm:$0xf]
  %v25 = vld [vmem:[%s1 + $0x24] sm:$0xff]
  %v26 = vld [vmem:[%s1 + $0x2c] sm:$0xf]
  %v27 = vld [vmem:[%s2] sm:$0x7]
  %v29 = vlaneseq
  %v30 = vshrl.u32 %v29, 7
  %v31 = vsub.s32 0, %v30
  %v32 = vrot.slane %v27, %v31
  %v33 = vlaneseq
  %v34 = vshrl.u32 %v33, 7
  %v35 = vsub.s32 1, %v34
  %v36 = vrot.slane %v27, %v35
  %v37 = vlaneseq
  %v38 = vshrl.u32 %v37, 7
  %v39 = vsub.s32 2, %v38
  %v40 = vrot.slane %v27, %v39
  %v48 = vunpack.c.l.b16 %v15
  %v49 = vunpack.c.l.b16 %v16
  %v50 = vunpack.c.l.b16 %v17
  %v51 = vunpack.c.l.b16 %v18
  %v52 = vpack.c.b16 %v49, %v48
  %v53 = vpack.c.b16 %v51, %v50
  %v62 = vunpack.c.l.b16 %v19
  %v63 = vunpack.c.h.b16 %v19
  %v64 = vunpack.c.l.b16 %v20
  %v65 = vunpack.c.l.b16 %v21
  %v66 = vunpack.c.h.b16 %v21
  %v67 = vunpack.c.l.b16 %v22
  %v68 = vunpack.c.l.b16 %v23
  %v69 = vunpack.c.h.b16 %v23
  %v70 = vunpack.c.l.b16 %v24
  %v71 = vunpack.c.l.b16 %v25
  %v72 = vunpack.c.h.b16 %v25
  %v73 = vunpack.c.l.b16 %v26
  %v74 = vpack.c.b16 %v65, %v62
  %v75 = vpack.c.b16 %v66, %v63
  %v76 = vpack.c.b16 %v67, %v64
  %v77 = vpack.c.b16 %v71, %v68
  %v78 = vpack.c.b16 %v72, %v69
  %v79 = vpack.c.b16 %v73, %v70
  %vm86 = vcmask 261120
  %v88 = vsel %vm86, %v52, 0
  %v91 = vsel %vm86, %v53, 0
  %93 = vmatprep.subr.bf16.mxu0 0
  %94 = vmatpush1.bf16.msra.mxu0 0
  %95 = vmatprep.subr.bf16.mxu0 0
  %96 = vmatpush1.bf16.msra.mxu0 0
  %97 = vmatprep.subr.bf16.mxu0 0
  %98 = vmatpush1.bf16.msra.mxu0 0
  %99 = vmatprep.subr.bf16.mxu0 0
  %100 = vmatpush1.bf16.msra.mxu0 0
  %101 = vmatprep.subr.bf16.mxu0 0
  %102 = vmatpush1.bf16.msra.mxu0 0
  %103 = vmatprep.subr.bf16.mxu0 0
  %104 = vmatpush1.bf16.msra.mxu0 0
  %105 = vmatprep.subr.bf16.mxu0 %v78
  %106 = vmatpush1.bf16.msra.mxu0 %v77
  %107 = vmatprep.subr.bf16.mxu0 %v75
  %108 = vmatpush1.bf16.msra.mxu0 %v74
  %109 = vmatprep.subr.bf16.mxu0 0
  %110 = vmatpush2.bf16.msra.mxu0 0
  %111 = vmatprep.subr.bf16.mxu0 0
  %112 = vmatpush2.bf16.msra.mxu0 0
  %113 = vmatprep.subr.bf16.mxu0 0
  %114 = vmatpush2.bf16.msra.mxu0 0
  %115 = vmatprep.subr.bf16.mxu0 0
  %116 = vmatpush2.bf16.msra.mxu0 0
  %117 = vmatprep.subr.bf16.mxu0 0
  %118 = vmatpush2.bf16.msra.mxu0 0
  %119 = vmatprep.subr.bf16.mxu0 0
  %120 = vmatpush2.bf16.msra.mxu0 0
  %121 = vmatprep.subr.bf16.mxu0 0
  %122 = vmatpush2.bf16.msra.mxu0 0
  %123 = vmatprep.subr.bf16.mxu0 0
  %124 = vmatpush2.bf16.msra.mxu0 0
  %125 = vmatprep.mubr.bf16.mxu0 0
  %126 = vmatmul.mubr.bf16.gmra.mxu0 %v88
  %v127 = vpop.f32.mrf.mxu0
  %v128 = vadd.f32 %v32, %v127
  %v129 = vpop.f32.mrf.mxu0
  %v130 = vadd.f32 %v36, %v129
  %v131 = vpop.f32.mrf.mxu0
  %v132 = vadd.f32 %v32, %v131
  %v133 = vpop.f32.mrf.mxu0
  %v134 = vadd.f32 %v36, %v133
  %135 = vmatprep.mubr.bf16.mxu0 0
  %136 = vmatmul.mubr.bf16.gmra.mxu0 %v91
  %v137 = vpop.f32.mrf.mxu0
  %v138 = vadd.f32 %v32, %v137
  %v139 = vpop.f32.mrf.mxu0
  %v140 = vadd.f32 %v36, %v139
  %v141 = vpop.f32.mrf.mxu0
  %v142 = vadd.f32 %v32, %v141
  %v143 = vpop.f32.mrf.mxu0
  %v144 = vadd.f32 %v36, %v143
  %145 = vdwg.mxu0
  %146 = vmatprep.subr.bf16.mxu0 0
  %147 = vmatpush1.bf16.msra.mxu0 0
  %148 = vmatprep.subr.bf16.mxu0 0
  %149 = vmatpush1.bf16.msra.mxu0 0
  %150 = vmatprep.subr.bf16.mxu0 0
  %151 = vmatpush1.bf16.msra.mxu0 0
  %152 = vmatprep.subr.bf16.mxu0 0
  %153 = vmatpush1.bf16.msra.mxu0 0
  %154 = vmatprep.subr.bf16.mxu0 0
  %155 = vmatpush1.bf16.msra.mxu0 0
  %156 = vmatprep.subr.bf16.mxu0 0
  %157 = vmatpush1.bf16.msra.mxu0 0
  %158 = vmatprep.subr.bf16.mxu0 0
  %159 = vmatpush1.bf16.msra.mxu0 %v79
  %160 = vmatprep.subr.bf16.mxu0 0
  %161 = vmatpush1.bf16.msra.mxu0 %v76
  %162 = vmatprep.subr.bf16.mxu0 0
  %163 = vmatpush2.bf16.msra.mxu0 0
  %164 = vmatprep.subr.bf16.mxu0 0
  %165 = vmatpush2.bf16.msra.mxu0 0
  %166 = vmatprep.subr.bf16.mxu0 0
  %167 = vmatpush2.bf16.msra.mxu0 0
  %168 = vmatprep.subr.bf16.mxu0 0
  %169 = vmatpush2.bf16.msra.mxu0 0
  %170 = vmatprep.subr.bf16.mxu0 0
  %171 = vmatpush2.bf16.msra.mxu0 0
  %172 = vmatprep.subr.bf16.mxu0 0
  %173 = vmatpush2.bf16.msra.mxu0 0
  %174 = vmatprep.subr.bf16.mxu0 0
  %175 = vmatpush2.bf16.msra.mxu0 0
  %176 = vmatprep.subr.bf16.mxu0 0
  %177 = vmatpush2.bf16.msra.mxu0 0
  %178 = vmatprep.mubr.bf16.mxu0 0
  %179 = vmatmul.mubr.bf16.gmra.mxu0 %v88
  %v180 = vpop.f32.mrf.mxu0
  %v181 = vadd.f32 %v40, %v180
  %v182 = vpop.f32.mrf.mxu0
  %v183 = vpop.f32.mrf.mxu0
  %v184 = vadd.f32 %v40, %v183
  %v185 = vpop.f32.mrf.mxu0
  %186 = vmatprep.mubr.bf16.mxu0 0
  %187 = vmatmul.mubr.bf16.gmra.mxu0 %v91
  %v188 = vpop.f32.mrf.mxu0
  %v189 = vadd.f32 %v40, %v188
  %v190 = vpop.f32.mrf.mxu0
  %v191 = vpop.f32.mrf.mxu0
  %v192 = vadd.f32 %v40, %v191
  %v193 = vpop.f32.mrf.mxu0
  %194 = vdwg.mxu0
  %195 = vst [vmem:[%s3] sm:$0xff] %v128
  %196 = vst [vmem:[%s3 + $0x8] sm:$0xff] %v130
  %197 = vst [vmem:[%s3 + $0x10] sm:$0xff] %v181
  %198 = vst [vmem:[%s3 + $0x18] sm:$0xff] %v132
  %199 = vst [vmem:[%s3 + $0x20] sm:$0xff] %v134
  %200 = vst [vmem:[%s3 + $0x28] sm:$0xff] %v184
  %201 = vst [vmem:[%s3 + $0x30] sm:$0xff] %v138
  %202 = vst [vmem:[%s3 + $0x38] sm:$0xff] %v140
  %203 = vst [vmem:[%s3 + $0x40] sm:$0xff] %v189
  %204 = vst [vmem:[%s3 + $0x48] sm:$0xff] %v142
  %205 = vst [vmem:[%s3 + $0x50] sm:$0xff] %v144
  %206 = vst [vmem:[%s3 + $0x58] sm:$0xff] %v192
  // Predicated region
  $region14: #{forward.38} parent=0 // pred_check
    _
  $region15: #{forward.38} parent=0 // pred_check_branch
    %208 = sbr.rel (0) target = $region17
  $region16: #{forward.38} parent=0 // pred_region
    _
  $region17: #{forward.38} parent=0 // pred_fallthru
    _
  // Predicated region
  $region18: #{forward.38} parent=0 // pred_check
    _
  $region19: #{forward.38} parent=0 // pred_check_branch
    %210 = sbr.rel (0) target = $region21
  $region20: #{forward.38} parent=0 // pred_region
    _
  $region21: #{forward.38} parent=0 // pred_fallthru
    _

// kernel: forward.43
$region0: #{forward.43}
  #allocation0 [shape = 'u32[]', space=smem, size = 0x4, offset = 0x4, fixed_abs, tag = 'smem constant byte address 0x4 - core index']
  #allocation1 [shape = 'u32[144,128]{1,0:T(1,128)}', space=vmem, size = 0x12000, scoped, tag = 'internal scratch']
  %s0 = inlined_call_operand.vmem [shape: f32[16,128], index: 0, kind: input, shape index: {}]
  %s1 = inlined_call_operand.vmem [shape: f32[2,16,128], index: 1, kind: input, shape index: {}]
  %s2 = inlined_call_operand.vmem [shape: f32[32,128], index: 2, kind: input, shape index: {}]
  %s3 = inlined_call_operand.vmem [shape: f32[2,6], index: 3, kind: input, shape index: {}]
  %s4 = inlined_call_operand.vmem [shape: f32[32,384], index: 4, kind: input, shape index: {}]
  %s5 = inlined_call_operand.vmem [shape: bf16[128,128], index: 5, kind: input, shape index: {}]
  %s6 = inlined_call_operand.vmem [shape: f32[1,128], index: 6, kind: input, shape index: {}]
  %s7 = inlined_call_operand.vmem [shape: bf16[128,256], index: 7, kind: input, shape index: {}]
  %s8 = inlined_call_operand.vmem [shape: bf16[128,384], index: 8, kind: input, shape index: {}]
  %s9 = inlined_call_operand.vmem [shape: bf16[6,384], index: 9, kind: input, shape index: {}]
  %s10 = inlined_call_operand.vmem [shape: bf16[128,128], index: 10, kind: input, shape index: {}]
  %s11 = inlined_call_operand.vmem [shape: bf16[128,128], index: 11, kind: input, shape index: {}]
  %s12 = inlined_call_operand.vmem [shape: f32[1,128], index: 12, kind: input, shape index: {}]
  %s13 = inlined_call_operand.vmem [shape: bf16[128,6], index: 13, kind: input, shape index: {}]
  %s14 = inlined_call_operand.vmem [shape: f32[1,6], index: 14, kind: input, shape index: {}]
  %s15 = inlined_call_operand.vmem [shape: f32[32,128], index: 15, kind: output, shape index: {0}]
  %s16 = inlined_call_operand.vmem [shape: f32[2,6], index: 16, kind: output, shape index: {1}]
  %17 = xla_tuple %s15, %s16
  %s18 = sld [smem:[#allocation0]]
  $region78: #{forward.43} parent=0
    _
  %s20 = ssub.s32 1, %s18
  %s21 = scalar_select 0, %s20, %s18
  // Predicated region
  $region2: #{forward.43} parent=0 // pred_check
    _
  $region3: #{forward.43} parent=0 // pred_check_branch
    %23 = sbr.rel (0) target = $region5
  $region4: #{forward.43} parent=0 // pred_region
    _
  $region5: #{forward.43} parent=0 // pred_fallthru
    _
  // Predicated region
  $region6: #{forward.43} parent=0 // pred_check
    _
  $region7: #{forward.43} parent=0 // pred_check_branch
    %25 = sbr.rel (0) target = $region9
  $region8: #{forward.43} parent=0 // pred_region
    _
  $region9: #{forward.43} parent=0 // pred_fallthru
    _
  // Predicated region
  $region10: #{forward.43} parent=0 // pred_check
    _
  $region11: #{forward.43} parent=0 // pred_check_branch
    %27 = sbr.rel (0) target = $region13
  $region12: #{forward.43} parent=0 // pred_region
    _
  $region13: #{forward.43} parent=0 // pred_fallthru
    _
  // Predicated region
  $region14: #{forward.43} parent=0 // pred_check
    _
  $region15: #{forward.43} parent=0 // pred_check_branch
    %29 = sbr.rel (0) target = $region17
  $region16: #{forward.43} parent=0 // pred_region
    _
  $region17: #{forward.43} parent=0 // pred_fallthru
    _
  // Predicated region
  $region18: #{forward.43} parent=0 // pred_check
    _
  $region19: #{forward.43} parent=0 // pred_check_branch
    %31 = sbr.rel (0) target = $region21
  $region20: #{forward.43} parent=0 // pred_region
    _
  $region21: #{forward.43} parent=0 // pred_fallthru
    _
  // Predicated region
  $region22: #{forward.43} parent=0 // pred_check
    _
  $region23: #{forward.43} parent=0 // pred_check_branch
    %33 = sbr.rel (0) target = $region25
  $region24: #{forward.43} parent=0 // pred_region
    _
  $region25: #{forward.43} parent=0 // pred_fallthru
    _
  // Predicated region
  $region26: #{forward.43} parent=0 // pred_check
    _
  $region27: #{forward.43} parent=0 // pred_check_branch
    %35 = sbr.rel (0) target = $region29
  $region28: #{forward.43} parent=0 // pred_region
    _
  $region29: #{forward.43} parent=0 // pred_fallthru
    _
  // Predicated region
  $region30: #{forward.43} parent=0 // pred_check
    _
  $region31: #{forward.43} parent=0 // pred_check_branch
    %37 = sbr.rel (0) target = $region33
  $region32: #{forward.43} parent=0 // pred_region
    _
  $region33: #{forward.43} parent=0 // pred_fallthru
    _
  // Predicated region
  $region34: #{forward.43} parent=0 // pred_check
    _
  $region35: #{forward.43} parent=0 // pred_check_branch
    %39 = sbr.rel (0) target = $region37
  $region36: #{forward.43} parent=0 // pred_region
    _
  $region37: #{forward.43} parent=0 // pred_fallthru
    _
  // Predicated region
  $region38: #{forward.43} parent=0 // pred_check
    _
  $region39: #{forward.43} parent=0 // pred_check_branch
    %41 = sbr.rel (0) target = $region41
  $region40: #{forward.43} parent=0 // pred_region
    _
  $region41: #{forward.43} parent=0 // pred_fallthru
    _
  // Predicated region
  $region42: #{forward.43} parent=0 // pred_check
    _
  $region43: #{forward.43} parent=0 // pred_check_branch
    %43 = sbr.rel (0) target = $region45
  $region44: #{forward.43} parent=0 // pred_region
    _
  $region45: #{forward.43} parent=0 // pred_fallthru
    _
  // Predicated region
  $region46: #{forward.43} parent=0 // pred_check
    _
  $region47: #{forward.43} parent=0 // pred_check_branch
    %45 = sbr.rel (0) target = $region49
  $region48: #{forward.43} parent=0 // pred_region
    _
  $region49: #{forward.43} parent=0 // pred_fallthru
    _
  // Predicated region
  $region50: #{forward.43} parent=0 // pred_check
    _
  $region51: #{forward.43} parent=0 // pred_check_branch
    %47 = sbr.rel (0) target = $region53
  $region52: #{forward.43} parent=0 // pred_region
    _
  $region53: #{forward.43} parent=0 // pred_fallthru
    _
  // Predicated region
  $region54: #{forward.43} parent=0 // pred_check
    _
  $region55: #{forward.43} parent=0 // pred_check_branch
    %49 = sbr.rel (0) target = $region57
  $region56: #{forward.43} parent=0 // pred_region
    _
  $region57: #{forward.43} parent=0 // pred_fallthru
    _
  // Predicated region
  $region58: #{forward.43} parent=0 // pred_check
    _
  $region59: #{forward.43} parent=0 // pred_check_branch
    %51 = sbr.rel (0) target = $region61
  $region60: #{forward.43} parent=0 // pred_region
    _
  $region61: #{forward.43} parent=0 // pred_fallthru
    _
  %v53 = vld [vmem:[%s0] sm:$0xff]
  %v54 = vld [vmem:[%s0 + $0x8] sm:$0xff]
  %v55 = vld [vmem:[%s1] sm:$0xff]
  %v56 = vld [vmem:[%s1 + $0x8] sm:$0xff]
  %v57 = vsub.f32 %v55, %v53
  %v58 = vsub.f32 %v56, %v54
  %v59 = vmul.f32 %v57, %v57
  %v60 = vmul.f32 %v58, %v58
  %s61 = scalar_lea.vmem %s1, 16
  %v62 = vld [vmem:[%s61] sm:$0xff]
  %v63 = vld [vmem:[%s61 + $0x8] sm:$0xff]
  %v64 = vsub.f32 %v62, %v53
  %v65 = vsub.f32 %v63, %v54
  %v66 = vmul.f32 %v64, %v64
  %v67 = vmul.f32 %v65, %v65
  %v68 = vpack.c.bf16 %v60, %v59
  %v69 = vpack.c.bf16 %v67, %v66
  %v70 = vld [vmem:[%s5] sm:$0xf]
  %v71 = vld [vmem:[%s5 + $0x4] sm:$0xf]
  %v72 = vld [vmem:[%s5 + $0x8] sm:$0xf]
  %v73 = vld [vmem:[%s5 + $0xc] sm:$0xf]
  %v74 = vld [vmem:[%s5 + $0x10] sm:$0xf]
  %v75 = vld [vmem:[%s5 + $0x14] sm:$0xf]
  %v76 = vld [vmem:[%s5 + $0x18] sm:$0xf]
  %v77 = vld [vmem:[%s5 + $0x1c] sm:$0xf]
  %v78 = vld [vmem:[%s5 + $0x20] sm:$0xf]
  %v79 = vld [vmem:[%s5 + $0x24] sm:$0xf]
  %v80 = vld [vmem:[%s5 + $0x28] sm:$0xf]
  %v81 = vld [vmem:[%s5 + $0x2c] sm:$0xf]
  %v82 = vld [vmem:[%s5 + $0x30] sm:$0xf]
  %v83 = vld [vmem:[%s5 + $0x34] sm:$0xf]
  %v84 = vld [vmem:[%s5 + $0x38] sm:$0xf]
  %v85 = vld [vmem:[%s5 + $0x3c] sm:$0xf]
  %v86 = vld [vmem:[%s6] sm:$0x1]
  %v88 = vlaneseq
  %v89 = vshrl.u32 %v88, 7
  %v90 = vsub.s32 0, %v89
  %v91 = vrot.slane %v86, %v90
  %v109 = vunpack.c.l.b16 %v70
  %v110 = vunpack.c.l.b16 %v71
  %v111 = vunpack.c.l.b16 %v72
  %v112 = vunpack.c.l.b16 %v73
  %v113 = vunpack.c.l.b16 %v74
  %v114 = vunpack.c.l.b16 %v75
  %v115 = vunpack.c.l.b16 %v76
  %v116 = vunpack.c.l.b16 %v77
  %v117 = vunpack.c.l.b16 %v78
  %v118 = vunpack.c.l.b16 %v79
  %v119 = vunpack.c.l.b16 %v80
  %v120 = vunpack.c.l.b16 %v81
  %v121 = vunpack.c.l.b16 %v82
  %v122 = vunpack.c.l.b16 %v83
  %v123 = vunpack.c.l.b16 %v84
  %v124 = vunpack.c.l.b16 %v85
  %v125 = vpack.c.b16 %v110, %v109
  %v126 = vpack.c.b16 %v112, %v111
  %v127 = vpack.c.b16 %v114, %v113
  %v128 = vpack.c.b16 %v116, %v115
  %v129 = vpack.c.b16 %v118, %v117
  %v130 = vpack.c.b16 %v120, %v119
  %v131 = vpack.c.b16 %v122, %v121
  %v132 = vpack.c.b16 %v124, %v123
  %141 = vmatprep.subr.bf16.mxu0 0
  %142 = vmatpush1.bf16.msra.mxu0 %v132
  %143 = vmatprep.subr.bf16.mxu0 0
  %144 = vmatpush1.bf16.msra.mxu0 %v131
  %145 = vmatprep.subr.bf16.mxu0 0
  %146 = vmatpush1.bf16.msra.mxu0 %v130
  %147 = vmatprep.subr.bf16.mxu0 0
  %148 = vmatpush1.bf16.msra.mxu0 %v129
  %149 = vmatprep.subr.bf16.mxu0 0
  %150 = vmatpush1.bf16.msra.mxu0 %v128
  %151 = vmatprep.subr.bf16.mxu0 0
  %152 = vmatpush1.bf16.msra.mxu0 %v127
  %153 = vmatprep.subr.bf16.mxu0 0
  %154 = vmatpush1.bf16.msra.mxu0 %v126
  %155 = vmatprep.subr.bf16.mxu0 0
  %156 = vmatpush1.bf16.msra.mxu0 %v125
  %157 = vmatprep.subr.bf16.mxu0 0
  %158 = vmatpush2.bf16.msra.mxu0 0
  %159 = vmatprep.subr.bf16.mxu0 0
  %160 = vmatpush2.bf16.msra.mxu0 0
  %161 = vmatprep.subr.bf16.mxu0 0
  %162 = vmatpush2.bf16.msra.mxu0 0
  %163 = vmatprep.subr.bf16.mxu0 0
  %164 = vmatpush2.bf16.msra.mxu0 0
  %165 = vmatprep.subr.bf16.mxu0 0
  %166 = vmatpush2.bf16.msra.mxu0 0
  %167 = vmatprep.subr.bf16.mxu0 0
  %168 = vmatpush2.bf16.msra.mxu0 0
  %169 = vmatprep.subr.bf16.mxu0 0
  %170 = vmatpush2.bf16.msra.mxu0 0
  %171 = vmatprep.subr.bf16.mxu0 0
  %172 = vmatpush2.bf16.msra.mxu0 0
  %173 = vmatprep.mubr.bf16.mxu0 0
  %174 = vmatmul.mubr.bf16.gmra.mxu0 %v68
  %v175 = vpop.f32.mrf.mxu0
  %v176 = vadd.f32 %v91, %v175
  %v177 = vpop.f32.mrf.mxu0
  %v178 = vpop.f32.mrf.mxu0
  %v179 = vadd.f32 %v91, %v178
  %v180 = vpop.f32.mrf.mxu0
  %181 = vmatprep.mubr.bf16.mxu0 0
  %182 = vmatmul.mubr.bf16.gmra.mxu0 %v69
  %v183 = vpop.f32.mrf.mxu0
  %v184 = vadd.f32 %v91, %v183
  %v185 = vpop.f32.mrf.mxu0
  %v186 = vpop.f32.mrf.mxu0
  %v187 = vadd.f32 %v91, %v186
  %v188 = vpop.f32.mrf.mxu0
  %189 = vdwg.mxu0
  %v190 = vmax.f32 %v176, 0.0
  %v191 = vmax.f32 %v179, 0.0
  %v192 = vmax.f32 %v184, 0.0
  %v193 = vmax.f32 %v187, 0.0
  %v194 = vld [vmem:[%s3] sm:$0x3]
  %v195 = vpack.c.bf16 %v194, %v194
  %v196 = vld [vmem:[%s9] sm:$0x77]
  %v197 = vld [vmem:[%s9 + $0x8] sm:$0x7]
  %v200 = vunpack.c.l.b16 %v196
  %v201 = vunpack.c.h.b16 %v196
  %v202 = vunpack.c.l.b16 %v197
  %v203 = vpack.c.b16 %v200, %v200
  %v204 = vpack.c.b16 %v201, %v201
  %v205 = vpack.c.b16 %v202, %v202
  %vm206 = vcmask 48128
  %v208 = vsel %vm206, %v195, 0
  %vm210 = vcmask 1042432
  %v212 = vsel %vm210, %v203, 0
  %v215 = vsel %vm210, %v204, 0
  %v218 = vsel %vm210, %v205, 0
  %220 = vmatprep.subr.bf16.mxu0 0
  %221 = vmatpush1.bf16.msra.mxu0 0
  %222 = vmatprep.subr.bf16.mxu0 0
  %223 = vmatpush1.bf16.msra.mxu0 0
  %224 = vmatprep.subr.bf16.mxu0 0
  %225 = vmatpush1.bf16.msra.mxu0 0
  %226 = vmatprep.subr.bf16.mxu0 0
  %227 = vmatpush1.bf16.msra.mxu0 0
  %228 = vmatprep.subr.bf16.mxu0 0
  %229 = vmatpush1.bf16.msra.mxu0 0
  %230 = vmatprep.subr.bf16.mxu0 0
  %231 = vmatpush1.bf16.msra.mxu0 0
  %232 = vmatprep.subr.bf16.mxu0 0
  %233 = vmatpush1.bf16.msra.mxu0 0
  %234 = vmatprep.subr.bf16.mxu0 %v215
  %235 = vmatpush1.bf16.msra.mxu0 %v212
  %236 = vmatprep.subr.bf16.mxu0 0
  %237 = vmatpush2.bf16.msra.mxu0 0
  %238 = vmatprep.subr.bf16.mxu0 0
  %239 = vmatpush2.bf16.msra.mxu0 0
  %240 = vmatprep.subr.bf16.mxu0 0
  %241 = vmatpush2.bf16.msra.mxu0 0
  %242 = vmatprep.subr.bf16.mxu0 0
  %243 = vmatpush2.bf16.msra.mxu0 0
  %244 = vmatprep.subr.bf16.mxu0 0
  %245 = vmatpush2.bf16.msra.mxu0 0
  %246 = vmatprep.subr.bf16.mxu0 0
  %247 = vmatpush2.bf16.msra.mxu0 0
  %248 = vmatprep.subr.bf16.mxu0 0
  %249 = vmatpush2.bf16.msra.mxu0 0
  %250 = vmatprep.subr.bf16.mxu0 0
  %251 = vmatpush2.bf16.msra.mxu0 0
  %252 = vmatprep.mubr.bf16.mxu0 0
  %253 = vmatmul.mubr.bf16.gmra.mxu0 %v208
  %v254 = vpop.f32.mrf.mxu0
  %v255 = vadd.f32 0.0, %v254
  %v256 = vpop.f32.mrf.mxu0
  %v257 = vadd.f32 0.0, %v256
  %v258 = vpop.f32.mrf.mxu0
  %v259 = vpop.f32.mrf.mxu0
  %260 = vdwg.mxu0
  %261 = vmatprep.subr.bf16.mxu0 0
  %262 = vmatpush1.bf16.msra.mxu0 0
  %263 = vmatprep.subr.bf16.mxu0 0
  %264 = vmatpush1.bf16.msra.mxu0 0
  %265 = vmatprep.subr.bf16.mxu0 0
  %266 = vmatpush1.bf16.msra.mxu0 0
  %267 = vmatprep.subr.bf16.mxu0 0
  %268 = vmatpush1.bf16.msra.mxu0 0
  %269 = vmatprep.subr.bf16.mxu0 0
  %270 = vmatpush1.bf16.msra.mxu0 0
  %271 = vmatprep.subr.bf16.mxu0 0
  %272 = vmatpush1.bf16.msra.mxu0 0
  %273 = vmatprep.subr.bf16.mxu0 0
  %274 = vmatpush1.bf16.msra.mxu0 0
  %275 = vmatprep.subr.bf16.mxu0 0
  %276 = vmatpush1.bf16.msra.mxu0 %v218
  %277 = vmatprep.subr.bf16.mxu0 0
  %278 = vmatpush2.bf16.msra.mxu0 0
  %279 = vmatprep.subr.bf16.mxu0 0
  %280 = vmatpush2.bf16.msra.mxu0 0
  %281 = vmatprep.subr.bf16.mxu0 0
  %282 = vmatpush2.bf16.msra.mxu0 0
  %283 = vmatprep.subr.bf16.mxu0 0
  %284 = vmatpush2.bf16.msra.mxu0 0
  %285 = vmatprep.subr.bf16.mxu0 0
  %286 = vmatpush2.bf16.msra.mxu0 0
  %287 = vmatprep.subr.bf16.mxu0 0
  %288 = vmatpush2.bf16.msra.mxu0 0
  %289 = vmatprep.subr.bf16.mxu0 0
  %290 = vmatpush2.bf16.msra.mxu0 0
  %291 = vmatprep.subr.bf16.mxu0 0
  %292 = vmatpush2.bf16.msra.mxu0 0
  %293 = vmatprep.mubr.bf16.mxu0 0
  %294 = vmatmul.mubr.bf16.gmra.mxu0 %v208
  %v295 = vpop.f32.mrf.mxu0
  %v296 = vadd.f32 0.0, %v295
  %v297 = vpop.f32.mrf.mxu0
  %v298 = vpop.f32.mrf.mxu0
  %v299 = vpop.f32.mrf.mxu0
  %300 = vdwg.mxu0
  %v301 = vlaneseq
  %v302 = vshrl.u32 %v301, 7
  %v303 = vsub.s32 0, %v302
  %v304 = vrot.slane %v255, %v303
  %v305 = vlaneseq
  %v306 = vshrl.u32 %v305, 7
  %v307 = vsub.s32 0, %v306
  %v308 = vrot.slane %v257, %v307
  %v309 = vlaneseq
  %v310 = vshrl.u32 %v309, 7
  %v311 = vsub.s32 0, %v310
  %v312 = vrot.slane %v296, %v311
  %v313 = vlaneseq
  %v314 = vshrl.u32 %v313, 7
  %v315 = vsub.s32 1, %v314
  %v316 = vrot.slane %v255, %v315
  %v317 = vlaneseq
  %v318 = vshrl.u32 %v317, 7
  %v319 = vsub.s32 1, %v318
  %v320 = vrot.slane %v257, %v319
  %v321 = vlaneseq
  %v322 = vshrl.u32 %v321, 7
  %v323 = vsub.s32 1, %v322
  %v324 = vrot.slane %v296, %v323
  %v325 = vpack.c.bf16 %v191, %v190
  %v326 = vpack.c.bf16 %v193, %v192
  %v327 = vld [vmem:[%s8] sm:$0xff]
  %v328 = vld [vmem:[%s8 + $0x8] sm:$0xf]
  %v329 = vld [vmem:[%s8 + $0xc] sm:$0xff]
  %v330 = vld [vmem:[%s8 + $0x14] sm:$0xf]
  %v331 = vld [vmem:[%s8 + $0x18] sm:$0xff]
  %v332 = vld [vmem:[%s8 + $0x20] sm:$0xf]
  %v333 = vld [vmem:[%s8 + $0x24] sm:$0xff]
  %v334 = vld [vmem:[%s8 + $0x2c] sm:$0xf]
  %v335 = vld [vmem:[%s8 + $0x30] sm:$0xff]
  %v336 = vld [vmem:[%s8 + $0x38] sm:$0xf]
  %v337 = vld [vmem:[%s8 + $0x3c] sm:$0xff]
  %v338 = vld [vmem:[%s8 + $0x44] sm:$0xf]
  %v339 = vld [vmem:[%s8 + $0x48] sm:$0xff]
  %v340 = vld [vmem:[%s8 + $0x50] sm:$0xf]
  %v341 = vld [vmem:[%s8 + $0x54] sm:$0xff]
  %v342 = vld [vmem:[%s8 + $0x5c] sm:$0xf]
  %v343 = vld [vmem:[%s8 + $0x60] sm:$0xff]
  %v344 = vld [vmem:[%s8 + $0x68] sm:$0xf]
  %v345 = vld [vmem:[%s8 + $0x6c] sm:$0xff]
  %v346 = vld [vmem:[%s8 + $0x74] sm:$0xf]
  %v347 = vld [vmem:[%s8 + $0x78] sm:$0xff]
  %v348 = vld [vmem:[%s8 + $0x80] sm:$0xf]
  %v349 = vld [vmem:[%s8 + $0x84] sm:$0xff]
  %v350 = vld [vmem:[%s8 + $0x8c] sm:$0xf]
  %v351 = vld [vmem:[%s8 + $0x90] sm:$0xff]
  %v352 = vld [vmem:[%s8 + $0x98] sm:$0xf]
  %v353 = vld [vmem:[%s8 + $0x9c] sm:$0xff]
  %v354 = vld [vmem:[%s8 + $0xa4] sm:$0xf]
  %v355 = vld [vmem:[%s8 + $0xa8] sm:$0xff]
  %v356 = vld [vmem:[%s8 + $0xb0] sm:$0xf]
  %v357 = vld [vmem:[%s8 + $0xb4] sm:$0xff]
  %v358 = vld [vmem:[%s8 + $0xbc] sm:$0xf]
  %v359 = vld [vmem:[%s4] sm:$0xff]
  %v360 = vld [vmem:[%s4 + $0x8] sm:$0xff]
  %v361 = vld [vmem:[%s4 + $0x10] sm:$0xff]
  %v362 = vld [vmem:[%s4 + $0x18] sm:$0xff]
  %v363 = vld [vmem:[%s4 + $0x20] sm:$0xff]
  %v364 = vld [vmem:[%s4 + $0x28] sm:$0xff]
  %v365 = vld [vmem:[%s4 + $0x30] sm:$0xff]
  %v366 = vld [vmem:[%s4 + $0x38] sm:$0xff]
  %v367 = vld [vmem:[%s4 + $0x40] sm:$0xff]
  %v368 = vld [vmem:[%s4 + $0x48] sm:$0xff]
  %v369 = vld [vmem:[%s4 + $0x50] sm:$0xff]
  %v370 = vld [vmem:[%s4 + $0x58] sm:$0xff]
  %v403 = vunpack.c.l.b16 %v327
  %v404 = vunpack.c.h.b16 %v327
  %v405 = vunpack.c.l.b16 %v328
  %v406 = vunpack.c.l.b16 %v329
  %v407 = vunpack.c.h.b16 %v329
  %v408 = vunpack.c.l.b16 %v330
  %v409 = vunpack.c.l.b16 %v331
  %v410 = vunpack.c.h.b16 %v331
  %v411 = vunpack.c.l.b16 %v332
  %v412 = vunpack.c.l.b16 %v333
  %v413 = vunpack.c.h.b16 %v333
  %v414 = vunpack.c.l.b16 %v334
  %v415 = vunpack.c.l.b16 %v335
  %v416 = vunpack.c.h.b16 %v335
  %v417 = vunpack.c.l.b16 %v336
  %v418 = vunpack.c.l.b16 %v337
  %v419 = vunpack.c.h.b16 %v337
  %v420 = vunpack.c.l.b16 %v338
  %v421 = vunpack.c.l.b16 %v339
  %v422 = vunpack.c.h.b16 %v339
  %v423 = vunpack.c.l.b16 %v340
  %v424 = vunpack.c.l.b16 %v341
  %v425 = vunpack.c.h.b16 %v341
  %v426 = vunpack.c.l.b16 %v342
  %v427 = vunpack.c.l.b16 %v343
  %v428 = vunpack.c.h.b16 %v343
  %v429 = vunpack.c.l.b16 %v344
  %v430 = vunpack.c.l.b16 %v345
  %v431 = vunpack.c.h.b16 %v345
  %v432 = vunpack.c.l.b16 %v346
  %v433 = vunpack.c.l.b16 %v347
  %v434 = vunpack.c.h.b16 %v347
  %v435 = vunpack.c.l.b16 %v348
  %v436 = vunpack.c.l.b16 %v349
  %v437 = vunpack.c.h.b16 %v349
  %v438 = vunpack.c.l.b16 %v350
  %v439 = vunpack.c.l.b16 %v351
  %v440 = vunpack.c.h.b16 %v351
  %v441 = vunpack.c.l.b16 %v352
  %v442 = vunpack.c.l.b16 %v353
  %v443 = vunpack.c.h.b16 %v353
  %v444 = vunpack.c.l.b16 %v354
  %v445 = vunpack.c.l.b16 %v355
  %v446 = vunpack.c.h.b16 %v355
  %v447 = vunpack.c.l.b16 %v356
  %v448 = vunpack.c.l.b16 %v357
  %v449 = vunpack.c.h.b16 %v357
  %v450 = vunpack.c.l.b16 %v358
  %v451 = vpack.c.b16 %v406, %v403
  %v452 = vpack.c.b16 %v407, %v404
  %v453 = vpack.c.b16 %v408, %v405
  %v454 = vpack.c.b16 %v412, %v409
  %v455 = vpack.c.b16 %v413, %v410
  %v456 = vpack.c.b16 %v414, %v411
  %v457 = vpack.c.b16 %v418, %v415
  %v458 = vpack.c.b16 %v419, %v416
  %v459 = vpack.c.b16 %v420, %v417
  %v460 = vpack.c.b16 %v424, %v421
  %v461 = vpack.c.b16 %v425, %v422
  %v462 = vpack.c.b16 %v426, %v423
  %v463 = vpack.c.b16 %v430, %v427
  %v464 = vpack.c.b16 %v431, %v428
  %v465 = vpack.c.b16 %v432, %v429
  %v466 = vpack.c.b16 %v436, %v433
  %v467 = vpack.c.b16 %v437, %v434
  %v468 = vpack.c.b16 %v438, %v435
  %v469 = vpack.c.b16 %v442, %v439
  %v470 = vpack.c.b16 %v443, %v440
  %v471 = vpack.c.b16 %v444, %v441
  %v472 = vpack.c.b16 %v448, %v445
  %v473 = vpack.c.b16 %v449, %v446
  %v474 = vpack.c.b16 %v450, %v447
  %499 = vmatprep.subr.bf16.mxu0 %v473
  %500 = vmatpush1.bf16.msra.mxu0 %v472
  %501 = vmatprep.subr.bf16.mxu0 %v470
  %502 = vmatpush1.bf16.msra.mxu0 %v469
  %503 = vmatprep.subr.bf16.mxu0 %v467
  %504 = vmatpush1.bf16.msra.mxu0 %v466
  %505 = vmatprep.subr.bf16.mxu0 %v464
  %506 = vmatpush1.bf16.msra.mxu0 %v463
  %507 = vmatprep.subr.bf16.mxu0 %v461
  %508 = vmatpush1.bf16.msra.mxu0 %v460
  %509 = vmatprep.subr.bf16.mxu0 %v458
  %510 = vmatpush1.bf16.msra.mxu0 %v457
  %511 = vmatprep.subr.bf16.mxu0 %v455
  %512 = vmatpush1.bf16.msra.mxu0 %v454
  %513 = vmatprep.subr.bf16.mxu0 %v452
  %514 = vmatpush1.bf16.msra.mxu0 %v451
  %515 = vmatprep.subr.bf16.mxu0 0
  %516 = vmatpush2.bf16.msra.mxu0 0
  %517 = vmatprep.subr.bf16.mxu0 0
  %518 = vmatpush2.bf16.msra.mxu0 0
  %519 = vmatprep.subr.bf16.mxu0 0
  %520 = vmatpush2.bf16.msra.mxu0 0
  %521 = vmatprep.subr.bf16.mxu0 0
  %522 = vmatpush2.bf16.msra.mxu0 0
  %523 = vmatprep.subr.bf16.mxu0 0
  %524 = vmatpush2.bf16.msra.mxu0 0
  %525 = vmatprep.subr.bf16.mxu0 0
  %526 = vmatpush2.bf16.msra.mxu0 0
  %527 = vmatprep.subr.bf16.mxu0 0
  %528 = vmatpush2.bf16.msra.mxu0 0
  %529 = vmatprep.subr.bf16.mxu0 0
  %530 = vmatpush2.bf16.msra.mxu0 0
  %531 = vmatprep.mubr.bf16.mxu0 0
  %532 = vmatmul.mubr.bf16.gmra.mxu0 %v325
  %v533 = vpop.f32.mrf.mxu0
  %v534 = vadd.f32 %v359, %v533
  %v535 = vpop.f32.mrf.mxu0
  %v536 = vadd.f32 %v360, %v535
  %v537 = vpop.f32.mrf.mxu0
  %v538 = vadd.f32 %v362, %v537
  %v539 = vpop.f32.mrf.mxu0
  %v540 = vadd.f32 %v363, %v539
  %541 = vmatprep.mubr.bf16.mxu0 0
  %542 = vmatmul.mubr.bf16.gmra.mxu0 %v326
  %v543 = vpop.f32.mrf.mxu0
  %v544 = vadd.f32 %v365, %v543
  %v545 = vpop.f32.mrf.mxu0
  %v546 = vadd.f32 %v366, %v545
  %v547 = vpop.f32.mrf.mxu0
  %v548 = vadd.f32 %v368, %v547
  %v549 = vpop.f32.mrf.mxu0
  %v550 = vadd.f32 %v369, %v549
  %551 = vdwg.mxu0
  %552 = vmatprep.subr.bf16.mxu0 0
  %553 = vmatpush1.bf16.msra.mxu0 %v474
  %554 = vmatprep.subr.bf16.mxu0 0
  %555 = vmatpush1.bf16.msra.mxu0 %v471
  %556 = vmatprep.subr.bf16.mxu0 0
  %557 = vmatpush1.bf16.msra.mxu0 %v468
  %558 = vmatprep.subr.bf16.mxu0 0
  %559 = vmatpush1.bf16.msra.mxu0 %v465
  %560 = vmatprep.subr.bf16.mxu0 0
  %561 = vmatpush1.bf16.msra.mxu0 %v462
  %562 = vmatprep.subr.bf16.mxu0 0
  %563 = vmatpush1.bf16.msra.mxu0 %v459
  %564 = vmatprep.subr.bf16.mxu0 0
  %565 = vmatpush1.bf16.msra.mxu0 %v456
  %566 = vmatprep.subr.bf16.mxu0 0
  %567 = vmatpush1.bf16.msra.mxu0 %v453
  %568 = vmatprep.subr.bf16.mxu0 0
  %569 = vmatpush2.bf16.msra.mxu0 0
  %570 = vmatprep.subr.bf16.mxu0 0
  %571 = vmatpush2.bf16.msra.mxu0 0
  %572 = vmatprep.subr.bf16.mxu0 0
  %573 = vmatpush2.bf16.msra.mxu0 0
  %574 = vmatprep.subr.bf16.mxu0 0
  %575 = vmatpush2.bf16.msra.mxu0 0
  %576 = vmatprep.subr.bf16.mxu0 0
  %577 = vmatpush2.bf16.msra.mxu0 0
  %578 = vmatprep.subr.bf16.mxu0 0
  %579 = vmatpush2.bf16.msra.mxu0 0
  %580 = vmatprep.subr.bf16.mxu0 0
  %581 = vmatpush2.bf16.msra.mxu0 0
  %582 = vmatprep.subr.bf16.mxu0 0
  %583 = vmatpush2.bf16.msra.mxu0 0
  %584 = vmatprep.mubr.bf16.mxu0 0
  %585 = vmatmul.mubr.bf16.gmra.mxu0 %v325
  %v586 = vpop.f32.mrf.mxu0
  %v587 = vadd.f32 %v361, %v586
  %v588 = vpop.f32.mrf.mxu0
  %v589 = vpop.f32.mrf.mxu0
  %v590 = vadd.f32 %v364, %v589
  %v591 = vpop.f32.mrf.mxu0
  %592 = vmatprep.mubr.bf16.mxu0 0
  %593 = vmatmul.mubr.bf16.gmra.mxu0 %v326
  %v594 = vpop.f32.mrf.mxu0
  %v595 = vadd.f32 %v367, %v594
  %v596 = vpop.f32.mrf.mxu0
  %v597 = vpop.f32.mrf.mxu0
  %v598 = vadd.f32 %v370, %v597
  %v599 = vpop.f32.mrf.mxu0
  %600 = vdwg.mxu0
  %v601 = vadd.f32 %v534, %v304
  %v602 = vadd.f32 %v536, %v308
  %v603 = vadd.f32 %v587, %v312
  %v604 = vadd.f32 %v538, %v304
  %v605 = vadd.f32 %v540, %v308
  %v606 = vadd.f32 %v590, %v312
  %v607 = vadd.f32 %v544, %v316
  %v608 = vadd.f32 %v546, %v320
  %v609 = vadd.f32 %v595, %v324
  %v610 = vadd.f32 %v548, %v316
  %v611 = vadd.f32 %v550, %v320
  %v612 = vadd.f32 %v598, %v324
  %v613 = vld [vmem:[%s2] sm:$0xff]
  %v614 = vld [vmem:[%s2 + $0x8] sm:$0xff]
  %v615 = vld [vmem:[%s2 + $0x10] sm:$0xff]
  %v616 = vld [vmem:[%s2 + $0x18] sm:$0xff]
  %v617 = vpack.c.bf16 %v614, %v613
  %v618 = vpack.c.bf16 %v616, %v615
  %v619 = vld [vmem:[%s7] sm:$0xff]
  %v620 = vld [vmem:[%s7 + $0x8] sm:$0xff]
  %v621 = vld [vmem:[%s7 + $0x10] sm:$0xff]
  %v622 = vld [vmem:[%s7 + $0x18] sm:$0xff]
  %v623 = vld [vmem:[%s7 + $0x20] sm:$0xff]
  %v624 = vld [vmem:[%s7 + $0x28] sm:$0xff]
  %v625 = vld [vmem:[%s7 + $0x30] sm:$0xff]
  %v626 = vld [vmem:[%s7 + $0x38] sm:$0xff]
  %v627 = vld [vmem:[%s7 + $0x40] sm:$0xff]
  %v628 = vld [vmem:[%s7 + $0x48] sm:$0xff]
  %v629 = vld [vmem:[%s7 + $0x50] sm:$0xff]
  %v630 = vld [vmem:[%s7 + $0x58] sm:$0xff]
  %v631 = vld [vmem:[%s7 + $0x60] sm:$0xff]
  %v632 = vld [vmem:[%s7 + $0x68] sm:$0xff]
  %v633 = vld [vmem:[%s7 + $0x70] sm:$0xff]
  %v634 = vld [vmem:[%s7 + $0x78] sm:$0xff]
  %v651 = vunpack.c.l.b16 %v619
  %v652 = vunpack.c.h.b16 %v619
  %v653 = vunpack.c.l.b16 %v620
  %v654 = vunpack.c.h.b16 %v620
  %v655 = vunpack.c.l.b16 %v621
  %v656 = vunpack.c.h.b16 %v621
  %v657 = vunpack.c.l.b16 %v622
  %v658 = vunpack.c.h.b16 %v622
  %v659 = vunpack.c.l.b16 %v623
  %v660 = vunpack.c.h.b16 %v623
  %v661 = vunpack.c.l.b16 %v624
  %v662 = vunpack.c.h.b16 %v624
  %v663 = vunpack.c.l.b16 %v625
  %v664 = vunpack.c.h.b16 %v625
  %v665 = vunpack.c.l.b16 %v626
  %v666 = vunpack.c.h.b16 %v626
  %v667 = vunpack.c.l.b16 %v627
  %v668 = vunpack.c.h.b16 %v627
  %v669 = vunpack.c.l.b16 %v628
  %v670 = vunpack.c.h.b16 %v628
  %v671 = vunpack.c.l.b16 %v629
  %v672 = vunpack.c.h.b16 %v629
  %v673 = vunpack.c.l.b16 %v630
  %v674 = vunpack.c.h.b16 %v630
  %v675 = vunpack.c.l.b16 %v631
  %v676 = vunpack.c.h.b16 %v631
  %v677 = vunpack.c.l.b16 %v632
  %v678 = vunpack.c.h.b16 %v632
  %v679 = vunpack.c.l.b16 %v633
  %v680 = vunpack.c.h.b16 %v633
  %v681 = vunpack.c.l.b16 %v634
  %v682 = vunpack.c.h.b16 %v634
  %v683 = vpack.c.b16 %v653, %v651
  %v684 = vpack.c.b16 %v654, %v652
  %v685 = vpack.c.b16 %v657, %v655
  %v686 = vpack.c.b16 %v658, %v656
  %v687 = vpack.c.b16 %v661, %v659
  %v688 = vpack.c.b16 %v662, %v660
  %v689 = vpack.c.b16 %v665, %v663
  %v690 = vpack.c.b16 %v666, %v664
  %v691 = vpack.c.b16 %v669, %v667
  %v692 = vpack.c.b16 %v670, %v668
  %v693 = vpack.c.b16 %v673, %v671
  %v694 = vpack.c.b16 %v674, %v672
  %v695 = vpack.c.b16 %v677, %v675
  %v696 = vpack.c.b16 %v678, %v676
  %v697 = vpack.c.b16 %v681, %v679
  %v698 = vpack.c.b16 %v682, %v680
  %715 = vmatprep.subr.bf16.mxu0 %v698
  %716 = vmatpush1.bf16.msra.mxu0 %v697
  %717 = vmatprep.subr.bf16.mxu0 %v696
  %718 = vmatpush1.bf16.msra.mxu0 %v695
  %719 = vmatprep.subr.bf16.mxu0 %v694
  %720 = vmatpush1.bf16.msra.mxu0 %v693
  %721 = vmatprep.subr.bf16.mxu0 %v692
  %722 = vmatpush1.bf16.msra.mxu0 %v691
  %723 = vmatprep.subr.bf16.mxu0 %v690
  %724 = vmatpush1.bf16.msra.mxu0 %v689
  %725 = vmatprep.subr.bf16.mxu0 %v688
  %726 = vmatpush1.bf16.msra.mxu0 %v687
  %727 = vmatprep.subr.bf16.mxu0 %v686
  %728 = vmatpush1.bf16.msra.mxu0 %v685
  %729 = vmatprep.subr.bf16.mxu0 %v684
  %730 = vmatpush1.bf16.msra.mxu0 %v683
  %731 = vmatprep.subr.bf16.mxu0 0
  %732 = vmatpush2.bf16.msra.mxu0 0
  %733 = vmatprep.subr.bf16.mxu0 0
  %734 = vmatpush2.bf16.msra.mxu0 0
  %735 = vmatprep.subr.bf16.mxu0 0
  %736 = vmatpush2.bf16.msra.mxu0 0
  %737 = vmatprep.subr.bf16.mxu0 0
  %738 = vmatpush2.bf16.msra.mxu0 0
  %739 = vmatprep.subr.bf16.mxu0 0
  %740 = vmatpush2.bf16.msra.mxu0 0
  %741 = vmatprep.subr.bf16.mxu0 0
  %742 = vmatpush2.bf16.msra.mxu0 0
  %743 = vmatprep.subr.bf16.mxu0 0
  %744 = vmatpush2.bf16.msra.mxu0 0
  %745 = vmatprep.subr.bf16.mxu0 0
  %746 = vmatpush2.bf16.msra.mxu0 0
  %747 = vmatprep.mubr.bf16.mxu0 0
  %748 = vmatmul.mubr.bf16.gmra.mxu0 %v617
  %v749 = vpop.f32.mrf.mxu0
  %v750 = vadd.f32 0.0, %v749
  %v751 = vpop.f32.mrf.mxu0
  %v752 = vadd.f32 0.0, %v751
  %v753 = vpop.f32.mrf.mxu0
  %v754 = vadd.f32 0.0, %v753
  %v755 = vpop.f32.mrf.mxu0
  %v756 = vadd.f32 0.0, %v755
  %757 = vmatprep.mubr.bf16.mxu0 0
  %758 = vmatmul.mubr.bf16.gmra.mxu0 %v618
  %v759 = vpop.f32.mrf.mxu0
  %v760 = vadd.f32 0.0, %v759
  %v761 = vpop.f32.mrf.mxu0
  %v762 = vadd.f32 0.0, %v761
  %v763 = vpop.f32.mrf.mxu0
  %v764 = vadd.f32 0.0, %v763
  %v765 = vpop.f32.mrf.mxu0
  %v766 = vadd.f32 0.0, %v765
  %767 = vdwg.mxu0
  %v768 = vadd.f32 %v750, %v601
  %v769 = vadd.f32 %v754, %v604
  %v770 = vadd.f32 %v760, %v607
  %v771 = vadd.f32 %v764, %v610
  %v772 = vxor.u32 %v768, 2147483648
  %v773 = vxor.u32 %v769, 2147483648
  %v774 = vxor.u32 %v770, 2147483648
  %v775 = vxor.u32 %v771, 2147483648
  %v776 = vmul.f32 %v772, 1.442695
  %v777 = vpow.pop %v776
  %v778 = vmul.f32 %v773, 1.442695
  %v779 = vpow.pop %v778
  %v780 = vmul.f32 %v774, 1.442695
  %v781 = vpow.pop %v780
  %v782 = vmul.f32 %v775, 1.442695
  %v783 = vpow.pop %v782
  %v784 = vadd.f32 %v777, 1.0
  %v785 = vadd.f32 %v779, 1.0
  %v786 = vadd.f32 %v781, 1.0
  %v787 = vadd.f32 %v783, 1.0
  %v788 = vrcp.pop %v784
  %v789 = vmul.f32 1.0, %v788
  %v790 = vrcp.pop %v785
  %v791 = vmul.f32 1.0, %v790
  %v792 = vrcp.pop %v786
  %v793 = vmul.f32 1.0, %v792
  %v794 = vrcp.pop %v787
  %v795 = vmul.f32 1.0, %v794
  %v796 = vadd.f32 %v752, %v602
  %v797 = vadd.f32 %v756, %v605
  %v798 = vadd.f32 %v762, %v608
  %v799 = vadd.f32 %v766, %v611
  %v800 = vxor.u32 %v796, 2147483648
  %v801 = vxor.u32 %v797, 2147483648
  %v802 = vxor.u32 %v798, 2147483648
  %v803 = vxor.u32 %v799, 2147483648
  %v804 = vmul.f32 %v800, 1.442695
  %v805 = vpow.pop %v804
  %v806 = vmul.f32 %v801, 1.442695
  %v807 = vpow.pop %v806
  %v808 = vmul.f32 %v802, 1.442695
  %v809 = vpow.pop %v808
  %v810 = vmul.f32 %v803, 1.442695
  %v811 = vpow.pop %v810
  %v812 = vadd.f32 %v805, 1.0
  %v813 = vadd.f32 %v807, 1.0
  %v814 = vadd.f32 %v809, 1.0
  %v815 = vadd.f32 %v811, 1.0
  %v816 = vrcp.pop %v812
  %v817 = vmul.f32 1.0, %v816
  %v818 = vrcp.pop %v813
  %v819 = vmul.f32 1.0, %v818
  %v820 = vrcp.pop %v814
  %v821 = vmul.f32 1.0, %v820
  %v822 = vrcp.pop %v815
  %v823 = vmul.f32 1.0, %v822
  %v824 = vmul.f32 %v817, %v613
  %v825 = vmul.f32 %v819, %v614
  %v826 = vmul.f32 %v821, %v615
  %v827 = vmul.f32 %v823, %v616
  %v828 = vpack.c.bf16 %v825, %v824
  %v829 = vpack.c.bf16 %v827, %v826
  %v830 = vld [vmem:[%s10] sm:$0xf]
  %v831 = vld [vmem:[%s10 + $0x4] sm:$0xf]
  %v832 = vld [vmem:[%s10 + $0x8] sm:$0xf]
  %v833 = vld [vmem:[%s10 + $0xc] sm:$0xf]
  %v834 = vld [vmem:[%s10 + $0x10] sm:$0xf]
  %v835 = vld [vmem:[%s10 + $0x14] sm:$0xf]
  %v836 = vld [vmem:[%s10 + $0x18] sm:$0xf]
  %v837 = vld [vmem:[%s10 + $0x1c] sm:$0xf]
  %v838 = vld [vmem:[%s10 + $0x20] sm:$0xf]
  %v839 = vld [vmem:[%s10 + $0x24] sm:$0xf]
  %v840 = vld [vmem:[%s10 + $0x28] sm:$0xf]
  %v841 = vld [vmem:[%s10 + $0x2c] sm:$0xf]
  %v842 = vld [vmem:[%s10 + $0x30] sm:$0xf]
  %v843 = vld [vmem:[%s10 + $0x34] sm:$0xf]
  %v844 = vld [vmem:[%s10 + $0x38] sm:$0xf]
  %v845 = vld [vmem:[%s10 + $0x3c] sm:$0xf]
  %v862 = vunpack.c.l.b16 %v830
  %v863 = vunpack.c.l.b16 %v831
  %v864 = vunpack.c.l.b16 %v832
  %v865 = vunpack.c.l.b16 %v833
  %v866 = vunpack.c.l.b16 %v834
  %v867 = vunpack.c.l.b16 %v835
  %v868 = vunpack.c.l.b16 %v836
  %v869 = vunpack.c.l.b16 %v837
  %v870 = vunpack.c.l.b16 %v838
  %v871 = vunpack.c.l.b16 %v839
  %v872 = vunpack.c.l.b16 %v840
  %v873 = vunpack.c.l.b16 %v841
  %v874 = vunpack.c.l.b16 %v842
  %v875 = vunpack.c.l.b16 %v843
  %v876 = vunpack.c.l.b16 %v844
  %v877 = vunpack.c.l.b16 %v845
  %v878 = vpack.c.b16 %v863, %v862
  %v879 = vpack.c.b16 %v865, %v864
  %v880 = vpack.c.b16 %v867, %v866
  %v881 = vpack.c.b16 %v869, %v868
  %v882 = vpack.c.b16 %v871, %v870
  %v883 = vpack.c.b16 %v873, %v872
  %v884 = vpack.c.b16 %v875, %v874
  %v885 = vpack.c.b16 %v877, %v876
  %894 = vmatprep.subr.bf16.mxu0 0
  %895 = vmatpush1.bf16.msra.mxu0 %v885
  %896 = vmatprep.subr.bf16.mxu0 0
  %897 = vmatpush1.bf16.msra.mxu0 %v884
  %898 = vmatprep.subr.bf16.mxu0 0
  %899 = vmatpush1.bf16.msra.mxu0 %v883
  %900 = vmatprep.subr.bf16.mxu0 0
  %901 = vmatpush1.bf16.msra.mxu0 %v882
  %902 = vmatprep.subr.bf16.mxu0 0
  %903 = vmatpush1.bf16.msra.mxu0 %v881
  %904 = vmatprep.subr.bf16.mxu0 0
  %905 = vmatpush1.bf16.msra.mxu0 %v880
  %906 = vmatprep.subr.bf16.mxu0 0
  %907 = vmatpush1.bf16.msra.mxu0 %v879
  %908 = vmatprep.subr.bf16.mxu0 0
  %909 = vmatpush1.bf16.msra.mxu0 %v878
  %910 = vmatprep.subr.bf16.mxu0 0
  %911 = vmatpush2.bf16.msra.mxu0 0
  %912 = vmatprep.subr.bf16.mxu0 0
  %913 = vmatpush2.bf16.msra.mxu0 0
  %914 = vmatprep.subr.bf16.mxu0 0
  %915 = vmatpush2.bf16.msra.mxu0 0
  %916 = vmatprep.subr.bf16.mxu0 0
  %917 = vmatpush2.bf16.msra.mxu0 0
  %918 = vmatprep.subr.bf16.mxu0 0
  %919 = vmatpush2.bf16.msra.mxu0 0
  %920 = vmatprep.subr.bf16.mxu0 0
  %921 = vmatpush2.bf16.msra.mxu0 0
  %922 = vmatprep.subr.bf16.mxu0 0
  %923 = vmatpush2.bf16.msra.mxu0 0
  %924 = vmatprep.subr.bf16.mxu0 0
  %925 = vmatpush2.bf16.msra.mxu0 0
  %926 = vmatprep.mubr.bf16.mxu0 0
  %927 = vmatmul.mubr.bf16.gmra.mxu0 %v828
  %v928 = vpop.f32.mrf.mxu0
  %v929 = vadd.f32 %v603, %v928
  %v930 = vpop.f32.mrf.mxu0
  %v931 = vpop.f32.mrf.mxu0
  %v932 = vadd.f32 %v606, %v931
  %v933 = vpop.f32.mrf.mxu0
  %934 = vmatprep.mubr.bf16.mxu0 0
  %935 = vmatmul.mubr.bf16.gmra.mxu0 %v829
  %v936 = vpop.f32.mrf.mxu0
  %v937 = vadd.f32 %v609, %v936
  %v938 = vpop.f32.mrf.mxu0
  %v939 = vpop.f32.mrf.mxu0
  %v940 = vadd.f32 %v612, %v939
  %v941 = vpop.f32.mrf.mxu0
  %942 = vdwg.mxu0
  %v943 = vtanh.pop %v929
  %v944 = vtanh.pop %v932
  %v945 = vtanh.pop %v937
  %v946 = vtanh.pop %v940
  %v947 = vsub.f32 1.0, %v789
  %v948 = vsub.f32 1.0, %v791
  %v949 = vsub.f32 1.0, %v793
  %v950 = vsub.f32 1.0, %v795
  %v951 = vmul.f32 %v947, %v613
  %v952 = vmul.f32 %v948, %v614
  %v953 = vmul.f32 %v949, %v615
  %v954 = vmul.f32 %v950, %v616
  %v955 = vmul.f32 %v789, %v943
  %v956 = vmul.f32 %v791, %v944
  %v957 = vmul.f32 %v793, %v945
  %v958 = vmul.f32 %v795, %v946
  %v959 = vadd.f32 %v951, %v955
  %v960 = vadd.f32 %v952, %v956
  %v961 = vadd.f32 %v953, %v957
  %v962 = vadd.f32 %v954, %v958
  %963 = vst [vmem:[%s15] sm:$0xff] %v959
  %964 = vst [vmem:[%s15 + $0x8] sm:$0xff] %v960
  %965 = vst [vmem:[%s15 + $0x10] sm:$0xff] %v961
  %966 = vst [vmem:[%s15 + $0x18] sm:$0xff] %v962
  %v967 = vadd.f32 %v959, %v960
  %v968 = vrot.slane %v967, 4
  %v969 = vadd.f32 %v967, %v968
  %v970 = vrot.slane %v969, 2
  %v971 = vadd.f32 %v969, %v970
  %v972 = vrot.slane %v971, 1
  %v973 = vadd.f32 %v971, %v972
  %v974 = vrcp.pop 16.0
  %v975 = vmul.f32 %v973, %v974
  %v976 = vadd.f32 %v961, %v962
  %v977 = vrot.slane %v976, 4
  %v978 = vadd.f32 %v976, %v977
  %v979 = vrot.slane %v978, 2
  %v980 = vadd.f32 %v978, %v979
  %v981 = vrot.slane %v980, 1
  %v982 = vadd.f32 %v980, %v981
  %v983 = vmul.f32 %v982, %v974
  %vm984 = vcmask 1040384
  %v985 = vsel %vm984, %v975, %v983
  %v986 = vpack.c.bf16 %v985, %v985
  %v987 = vld [vmem:[%s11] sm:$0xf]
  %v988 = vld [vmem:[%s11 + $0x4] sm:$0xf]
  %v989 = vld [vmem:[%s11 + $0x8] sm:$0xf]
  %v990 = vld [vmem:[%s11 + $0xc] sm:$0xf]
  %v991 = vld [vmem:[%s11 + $0x10] sm:$0xf]
  %v992 = vld [vmem:[%s11 + $0x14] sm:$0xf]
  %v993 = vld [vmem:[%s11 + $0x18] sm:$0xf]
  %v994 = vld [vmem:[%s11 + $0x1c] sm:$0xf]
  %v995 = vld [vmem:[%s11 + $0x20] sm:$0xf]
  %v996 = vld [vmem:[%s11 + $0x24] sm:$0xf]
  %v997 = vld [vmem:[%s11 + $0x28] sm:$0xf]
  %v998 = vld [vmem:[%s11 + $0x2c] sm:$0xf]
  %v999 = vld [vmem:[%s11 + $0x30] sm:$0xf]
  %v1000 = vld [vmem:[%s11 + $0x34] sm:$0xf]
  %v1001 = vld [vmem:[%s11 + $0x38] sm:$0xf]
  %v1002 = vld [vmem:[%s11 + $0x3c] sm:$0xf]
  %v1003 = vld [vmem:[%s12] sm:$0x1]
  %v1005 = vlaneseq
  %v1006 = vshrl.u32 %v1005, 7
  %v1007 = vsub.s32 0, %v1006
  %v1008 = vrot.slane %v1003, %v1007
  %v1026 = vunpack.c.l.b16 %v987
  %v1027 = vunpack.c.l.b16 %v988
  %v1028 = vunpack.c.l.b16 %v989
  %v1029 = vunpack.c.l.b16 %v990
  %v1030 = vunpack.c.l.b16 %v991
  %v1031 = vunpack.c.l.b16 %v992
  %v1032 = vunpack.c.l.b16 %v993
  %v1033 = vunpack.c.l.b16 %v994
  %v1034 = vunpack.c.l.b16 %v995
  %v1035 = vunpack.c.l.b16 %v996
  %v1036 = vunpack.c.l.b16 %v997
  %v1037 = vunpack.c.l.b16 %v998
  %v1038 = vunpack.c.l.b16 %v999
  %v1039 = vunpack.c.l.b16 %v1000
  %v1040 = vunpack.c.l.b16 %v1001
  %v1041 = vunpack.c.l.b16 %v1002
  %v1042 = vpack.c.b16 %v1027, %v1026
  %v1043 = vpack.c.b16 %v1029, %v1028
  %v1044 = vpack.c.b16 %v1031, %v1030
  %v1045 = vpack.c.b16 %v1033, %v1032
  %v1046 = vpack.c.b16 %v1035, %v1034
  %v1047 = vpack.c.b16 %v1037, %v1036
  %v1048 = vpack.c.b16 %v1039, %v1038
  %v1049 = vpack.c.b16 %v1041, %v1040
  %1058 = vmatprep.subr.bf16.mxu0 0
  %1059 = vmatpush1.bf16.msra.mxu0 %v1049
  %1060 = vmatprep.subr.bf16.mxu0 0
  %1061 = vmatpush1.bf16.msra.mxu0 %v1048
  %1062 = vmatprep.subr.bf16.mxu0 0
  %1063 = vmatpush1.bf16.msra.mxu0 %v1047
  %1064 = vmatprep.subr.bf16.mxu0 0
  %1065 = vmatpush1.bf16.msra.mxu0 %v1046
  %1066 = vmatprep.subr.bf16.mxu0 0
  %1067 = vmatpush1.bf16.msra.mxu0 %v1045
  %1068 = vmatprep.subr.bf16.mxu0 0
  %1069 = vmatpush1.bf16.msra.mxu0 %v1044
  %1070 = vmatprep.subr.bf16.mxu0 0
  %1071 = vmatpush1.bf16.msra.mxu0 %v1043
  %1072 = vmatprep.subr.bf16.mxu0 0
  %1073 = vmatpush1.bf16.msra.mxu0 %v1042
  %1074 = vmatprep.subr.bf16.mxu0 0
  %1075 = vmatpush2.bf16.msra.mxu0 0
  %1076 = vmatprep.subr.bf16.mxu0 0
  %1077 = vmatpush2.bf16.msra.mxu0 0
  %1078 = vmatprep.subr.bf16.mxu0 0
  %1079 = vmatpush2.bf16.msra.mxu0 0
  %1080 = vmatprep.subr.bf16.mxu0 0
  %1081 = vmatpush2.bf16.msra.mxu0 0
  %1082 = vmatprep.subr.bf16.mxu0 0
  %1083 = vmatpush2.bf16.msra.mxu0 0
  %1084 = vmatprep.subr.bf16.mxu0 0
  %1085 = vmatpush2.bf16.msra.mxu0 0
  %1086 = vmatprep.subr.bf16.mxu0 0
  %1087 = vmatpush2.bf16.msra.mxu0 0
  %1088 = vmatprep.subr.bf16.mxu0 0
  %1089 = vmatpush2.bf16.msra.mxu0 0
  %1090 = vmatprep.mubr.bf16.mxu0 0
  %1091 = vmatmul.mubr.bf16.gmra.mxu0 %v986
  %v1092 = vpop.f32.mrf.mxu0
  %v1093 = vadd.f32 %v1008, %v1092
  %v1094 = vpop.f32.mrf.mxu0
  %v1095 = vpop.f32.mrf.mxu0
  %v1096 = vpop.f32.mrf.mxu0
  %1097 = vdwg.mxu0
  %v1098 = vmax.f32 %v1093, 0.0
  %v1099 = vpack.c.bf16 %v1098, %v1098
  %v1100 = vld [vmem:[%s13] sm:$0xf]
  %v1101 = vld [vmem:[%s13 + $0x4] sm:$0xf]
  %v1102 = vld [vmem:[%s13 + $0x8] sm:$0xf]
  %v1103 = vld [vmem:[%s13 + $0xc] sm:$0xf]
  %v1104 = vld [vmem:[%s13 + $0x10] sm:$0xf]
  %v1105 = vld [vmem:[%s13 + $0x14] sm:$0xf]
  %v1106 = vld [vmem:[%s13 + $0x18] sm:$0xf]
  %v1107 = vld [vmem:[%s13 + $0x1c] sm:$0xf]
  %v1108 = vld [vmem:[%s13 + $0x20] sm:$0xf]
  %v1109 = vld [vmem:[%s13 + $0x24] sm:$0xf]
  %v1110 = vld [vmem:[%s13 + $0x28] sm:$0xf]
  %v1111 = vld [vmem:[%s13 + $0x2c] sm:$0xf]
  %v1112 = vld [vmem:[%s13 + $0x30] sm:$0xf]
  %v1113 = vld [vmem:[%s13 + $0x34] sm:$0xf]
  %v1114 = vld [vmem:[%s13 + $0x38] sm:$0xf]
  %v1115 = vld [vmem:[%s13 + $0x3c] sm:$0xf]
  %v1116 = vld [vmem:[%s14] sm:$0x1]
  %v1118 = vlaneseq
  %v1119 = vshrl.u32 %v1118, 7
  %v1120 = vsub.s32 0, %v1119
  %v1121 = vrot.slane %v1116, %v1120
  %v1139 = vunpack.c.l.b16 %v1100
  %v1140 = vunpack.c.l.b16 %v1101
  %v1141 = vunpack.c.l.b16 %v1102
  %v1142 = vunpack.c.l.b16 %v1103
  %v1143 = vunpack.c.l.b16 %v1104
  %v1144 = vunpack.c.l.b16 %v1105
  %v1145 = vunpack.c.l.b16 %v1106
  %v1146 = vunpack.c.l.b16 %v1107
  %v1147 = vunpack.c.l.b16 %v1108
  %v1148 = vunpack.c.l.b16 %v1109
  %v1149 = vunpack.c.l.b16 %v1110
  %v1150 = vunpack.c.l.b16 %v1111
  %v1151 = vunpack.c.l.b16 %v1112
  %v1152 = vunpack.c.l.b16 %v1113
  %v1153 = vunpack.c.l.b16 %v1114
  %v1154 = vunpack.c.l.b16 %v1115
  %v1155 = vpack.c.b16 %v1140, %v1139
  %v1156 = vpack.c.b16 %v1142, %v1141
  %v1157 = vpack.c.b16 %v1144, %v1143
  %v1158 = vpack.c.b16 %v1146, %v1145
  %v1159 = vpack.c.b16 %v1148, %v1147
  %v1160 = vpack.c.b16 %v1150, %v1149
  %v1161 = vpack.c.b16 %v1152, %v1151
  %v1162 = vpack.c.b16 %v1154, %v1153
  %1171 = vmatprep.subr.bf16.mxu0 0
  %1172 = vmatpush1.bf16.msra.mxu0 %v1162
  %1173 = vmatprep.subr.bf16.mxu0 0
  %1174 = vmatpush1.bf16.msra.mxu0 %v1161
  %1175 = vmatprep.subr.bf16.mxu0 0
  %1176 = vmatpush1.bf16.msra.mxu0 %v1160
  %1177 = vmatprep.subr.bf16.mxu0 0
  %1178 = vmatpush1.bf16.msra.mxu0 %v1159
  %1179 = vmatprep.subr.bf16.mxu0 0
  %1180 = vmatpush1.bf16.msra.mxu0 %v1158
  %1181 = vmatprep.subr.bf16.mxu0 0
  %1182 = vmatpush1.bf16.msra.mxu0 %v1157
  %1183 = vmatprep.subr.bf16.mxu0 0
  %1184 = vmatpush1.bf16.msra.mxu0 %v1156
  %1185 = vmatprep.subr.bf16.mxu0 0
  %1186 = vmatpush1.bf16.msra.mxu0 %v1155
  %1187 = vmatprep.subr.bf16.mxu0 0
  %1188 = vmatpush2.bf16.msra.mxu0 0
  %1189 = vmatprep.subr.bf16.mxu0 0
  %1190 = vmatpush2.bf16.msra.mxu0 0
  %1191 = vmatprep.subr.bf16.mxu0 0
  %1192 = vmatpush2.bf16.msra.mxu0 0
  %1193 = vmatprep.subr.bf16.mxu0 0
  %1194 = vmatpush2.bf16.msra.mxu0 0
  %1195 = vmatprep.subr.bf16.mxu0 0
  %1196 = vmatpush2.bf16.msra.mxu0 0
  %1197 = vmatprep.subr.bf16.mxu0 0
  %1198 = vmatpush2.bf16.msra.mxu0 0
  %1199 = vmatprep.subr.bf16.mxu0 0
  %1200 = vmatpush2.bf16.msra.mxu0 0
  %1201 = vmatprep.subr.bf16.mxu0 0
  %1202 = vmatpush2.bf16.msra.mxu0 0
  %1203 = vmatprep.mubr.bf16.mxu0 0
  %1204 = vmatmul.mubr.bf16.gmra.mxu0 %v1099
  %v1205 = vpop.f32.mrf.mxu0
  %v1206 = vadd.f32 %v1121, %v1205
  %v1207 = vpop.f32.mrf.mxu0
  %v1208 = vpop.f32.mrf.mxu0
  %v1209 = vpop.f32.mrf.mxu0
  %1210 = vdwg.mxu0
  %v1211 = vmul.f32 %v1206, 0.01
  %v1212 = vld [vmem:[%s3] sm:$0x3]
  %v1213 = vadd.f32 %v1212, %v1211
  %vm1214 = vcmask 41984
  %1215 = vst.msk [vmem:[%s16] sm:$0x3] %vm1214, %v1213
  // Predicated region
  $region62: #{forward.43} parent=0 // pred_check
    _
  $region63: #{forward.43} parent=0 // pred_check_branch
    %1217 = sbr.rel (0) target = $region65
  $region64: #{forward.43} parent=0 // pred_region
    _
  $region65: #{forward.43} parent=0 // pred_fallthru
    _
  // Predicated region
  $region66: #{forward.43} parent=0 // pred_check
    _
  $region67: #{forward.43} parent=0 // pred_check_branch
    %1219 = sbr.rel (0) target = $region69
  $region68: #{forward.43} parent=0 // pred_region
    _
  $region69: #{forward.43} parent=0 // pred_fallthru
    _
  // Predicated region
  $region70: #{forward.43} parent=0 // pred_check
    _
  $region71: #{forward.43} parent=0 // pred_check_branch
    %1221 = sbr.rel (0) target = $region73
  $region72: #{forward.43} parent=0 // pred_region
    _
  $region73: #{forward.43} parent=0 // pred_fallthru
    _
  // Predicated region
  $region74: #{forward.43} parent=0 // pred_check
    _
  $region75: #{forward.43} parent=0 // pred_check_branch
    %1223 = sbr.rel (0) target = $region77
  $region76: #{forward.43} parent=0 // pred_region
    _
  $region77: #{forward.43} parent=0 // pred_fallthru
    _

// kernel: forward.35
$region0: #{forward.35}
  #allocation0 [shape = 'u32[]', space=smem, size = 0x4, offset = 0x4, fixed_abs, tag = 'smem constant byte address 0x4 - core index']
  #allocation1 [shape = 'u32[144,128]{1,0:T(1,128)}', space=vmem, size = 0x12000, scoped, tag = 'internal scratch']
  %s0 = inlined_call_operand.vmem [shape: bf16[16,192], index: 0, kind: input, shape index: {}]
  %s1 = inlined_call_operand.vmem [shape: bf16[192,160], index: 1, kind: input, shape index: {}]
  %s2 = inlined_call_operand.vmem [shape: f32[1,160], index: 2, kind: input, shape index: {}]
  %s3 = inlined_call_operand.vmem [shape: f32[16,160], index: 3, kind: output, shape index: {}]
  %s4 = sld [smem:[#allocation0]]
  $region22: #{forward.35} parent=0
    _
  %s6 = ssub.s32 1, %s4
  %s7 = scalar_select 0, %s6, %s4
  // Predicated region
  $region2: #{forward.35} parent=0 // pred_check
    _
  $region3: #{forward.35} parent=0 // pred_check_branch
    %9 = sbr.rel (0) target = $region5
  $region4: #{forward.35} parent=0 // pred_region
    _
  $region5: #{forward.35} parent=0 // pred_fallthru
    _
  // Predicated region
  $region6: #{forward.35} parent=0 // pred_check
    _
  $region7: #{forward.35} parent=0 // pred_check_branch
    %11 = sbr.rel (0) target = $region9
  $region8: #{forward.35} parent=0 // pred_region
    _
  $region9: #{forward.35} parent=0 // pred_fallthru
    _
  // Predicated region
  $region10: #{forward.35} parent=0 // pred_check
    _
  $region11: #{forward.35} parent=0 // pred_check_branch
    %13 = sbr.rel (0) target = $region13
  $region12: #{forward.35} parent=0 // pred_region
    _
  $region13: #{forward.35} parent=0 // pred_fallthru
    _
  %v15 = vld [vmem:[%s0] sm:$0xff]
  %v16 = vld [vmem:[%s0 + $0x8] sm:$0xff]
  %v17 = vld [vmem:[%s1] sm:$0xff]
  %v18 = vld [vmem:[%s1 + $0x8] sm:$0xff]
  %v19 = vld [vmem:[%s1 + $0x10] sm:$0xff]
  %v20 = vld [vmem:[%s1 + $0x18] sm:$0xff]
  %v21 = vld [vmem:[%s1 + $0x20] sm:$0xff]
  %v22 = vld [vmem:[%s1 + $0x28] sm:$0xff]
  %v23 = vld [vmem:[%s1 + $0x30] sm:$0xff]
  %v24 = vld [vmem:[%s1 + $0x38] sm:$0xff]
  %v25 = vld [vmem:[%s1 + $0x40] sm:$0xff]
  %v26 = vld [vmem:[%s1 + $0x48] sm:$0xff]
  %v27 = vld [vmem:[%s1 + $0x50] sm:$0xff]
  %v28 = vld [vmem:[%s1 + $0x58] sm:$0xff]
  %v29 = vld [vmem:[%s1 + $0x60] sm:$0xff]
  %v30 = vld [vmem:[%s1 + $0x68] sm:$0xff]
  %v31 = vld [vmem:[%s1 + $0x70] sm:$0xff]
  %v32 = vld [vmem:[%s1 + $0x78] sm:$0xff]
  %v33 = vld [vmem:[%s1 + $0x80] sm:$0xff]
  %v34 = vld [vmem:[%s1 + $0x88] sm:$0xff]
  %v35 = vld [vmem:[%s1 + $0x90] sm:$0xff]
  %v36 = vld [vmem:[%s1 + $0x98] sm:$0xff]
  %v37 = vld [vmem:[%s1 + $0xa0] sm:$0xff]
  %v38 = vld [vmem:[%s1 + $0xa8] sm:$0xff]
  %v39 = vld [vmem:[%s1 + $0xb0] sm:$0xff]
  %v40 = vld [vmem:[%s1 + $0xb8] sm:$0xff]
  %v41 = vld [vmem:[%s2] sm:$0x3]
  %v43 = vlaneseq
  %v44 = vshrl.u32 %v43, 7
  %v45 = vsub.s32 0, %v44
  %v46 = vrot.slane %v41, %v45
  %v47 = vlaneseq
  %v48 = vshrl.u32 %v47, 7
  %v49 = vsub.s32 1, %v48
  %v50 = vrot.slane %v41, %v49
  %v55 = vunpack.c.l.b16 %v15
  %v56 = vunpack.c.h.b16 %v15
  %v57 = vunpack.c.l.b16 %v16
  %v58 = vunpack.c.h.b16 %v16
  %v59 = vpack.c.b16 %v57, %v55
  %v60 = vpack.c.b16 %v58, %v56
  %v86 = vunpack.c.l.b16 %v17
  %v87 = vunpack.c.h.b16 %v17
  %v88 = vunpack.c.l.b16 %v18
  %v89 = vunpack.c.h.b16 %v18
  %v90 = vunpack.c.l.b16 %v19
  %v91 = vunpack.c.h.b16 %v19
  %v92 = vunpack.c.l.b16 %v20
  %v93 = vunpack.c.h.b16 %v20
  %v94 = vunpack.c.l.b16 %v21
  %v95 = vunpack.c.h.b16 %v21
  %v96 = vunpack.c.l.b16 %v22
  %v97 = vunpack.c.h.b16 %v22
  %v98 = vunpack.c.l.b16 %v23
  %v99 = vunpack.c.h.b16 %v23
  %v100 = vunpack.c.l.b16 %v24
  %v101 = vunpack.c.h.b16 %v24
  %v102 = vunpack.c.l.b16 %v25
  %v103 = vunpack.c.h.b16 %v25
  %v104 = vunpack.c.l.b16 %v26
  %v105 = vunpack.c.h.b16 %v26
  %v106 = vunpack.c.l.b16 %v27
  %v107 = vunpack.c.h.b16 %v27
  %v108 = vunpack.c.l.b16 %v28
  %v109 = vunpack.c.h.b16 %v28
  %v110 = vunpack.c.l.b16 %v29
  %v111 = vunpack.c.h.b16 %v29
  %v112 = vunpack.c.l.b16 %v30
  %v113 = vunpack.c.h.b16 %v30
  %v114 = vunpack.c.l.b16 %v31
  %v115 = vunpack.c.h.b16 %v31
  %v116 = vunpack.c.l.b16 %v32
  %v117 = vunpack.c.h.b16 %v32
  %v118 = vunpack.c.l.b16 %v33
  %v119 = vunpack.c.h.b16 %v33
  %v120 = vunpack.c.l.b16 %v34
  %v121 = vunpack.c.h.b16 %v34
  %v122 = vunpack.c.l.b16 %v35
  %v123 = vunpack.c.h.b16 %v35
  %v124 = vunpack.c.l.b16 %v36
  %v125 = vunpack.c.h.b16 %v36
  %v126 = vunpack.c.l.b16 %v37
  %v127 = vunpack.c.h.b16 %v37
  %v128 = vunpack.c.l.b16 %v38
  %v129 = vunpack.c.h.b16 %v38
  %v130 = vunpack.c.l.b16 %v39
  %v131 = vunpack.c.h.b16 %v39
  %v132 = vunpack.c.l.b16 %v40
  %v133 = vunpack.c.h.b16 %v40
  %v134 = vpack.c.b16 %v88, %v86
  %v135 = vpack.c.b16 %v89, %v87
  %v136 = vpack.c.b16 %v92, %v90
  %v137 = vpack.c.b16 %v93, %v91
  %v138 = vpack.c.b16 %v96, %v94
  %v139 = vpack.c.b16 %v97, %v95
  %v140 = vpack.c.b16 %v100, %v98
  %v141 = vpack.c.b16 %v101, %v99
  %v142 = vpack.c.b16 %v104, %v102
  %v143 = vpack.c.b16 %v105, %v103
  %v144 = vpack.c.b16 %v108, %v106
  %v145 = vpack.c.b16 %v109, %v107
  %v146 = vpack.c.b16 %v112, %v110
  %v147 = vpack.c.b16 %v113, %v111
  %v148 = vpack.c.b16 %v116, %v114
  %v149 = vpack.c.b16 %v117, %v115
  %v150 = vpack.c.b16 %v120, %v118
  %v151 = vpack.c.b16 %v121, %v119
  %v152 = vpack.c.b16 %v124, %v122
  %v153 = vpack.c.b16 %v125, %v123
  %v154 = vpack.c.b16 %v128, %v126
  %v155 = vpack.c.b16 %v129, %v127
  %v156 = vpack.c.b16 %v132, %v130
  %v157 = vpack.c.b16 %v133, %v131
  %vm182 = vcmask 523264
  %v184 = vsel %vm182, %v60, 0
  %186 = vmatprep.subr.bf16.mxu0 %v149
  %187 = vmatpush1.bf16.msra.mxu0 %v148
  %188 = vmatprep.subr.bf16.mxu0 %v147
  %189 = vmatpush1.bf16.msra.mxu0 %v146
  %190 = vmatprep.subr.bf16.mxu0 %v145
  %191 = vmatpush1.bf16.msra.mxu0 %v144
  %192 = vmatprep.subr.bf16.mxu0 %v143
  %193 = vmatpush1.bf16.msra.mxu0 %v142
  %194 = vmatprep.subr.bf16.mxu0 %v141
  %195 = vmatpush1.bf16.msra.mxu0 %v140
  %196 = vmatprep.subr.bf16.mxu0 %v139
  %197 = vmatpush1.bf16.msra.mxu0 %v138
  %198 = vmatprep.subr.bf16.mxu0 %v137
  %199 = vmatpush1.bf16.msra.mxu0 %v136
  %200 = vmatprep.subr.bf16.mxu0 %v135
  %201 = vmatpush1.bf16.msra.mxu0 %v134
  %202 = vmatprep.subr.bf16.mxu0 0
  %203 = vmatpush2.bf16.msra.mxu0 0
  %204 = vmatprep.subr.bf16.mxu0 0
  %205 = vmatpush2.bf16.msra.mxu0 0
  %206 = vmatprep.subr.bf16.mxu0 0
  %207 = vmatpush2.bf16.msra.mxu0 0
  %208 = vmatprep.subr.bf16.mxu0 0
  %209 = vmatpush2.bf16.msra.mxu0 0
  %210 = vmatprep.subr.bf16.mxu0 %v157
  %211 = vmatpush2.bf16.msra.mxu0 %v156
  %212 = vmatprep.subr.bf16.mxu0 %v155
  %213 = vmatpush2.bf16.msra.mxu0 %v154
  %214 = vmatprep.subr.bf16.mxu0 %v153
  %215 = vmatpush2.bf16.msra.mxu0 %v152
  %216 = vmatprep.subr.bf16.mxu0 %v151
  %217 = vmatpush2.bf16.msra.mxu0 %v150
  %218 = vmatprep.mubr.bf16.mxu0 %v184
  %219 = vmatmul.mubr.bf16.gmra.mxu0 %v59
  %v220 = vpop.f32.mrf.mxu0
  %v221 = vadd.f32 %v46, %v220
  %v222 = vpop.f32.mrf.mxu0
  %v223 = vadd.f32 %v50, %v222
  %v224 = vpop.f32.mrf.mxu0
  %v225 = vadd.f32 %v46, %v224
  %v226 = vpop.f32.mrf.mxu0
  %v227 = vadd.f32 %v50, %v226
  %228 = vdwg.mxu0
  %229 = vst [vmem:[%s3] sm:$0xff] %v221
  %vm230 = vcmask 261120
  %231 = vst.msk [vmem:[%s3 + $0x8] sm:$0xff] %vm230, %v223
  %232 = vst [vmem:[%s3 + $0x10] sm:$0xff] %v225
  %233 = vst.msk [vmem:[%s3 + $0x18] sm:$0xff] %vm230, %v227
  // Predicated region
  $region14: #{forward.35} parent=0 // pred_check
    _
  $region15: #{forward.35} parent=0 // pred_check_branch
    %235 = sbr.rel (0) target = $region17
  $region16: #{forward.35} parent=0 // pred_region
    _
  $region17: #{forward.35} parent=0 // pred_fallthru
    _
  // Predicated region
  $region18: #{forward.35} parent=0 // pred_check
    _
  $region19: #{forward.35} parent=0 // pred_check_branch
    %237 = sbr.rel (0) target = $region21
  $region20: #{forward.35} parent=0 // pred_region
    _
  $region21: #{forward.35} parent=0 // pred_fallthru
    _

// kernel: forward.37
$region0: #{forward.37}
  #allocation0 [shape = 'u32[]', space=smem, size = 0x4, offset = 0x4, fixed_abs, tag = 'smem constant byte address 0x4 - core index']
  #allocation1 [shape = 'u32[144,128]{1,0:T(1,128)}', space=vmem, size = 0x12000, scoped, tag = 'internal scratch']
  %s0 = inlined_call_operand.vmem [shape: bf16[16,32], index: 0, kind: input, shape index: {}]
  %s1 = inlined_call_operand.vmem [shape: bf16[32,384], index: 1, kind: input, shape index: {}]
  %s2 = inlined_call_operand.vmem [shape: f32[1,384], index: 2, kind: input, shape index: {}]
  %s3 = inlined_call_operand.vmem [shape: f32[16,384], index: 3, kind: output, shape index: {}]
  %s4 = sld [smem:[#allocation0]]
  $region22: #{forward.37} parent=0
    _
  %s6 = ssub.s32 1, %s4
  %s7 = scalar_select 0, %s6, %s4
  // Predicated region
  $region2: #{forward.37} parent=0 // pred_check
    _
  $region3: #{forward.37} parent=0 // pred_check_branch
    %9 = sbr.rel (0) target = $region5
  $region4: #{forward.37} parent=0 // pred_region
    _
  $region5: #{forward.37} parent=0 // pred_fallthru
    _
  // Predicated region
  $region6: #{forward.37} parent=0 // pred_check
    _
  $region7: #{forward.37} parent=0 // pred_check_branch
    %11 = sbr.rel (0) target = $region9
  $region8: #{forward.37} parent=0 // pred_region
    _
  $region9: #{forward.37} parent=0 // pred_fallthru
    _
  // Predicated region
  $region10: #{forward.37} parent=0 // pred_check
    _
  $region11: #{forward.37} parent=0 // pred_check_branch
    %13 = sbr.rel (0) target = $region13
  $region12: #{forward.37} parent=0 // pred_region
    _
  $region13: #{forward.37} parent=0 // pred_fallthru
    _
  %v15 = vld [vmem:[%s0] sm:$0xf]
  %v16 = vld [vmem:[%s0 + $0x4] sm:$0xf]
  %v17 = vld [vmem:[%s1] sm:$0xff]
  %v18 = vld [vmem:[%s1 + $0x8] sm:$0xf]
  %v19 = vld [vmem:[%s1 + $0xc] sm:$0xff]
  %v20 = vld [vmem:[%s1 + $0x14] sm:$0xf]
  %v21 = vld [vmem:[%s1 + $0x18] sm:$0xff]
  %v22 = vld [vmem:[%s1 + $0x20] sm:$0xf]
  %v23 = vld [vmem:[%s1 + $0x24] sm:$0xff]
  %v24 = vld [vmem:[%s1 + $0x2c] sm:$0xf]
  %v25 = vld [vmem:[%s2] sm:$0x7]
  %v27 = vlaneseq
  %v28 = vshrl.u32 %v27, 7
  %v29 = vsub.s32 0, %v28
  %v30 = vrot.slane %v25, %v29
  %v31 = vlaneseq
  %v32 = vshrl.u32 %v31, 7
  %v33 = vsub.s32 1, %v32
  %v34 = vrot.slane %v25, %v33
  %v35 = vlaneseq
  %v36 = vshrl.u32 %v35, 7
  %v37 = vsub.s32 2, %v36
  %v38 = vrot.slane %v25, %v37
  %v44 = vunpack.c.l.b16 %v15
  %v45 = vunpack.c.l.b16 %v16
  %v46 = vpack.c.b16 %v45, %v44
  %v55 = vunpack.c.l.b16 %v17
  %v56 = vunpack.c.h.b16 %v17
  %v57 = vunpack.c.l.b16 %v18
  %v58 = vunpack.c.l.b16 %v19
  %v59 = vunpack.c.h.b16 %v19
  %v60 = vunpack.c.l.b16 %v20
  %v61 = vunpack.c.l.b16 %v21
  %v62 = vunpack.c.h.b16 %v21
  %v63 = vunpack.c.l.b16 %v22
  %v64 = vunpack.c.l.b16 %v23
  %v65 = vunpack.c.h.b16 %v23
  %v66 = vunpack.c.l.b16 %v24
  %v67 = vpack.c.b16 %v58, %v55
  %v68 = vpack.c.b16 %v59, %v56
  %v69 = vpack.c.b16 %v60, %v57
  %v70 = vpack.c.b16 %v64, %v61
  %v71 = vpack.c.b16 %v65, %v62
  %v72 = vpack.c.b16 %v66, %v63
  %vm79 = vcmask 261120
  %v81 = vsel %vm79, %v46, 0
  %83 = vmatprep.subr.bf16.mxu0 0
  %84 = vmatpush1.bf16.msra.mxu0 0
  %85 = vmatprep.subr.bf16.mxu0 0
  %86 = vmatpush1.bf16.msra.mxu0 0
  %87 = vmatprep.subr.bf16.mxu0 0
  %88 = vmatpush1.bf16.msra.mxu0 0
  %89 = vmatprep.subr.bf16.mxu0 0
  %90 = vmatpush1.bf16.msra.mxu0 0
  %91 = vmatprep.subr.bf16.mxu0 0
  %92 = vmatpush1.bf16.msra.mxu0 0
  %93 = vmatprep.subr.bf16.mxu0 0
  %94 = vmatpush1.bf16.msra.mxu0 0
  %95 = vmatprep.subr.bf16.mxu0 %v71
  %96 = vmatpush1.bf16.msra.mxu0 %v70
  %97 = vmatprep.subr.bf16.mxu0 %v68
  %98 = vmatpush1.bf16.msra.mxu0 %v67
  %99 = vmatprep.subr.bf16.mxu0 0
  %100 = vmatpush2.bf16.msra.mxu0 0
  %101 = vmatprep.subr.bf16.mxu0 0
  %102 = vmatpush2.bf16.msra.mxu0 0
  %103 = vmatprep.subr.bf16.mxu0 0
  %104 = vmatpush2.bf16.msra.mxu0 0
  %105 = vmatprep.subr.bf16.mxu0 0
  %106 = vmatpush2.bf16.msra.mxu0 0
  %107 = vmatprep.subr.bf16.mxu0 0
  %108 = vmatpush2.bf16.msra.mxu0 0
  %109 = vmatprep.subr.bf16.mxu0 0
  %110 = vmatpush2.bf16.msra.mxu0 0
  %111 = vmatprep.subr.bf16.mxu0 0
  %112 = vmatpush2.bf16.msra.mxu0 0
  %113 = vmatprep.subr.bf16.mxu0 0
  %114 = vmatpush2.bf16.msra.mxu0 0
  %115 = vmatprep.mubr.bf16.mxu0 0
  %116 = vmatmul.mubr.bf16.gmra.mxu0 %v81
  %v117 = vpop.f32.mrf.mxu0
  %v118 = vadd.f32 %v30, %v117
  %v119 = vpop.f32.mrf.mxu0
  %v120 = vadd.f32 %v34, %v119
  %v121 = vpop.f32.mrf.mxu0
  %v122 = vadd.f32 %v30, %v121
  %v123 = vpop.f32.mrf.mxu0
  %v124 = vadd.f32 %v34, %v123
  %125 = vdwg.mxu0
  %126 = vmatprep.subr.bf16.mxu0 0
  %127 = vmatpush1.bf16.msra.mxu0 0
  %128 = vmatprep.subr.bf16.mxu0 0
  %129 = vmatpush1.bf16.msra.mxu0 0
  %130 = vmatprep.subr.bf16.mxu0 0
  %131 = vmatpush1.bf16.msra.mxu0 0
  %132 = vmatprep.subr.bf16.mxu0 0
  %133 = vmatpush1.bf16.msra.mxu0 0
  %134 = vmatprep.subr.bf16.mxu0 0
  %135 = vmatpush1.bf16.msra.mxu0 0
  %136 = vmatprep.subr.bf16.mxu0 0
  %137 = vmatpush1.bf16.msra.mxu0 0
  %138 = vmatprep.subr.bf16.mxu0 0
  %139 = vmatpush1.bf16.msra.mxu0 %v72
  %140 = vmatprep.subr.bf16.mxu0 0
  %141 = vmatpush1.bf16.msra.mxu0 %v69
  %142 = vmatprep.subr.bf16.mxu0 0
  %143 = vmatpush2.bf16.msra.mxu0 0
  %144 = vmatprep.subr.bf16.mxu0 0
  %145 = vmatpush2.bf16.msra.mxu0 0
  %146 = vmatprep.subr.bf16.mxu0 0
  %147 = vmatpush2.bf16.msra.mxu0 0
  %148 = vmatprep.subr.bf16.mxu0 0
  %149 = vmatpush2.bf16.msra.mxu0 0
  %150 = vmatprep.subr.bf16.mxu0 0
  %151 = vmatpush2.bf16.msra.mxu0 0
  %152 = vmatprep.subr.bf16.mxu0 0
  %153 = vmatpush2.bf16.msra.mxu0 0
  %154 = vmatprep.subr.bf16.mxu0 0
  %155 = vmatpush2.bf16.msra.mxu0 0
  %156 = vmatprep.subr.bf16.mxu0 0
  %157 = vmatpush2.bf16.msra.mxu0 0
  %158 = vmatprep.mubr.bf16.mxu0 0
  %159 = vmatmul.mubr.bf16.gmra.mxu0 %v81
  %v160 = vpop.f32.mrf.mxu0
  %v161 = vadd.f32 %v38, %v160
  %v162 = vpop.f32.mrf.mxu0
  %v163 = vpop.f32.mrf.mxu0
  %v164 = vadd.f32 %v38, %v163
  %v165 = vpop.f32.mrf.mxu0
  %166 = vdwg.mxu0
  %167 = vst [vmem:[%s3] sm:$0xff] %v118
  %168 = vst [vmem:[%s3 + $0x8] sm:$0xff] %v120
  %169 = vst [vmem:[%s3 + $0x10] sm:$0xff] %v161
  %170 = vst [vmem:[%s3 + $0x18] sm:$0xff] %v122
  %171 = vst [vmem:[%s3 + $0x20] sm:$0xff] %v124
  %172 = vst [vmem:[%s3 + $0x28] sm:$0xff] %v164
  // Predicated region
  $region14: #{forward.37} parent=0 // pred_check
    _
  $region15: #{forward.37} parent=0 // pred_check_branch
    %174 = sbr.rel (0) target = $region17
  $region16: #{forward.37} parent=0 // pred_region
    _
  $region17: #{forward.37} parent=0 // pred_fallthru
    _
  // Predicated region
  $region18: #{forward.37} parent=0 // pred_check
    _
  $region19: #{forward.37} parent=0 // pred_check_branch
    %176 = sbr.rel (0) target = $region21
  $region20: #{forward.37} parent=0 // pred_region
    _
  $region21: #{forward.37} parent=0 // pred_fallthru
    _

// kernel: forward.39
$region0: #{forward.39}
  #allocation0 [shape = 'u32[]', space=smem, size = 0x4, offset = 0x4, fixed_abs, tag = 'smem constant byte address 0x4 - core index']
  #allocation1 [shape = 'u32[144,128]{1,0:T(1,128)}', space=vmem, size = 0x12000, scoped, tag = 'internal scratch']
  #allocation2 [shape = 'f32[1,1]{1,0:T(1,128)S(1)}', space=vmem, size = 0x200, scoped, tag = 'scoped memory for forward.39']
  %s0 = inlined_call_operand.vmem [shape: f32[16,128], index: 0, kind: input, shape index: {}]
  %s1 = inlined_call_operand.vmem [shape: f32[2,16,128], index: 1, kind: input, shape index: {}]
  %s2 = inlined_call_operand.vmem [shape: f32[16,128], index: 2, kind: input, shape index: {}]
  %s3 = inlined_call_operand.vmem [shape: f32[16,1], index: 3, kind: input, shape index: {}]
  %s4 = inlined_call_operand.vmem [shape: f32[16,384], index: 4, kind: input, shape index: {}]
  %s5 = inlined_call_operand.vmem [shape: f32[1,384], index: 5, kind: input, shape index: {}]
  %s6 = inlined_call_operand.vmem [shape: bf16[128,128], index: 6, kind: input, shape index: {}]
  %s7 = inlined_call_operand.vmem [shape: f32[1,128], index: 7, kind: input, shape index: {}]
  %s8 = inlined_call_operand.vmem [shape: bf16[128,256], index: 8, kind: input, shape index: {}]
  %s9 = inlined_call_operand.vmem [shape: bf16[128,384], index: 9, kind: input, shape index: {}]
  %s10 = inlined_call_operand.vmem [shape: bf16[128,128], index: 10, kind: input, shape index: {}]
  %s11 = inlined_call_operand.vmem [shape: bf16[128,128], index: 11, kind: input, shape index: {}]
  %s12 = inlined_call_operand.vmem [shape: f32[1,128], index: 12, kind: input, shape index: {}]
  %s13 = inlined_call_operand.vmem [shape: bf16[128,1], index: 13, kind: input, shape index: {}]
  %s14 = inlined_call_operand.<no memory space> [shape: f32[1,1], index: 14, kind: input, shape index: {}]
  %s15 = inlined_call_operand.vmem [shape: f32[16,128], index: 15, kind: output, shape index: {0}]
  %s16 = inlined_call_operand.vmem [shape: f32[16,1], index: 16, kind: output, shape index: {1}]
  %17 = xla_tuple %s15, %s16
  %s18 = sld [smem:[#allocation0]]
  $region78: #{forward.39} parent=0
    _
  %s20 = ssub.s32 1, %s18
  %s21 = scalar_select 0, %s20, %s18
  %v22 = vstv %s14
  %23 = vst [vmem:[#allocation2] sm:$0x1] %v22
  // Predicated region
  $region2: #{forward.39} parent=0 // pred_check
    _
  $region3: #{forward.39} parent=0 // pred_check_branch
    %25 = sbr.rel (0) target = $region5
  $region4: #{forward.39} parent=0 // pred_region
    _
  $region5: #{forward.39} parent=0 // pred_fallthru
    _
  // Predicated region
  $region6: #{forward.39} parent=0 // pred_check
    _
  $region7: #{forward.39} parent=0 // pred_check_branch
    %27 = sbr.rel (0) target = $region9
  $region8: #{forward.39} parent=0 // pred_region
    _
  $region9: #{forward.39} parent=0 // pred_fallthru
    _
  // Predicated region
  $region10: #{forward.39} parent=0 // pred_check
    _
  $region11: #{forward.39} parent=0 // pred_check_branch
    %29 = sbr.rel (0) target = $region13
  $region12: #{forward.39} parent=0 // pred_region
    _
  $region13: #{forward.39} parent=0 // pred_fallthru
    _
  // Predicated region
  $region14: #{forward.39} parent=0 // pred_check
    _
  $region15: #{forward.39} parent=0 // pred_check_branch
    %31 = sbr.rel (0) target = $region17
  $region16: #{forward.39} parent=0 // pred_region
    _
  $region17: #{forward.39} parent=0 // pred_fallthru
    _
  // Predicated region
  $region18: #{forward.39} parent=0 // pred_check
    _
  $region19: #{forward.39} parent=0 // pred_check_branch
    %33 = sbr.rel (0) target = $region21
  $region20: #{forward.39} parent=0 // pred_region
    _
  $region21: #{forward.39} parent=0 // pred_fallthru
    _
  // Predicated region
  $region22: #{forward.39} parent=0 // pred_check
    _
  $region23: #{forward.39} parent=0 // pred_check_branch
    %35 = sbr.rel (0) target = $region25
  $region24: #{forward.39} parent=0 // pred_region
    _
  $region25: #{forward.39} parent=0 // pred_fallthru
    _
  // Predicated region
  $region26: #{forward.39} parent=0 // pred_check
    _
  $region27: #{forward.39} parent=0 // pred_check_branch
    %37 = sbr.rel (0) target = $region29
  $region28: #{forward.39} parent=0 // pred_region
    _
  $region29: #{forward.39} parent=0 // pred_fallthru
    _
  // Predicated region
  $region30: #{forward.39} parent=0 // pred_check
    _
  $region31: #{forward.39} parent=0 // pred_check_branch
    %39 = sbr.rel (0) target = $region33
  $region32: #{forward.39} parent=0 // pred_region
    _
  $region33: #{forward.39} parent=0 // pred_fallthru
    _
  // Predicated region
  $region34: #{forward.39} parent=0 // pred_check
    _
  $region35: #{forward.39} parent=0 // pred_check_branch
    %41 = sbr.rel (0) target = $region37
  $region36: #{forward.39} parent=0 // pred_region
    _
  $region37: #{forward.39} parent=0 // pred_fallthru
    _
  // Predicated region
  $region38: #{forward.39} parent=0 // pred_check
    _
  $region39: #{forward.39} parent=0 // pred_check_branch
    %43 = sbr.rel (0) target = $region41
  $region40: #{forward.39} parent=0 // pred_region
    _
  $region41: #{forward.39} parent=0 // pred_fallthru
    _
  // Predicated region
  $region42: #{forward.39} parent=0 // pred_check
    _
  $region43: #{forward.39} parent=0 // pred_check_branch
    %45 = sbr.rel (0) target = $region45
  $region44: #{forward.39} parent=0 // pred_region
    _
  $region45: #{forward.39} parent=0 // pred_fallthru
    _
  // Predicated region
  $region46: #{forward.39} parent=0 // pred_check
    _
  $region47: #{forward.39} parent=0 // pred_check_branch
    %47 = sbr.rel (0) target = $region49
  $region48: #{forward.39} parent=0 // pred_region
    _
  $region49: #{forward.39} parent=0 // pred_fallthru
    _
  // Predicated region
  $region50: #{forward.39} parent=0 // pred_check
    _
  $region51: #{forward.39} parent=0 // pred_check_branch
    %49 = sbr.rel (0) target = $region53
  $region52: #{forward.39} parent=0 // pred_region
    _
  $region53: #{forward.39} parent=0 // pred_fallthru
    _
  // Predicated region
  $region54: #{forward.39} parent=0 // pred_check
    _
  $region55: #{forward.39} parent=0 // pred_check_branch
    %51 = sbr.rel (0) target = $region57
  $region56: #{forward.39} parent=0 // pred_region
    _
  $region57: #{forward.39} parent=0 // pred_fallthru
    _
  // Predicated region
  $region58: #{forward.39} parent=0 // pred_check
    _
  $region59: #{forward.39} parent=0 // pred_check_branch
    %53 = sbr.rel (0) target = $region61
  $region60: #{forward.39} parent=0 // pred_region
    _
  $region61: #{forward.39} parent=0 // pred_fallthru
    _
  %v55 = vld [vmem:[%s0] sm:$0xff]
  %v56 = vld [vmem:[%s0 + $0x8] sm:$0xff]
  %v57 = vld [vmem:[%s1] sm:$0xff]
  %v58 = vld [vmem:[%s1 + $0x8] sm:$0xff]
  %v59 = vsub.f32 %v57, %v55
  %v60 = vsub.f32 %v58, %v56
  %v61 = vmul.f32 %v59, %v59
  %v62 = vmul.f32 %v60, %v60
  %s63 = scalar_lea.vmem %s1, 16
  %v64 = vld [vmem:[%s63] sm:$0xff]
  %v65 = vld [vmem:[%s63 + $0x8] sm:$0xff]
  %v66 = vsub.f32 %v64, %v55
  %v67 = vsub.f32 %v65, %v56
  %v68 = vmul.f32 %v66, %v66
  %v69 = vmul.f32 %v67, %v67
  %v70 = vadd.f32 %v61, %v68
  %v71 = vadd.f32 %v62, %v69
  %v72 = vmul.f32 %v70, 0.5
  %v73 = vmul.f32 %v71, 0.5
  %v74 = vpack.c.bf16 %v73, %v72
  %v75 = vld [vmem:[%s6] sm:$0xf]
  %v76 = vld [vmem:[%s6 + $0x4] sm:$0xf]
  %v77 = vld [vmem:[%s6 + $0x8] sm:$0xf]
  %v78 = vld [vmem:[%s6 + $0xc] sm:$0xf]
  %v79 = vld [vmem:[%s6 + $0x10] sm:$0xf]
  %v80 = vld [vmem:[%s6 + $0x14] sm:$0xf]
  %v81 = vld [vmem:[%s6 + $0x18] sm:$0xf]
  %v82 = vld [vmem:[%s6 + $0x1c] sm:$0xf]
  %v83 = vld [vmem:[%s6 + $0x20] sm:$0xf]
  %v84 = vld [vmem:[%s6 + $0x24] sm:$0xf]
  %v85 = vld [vmem:[%s6 + $0x28] sm:$0xf]
  %v86 = vld [vmem:[%s6 + $0x2c] sm:$0xf]
  %v87 = vld [vmem:[%s6 + $0x30] sm:$0xf]
  %v88 = vld [vmem:[%s6 + $0x34] sm:$0xf]
  %v89 = vld [vmem:[%s6 + $0x38] sm:$0xf]
  %v90 = vld [vmem:[%s6 + $0x3c] sm:$0xf]
  %v91 = vld [vmem:[%s7] sm:$0x1]
  %v93 = vlaneseq
  %v94 = vshrl.u32 %v93, 7
  %v95 = vsub.s32 0, %v94
  %v96 = vrot.slane %v91, %v95
  %v114 = vunpack.c.l.b16 %v75
  %v115 = vunpack.c.l.b16 %v76
  %v116 = vunpack.c.l.b16 %v77
  %v117 = vunpack.c.l.b16 %v78
  %v118 = vunpack.c.l.b16 %v79
  %v119 = vunpack.c.l.b16 %v80
  %v120 = vunpack.c.l.b16 %v81
  %v121 = vunpack.c.l.b16 %v82
  %v122 = vunpack.c.l.b16 %v83
  %v123 = vunpack.c.l.b16 %v84
  %v124 = vunpack.c.l.b16 %v85
  %v125 = vunpack.c.l.b16 %v86
  %v126 = vunpack.c.l.b16 %v87
  %v127 = vunpack.c.l.b16 %v88
  %v128 = vunpack.c.l.b16 %v89
  %v129 = vunpack.c.l.b16 %v90
  %v130 = vpack.c.b16 %v115, %v114
  %v131 = vpack.c.b16 %v117, %v116
  %v132 = vpack.c.b16 %v119, %v118
  %v133 = vpack.c.b16 %v121, %v120
  %v134 = vpack.c.b16 %v123, %v122
  %v135 = vpack.c.b16 %v125, %v124
  %v136 = vpack.c.b16 %v127, %v126
  %v137 = vpack.c.b16 %v129, %v128
  %146 = vmatprep.subr.bf16.mxu0 0
  %147 = vmatpush1.bf16.msra.mxu0 %v137
  %148 = vmatprep.subr.bf16.mxu0 0
  %149 = vmatpush1.bf16.msra.mxu0 %v136
  %150 = vmatprep.subr.bf16.mxu0 0
  %151 = vmatpush1.bf16.msra.mxu0 %v135
  %152 = vmatprep.subr.bf16.mxu0 0
  %153 = vmatpush1.bf16.msra.mxu0 %v134
  %154 = vmatprep.subr.bf16.mxu0 0
  %155 = vmatpush1.bf16.msra.mxu0 %v133
  %156 = vmatprep.subr.bf16.mxu0 0
  %157 = vmatpush1.bf16.msra.mxu0 %v132
  %158 = vmatprep.subr.bf16.mxu0 0
  %159 = vmatpush1.bf16.msra.mxu0 %v131
  %160 = vmatprep.subr.bf16.mxu0 0
  %161 = vmatpush1.bf16.msra.mxu0 %v130
  %162 = vmatprep.subr.bf16.mxu0 0
  %163 = vmatpush2.bf16.msra.mxu0 0
  %164 = vmatprep.subr.bf16.mxu0 0
  %165 = vmatpush2.bf16.msra.mxu0 0
  %166 = vmatprep.subr.bf16.mxu0 0
  %167 = vmatpush2.bf16.msra.mxu0 0
  %168 = vmatprep.subr.bf16.mxu0 0
  %169 = vmatpush2.bf16.msra.mxu0 0
  %170 = vmatprep.subr.bf16.mxu0 0
  %171 = vmatpush2.bf16.msra.mxu0 0
  %172 = vmatprep.subr.bf16.mxu0 0
  %173 = vmatpush2.bf16.msra.mxu0 0
  %174 = vmatprep.subr.bf16.mxu0 0
  %175 = vmatpush2.bf16.msra.mxu0 0
  %176 = vmatprep.subr.bf16.mxu0 0
  %177 = vmatpush2.bf16.msra.mxu0 0
  %178 = vmatprep.mubr.bf16.mxu0 0
  %179 = vmatmul.mubr.bf16.gmra.mxu0 %v74
  %v180 = vpop.f32.mrf.mxu0
  %v181 = vadd.f32 %v96, %v180
  %v182 = vpop.f32.mrf.mxu0
  %v183 = vpop.f32.mrf.mxu0
  %v184 = vadd.f32 %v96, %v183
  %v185 = vpop.f32.mrf.mxu0
  %186 = vdwg.mxu0
  %v187 = vmax.f32 %v181, 0.0
  %v188 = vmax.f32 %v184, 0.0
  %v189 = vpack.c.bf16 %v188, %v187
  %v190 = vld [vmem:[%s9] sm:$0xff]
  %v191 = vld [vmem:[%s9 + $0x8] sm:$0xf]
  %v192 = vld [vmem:[%s9 + $0xc] sm:$0xff]
  %v193 = vld [vmem:[%s9 + $0x14] sm:$0xf]
  %v194 = vld [vmem:[%s9 + $0x18] sm:$0xff]
  %v195 = vld [vmem:[%s9 + $0x20] sm:$0xf]
  %v196 = vld [vmem:[%s9 + $0x24] sm:$0xff]
  %v197 = vld [vmem:[%s9 + $0x2c] sm:$0xf]
  %v198 = vld [vmem:[%s9 + $0x30] sm:$0xff]
  %v199 = vld [vmem:[%s9 + $0x38] sm:$0xf]
  %v200 = vld [vmem:[%s9 + $0x3c] sm:$0xff]
  %v201 = vld [vmem:[%s9 + $0x44] sm:$0xf]
  %v202 = vld [vmem:[%s9 + $0x48] sm:$0xff]
  %v203 = vld [vmem:[%s9 + $0x50] sm:$0xf]
  %v204 = vld [vmem:[%s9 + $0x54] sm:$0xff]
  %v205 = vld [vmem:[%s9 + $0x5c] sm:$0xf]
  %v206 = vld [vmem:[%s9 + $0x60] sm:$0xff]
  %v207 = vld [vmem:[%s9 + $0x68] sm:$0xf]
  %v208 = vld [vmem:[%s9 + $0x6c] sm:$0xff]
  %v209 = vld [vmem:[%s9 + $0x74] sm:$0xf]
  %v210 = vld [vmem:[%s9 + $0x78] sm:$0xff]
  %v211 = vld [vmem:[%s9 + $0x80] sm:$0xf]
  %v212 = vld [vmem:[%s9 + $0x84] sm:$0xff]
  %v213 = vld [vmem:[%s9 + $0x8c] sm:$0xf]
  %v214 = vld [vmem:[%s9 + $0x90] sm:$0xff]
  %v215 = vld [vmem:[%s9 + $0x98] sm:$0xf]
  %v216 = vld [vmem:[%s9 + $0x9c] sm:$0xff]
  %v217 = vld [vmem:[%s9 + $0xa4] sm:$0xf]
  %v218 = vld [vmem:[%s9 + $0xa8] sm:$0xff]
  %v219 = vld [vmem:[%s9 + $0xb0] sm:$0xf]
  %v220 = vld [vmem:[%s9 + $0xb4] sm:$0xff]
  %v221 = vld [vmem:[%s9 + $0xbc] sm:$0xf]
  %v222 = vld [vmem:[%s4] sm:$0xff]
  %v223 = vld [vmem:[%s4 + $0x8] sm:$0xff]
  %v224 = vld [vmem:[%s4 + $0x10] sm:$0xff]
  %v225 = vld [vmem:[%s4 + $0x18] sm:$0xff]
  %v226 = vld [vmem:[%s4 + $0x20] sm:$0xff]
  %v227 = vld [vmem:[%s4 + $0x28] sm:$0xff]
  %v260 = vunpack.c.l.b16 %v190
  %v261 = vunpack.c.h.b16 %v190
  %v262 = vunpack.c.l.b16 %v191
  %v263 = vunpack.c.l.b16 %v192
  %v264 = vunpack.c.h.b16 %v192
  %v265 = vunpack.c.l.b16 %v193
  %v266 = vunpack.c.l.b16 %v194
  %v267 = vunpack.c.h.b16 %v194
  %v268 = vunpack.c.l.b16 %v195
  %v269 = vunpack.c.l.b16 %v196
  %v270 = vunpack.c.h.b16 %v196
  %v271 = vunpack.c.l.b16 %v197
  %v272 = vunpack.c.l.b16 %v198
  %v273 = vunpack.c.h.b16 %v198
  %v274 = vunpack.c.l.b16 %v199
  %v275 = vunpack.c.l.b16 %v200
  %v276 = vunpack.c.h.b16 %v200
  %v277 = vunpack.c.l.b16 %v201
  %v278 = vunpack.c.l.b16 %v202
  %v279 = vunpack.c.h.b16 %v202
  %v280 = vunpack.c.l.b16 %v203
  %v281 = vunpack.c.l.b16 %v204
  %v282 = vunpack.c.h.b16 %v204
  %v283 = vunpack.c.l.b16 %v205
  %v284 = vunpack.c.l.b16 %v206
  %v285 = vunpack.c.h.b16 %v206
  %v286 = vunpack.c.l.b16 %v207
  %v287 = vunpack.c.l.b16 %v208
  %v288 = vunpack.c.h.b16 %v208
  %v289 = vunpack.c.l.b16 %v209
  %v290 = vunpack.c.l.b16 %v210
  %v291 = vunpack.c.h.b16 %v210
  %v292 = vunpack.c.l.b16 %v211
  %v293 = vunpack.c.l.b16 %v212
  %v294 = vunpack.c.h.b16 %v212
  %v295 = vunpack.c.l.b16 %v213
  %v296 = vunpack.c.l.b16 %v214
  %v297 = vunpack.c.h.b16 %v214
  %v298 = vunpack.c.l.b16 %v215
  %v299 = vunpack.c.l.b16 %v216
  %v300 = vunpack.c.h.b16 %v216
  %v301 = vunpack.c.l.b16 %v217
  %v302 = vunpack.c.l.b16 %v218
  %v303 = vunpack.c.h.b16 %v218
  %v304 = vunpack.c.l.b16 %v219
  %v305 = vunpack.c.l.b16 %v220
  %v306 = vunpack.c.h.b16 %v220
  %v307 = vunpack.c.l.b16 %v221
  %v308 = vpack.c.b16 %v263, %v260
  %v309 = vpack.c.b16 %v264, %v261
  %v310 = vpack.c.b16 %v265, %v262
  %v311 = vpack.c.b16 %v269, %v266
  %v312 = vpack.c.b16 %v270, %v267
  %v313 = vpack.c.b16 %v271, %v268
  %v314 = vpack.c.b16 %v275, %v272
  %v315 = vpack.c.b16 %v276, %v273
  %v316 = vpack.c.b16 %v277, %v274
  %v317 = vpack.c.b16 %v281, %v278
  %v318 = vpack.c.b16 %v282, %v279
  %v319 = vpack.c.b16 %v283, %v280
  %v320 = vpack.c.b16 %v287, %v284
  %v321 = vpack.c.b16 %v288, %v285
  %v322 = vpack.c.b16 %v289, %v286
  %v323 = vpack.c.b16 %v293, %v290
  %v324 = vpack.c.b16 %v294, %v291
  %v325 = vpack.c.b16 %v295, %v292
  %v326 = vpack.c.b16 %v299, %v296
  %v327 = vpack.c.b16 %v300, %v297
  %v328 = vpack.c.b16 %v301, %v298
  %v329 = vpack.c.b16 %v305, %v302
  %v330 = vpack.c.b16 %v306, %v303
  %v331 = vpack.c.b16 %v307, %v304
  %356 = vmatprep.subr.bf16.mxu0 %v330
  %357 = vmatpush1.bf16.msra.mxu0 %v329
  %358 = vmatprep.subr.bf16.mxu0 %v327
  %359 = vmatpush1.bf16.msra.mxu0 %v326
  %360 = vmatprep.subr.bf16.mxu0 %v324
  %361 = vmatpush1.bf16.msra.mxu0 %v323
  %362 = vmatprep.subr.bf16.mxu0 %v321
  %363 = vmatpush1.bf16.msra.mxu0 %v320
  %364 = vmatprep.subr.bf16.mxu0 %v318
  %365 = vmatpush1.bf16.msra.mxu0 %v317
  %366 = vmatprep.subr.bf16.mxu0 %v315
  %367 = vmatpush1.bf16.msra.mxu0 %v314
  %368 = vmatprep.subr.bf16.mxu0 %v312
  %369 = vmatpush1.bf16.msra.mxu0 %v311
  %370 = vmatprep.subr.bf16.mxu0 %v309
  %371 = vmatpush1.bf16.msra.mxu0 %v308
  %372 = vmatprep.subr.bf16.mxu0 0
  %373 = vmatpush2.bf16.msra.mxu0 0
  %374 = vmatprep.subr.bf16.mxu0 0
  %375 = vmatpush2.bf16.msra.mxu0 0
  %376 = vmatprep.subr.bf16.mxu0 0
  %377 = vmatpush2.bf16.msra.mxu0 0
  %378 = vmatprep.subr.bf16.mxu0 0
  %379 = vmatpush2.bf16.msra.mxu0 0
  %380 = vmatprep.subr.bf16.mxu0 0
  %381 = vmatpush2.bf16.msra.mxu0 0
  %382 = vmatprep.subr.bf16.mxu0 0
  %383 = vmatpush2.bf16.msra.mxu0 0
  %384 = vmatprep.subr.bf16.mxu0 0
  %385 = vmatpush2.bf16.msra.mxu0 0
  %386 = vmatprep.subr.bf16.mxu0 0
  %387 = vmatpush2.bf16.msra.mxu0 0
  %388 = vmatprep.mubr.bf16.mxu0 0
  %389 = vmatmul.mubr.bf16.gmra.mxu0 %v189
  %v390 = vpop.f32.mrf.mxu0
  %v391 = vadd.f32 %v222, %v390
  %v392 = vpop.f32.mrf.mxu0
  %v393 = vadd.f32 %v223, %v392
  %v394 = vpop.f32.mrf.mxu0
  %v395 = vadd.f32 %v225, %v394
  %v396 = vpop.f32.mrf.mxu0
  %v397 = vadd.f32 %v226, %v396
  %398 = vdwg.mxu0
  %399 = vmatprep.subr.bf16.mxu0 0
  %400 = vmatpush1.bf16.msra.mxu0 %v331
  %401 = vmatprep.subr.bf16.mxu0 0
  %402 = vmatpush1.bf16.msra.mxu0 %v328
  %403 = vmatprep.subr.bf16.mxu0 0
  %404 = vmatpush1.bf16.msra.mxu0 %v325
  %405 = vmatprep.subr.bf16.mxu0 0
  %406 = vmatpush1.bf16.msra.mxu0 %v322
  %407 = vmatprep.subr.bf16.mxu0 0
  %408 = vmatpush1.bf16.msra.mxu0 %v319
  %409 = vmatprep.subr.bf16.mxu0 0
  %410 = vmatpush1.bf16.msra.mxu0 %v316
  %411 = vmatprep.subr.bf16.mxu0 0
  %412 = vmatpush1.bf16.msra.mxu0 %v313
  %413 = vmatprep.subr.bf16.mxu0 0
  %414 = vmatpush1.bf16.msra.mxu0 %v310
  %415 = vmatprep.subr.bf16.mxu0 0
  %416 = vmatpush2.bf16.msra.mxu0 0
  %417 = vmatprep.subr.bf16.mxu0 0
  %418 = vmatpush2.bf16.msra.mxu0 0
  %419 = vmatprep.subr.bf16.mxu0 0
  %420 = vmatpush2.bf16.msra.mxu0 0
  %421 = vmatprep.subr.bf16.mxu0 0
  %422 = vmatpush2.bf16.msra.mxu0 0
  %423 = vmatprep.subr.bf16.mxu0 0
  %424 = vmatpush2.bf16.msra.mxu0 0
  %425 = vmatprep.subr.bf16.mxu0 0
  %426 = vmatpush2.bf16.msra.mxu0 0
  %427 = vmatprep.subr.bf16.mxu0 0
  %428 = vmatpush2.bf16.msra.mxu0 0
  %429 = vmatprep.subr.bf16.mxu0 0
  %430 = vmatpush2.bf16.msra.mxu0 0
  %431 = vmatprep.mubr.bf16.mxu0 0
  %432 = vmatmul.mubr.bf16.gmra.mxu0 %v189
  %v433 = vpop.f32.mrf.mxu0
  %v434 = vadd.f32 %v224, %v433
  %v435 = vpop.f32.mrf.mxu0
  %v436 = vpop.f32.mrf.mxu0
  %v437 = vadd.f32 %v227, %v436
  %v438 = vpop.f32.mrf.mxu0
  %439 = vdwg.mxu0
  %v440 = vld [vmem:[%s3] sm:$0xff]
  %v441 = vld [vmem:[%s3 + $0x8] sm:$0xff]
  %v442 = vld [vmem:[%s5] sm:$0x7]
  %444 = vset.pattern.permute.xlu0 0
  %445 = vperm.xlu0 %444, %v440
  %v446 = vpop.permute.xlu0 %445
  %449 = vset.pattern.permute.xlu0 0
  %450 = vperm.xlu0 %449, %v441
  %v451 = vpop.permute.xlu0 %450
  %v454 = vlaneseq
  %v455 = vshrl.u32 %v454, 7
  %v456 = vsub.s32 0, %v455
  %v457 = vrot.slane %v442, %v456
  %v458 = vlaneseq
  %v459 = vshrl.u32 %v458, 7
  %v460 = vsub.s32 1, %v459
  %v461 = vrot.slane %v442, %v460
  %v462 = vlaneseq
  %v463 = vshrl.u32 %v462, 7
  %v464 = vsub.s32 2, %v463
  %v465 = vrot.slane %v442, %v464
  %v469 = vmul.f32 %v446, %v457
  %v470 = vmul.f32 %v446, %v461
  %v471 = vmul.f32 %v446, %v465
  %v472 = vmul.f32 %v451, %v457
  %v473 = vmul.f32 %v451, %v461
  %v474 = vmul.f32 %v451, %v465
  %v475 = vadd.f32 %v391, %v469
  %v476 = vadd.f32 %v393, %v470
  %v477 = vadd.f32 %v434, %v471
  %v478 = vadd.f32 %v395, %v472
  %v479 = vadd.f32 %v397, %v473
  %v480 = vadd.f32 %v437, %v474
  %v481 = vld [vmem:[%s2] sm:$0xff]
  %v482 = vld [vmem:[%s2 + $0x8] sm:$0xff]
  %v483 = vpack.c.bf16 %v482, %v481
  %v484 = vld [vmem:[%s8] sm:$0xff]
  %v485 = vld [vmem:[%s8 + $0x8] sm:$0xff]
  %v486 = vld [vmem:[%s8 + $0x10] sm:$0xff]
  %v487 = vld [vmem:[%s8 + $0x18] sm:$0xff]
  %v488 = vld [vmem:[%s8 + $0x20] sm:$0xff]
  %v489 = vld [vmem:[%s8 + $0x28] sm:$0xff]
  %v490 = vld [vmem:[%s8 + $0x30] sm:$0xff]
  %v491 = vld [vmem:[%s8 + $0x38] sm:$0xff]
  %v492 = vld [vmem:[%s8 + $0x40] sm:$0xff]
  %v493 = vld [vmem:[%s8 + $0x48] sm:$0xff]
  %v494 = vld [vmem:[%s8 + $0x50] sm:$0xff]
  %v495 = vld [vmem:[%s8 + $0x58] sm:$0xff]
  %v496 = vld [vmem:[%s8 + $0x60] sm:$0xff]
  %v497 = vld [vmem:[%s8 + $0x68] sm:$0xff]
  %v498 = vld [vmem:[%s8 + $0x70] sm:$0xff]
  %v499 = vld [vmem:[%s8 + $0x78] sm:$0xff]
  %v516 = vunpack.c.l.b16 %v484
  %v517 = vunpack.c.h.b16 %v484
  %v518 = vunpack.c.l.b16 %v485
  %v519 = vunpack.c.h.b16 %v485
  %v520 = vunpack.c.l.b16 %v486
  %v521 = vunpack.c.h.b16 %v486
  %v522 = vunpack.c.l.b16 %v487
  %v523 = vunpack.c.h.b16 %v487
  %v524 = vunpack.c.l.b16 %v488
  %v525 = vunpack.c.h.b16 %v488
  %v526 = vunpack.c.l.b16 %v489
  %v527 = vunpack.c.h.b16 %v489
  %v528 = vunpack.c.l.b16 %v490
  %v529 = vunpack.c.h.b16 %v490
  %v530 = vunpack.c.l.b16 %v491
  %v531 = vunpack.c.h.b16 %v491
  %v532 = vunpack.c.l.b16 %v492
  %v533 = vunpack.c.h.b16 %v492
  %v534 = vunpack.c.l.b16 %v493
  %v535 = vunpack.c.h.b16 %v493
  %v536 = vunpack.c.l.b16 %v494
  %v537 = vunpack.c.h.b16 %v494
  %v538 = vunpack.c.l.b16 %v495
  %v539 = vunpack.c.h.b16 %v495
  %v540 = vunpack.c.l.b16 %v496
  %v541 = vunpack.c.h.b16 %v496
  %v542 = vunpack.c.l.b16 %v497
  %v543 = vunpack.c.h.b16 %v497
  %v544 = vunpack.c.l.b16 %v498
  %v545 = vunpack.c.h.b16 %v498
  %v546 = vunpack.c.l.b16 %v499
  %v547 = vunpack.c.h.b16 %v499
  %v548 = vpack.c.b16 %v518, %v516
  %v549 = vpack.c.b16 %v519, %v517
  %v550 = vpack.c.b16 %v522, %v520
  %v551 = vpack.c.b16 %v523, %v521
  %v552 = vpack.c.b16 %v526, %v524
  %v553 = vpack.c.b16 %v527, %v525
  %v554 = vpack.c.b16 %v530, %v528
  %v555 = vpack.c.b16 %v531, %v529
  %v556 = vpack.c.b16 %v534, %v532
  %v557 = vpack.c.b16 %v535, %v533
  %v558 = vpack.c.b16 %v538, %v536
  %v559 = vpack.c.b16 %v539, %v537
  %v560 = vpack.c.b16 %v542, %v540
  %v561 = vpack.c.b16 %v543, %v541
  %v562 = vpack.c.b16 %v546, %v544
  %v563 = vpack.c.b16 %v547, %v545
  %580 = vmatprep.subr.bf16.mxu0 %v563
  %581 = vmatpush1.bf16.msra.mxu0 %v562
  %582 = vmatprep.subr.bf16.mxu0 %v561
  %583 = vmatpush1.bf16.msra.mxu0 %v560
  %584 = vmatprep.subr.bf16.mxu0 %v559
  %585 = vmatpush1.bf16.msra.mxu0 %v558
  %586 = vmatprep.subr.bf16.mxu0 %v557
  %587 = vmatpush1.bf16.msra.mxu0 %v556
  %588 = vmatprep.subr.bf16.mxu0 %v555
  %589 = vmatpush1.bf16.msra.mxu0 %v554
  %590 = vmatprep.subr.bf16.mxu0 %v553
  %591 = vmatpush1.bf16.msra.mxu0 %v552
  %592 = vmatprep.subr.bf16.mxu0 %v551
  %593 = vmatpush1.bf16.msra.mxu0 %v550
  %594 = vmatprep.subr.bf16.mxu0 %v549
  %595 = vmatpush1.bf16.msra.mxu0 %v548
  %596 = vmatprep.subr.bf16.mxu0 0
  %597 = vmatpush2.bf16.msra.mxu0 0
  %598 = vmatprep.subr.bf16.mxu0 0
  %599 = vmatpush2.bf16.msra.mxu0 0
  %600 = vmatprep.subr.bf16.mxu0 0
  %601 = vmatpush2.bf16.msra.mxu0 0
  %602 = vmatprep.subr.bf16.mxu0 0
  %603 = vmatpush2.bf16.msra.mxu0 0
  %604 = vmatprep.subr.bf16.mxu0 0
  %605 = vmatpush2.bf16.msra.mxu0 0
  %606 = vmatprep.subr.bf16.mxu0 0
  %607 = vmatpush2.bf16.msra.mxu0 0
  %608 = vmatprep.subr.bf16.mxu0 0
  %609 = vmatpush2.bf16.msra.mxu0 0
  %610 = vmatprep.subr.bf16.mxu0 0
  %611 = vmatpush2.bf16.msra.mxu0 0
  %612 = vmatprep.mubr.bf16.mxu0 0
  %613 = vmatmul.mubr.bf16.gmra.mxu0 %v483
  %v614 = vpop.f32.mrf.mxu0
  %v615 = vadd.f32 0.0, %v614
  %v616 = vpop.f32.mrf.mxu0
  %v617 = vadd.f32 0.0, %v616
  %v618 = vpop.f32.mrf.mxu0
  %v619 = vadd.f32 0.0, %v618
  %v620 = vpop.f32.mrf.mxu0
  %v621 = vadd.f32 0.0, %v620
  %622 = vdwg.mxu0
  %v623 = vadd.f32 %v615, %v475
  %v624 = vadd.f32 %v619, %v478
  %v625 = vxor.u32 %v623, 2147483648
  %v626 = vxor.u32 %v624, 2147483648
  %v627 = vmul.f32 %v625, 1.442695
  %v628 = vpow.pop %v627
  %v629 = vmul.f32 %v626, 1.442695
  %v630 = vpow.pop %v629
  %v631 = vadd.f32 %v628, 1.0
  %v632 = vadd.f32 %v630, 1.0
  %v633 = vrcp.pop %v631
  %v634 = vmul.f32 1.0, %v633
  %v635 = vrcp.pop %v632
  %v636 = vmul.f32 1.0, %v635
  %v637 = vadd.f32 %v617, %v476
  %v638 = vadd.f32 %v621, %v479
  %v639 = vxor.u32 %v637, 2147483648
  %v640 = vxor.u32 %v638, 2147483648
  %v641 = vmul.f32 %v639, 1.442695
  %v642 = vpow.pop %v641
  %v643 = vmul.f32 %v640, 1.442695
  %v644 = vpow.pop %v643
  %v645 = vadd.f32 %v642, 1.0
  %v646 = vadd.f32 %v644, 1.0
  %v647 = vrcp.pop %v645
  %v648 = vmul.f32 1.0, %v647
  %v649 = vrcp.pop %v646
  %v650 = vmul.f32 1.0, %v649
  %v651 = vmul.f32 %v648, %v481
  %v652 = vmul.f32 %v650, %v482
  %v653 = vpack.c.bf16 %v652, %v651
  %v654 = vld [vmem:[%s10] sm:$0xf]
  %v655 = vld [vmem:[%s10 + $0x4] sm:$0xf]
  %v656 = vld [vmem:[%s10 + $0x8] sm:$0xf]
  %v657 = vld [vmem:[%s10 + $0xc] sm:$0xf]
  %v658 = vld [vmem:[%s10 + $0x10] sm:$0xf]
  %v659 = vld [vmem:[%s10 + $0x14] sm:$0xf]
  %v660 = vld [vmem:[%s10 + $0x18] sm:$0xf]
  %v661 = vld [vmem:[%s10 + $0x1c] sm:$0xf]
  %v662 = vld [vmem:[%s10 + $0x20] sm:$0xf]
  %v663 = vld [vmem:[%s10 + $0x24] sm:$0xf]
  %v664 = vld [vmem:[%s10 + $0x28] sm:$0xf]
  %v665 = vld [vmem:[%s10 + $0x2c] sm:$0xf]
  %v666 = vld [vmem:[%s10 + $0x30] sm:$0xf]
  %v667 = vld [vmem:[%s10 + $0x34] sm:$0xf]
  %v668 = vld [vmem:[%s10 + $0x38] sm:$0xf]
  %v669 = vld [vmem:[%s10 + $0x3c] sm:$0xf]
  %v686 = vunpack.c.l.b16 %v654
  %v687 = vunpack.c.l.b16 %v655
  %v688 = vunpack.c.l.b16 %v656
  %v689 = vunpack.c.l.b16 %v657
  %v690 = vunpack.c.l.b16 %v658
  %v691 = vunpack.c.l.b16 %v659
  %v692 = vunpack.c.l.b16 %v660
  %v693 = vunpack.c.l.b16 %v661
  %v694 = vunpack.c.l.b16 %v662
  %v695 = vunpack.c.l.b16 %v663
  %v696 = vunpack.c.l.b16 %v664
  %v697 = vunpack.c.l.b16 %v665
  %v698 = vunpack.c.l.b16 %v666
  %v699 = vunpack.c.l.b16 %v667
  %v700 = vunpack.c.l.b16 %v668
  %v701 = vunpack.c.l.b16 %v669
  %v702 = vpack.c.b16 %v687, %v686
  %v703 = vpack.c.b16 %v689, %v688
  %v704 = vpack.c.b16 %v691, %v690
  %v705 = vpack.c.b16 %v693, %v692
  %v706 = vpack.c.b16 %v695, %v694
  %v707 = vpack.c.b16 %v697, %v696
  %v708 = vpack.c.b16 %v699, %v698
  %v709 = vpack.c.b16 %v701, %v700
  %718 = vmatprep.subr.bf16.mxu0 0
  %719 = vmatpush1.bf16.msra.mxu0 %v709
  %720 = vmatprep.subr.bf16.mxu0 0
  %721 = vmatpush1.bf16.msra.mxu0 %v708
  %722 = vmatprep.subr.bf16.mxu0 0
  %723 = vmatpush1.bf16.msra.mxu0 %v707
  %724 = vmatprep.subr.bf16.mxu0 0
  %725 = vmatpush1.bf16.msra.mxu0 %v706
  %726 = vmatprep.subr.bf16.mxu0 0
  %727 = vmatpush1.bf16.msra.mxu0 %v705
  %728 = vmatprep.subr.bf16.mxu0 0
  %729 = vmatpush1.bf16.msra.mxu0 %v704
  %730 = vmatprep.subr.bf16.mxu0 0
  %731 = vmatpush1.bf16.msra.mxu0 %v703
  %732 = vmatprep.subr.bf16.mxu0 0
  %733 = vmatpush1.bf16.msra.mxu0 %v702
  %734 = vmatprep.subr.bf16.mxu0 0
  %735 = vmatpush2.bf16.msra.mxu0 0
  %736 = vmatprep.subr.bf16.mxu0 0
  %737 = vmatpush2.bf16.msra.mxu0 0
  %738 = vmatprep.subr.bf16.mxu0 0
  %739 = vmatpush2.bf16.msra.mxu0 0
  %740 = vmatprep.subr.bf16.mxu0 0
  %741 = vmatpush2.bf16.msra.mxu0 0
  %742 = vmatprep.subr.bf16.mxu0 0
  %743 = vmatpush2.bf16.msra.mxu0 0
  %744 = vmatprep.subr.bf16.mxu0 0
  %745 = vmatpush2.bf16.msra.mxu0 0
  %746 = vmatprep.subr.bf16.mxu0 0
  %747 = vmatpush2.bf16.msra.mxu0 0
  %748 = vmatprep.subr.bf16.mxu0 0
  %749 = vmatpush2.bf16.msra.mxu0 0
  %750 = vmatprep.mubr.bf16.mxu0 0
  %751 = vmatmul.mubr.bf16.gmra.mxu0 %v653
  %v752 = vpop.f32.mrf.mxu0
  %v753 = vadd.f32 %v477, %v752
  %v754 = vpop.f32.mrf.mxu0
  %v755 = vpop.f32.mrf.mxu0
  %v756 = vadd.f32 %v480, %v755
  %v757 = vpop.f32.mrf.mxu0
  %758 = vdwg.mxu0
  %v759 = vtanh.pop %v753
  %v760 = vtanh.pop %v756
  %v761 = vsub.f32 1.0, %v634
  %v762 = vsub.f32 1.0, %v636
  %v763 = vmul.f32 %v761, %v481
  %v764 = vmul.f32 %v762, %v482
  %v765 = vmul.f32 %v634, %v759
  %v766 = vmul.f32 %v636, %v760
  %v767 = vadd.f32 %v763, %v765
  %v768 = vadd.f32 %v764, %v766
  %769 = vst [vmem:[%s15] sm:$0xff] %v767
  %770 = vst [vmem:[%s15 + $0x8] sm:$0xff] %v768
  %v771 = vpack.c.bf16 %v768, %v767
  %v772 = vld [vmem:[%s11] sm:$0xf]
  %v773 = vld [vmem:[%s11 + $0x4] sm:$0xf]
  %v774 = vld [vmem:[%s11 + $0x8] sm:$0xf]
  %v775 = vld [vmem:[%s11 + $0xc] sm:$0xf]
  %v776 = vld [vmem:[%s11 + $0x10] sm:$0xf]
  %v777 = vld [vmem:[%s11 + $0x14] sm:$0xf]
  %v778 = vld [vmem:[%s11 + $0x18] sm:$0xf]
  %v779 = vld [vmem:[%s11 + $0x1c] sm:$0xf]
  %v780 = vld [vmem:[%s11 + $0x20] sm:$0xf]
  %v781 = vld [vmem:[%s11 + $0x24] sm:$0xf]
  %v782 = vld [vmem:[%s11 + $0x28] sm:$0xf]
  %v783 = vld [vmem:[%s11 + $0x2c] sm:$0xf]
  %v784 = vld [vmem:[%s11 + $0x30] sm:$0xf]
  %v785 = vld [vmem:[%s11 + $0x34] sm:$0xf]
  %v786 = vld [vmem:[%s11 + $0x38] sm:$0xf]
  %v787 = vld [vmem:[%s11 + $0x3c] sm:$0xf]
  %v788 = vld [vmem:[%s12] sm:$0x1]
  %v790 = vlaneseq
  %v791 = vshrl.u32 %v790, 7
  %v792 = vsub.s32 0, %v791
  %v793 = vrot.slane %v788, %v792
  %v811 = vunpack.c.l.b16 %v772
  %v812 = vunpack.c.l.b16 %v773
  %v813 = vunpack.c.l.b16 %v774
  %v814 = vunpack.c.l.b16 %v775
  %v815 = vunpack.c.l.b16 %v776
  %v816 = vunpack.c.l.b16 %v777
  %v817 = vunpack.c.l.b16 %v778
  %v818 = vunpack.c.l.b16 %v779
  %v819 = vunpack.c.l.b16 %v780
  %v820 = vunpack.c.l.b16 %v781
  %v821 = vunpack.c.l.b16 %v782
  %v822 = vunpack.c.l.b16 %v783
  %v823 = vunpack.c.l.b16 %v784
  %v824 = vunpack.c.l.b16 %v785
  %v825 = vunpack.c.l.b16 %v786
  %v826 = vunpack.c.l.b16 %v787
  %v827 = vpack.c.b16 %v812, %v811
  %v828 = vpack.c.b16 %v814, %v813
  %v829 = vpack.c.b16 %v816, %v815
  %v830 = vpack.c.b16 %v818, %v817
  %v831 = vpack.c.b16 %v820, %v819
  %v832 = vpack.c.b16 %v822, %v821
  %v833 = vpack.c.b16 %v824, %v823
  %v834 = vpack.c.b16 %v826, %v825
  %843 = vmatprep.subr.bf16.mxu0 0
  %844 = vmatpush1.bf16.msra.mxu0 %v834
  %845 = vmatprep.subr.bf16.mxu0 0
  %846 = vmatpush1.bf16.msra.mxu0 %v833
  %847 = vmatprep.subr.bf16.mxu0 0
  %848 = vmatpush1.bf16.msra.mxu0 %v832
  %849 = vmatprep.subr.bf16.mxu0 0
  %850 = vmatpush1.bf16.msra.mxu0 %v831
  %851 = vmatprep.subr.bf16.mxu0 0
  %852 = vmatpush1.bf16.msra.mxu0 %v830
  %853 = vmatprep.subr.bf16.mxu0 0
  %854 = vmatpush1.bf16.msra.mxu0 %v829
  %855 = vmatprep.subr.bf16.mxu0 0
  %856 = vmatpush1.bf16.msra.mxu0 %v828
  %857 = vmatprep.subr.bf16.mxu0 0
  %858 = vmatpush1.bf16.msra.mxu0 %v827
  %859 = vmatprep.subr.bf16.mxu0 0
  %860 = vmatpush2.bf16.msra.mxu0 0
  %861 = vmatprep.subr.bf16.mxu0 0
  %862 = vmatpush2.bf16.msra.mxu0 0
  %863 = vmatprep.subr.bf16.mxu0 0
  %864 = vmatpush2.bf16.msra.mxu0 0
  %865 = vmatprep.subr.bf16.mxu0 0
  %866 = vmatpush2.bf16.msra.mxu0 0
  %867 = vmatprep.subr.bf16.mxu0 0
  %868 = vmatpush2.bf16.msra.mxu0 0
  %869 = vmatprep.subr.bf16.mxu0 0
  %870 = vmatpush2.bf16.msra.mxu0 0
  %871 = vmatprep.subr.bf16.mxu0 0
  %872 = vmatpush2.bf16.msra.mxu0 0
  %873 = vmatprep.subr.bf16.mxu0 0
  %874 = vmatpush2.bf16.msra.mxu0 0
  %875 = vmatprep.mubr.bf16.mxu0 0
  %876 = vmatmul.mubr.bf16.gmra.mxu0 %v771
  %v877 = vpop.f32.mrf.mxu0
  %v878 = vadd.f32 %v793, %v877
  %v879 = vpop.f32.mrf.mxu0
  %v880 = vpop.f32.mrf.mxu0
  %v881 = vadd.f32 %v793, %v880
  %v882 = vpop.f32.mrf.mxu0
  %883 = vdwg.mxu0
  %v884 = vmax.f32 %v878, 0.0
  %v885 = vmax.f32 %v881, 0.0
  %v886 = vpack.c.bf16 %v885, %v884
  %v887 = vld [vmem:[%s13] sm:$0xf]
  %v888 = vld [vmem:[%s13 + $0x4] sm:$0xf]
  %v889 = vld [vmem:[%s13 + $0x8] sm:$0xf]
  %v890 = vld [vmem:[%s13 + $0xc] sm:$0xf]
  %v891 = vld [vmem:[%s13 + $0x10] sm:$0xf]
  %v892 = vld [vmem:[%s13 + $0x14] sm:$0xf]
  %v893 = vld [vmem:[%s13 + $0x18] sm:$0xf]
  %v894 = vld [vmem:[%s13 + $0x1c] sm:$0xf]
  %v895 = vld [vmem:[%s13 + $0x20] sm:$0xf]
  %v896 = vld [vmem:[%s13 + $0x24] sm:$0xf]
  %v897 = vld [vmem:[%s13 + $0x28] sm:$0xf]
  %v898 = vld [vmem:[%s13 + $0x2c] sm:$0xf]
  %v899 = vld [vmem:[%s13 + $0x30] sm:$0xf]
  %v900 = vld [vmem:[%s13 + $0x34] sm:$0xf]
  %v901 = vld [vmem:[%s13 + $0x38] sm:$0xf]
  %v902 = vld [vmem:[%s13 + $0x3c] sm:$0xf]
  %v903 = vld [vmem:[#allocation2] sm:$0x1]
  %v905 = vlaneseq
  %v906 = vshrl.u32 %v905, 7
  %v907 = vsub.s32 0, %v906
  %v908 = vrot.slane %v903, %v907
  %v926 = vunpack.c.l.b16 %v887
  %v927 = vunpack.c.l.b16 %v888
  %v928 = vunpack.c.l.b16 %v889
  %v929 = vunpack.c.l.b16 %v890
  %v930 = vunpack.c.l.b16 %v891
  %v931 = vunpack.c.l.b16 %v892
  %v932 = vunpack.c.l.b16 %v893
  %v933 = vunpack.c.l.b16 %v894
  %v934 = vunpack.c.l.b16 %v895
  %v935 = vunpack.c.l.b16 %v896
  %v936 = vunpack.c.l.b16 %v897
  %v937 = vunpack.c.l.b16 %v898
  %v938 = vunpack.c.l.b16 %v899
  %v939 = vunpack.c.l.b16 %v900
  %v940 = vunpack.c.l.b16 %v901
  %v941 = vunpack.c.l.b16 %v902
  %v942 = vpack.c.b16 %v927, %v926
  %v943 = vpack.c.b16 %v929, %v928
  %v944 = vpack.c.b16 %v931, %v930
  %v945 = vpack.c.b16 %v933, %v932
  %v946 = vpack.c.b16 %v935, %v934
  %v947 = vpack.c.b16 %v937, %v936
  %v948 = vpack.c.b16 %v939, %v938
  %v949 = vpack.c.b16 %v941, %v940
  %958 = vmatprep.subr.bf16.mxu0 0
  %959 = vmatpush1.bf16.msra.mxu0 %v949
  %960 = vmatprep.subr.bf16.mxu0 0
  %961 = vmatpush1.bf16.msra.mxu0 %v948
  %962 = vmatprep.subr.bf16.mxu0 0
  %963 = vmatpush1.bf16.msra.mxu0 %v947
  %964 = vmatprep.subr.bf16.mxu0 0
  %965 = vmatpush1.bf16.msra.mxu0 %v946
  %966 = vmatprep.subr.bf16.mxu0 0
  %967 = vmatpush1.bf16.msra.mxu0 %v945
  %968 = vmatprep.subr.bf16.mxu0 0
  %969 = vmatpush1.bf16.msra.mxu0 %v944
  %970 = vmatprep.subr.bf16.mxu0 0
  %971 = vmatpush1.bf16.msra.mxu0 %v943
  %972 = vmatprep.subr.bf16.mxu0 0
  %973 = vmatpush1.bf16.msra.mxu0 %v942
  %974 = vmatprep.subr.bf16.mxu0 0
  %975 = vmatpush2.bf16.msra.mxu0 0
  %976 = vmatprep.subr.bf16.mxu0 0
  %977 = vmatpush2.bf16.msra.mxu0 0
  %978 = vmatprep.subr.bf16.mxu0 0
  %979 = vmatpush2.bf16.msra.mxu0 0
  %980 = vmatprep.subr.bf16.mxu0 0
  %981 = vmatpush2.bf16.msra.mxu0 0
  %982 = vmatprep.subr.bf16.mxu0 0
  %983 = vmatpush2.bf16.msra.mxu0 0
  %984 = vmatprep.subr.bf16.mxu0 0
  %985 = vmatpush2.bf16.msra.mxu0 0
  %986 = vmatprep.subr.bf16.mxu0 0
  %987 = vmatpush2.bf16.msra.mxu0 0
  %988 = vmatprep.subr.bf16.mxu0 0
  %989 = vmatpush2.bf16.msra.mxu0 0
  %990 = vmatprep.mubr.bf16.mxu0 0
  %991 = vmatmul.mubr.bf16.gmra.mxu0 %v886
  %v992 = vpop.f32.mrf.mxu0
  %v993 = vadd.f32 %v908, %v992
  %v994 = vpop.f32.mrf.mxu0
  %v995 = vpop.f32.mrf.mxu0
  %v996 = vadd.f32 %v908, %v995
  %v997 = vpop.f32.mrf.mxu0
  %998 = vdwg.mxu0
  %v999 = vld [vmem:[%s3] sm:$0xff]
  %v1000 = vld [vmem:[%s3 + $0x8] sm:$0xff]
  %v1001 = vadd.f32 %v999, %v993
  %v1002 = vadd.f32 %v1000, %v996
  %v1003 = vmax.f32 %v1001, 0.001
  %v1004 = vmax.f32 %v1002, 0.001
  %v1005 = vmin.f32 %v1003, 1.0
  %v1006 = vmin.f32 %v1004, 1.0
  %vm1007 = vcmask 7168
  %1008 = vst.msk [vmem:[%s16] sm:$0xff] %vm1007, %v1005
  %1009 = vst.msk [vmem:[%s16 + $0x8] sm:$0xff] %vm1007, %v1006
  // Predicated region
  $region62: #{forward.39} parent=0 // pred_check
    _
  $region63: #{forward.39} parent=0 // pred_check_branch
    %1011 = sbr.rel (0) target = $region65
  $region64: #{forward.39} parent=0 // pred_region
    _
  $region65: #{forward.39} parent=0 // pred_fallthru
    _
  // Predicated region
  $region66: #{forward.39} parent=0 // pred_check
    _
  $region67: #{forward.39} parent=0 // pred_check_branch
    %1013 = sbr.rel (0) target = $region69
  $region68: #{forward.39} parent=0 // pred_region
    _
  $region69: #{forward.39} parent=0 // pred_fallthru
    _
  // Predicated region
  $region70: #{forward.39} parent=0 // pred_check
    _
  $region71: #{forward.39} parent=0 // pred_check_branch
    %1015 = sbr.rel (0) target = $region73
  $region72: #{forward.39} parent=0 // pred_region
    _
  $region73: #{forward.39} parent=0 // pred_fallthru
    _
  // Predicated region
  $region74: #{forward.39} parent=0 // pred_check
    _
  $region75: #{forward.39} parent=0 // pred_check_branch
    %1017 = sbr.rel (0) target = $region77
  $region76: #{forward.39} parent=0 // pred_region
    _
  $region77: #{forward.39} parent=0 // pred_fallthru
    _

// kernel: forward.63
$region0: #{forward.63}
  #allocation0 [shape = 'u32[]', space=smem, size = 0x4, offset = 0x4, fixed_abs, tag = 'smem constant byte address 0x4 - core index']
  #allocation1 [shape = 'u32[144,128]{1,0:T(1,128)}', space=vmem, size = 0x12000, scoped, tag = 'internal scratch']
  %s0 = inlined_call_operand.vmem [shape: f32[9,1024], index: 0, kind: input, shape index: {}]
  %s1 = inlined_call_operand.vmem [shape: f32[9,1024], index: 1, kind: input, shape index: {}]
  %s2 = inlined_call_operand.vmem [shape: f32[1,1024], index: 2, kind: output, shape index: {}]
  %s3 = sld [smem:[#allocation0]]
  $region18: #{forward.63} parent=0
    _
  %s5 = ssub.s32 1, %s3
  %s6 = scalar_select 0, %s5, %s3
  // Predicated region
  $region2: #{forward.63} parent=0 // pred_check
    _
  $region3: #{forward.63} parent=0 // pred_check_branch
    %8 = sbr.rel (0) target = $region5
  $region4: #{forward.63} parent=0 // pred_region
    _
  $region5: #{forward.63} parent=0 // pred_fallthru
    _
  // Predicated region
  $region6: #{forward.63} parent=0 // pred_check
    _
  $region7: #{forward.63} parent=0 // pred_check_branch
    %10 = sbr.rel (0) target = $region9
  $region8: #{forward.63} parent=0 // pred_region
    _
  $region9: #{forward.63} parent=0 // pred_fallthru
    _
  %v11 = vld [vmem:[%s0] sm:$0xff]
  %v12 = vld [vmem:[%s0 + $0x8] sm:$0xff]
  %v13 = vld [vmem:[%s0 + $0x10] sm:$0xff]
  %v14 = vld [vmem:[%s0 + $0x18] sm:$0xff]
  %v15 = vld [vmem:[%s0 + $0x20] sm:$0xff]
  %v16 = vld [vmem:[%s0 + $0x28] sm:$0xff]
  %v17 = vld [vmem:[%s0 + $0x30] sm:$0xff]
  %v18 = vld [vmem:[%s0 + $0x38] sm:$0xff]
  %v19 = vld [vmem:[%s0 + $0x40] sm:$0x1]
  %v20 = vld [vmem:[%s0 + $0x48] sm:$0x1]
  %v21 = vld [vmem:[%s0 + $0x50] sm:$0x1]
  %v22 = vld [vmem:[%s0 + $0x58] sm:$0x1]
  %v23 = vld [vmem:[%s0 + $0x60] sm:$0x1]
  %v24 = vld [vmem:[%s0 + $0x68] sm:$0x1]
  %v25 = vld [vmem:[%s0 + $0x70] sm:$0x1]
  %v26 = vld [vmem:[%s0 + $0x78] sm:$0x1]
  %vm27 = vcmask 1040384
  %v28 = vsel %vm27, %v19, -inf
  %v29 = vmax.f32 %v11, %v28
  %v30 = vrot.slane %v29, 4
  %v31 = vmax.f32 %v29, %v30
  %v32 = vrot.slane %v31, 2
  %v33 = vmax.f32 %v31, %v32
  %v34 = vrot.slane %v33, 1
  %v35 = vmax.f32 %v33, %v34
  %v36 = vsel %vm27, %v20, -inf
  %v37 = vmax.f32 %v12, %v36
  %v38 = vrot.slane %v37, 4
  %v39 = vmax.f32 %v37, %v38
  %v40 = vrot.slane %v39, 2
  %v41 = vmax.f32 %v39, %v40
  %v42 = vrot.slane %v41, 1
  %v43 = vmax.f32 %v41, %v42
  %v44 = vsel %vm27, %v21, -inf
  %v45 = vmax.f32 %v13, %v44
  %v46 = vrot.slane %v45, 4
  %v47 = vmax.f32 %v45, %v46
  %v48 = vrot.slane %v47, 2
  %v49 = vmax.f32 %v47, %v48
  %v50 = vrot.slane %v49, 1
  %v51 = vmax.f32 %v49, %v50
  %v52 = vsel %vm27, %v22, -inf
  %v53 = vmax.f32 %v14, %v52
  %v54 = vrot.slane %v53, 4
  %v55 = vmax.f32 %v53, %v54
  %v56 = vrot.slane %v55, 2
  %v57 = vmax.f32 %v55, %v56
  %v58 = vrot.slane %v57, 1
  %v59 = vmax.f32 %v57, %v58
  %v60 = vsel %vm27, %v23, -inf
  %v61 = vmax.f32 %v15, %v60
  %v62 = vrot.slane %v61, 4
  %v63 = vmax.f32 %v61, %v62
  %v64 = vrot.slane %v63, 2
  %v65 = vmax.f32 %v63, %v64
  %v66 = vrot.slane %v65, 1
  %v67 = vmax.f32 %v65, %v66
  %v68 = vsel %vm27, %v24, -inf
  %v69 = vmax.f32 %v16, %v68
  %v70 = vrot.slane %v69, 4
  %v71 = vmax.f32 %v69, %v70
  %v72 = vrot.slane %v71, 2
  %v73 = vmax.f32 %v71, %v72
  %v74 = vrot.slane %v73, 1
  %v75 = vmax.f32 %v73, %v74
  %v76 = vsel %vm27, %v25, -inf
  %v77 = vmax.f32 %v17, %v76
  %v78 = vrot.slane %v77, 4
  %v79 = vmax.f32 %v77, %v78
  %v80 = vrot.slane %v79, 2
  %v81 = vmax.f32 %v79, %v80
  %v82 = vrot.slane %v81, 1
  %v83 = vmax.f32 %v81, %v82
  %v84 = vsel %vm27, %v26, -inf
  %v85 = vmax.f32 %v18, %v84
  %v86 = vrot.slane %v85, 4
  %v87 = vmax.f32 %v85, %v86
  %v88 = vrot.slane %v87, 2
  %v89 = vmax.f32 %v87, %v88
  %v90 = vrot.slane %v89, 1
  %v91 = vmax.f32 %v89, %v90
  %v92 = vsub.f32 %v11, %v35
  %v93 = vsub.f32 %v12, %v43
  %v94 = vsub.f32 %v13, %v51
  %v95 = vsub.f32 %v14, %v59
  %v96 = vsub.f32 %v15, %v67
  %v97 = vsub.f32 %v16, %v75
  %v98 = vsub.f32 %v17, %v83
  %v99 = vsub.f32 %v18, %v91
  %v100 = vsub.f32 %v19, %v35
  %v101 = vsub.f32 %v20, %v43
  %v102 = vsub.f32 %v21, %v51
  %v103 = vsub.f32 %v22, %v59
  %v104 = vsub.f32 %v23, %v67
  %v105 = vsub.f32 %v24, %v75
  %v106 = vsub.f32 %v25, %v83
  %v107 = vsub.f32 %v26, %v91
  %v108 = vmul.f32 %v92, 1.442695
  %v109 = vpow.pop %v108
  %v110 = vmul.f32 %v93, 1.442695
  %v111 = vpow.pop %v110
  %v112 = vmul.f32 %v94, 1.442695
  %v113 = vpow.pop %v112
  %v114 = vmul.f32 %v95, 1.442695
  %v115 = vpow.pop %v114
  %v116 = vmul.f32 %v96, 1.442695
  %v117 = vpow.pop %v116
  %v118 = vmul.f32 %v97, 1.442695
  %v119 = vpow.pop %v118
  %v120 = vmul.f32 %v98, 1.442695
  %v121 = vpow.pop %v120
  %v122 = vmul.f32 %v99, 1.442695
  %v123 = vpow.pop %v122
  %v124 = vmul.f32 %v100, 1.442695
  %v125 = vpow.pop %v124
  %v126 = vmul.f32 %v101, 1.442695
  %v127 = vpow.pop %v126
  %v128 = vmul.f32 %v102, 1.442695
  %v129 = vpow.pop %v128
  %v130 = vmul.f32 %v103, 1.442695
  %v131 = vpow.pop %v130
  %v132 = vmul.f32 %v104, 1.442695
  %v133 = vpow.pop %v132
  %v134 = vmul.f32 %v105, 1.442695
  %v135 = vpow.pop %v134
  %v136 = vmul.f32 %v106, 1.442695
  %v137 = vpow.pop %v136
  %v138 = vmul.f32 %v107, 1.442695
  %v139 = vpow.pop %v138
  %v140 = vsel %vm27, %v125, 0.0
  %v141 = vadd.f32 %v109, %v140
  %v142 = vrot.slane %v141, 4
  %v143 = vadd.f32 %v141, %v142
  %v144 = vrot.slane %v143, 2
  %v145 = vadd.f32 %v143, %v144
  %v146 = vrot.slane %v145, 1
  %v147 = vadd.f32 %v145, %v146
  %v148 = vsel %vm27, %v127, 0.0
  %v149 = vadd.f32 %v111, %v148
  %v150 = vrot.slane %v149, 4
  %v151 = vadd.f32 %v149, %v150
  %v152 = vrot.slane %v151, 2
  %v153 = vadd.f32 %v151, %v152
  %v154 = vrot.slane %v153, 1
  %v155 = vadd.f32 %v153, %v154
  %v156 = vsel %vm27, %v129, 0.0
  %v157 = vadd.f32 %v113, %v156
  %v158 = vrot.slane %v157, 4
  %v159 = vadd.f32 %v157, %v158
  %v160 = vrot.slane %v159, 2
  %v161 = vadd.f32 %v159, %v160
  %v162 = vrot.slane %v161, 1
  %v163 = vadd.f32 %v161, %v162
  %v164 = vsel %vm27, %v131, 0.0
  %v165 = vadd.f32 %v115, %v164
  %v166 = vrot.slane %v165, 4
  %v167 = vadd.f32 %v165, %v166
  %v168 = vrot.slane %v167, 2
  %v169 = vadd.f32 %v167, %v168
  %v170 = vrot.slane %v169, 1
  %v171 = vadd.f32 %v169, %v170
  %v172 = vsel %vm27, %v133, 0.0
  %v173 = vadd.f32 %v117, %v172
  %v174 = vrot.slane %v173, 4
  %v175 = vadd.f32 %v173, %v174
  %v176 = vrot.slane %v175, 2
  %v177 = vadd.f32 %v175, %v176
  %v178 = vrot.slane %v177, 1
  %v179 = vadd.f32 %v177, %v178
  %v180 = vsel %vm27, %v135, 0.0
  %v181 = vadd.f32 %v119, %v180
  %v182 = vrot.slane %v181, 4
  %v183 = vadd.f32 %v181, %v182
  %v184 = vrot.slane %v183, 2
  %v185 = vadd.f32 %v183, %v184
  %v186 = vrot.slane %v185, 1
  %v187 = vadd.f32 %v185, %v186
  %v188 = vsel %vm27, %v137, 0.0
  %v189 = vadd.f32 %v121, %v188
  %v190 = vrot.slane %v189, 4
  %v191 = vadd.f32 %v189, %v190
  %v192 = vrot.slane %v191, 2
  %v193 = vadd.f32 %v191, %v192
  %v194 = vrot.slane %v193, 1
  %v195 = vadd.f32 %v193, %v194
  %v196 = vsel %vm27, %v139, 0.0
  %v197 = vadd.f32 %v123, %v196
  %v198 = vrot.slane %v197, 4
  %v199 = vadd.f32 %v197, %v198
  %v200 = vrot.slane %v199, 2
  %v201 = vadd.f32 %v199, %v200
  %v202 = vrot.slane %v201, 1
  %v203 = vadd.f32 %v201, %v202
  %v204 = vld [vmem:[%s1] sm:$0xff]
  %v205 = vld [vmem:[%s1 + $0x8] sm:$0xff]
  %v206 = vld [vmem:[%s1 + $0x10] sm:$0xff]
  %v207 = vld [vmem:[%s1 + $0x18] sm:$0xff]
  %v208 = vld [vmem:[%s1 + $0x20] sm:$0xff]
  %v209 = vld [vmem:[%s1 + $0x28] sm:$0xff]
  %v210 = vld [vmem:[%s1 + $0x30] sm:$0xff]
  %v211 = vld [vmem:[%s1 + $0x38] sm:$0xff]
  %v212 = vld [vmem:[%s1 + $0x40] sm:$0x1]
  %v213 = vld [vmem:[%s1 + $0x48] sm:$0x1]
  %v214 = vld [vmem:[%s1 + $0x50] sm:$0x1]
  %v215 = vld [vmem:[%s1 + $0x58] sm:$0x1]
  %v216 = vld [vmem:[%s1 + $0x60] sm:$0x1]
  %v217 = vld [vmem:[%s1 + $0x68] sm:$0x1]
  %v218 = vld [vmem:[%s1 + $0x70] sm:$0x1]
  %v219 = vld [vmem:[%s1 + $0x78] sm:$0x1]
  %v220 = vmul.f32 %v109, %v204
  %v221 = vmul.f32 %v111, %v205
  %v222 = vmul.f32 %v113, %v206
  %v223 = vmul.f32 %v115, %v207
  %v224 = vmul.f32 %v117, %v208
  %v225 = vmul.f32 %v119, %v209
  %v226 = vmul.f32 %v121, %v210
  %v227 = vmul.f32 %v123, %v211
  %v228 = vmul.f32 %v125, %v212
  %v229 = vmul.f32 %v127, %v213
  %v230 = vmul.f32 %v129, %v214
  %v231 = vmul.f32 %v131, %v215
  %v232 = vmul.f32 %v133, %v216
  %v233 = vmul.f32 %v135, %v217
  %v234 = vmul.f32 %v137, %v218
  %v235 = vmul.f32 %v139, %v219
  %v236 = vsel %vm27, %v228, 0.0
  %v237 = vadd.f32 %v220, %v236
  %v238 = vrot.slane %v237, 4
  %v239 = vadd.f32 %v237, %v238
  %v240 = vrot.slane %v239, 2
  %v241 = vadd.f32 %v239, %v240
  %v242 = vrot.slane %v241, 1
  %v243 = vadd.f32 %v241, %v242
  %v244 = vsel %vm27, %v229, 0.0
  %v245 = vadd.f32 %v221, %v244
  %v246 = vrot.slane %v245, 4
  %v247 = vadd.f32 %v245, %v246
  %v248 = vrot.slane %v247, 2
  %v249 = vadd.f32 %v247, %v248
  %v250 = vrot.slane %v249, 1
  %v251 = vadd.f32 %v249, %v250
  %v252 = vsel %vm27, %v230, 0.0
  %v253 = vadd.f32 %v222, %v252
  %v254 = vrot.slane %v253, 4
  %v255 = vadd.f32 %v253, %v254
  %v256 = vrot.slane %v255, 2
  %v257 = vadd.f32 %v255, %v256
  %v258 = vrot.slane %v257, 1
  %v259 = vadd.f32 %v257, %v258
  %v260 = vsel %vm27, %v231, 0.0
  %v261 = vadd.f32 %v223, %v260
  %v262 = vrot.slane %v261, 4
  %v263 = vadd.f32 %v261, %v262
  %v264 = vrot.slane %v263, 2
  %v265 = vadd.f32 %v263, %v264
  %v266 = vrot.slane %v265, 1
  %v267 = vadd.f32 %v265, %v266
  %v268 = vsel %vm27, %v232, 0.0
  %v269 = vadd.f32 %v224, %v268
  %v270 = vrot.slane %v269, 4
  %v271 = vadd.f32 %v269, %v270
  %v272 = vrot.slane %v271, 2
  %v273 = vadd.f32 %v271, %v272
  %v274 = vrot.slane %v273, 1
  %v275 = vadd.f32 %v273, %v274
  %v276 = vsel %vm27, %v233, 0.0
  %v277 = vadd.f32 %v225, %v276
  %v278 = vrot.slane %v277, 4
  %v279 = vadd.f32 %v277, %v278
  %v280 = vrot.slane %v279, 2
  %v281 = vadd.f32 %v279, %v280
  %v282 = vrot.slane %v281, 1
  %v283 = vadd.f32 %v281, %v282
  %v284 = vsel %vm27, %v234, 0.0
  %v285 = vadd.f32 %v226, %v284
  %v286 = vrot.slane %v285, 4
  %v287 = vadd.f32 %v285, %v286
  %v288 = vrot.slane %v287, 2
  %v289 = vadd.f32 %v287, %v288
  %v290 = vrot.slane %v289, 1
  %v291 = vadd.f32 %v289, %v290
  %v292 = vsel %vm27, %v235, 0.0
  %v293 = vadd.f32 %v227, %v292
  %v294 = vrot.slane %v293, 4
  %v295 = vadd.f32 %v293, %v294
  %v296 = vrot.slane %v295, 2
  %v297 = vadd.f32 %v295, %v296
  %v298 = vrot.slane %v297, 1
  %v299 = vadd.f32 %v297, %v298
  %v300 = vrcp.pop %v147
  %v301 = vmul.f32 %v243, %v300
  %v302 = vrcp.pop %v155
  %v303 = vmul.f32 %v251, %v302
  %v304 = vrcp.pop %v163
  %v305 = vmul.f32 %v259, %v304
  %v306 = vrcp.pop %v171
  %v307 = vmul.f32 %v267, %v306
  %v308 = vrcp.pop %v179
  %v309 = vmul.f32 %v275, %v308
  %v310 = vrcp.pop %v187
  %v311 = vmul.f32 %v283, %v310
  %v312 = vrcp.pop %v195
  %v313 = vmul.f32 %v291, %v312
  %v314 = vrcp.pop %v203
  %v315 = vmul.f32 %v299, %v314
  %v324 = vcombine.low %v301, %v303
  %v325 = vcombine.low %v305, %v307
  %v326 = vcombine.low %v309, %v311
  %v327 = vcombine.low %v313, %v315
  %v329 = vunpack.c.l.s4 1966171168
  %v330 = vunpack.c.0.s8 %v329
  %v331 = vlaneseq
  %v332 = vshrl.u32 %v331, 7
  %v333 = vsub.s32 %v330, %v332
  %v334 = vrot.slane %v324, %v333
  %v336 = vunpack.c.l.s4 1966171168
  %v337 = vunpack.c.0.s8 %v336
  %v338 = vlaneseq
  %v339 = vshrl.u32 %v338, 7
  %v340 = vsub.s32 %v337, %v339
  %v341 = vrot.slane %v325, %v340
  %v343 = vunpack.c.l.s4 1966171168
  %v344 = vunpack.c.0.s8 %v343
  %v345 = vlaneseq
  %v346 = vshrl.u32 %v345, 7
  %v347 = vsub.s32 %v344, %v346
  %v348 = vrot.slane %v326, %v347
  %v350 = vunpack.c.l.s4 1966171168
  %v351 = vunpack.c.0.s8 %v350
  %v352 = vlaneseq
  %v353 = vshrl.u32 %v352, 7
  %v354 = vsub.s32 %v351, %v353
  %v355 = vrot.slane %v327, %v354
  %v356 = vcombine.low %v334, %v341
  %v357 = vcombine.low %v348, %v355
  %v359 = vunpack.c.l.s4 1966171168
  %v360 = vunpack.c.0.s8 %v359
  %v361 = vlaneseq
  %v362 = vshrl.u32 %v361, 7
  %v363 = vsub.s32 %v360, %v362
  %v364 = vrot.slane %v356, %v363
  %v366 = vunpack.c.l.s4 1966171168
  %v367 = vunpack.c.0.s8 %v366
  %v368 = vlaneseq
  %v369 = vshrl.u32 %v368, 7
  %v370 = vsub.s32 %v367, %v369
  %v371 = vrot.slane %v357, %v370
  %v372 = vcombine.low %v364, %v371
  %374 = vst [vmem:[%s2] sm:$0xff] %v372
  // Predicated region
  $region10: #{forward.63} parent=0 // pred_check
    _
  $region11: #{forward.63} parent=0 // pred_check_branch
    %376 = sbr.rel (0) target = $region13
  $region12: #{forward.63} parent=0 // pred_region
    _
  $region13: #{forward.63} parent=0 // pred_fallthru
    _
  // Predicated region
  $region14: #{forward.63} parent=0 // pred_check
    _
  $region15: #{forward.63} parent=0 // pred_check_branch
    %378 = sbr.rel (0) target = $region17
  $region16: #{forward.63} parent=0 // pred_region
    _
  $region17: #{forward.63} parent=0 // pred_fallthru
    _

// kernel: forward.58
$region0: #{forward.58}
  #allocation0 [shape = 'u32[]', space=smem, size = 0x4, offset = 0x4, fixed_abs, tag = 'smem constant byte address 0x4 - core index']
  #allocation1 [shape = 'u32[144,128]{1,0:T(1,128)}', space=vmem, size = 0x12000, scoped, tag = 'internal scratch']
  #allocation2 [shape = 'f32[1,1]{1,0:T(1,128)S(1)}', space=vmem, size = 0x200, scoped, tag = 'scoped memory for forward.58']
  %s0 = inlined_call_operand.vmem [shape: f32[16,128], index: 0, kind: input, shape index: {}]
  %s1 = inlined_call_operand.vmem [shape: f32[2,16,128], index: 1, kind: input, shape index: {}]
  %s2 = inlined_call_operand.vmem [shape: f32[16,128], index: 2, kind: input, shape index: {}]
  %s3 = inlined_call_operand.vmem [shape: f32[16,1], index: 3, kind: input, shape index: {}]
  %s4 = inlined_call_operand.vmem [shape: f32[16,384], index: 4, kind: input, shape index: {}]
  %s5 = inlined_call_operand.vmem [shape: f32[1,384], index: 5, kind: input, shape index: {}]
  %s6 = inlined_call_operand.vmem [shape: bf16[128,128], index: 6, kind: input, shape index: {}]
  %s7 = inlined_call_operand.vmem [shape: f32[1,128], index: 7, kind: input, shape index: {}]
  %s8 = inlined_call_operand.vmem [shape: bf16[128,256], index: 8, kind: input, shape index: {}]
  %s9 = inlined_call_operand.vmem [shape: bf16[128,384], index: 9, kind: input, shape index: {}]
  %s10 = inlined_call_operand.vmem [shape: bf16[128,128], index: 10, kind: input, shape index: {}]
  %s11 = inlined_call_operand.vmem [shape: bf16[128,256], index: 11, kind: input, shape index: {}]
  %s12 = inlined_call_operand.vmem [shape: f32[1,256], index: 12, kind: input, shape index: {}]
  %s13 = inlined_call_operand.vmem [shape: bf16[128,1], index: 13, kind: input, shape index: {}]
  %s14 = inlined_call_operand.<no memory space> [shape: f32[1,1], index: 14, kind: input, shape index: {}]
  %s15 = inlined_call_operand.vmem [shape: bf16[128,576], index: 15, kind: input, shape index: {}]
  %s16 = inlined_call_operand.vmem [shape: f32[1,576], index: 16, kind: input, shape index: {}]
  %s17 = inlined_call_operand.hbm [shape: f32[16,128], index: 17, kind: output, shape index: {0}]
  %s18 = inlined_call_operand.vmem [shape: f32[16,1], index: 18, kind: output, shape index: {1}]
  %s19 = inlined_call_operand.vmem [shape: f32[16,576], index: 19, kind: output, shape index: {2}]
  %20 = xla_tuple %s17, %s18, %s19
  %s21 = sld [smem:[#allocation0]]
  $region94: #{forward.58} parent=0
    _
  %s23 = ssub.s32 1, %s21
  %s24 = scalar_select 0, %s23, %s21
  %v25 = vstv %s14
  %26 = vst [vmem:[#allocation2] sm:$0x1] %v25
  $region1: #{forward.58} parent=0
    #allocation3 [shape = 'u8[8192]{0}', space=vmem, size = 0x2000, scoped, tag = 'output window, operand 0, single buffered']
    #allocation4 [shape = 's32[1]{0}', space=sflag, size = 0x4, scoped, tag = 'scoped memory for forward.58']
    %27 = vsyncpa [#allocation4], 0
    // Predicated region
    $region2: #{forward.58} parent=1 // pred_check
      _
    $region3: #{forward.58} parent=1 // pred_check_branch
      %29 = sbr.rel (0) target = $region5
    $region4: #{forward.58} parent=1 // pred_region
      _
    $region5: #{forward.58} parent=1 // pred_fallthru
      _
    // Predicated region
    $region6: #{forward.58} parent=1 // pred_check
      _
    $region7: #{forward.58} parent=1 // pred_check_branch
      %31 = sbr.rel (0) target = $region9
    $region8: #{forward.58} parent=1 // pred_region
      _
    $region9: #{forward.58} parent=1 // pred_fallthru
      _
    // Predicated region
    $region10: #{forward.58} parent=1 // pred_check
      _
    $region11: #{forward.58} parent=1 // pred_check_branch
      %33 = sbr.rel (0) target = $region13
    $region12: #{forward.58} parent=1 // pred_region
      _
    $region13: #{forward.58} parent=1 // pred_fallthru
      _
    // Predicated region
    $region14: #{forward.58} parent=1 // pred_check
      _
    $region15: #{forward.58} parent=1 // pred_check_branch
      %35 = sbr.rel (0) target = $region17
    $region16: #{forward.58} parent=1 // pred_region
      _
    $region17: #{forward.58} parent=1 // pred_fallthru
      _
    // Predicated region
    $region18: #{forward.58} parent=1 // pred_check
      _
    $region19: #{forward.58} parent=1 // pred_check_branch
      %37 = sbr.rel (0) target = $region21
    $region20: #{forward.58} parent=1 // pred_region
      _
    $region21: #{forward.58} parent=1 // pred_fallthru
      _
    // Predicated region
    $region22: #{forward.58} parent=1 // pred_check
      _
    $region23: #{forward.58} parent=1 // pred_check_branch
      %39 = sbr.rel (0) target = $region25
    $region24: #{forward.58} parent=1 // pred_region
      _
    $region25: #{forward.58} parent=1 // pred_fallthru
      _
    // Predicated region
    $region26: #{forward.58} parent=1 // pred_check
      _
    $region27: #{forward.58} parent=1 // pred_check_branch
      %41 = sbr.rel (0) target = $region29
    $region28: #{forward.58} parent=1 // pred_region
      _
    $region29: #{forward.58} parent=1 // pred_fallthru
      _
    // Predicated region
    $region30: #{forward.58} parent=1 // pred_check
      _
    $region31: #{forward.58} parent=1 // pred_check_branch
      %43 = sbr.rel (0) target = $region33
    $region32: #{forward.58} parent=1 // pred_region
      _
    $region33: #{forward.58} parent=1 // pred_fallthru
      _
    // Predicated region
    $region34: #{forward.58} parent=1 // pred_check
      _
    $region35: #{forward.58} parent=1 // pred_check_branch
      %45 = sbr.rel (0) target = $region37
    $region36: #{forward.58} parent=1 // pred_region
      _
    $region37: #{forward.58} parent=1 // pred_fallthru
      _
    // Predicated region
    $region38: #{forward.58} parent=1 // pred_check
      _
    $region39: #{forward.58} parent=1 // pred_check_branch
      %47 = sbr.rel (0) target = $region41
    $region40: #{forward.58} parent=1 // pred_region
      _
    $region41: #{forward.58} parent=1 // pred_fallthru
      _
    // Predicated region
    $region42: #{forward.58} parent=1 // pred_check
      _
    $region43: #{forward.58} parent=1 // pred_check_branch
      %49 = sbr.rel (0) target = $region45
    $region44: #{forward.58} parent=1 // pred_region
      _
    $region45: #{forward.58} parent=1 // pred_fallthru
      _
    // Predicated region
    $region46: #{forward.58} parent=1 // pred_check
      _
    $region47: #{forward.58} parent=1 // pred_check_branch
      %51 = sbr.rel (0) target = $region49
    $region48: #{forward.58} parent=1 // pred_region
      _
    $region49: #{forward.58} parent=1 // pred_fallthru
      _
    // Predicated region
    $region50: #{forward.58} parent=1 // pred_check
      _
    $region51: #{forward.58} parent=1 // pred_check_branch
      %53 = sbr.rel (0) target = $region53
    $region52: #{forward.58} parent=1 // pred_region
      _
    $region53: #{forward.58} parent=1 // pred_fallthru
      _
    // Predicated region
    $region54: #{forward.58} parent=1 // pred_check
      _
    $region55: #{forward.58} parent=1 // pred_check_branch
      %55 = sbr.rel (0) target = $region57
    $region56: #{forward.58} parent=1 // pred_region
      _
    $region57: #{forward.58} parent=1 // pred_fallthru
      _
    // Predicated region
    $region58: #{forward.58} parent=1 // pred_check
      _
    $region59: #{forward.58} parent=1 // pred_check_branch
      %57 = sbr.rel (0) target = $region61
    $region60: #{forward.58} parent=1 // pred_region
      _
    $region61: #{forward.58} parent=1 // pred_fallthru
      _
    // Predicated region
    $region62: #{forward.58} parent=1 // pred_check
      _
    $region63: #{forward.58} parent=1 // pred_check_branch
      %59 = sbr.rel (0) target = $region65
    $region64: #{forward.58} parent=1 // pred_region
      _
    $region65: #{forward.58} parent=1 // pred_fallthru
      _
    // Predicated region
    $region66: #{forward.58} parent=1 // pred_check
      _
    $region67: #{forward.58} parent=1 // pred_check_branch
      %61 = sbr.rel (0) target = $region69
    $region68: #{forward.58} parent=1 // pred_region
      _
    $region69: #{forward.58} parent=1 // pred_fallthru
      _
    %v63 = vld [vmem:[%s0] sm:$0xff]
    %v64 = vld [vmem:[%s0 + $0x8] sm:$0xff]
    %v65 = vld [vmem:[%s1] sm:$0xff]
    %v66 = vld [vmem:[%s1 + $0x8] sm:$0xff]
    %v67 = vsub.f32 %v65, %v63
    %v68 = vsub.f32 %v66, %v64
    %v69 = vmul.f32 %v67, %v67
    %v70 = vmul.f32 %v68, %v68
    %s71 = scalar_lea.vmem %s1, 16
    %v72 = vld [vmem:[%s71] sm:$0xff]
    %v73 = vld [vmem:[%s71 + $0x8] sm:$0xff]
    %v74 = vsub.f32 %v72, %v63
    %v75 = vsub.f32 %v73, %v64
    %v76 = vmul.f32 %v74, %v74
    %v77 = vmul.f32 %v75, %v75
    %v78 = vadd.f32 %v69, %v76
    %v79 = vadd.f32 %v70, %v77
    %v80 = vmul.f32 %v78, 0.5
    %v81 = vmul.f32 %v79, 0.5
    %v82 = vpack.c.bf16 %v81, %v80
    %v83 = vld [vmem:[%s6] sm:$0xf]
    %v84 = vld [vmem:[%s6 + $0x4] sm:$0xf]
    %v85 = vld [vmem:[%s6 + $0x8] sm:$0xf]
    %v86 = vld [vmem:[%s6 + $0xc] sm:$0xf]
    %v87 = vld [vmem:[%s6 + $0x10] sm:$0xf]
    %v88 = vld [vmem:[%s6 + $0x14] sm:$0xf]
    %v89 = vld [vmem:[%s6 + $0x18] sm:$0xf]
    %v90 = vld [vmem:[%s6 + $0x1c] sm:$0xf]
    %v91 = vld [vmem:[%s6 + $0x20] sm:$0xf]
    %v92 = vld [vmem:[%s6 + $0x24] sm:$0xf]
    %v93 = vld [vmem:[%s6 + $0x28] sm:$0xf]
    %v94 = vld [vmem:[%s6 + $0x2c] sm:$0xf]
    %v95 = vld [vmem:[%s6 + $0x30] sm:$0xf]
    %v96 = vld [vmem:[%s6 + $0x34] sm:$0xf]
    %v97 = vld [vmem:[%s6 + $0x38] sm:$0xf]
    %v98 = vld [vmem:[%s6 + $0x3c] sm:$0xf]
    %v99 = vld [vmem:[%s7] sm:$0x1]
    %v101 = vlaneseq
    %v102 = vshrl.u32 %v101, 7
    %v103 = vsub.s32 0, %v102
    %v104 = vrot.slane %v99, %v103
    %v122 = vunpack.c.l.b16 %v83
    %v123 = vunpack.c.l.b16 %v84
    %v124 = vunpack.c.l.b16 %v85
    %v125 = vunpack.c.l.b16 %v86
    %v126 = vunpack.c.l.b16 %v87
    %v127 = vunpack.c.l.b16 %v88
    %v128 = vunpack.c.l.b16 %v89
    %v129 = vunpack.c.l.b16 %v90
    %v130 = vunpack.c.l.b16 %v91
    %v131 = vunpack.c.l.b16 %v92
    %v132 = vunpack.c.l.b16 %v93
    %v133 = vunpack.c.l.b16 %v94
    %v134 = vunpack.c.l.b16 %v95
    %v135 = vunpack.c.l.b16 %v96
    %v136 = vunpack.c.l.b16 %v97
    %v137 = vunpack.c.l.b16 %v98
    %v138 = vpack.c.b16 %v123, %v122
    %v139 = vpack.c.b16 %v125, %v124
    %v140 = vpack.c.b16 %v127, %v126
    %v141 = vpack.c.b16 %v129, %v128
    %v142 = vpack.c.b16 %v131, %v130
    %v143 = vpack.c.b16 %v133, %v132
    %v144 = vpack.c.b16 %v135, %v134
    %v145 = vpack.c.b16 %v137, %v136
    %154 = vmatprep.subr.bf16.mxu0 0
    %155 = vmatpush1.bf16.msra.mxu0 %v145
    %156 = vmatprep.subr.bf16.mxu0 0
    %157 = vmatpush1.bf16.msra.mxu0 %v144
    %158 = vmatprep.subr.bf16.mxu0 0
    %159 = vmatpush1.bf16.msra.mxu0 %v143
    %160 = vmatprep.subr.bf16.mxu0 0
    %161 = vmatpush1.bf16.msra.mxu0 %v142
    %162 = vmatprep.subr.bf16.mxu0 0
    %163 = vmatpush1.bf16.msra.mxu0 %v141
    %164 = vmatprep.subr.bf16.mxu0 0
    %165 = vmatpush1.bf16.msra.mxu0 %v140
    %166 = vmatprep.subr.bf16.mxu0 0
    %167 = vmatpush1.bf16.msra.mxu0 %v139
    %168 = vmatprep.subr.bf16.mxu0 0
    %169 = vmatpush1.bf16.msra.mxu0 %v138
    %170 = vmatprep.subr.bf16.mxu0 0
    %171 = vmatpush2.bf16.msra.mxu0 0
    %172 = vmatprep.subr.bf16.mxu0 0
    %173 = vmatpush2.bf16.msra.mxu0 0
    %174 = vmatprep.subr.bf16.mxu0 0
    %175 = vmatpush2.bf16.msra.mxu0 0
    %176 = vmatprep.subr.bf16.mxu0 0
    %177 = vmatpush2.bf16.msra.mxu0 0
    %178 = vmatprep.subr.bf16.mxu0 0
    %179 = vmatpush2.bf16.msra.mxu0 0
    %180 = vmatprep.subr.bf16.mxu0 0
    %181 = vmatpush2.bf16.msra.mxu0 0
    %182 = vmatprep.subr.bf16.mxu0 0
    %183 = vmatpush2.bf16.msra.mxu0 0
    %184 = vmatprep.subr.bf16.mxu0 0
    %185 = vmatpush2.bf16.msra.mxu0 0
    %186 = vmatprep.mubr.bf16.mxu0 0
    %187 = vmatmul.mubr.bf16.gmra.mxu0 %v82
    %v188 = vpop.f32.mrf.mxu0
    %v189 = vadd.f32 %v104, %v188
    %v190 = vpop.f32.mrf.mxu0
    %v191 = vpop.f32.mrf.mxu0
    %v192 = vadd.f32 %v104, %v191
    %v193 = vpop.f32.mrf.mxu0
    %194 = vdwg.mxu0
    %v195 = vmax.f32 %v189, 0.0
    %v196 = vmax.f32 %v192, 0.0
    %v197 = vpack.c.bf16 %v196, %v195
    %v198 = vld [vmem:[%s9] sm:$0xff]
    %v199 = vld [vmem:[%s9 + $0x8] sm:$0xf]
    %v200 = vld [vmem:[%s9 + $0xc] sm:$0xff]
    %v201 = vld [vmem:[%s9 + $0x14] sm:$0xf]
    %v202 = vld [vmem:[%s9 + $0x18] sm:$0xff]
    %v203 = vld [vmem:[%s9 + $0x20] sm:$0xf]
    %v204 = vld [vmem:[%s9 + $0x24] sm:$0xff]
    %v205 = vld [vmem:[%s9 + $0x2c] sm:$0xf]
    %v206 = vld [vmem:[%s9 + $0x30] sm:$0xff]
    %v207 = vld [vmem:[%s9 + $0x38] sm:$0xf]
    %v208 = vld [vmem:[%s9 + $0x3c] sm:$0xff]
    %v209 = vld [vmem:[%s9 + $0x44] sm:$0xf]
    %v210 = vld [vmem:[%s9 + $0x48] sm:$0xff]
    %v211 = vld [vmem:[%s9 + $0x50] sm:$0xf]
    %v212 = vld [vmem:[%s9 + $0x54] sm:$0xff]
    %v213 = vld [vmem:[%s9 + $0x5c] sm:$0xf]
    %v214 = vld [vmem:[%s9 + $0x60] sm:$0xff]
    %v215 = vld [vmem:[%s9 + $0x68] sm:$0xf]
    %v216 = vld [vmem:[%s9 + $0x6c] sm:$0xff]
    %v217 = vld [vmem:[%s9 + $0x74] sm:$0xf]
    %v218 = vld [vmem:[%s9 + $0x78] sm:$0xff]
    %v219 = vld [vmem:[%s9 + $0x80] sm:$0xf]
    %v220 = vld [vmem:[%s9 + $0x84] sm:$0xff]
    %v221 = vld [vmem:[%s9 + $0x8c] sm:$0xf]
    %v222 = vld [vmem:[%s9 + $0x90] sm:$0xff]
    %v223 = vld [vmem:[%s9 + $0x98] sm:$0xf]
    %v224 = vld [vmem:[%s9 + $0x9c] sm:$0xff]
    %v225 = vld [vmem:[%s9 + $0xa4] sm:$0xf]
    %v226 = vld [vmem:[%s9 + $0xa8] sm:$0xff]
    %v227 = vld [vmem:[%s9 + $0xb0] sm:$0xf]
    %v228 = vld [vmem:[%s9 + $0xb4] sm:$0xff]
    %v229 = vld [vmem:[%s9 + $0xbc] sm:$0xf]
    %v230 = vld [vmem:[%s4] sm:$0xff]
    %v231 = vld [vmem:[%s4 + $0x8] sm:$0xff]
    %v232 = vld [vmem:[%s4 + $0x10] sm:$0xff]
    %v233 = vld [vmem:[%s4 + $0x18] sm:$0xff]
    %v234 = vld [vmem:[%s4 + $0x20] sm:$0xff]
    %v235 = vld [vmem:[%s4 + $0x28] sm:$0xff]
    %v268 = vunpack.c.l.b16 %v198
    %v269 = vunpack.c.h.b16 %v198
    %v270 = vunpack.c.l.b16 %v199
    %v271 = vunpack.c.l.b16 %v200
    %v272 = vunpack.c.h.b16 %v200
    %v273 = vunpack.c.l.b16 %v201
    %v274 = vunpack.c.l.b16 %v202
    %v275 = vunpack.c.h.b16 %v202
    %v276 = vunpack.c.l.b16 %v203
    %v277 = vunpack.c.l.b16 %v204
    %v278 = vunpack.c.h.b16 %v204
    %v279 = vunpack.c.l.b16 %v205
    %v280 = vunpack.c.l.b16 %v206
    %v281 = vunpack.c.h.b16 %v206
    %v282 = vunpack.c.l.b16 %v207
    %v283 = vunpack.c.l.b16 %v208
    %v284 = vunpack.c.h.b16 %v208
    %v285 = vunpack.c.l.b16 %v209
    %v286 = vunpack.c.l.b16 %v210
    %v287 = vunpack.c.h.b16 %v210
    %v288 = vunpack.c.l.b16 %v211
    %v289 = vunpack.c.l.b16 %v212
    %v290 = vunpack.c.h.b16 %v212
    %v291 = vunpack.c.l.b16 %v213
    %v292 = vunpack.c.l.b16 %v214
    %v293 = vunpack.c.h.b16 %v214
    %v294 = vunpack.c.l.b16 %v215
    %v295 = vunpack.c.l.b16 %v216
    %v296 = vunpack.c.h.b16 %v216
    %v297 = vunpack.c.l.b16 %v217
    %v298 = vunpack.c.l.b16 %v218
    %v299 = vunpack.c.h.b16 %v218
    %v300 = vunpack.c.l.b16 %v219
    %v301 = vunpack.c.l.b16 %v220
    %v302 = vunpack.c.h.b16 %v220
    %v303 = vunpack.c.l.b16 %v221
    %v304 = vunpack.c.l.b16 %v222
    %v305 = vunpack.c.h.b16 %v222
    %v306 = vunpack.c.l.b16 %v223
    %v307 = vunpack.c.l.b16 %v224
    %v308 = vunpack.c.h.b16 %v224
    %v309 = vunpack.c.l.b16 %v225
    %v310 = vunpack.c.l.b16 %v226
    %v311 = vunpack.c.h.b16 %v226
    %v312 = vunpack.c.l.b16 %v227
    %v313 = vunpack.c.l.b16 %v228
    %v314 = vunpack.c.h.b16 %v228
    %v315 = vunpack.c.l.b16 %v229
    %v316 = vpack.c.b16 %v271, %v268
    %v317 = vpack.c.b16 %v272, %v269
    %v318 = vpack.c.b16 %v273, %v270
    %v319 = vpack.c.b16 %v277, %v274
    %v320 = vpack.c.b16 %v278, %v275
    %v321 = vpack.c.b16 %v279, %v276
    %v322 = vpack.c.b16 %v283, %v280
    %v323 = vpack.c.b16 %v284, %v281
    %v324 = vpack.c.b16 %v285, %v282
    %v325 = vpack.c.b16 %v289, %v286
    %v326 = vpack.c.b16 %v290, %v287
    %v327 = vpack.c.b16 %v291, %v288
    %v328 = vpack.c.b16 %v295, %v292
    %v329 = vpack.c.b16 %v296, %v293
    %v330 = vpack.c.b16 %v297, %v294
    %v331 = vpack.c.b16 %v301, %v298
    %v332 = vpack.c.b16 %v302, %v299
    %v333 = vpack.c.b16 %v303, %v300
    %v334 = vpack.c.b16 %v307, %v304
    %v335 = vpack.c.b16 %v308, %v305
    %v336 = vpack.c.b16 %v309, %v306
    %v337 = vpack.c.b16 %v313, %v310
    %v338 = vpack.c.b16 %v314, %v311
    %v339 = vpack.c.b16 %v315, %v312
    %364 = vmatprep.subr.bf16.mxu0 %v338
    %365 = vmatpush1.bf16.msra.mxu0 %v337
    %366 = vmatprep.subr.bf16.mxu0 %v335
    %367 = vmatpush1.bf16.msra.mxu0 %v334
    %368 = vmatprep.subr.bf16.mxu0 %v332
    %369 = vmatpush1.bf16.msra.mxu0 %v331
    %370 = vmatprep.subr.bf16.mxu0 %v329
    %371 = vmatpush1.bf16.msra.mxu0 %v328
    %372 = vmatprep.subr.bf16.mxu0 %v326
    %373 = vmatpush1.bf16.msra.mxu0 %v325
    %374 = vmatprep.subr.bf16.mxu0 %v323
    %375 = vmatpush1.bf16.msra.mxu0 %v322
    %376 = vmatprep.subr.bf16.mxu0 %v320
    %377 = vmatpush1.bf16.msra.mxu0 %v319
    %378 = vmatprep.subr.bf16.mxu0 %v317
    %379 = vmatpush1.bf16.msra.mxu0 %v316
    %380 = vmatprep.subr.bf16.mxu0 0
    %381 = vmatpush2.bf16.msra.mxu0 0
    %382 = vmatprep.subr.bf16.mxu0 0
    %383 = vmatpush2.bf16.msra.mxu0 0
    %384 = vmatprep.subr.bf16.mxu0 0
    %385 = vmatpush2.bf16.msra.mxu0 0
    %386 = vmatprep.subr.bf16.mxu0 0
    %387 = vmatpush2.bf16.msra.mxu0 0
    %388 = vmatprep.subr.bf16.mxu0 0
    %389 = vmatpush2.bf16.msra.mxu0 0
    %390 = vmatprep.subr.bf16.mxu0 0
    %391 = vmatpush2.bf16.msra.mxu0 0
    %392 = vmatprep.subr.bf16.mxu0 0
    %393 = vmatpush2.bf16.msra.mxu0 0
    %394 = vmatprep.subr.bf16.mxu0 0
    %395 = vmatpush2.bf16.msra.mxu0 0
    %396 = vmatprep.mubr.bf16.mxu0 0
    %397 = vmatmul.mubr.bf16.gmra.mxu0 %v197
    %v398 = vpop.f32.mrf.mxu0
    %v399 = vadd.f32 %v230, %v398
    %v400 = vpop.f32.mrf.mxu0
    %v401 = vadd.f32 %v231, %v400
    %v402 = vpop.f32.mrf.mxu0
    %v403 = vadd.f32 %v233, %v402
    %v404 = vpop.f32.mrf.mxu0
    %v405 = vadd.f32 %v234, %v404
    %406 = vdwg.mxu0
    %407 = vmatprep.subr.bf16.mxu0 0
    %408 = vmatpush1.bf16.msra.mxu0 %v339
    %409 = vmatprep.subr.bf16.mxu0 0
    %410 = vmatpush1.bf16.msra.mxu0 %v336
    %411 = vmatprep.subr.bf16.mxu0 0
    %412 = vmatpush1.bf16.msra.mxu0 %v333
    %413 = vmatprep.subr.bf16.mxu0 0
    %414 = vmatpush1.bf16.msra.mxu0 %v330
    %415 = vmatprep.subr.bf16.mxu0 0
    %416 = vmatpush1.bf16.msra.mxu0 %v327
    %417 = vmatprep.subr.bf16.mxu0 0
    %418 = vmatpush1.bf16.msra.mxu0 %v324
    %419 = vmatprep.subr.bf16.mxu0 0
    %420 = vmatpush1.bf16.msra.mxu0 %v321
    %421 = vmatprep.subr.bf16.mxu0 0
    %422 = vmatpush1.bf16.msra.mxu0 %v318
    %423 = vmatprep.subr.bf16.mxu0 0
    %424 = vmatpush2.bf16.msra.mxu0 0
    %425 = vmatprep.subr.bf16.mxu0 0
    %426 = vmatpush2.bf16.msra.mxu0 0
    %427 = vmatprep.subr.bf16.mxu0 0
    %428 = vmatpush2.bf16.msra.mxu0 0
    %429 = vmatprep.subr.bf16.mxu0 0
    %430 = vmatpush2.bf16.msra.mxu0 0
    %431 = vmatprep.subr.bf16.mxu0 0
    %432 = vmatpush2.bf16.msra.mxu0 0
    %433 = vmatprep.subr.bf16.mxu0 0
    %434 = vmatpush2.bf16.msra.mxu0 0
    %435 = vmatprep.subr.bf16.mxu0 0
    %436 = vmatpush2.bf16.msra.mxu0 0
    %437 = vmatprep.subr.bf16.mxu0 0
    %438 = vmatpush2.bf16.msra.mxu0 0
    %439 = vmatprep.mubr.bf16.mxu0 0
    %440 = vmatmul.mubr.bf16.gmra.mxu0 %v197
    %v441 = vpop.f32.mrf.mxu0
    %v442 = vadd.f32 %v232, %v441
    %v443 = vpop.f32.mrf.mxu0
    %v444 = vpop.f32.mrf.mxu0
    %v445 = vadd.f32 %v235, %v444
    %v446 = vpop.f32.mrf.mxu0
    %447 = vdwg.mxu0
    %v448 = vld [vmem:[%s3] sm:$0xff]
    %v449 = vld [vmem:[%s3 + $0x8] sm:$0xff]
    %v450 = vld [vmem:[%s5] sm:$0x7]
    %452 = vset.pattern.permute.xlu0 0
    %453 = vperm.xlu0 %452, %v448
    %v454 = vpop.permute.xlu0 %453
    %457 = vset.pattern.permute.xlu0 0
    %458 = vperm.xlu0 %457, %v449
    %v459 = vpop.permute.xlu0 %458
    %v462 = vlaneseq
    %v463 = vshrl.u32 %v462, 7
    %v464 = vsub.s32 0, %v463
    %v465 = vrot.slane %v450, %v464
    %v466 = vlaneseq
    %v467 = vshrl.u32 %v466, 7
    %v468 = vsub.s32 1, %v467
    %v469 = vrot.slane %v450, %v468
    %v470 = vlaneseq
    %v471 = vshrl.u32 %v470, 7
    %v472 = vsub.s32 2, %v471
    %v473 = vrot.slane %v450, %v472
    %v477 = vmul.f32 %v454, %v465
    %v478 = vmul.f32 %v454, %v469
    %v479 = vmul.f32 %v454, %v473
    %v480 = vmul.f32 %v459, %v465
    %v481 = vmul.f32 %v459, %v469
    %v482 = vmul.f32 %v459, %v473
    %v483 = vadd.f32 %v399, %v477
    %v484 = vadd.f32 %v401, %v478
    %v485 = vadd.f32 %v442, %v479
    %v486 = vadd.f32 %v403, %v480
    %v487 = vadd.f32 %v405, %v481
    %v488 = vadd.f32 %v445, %v482
    %v489 = vld [vmem:[%s2] sm:$0xff]
    %v490 = vld [vmem:[%s2 + $0x8] sm:$0xff]
    %v491 = vpack.c.bf16 %v490, %v489
    %v492 = vld [vmem:[%s8] sm:$0xff]
    %v493 = vld [vmem:[%s8 + $0x8] sm:$0xff]
    %v494 = vld [vmem:[%s8 + $0x10] sm:$0xff]
    %v495 = vld [vmem:[%s8 + $0x18] sm:$0xff]
    %v496 = vld [vmem:[%s8 + $0x20] sm:$0xff]
    %v497 = vld [vmem:[%s8 + $0x28] sm:$0xff]
    %v498 = vld [vmem:[%s8 + $0x30] sm:$0xff]
    %v499 = vld [vmem:[%s8 + $0x38] sm:$0xff]
    %v500 = vld [vmem:[%s8 + $0x40] sm:$0xff]
    %v501 = vld [vmem:[%s8 + $0x48] sm:$0xff]
    %v502 = vld [vmem:[%s8 + $0x50] sm:$0xff]
    %v503 = vld [vmem:[%s8 + $0x58] sm:$0xff]
    %v504 = vld [vmem:[%s8 + $0x60] sm:$0xff]
    %v505 = vld [vmem:[%s8 + $0x68] sm:$0xff]
    %v506 = vld [vmem:[%s8 + $0x70] sm:$0xff]
    %v507 = vld [vmem:[%s8 + $0x78] sm:$0xff]
    %v524 = vunpack.c.l.b16 %v492
    %v525 = vunpack.c.h.b16 %v492
    %v526 = vunpack.c.l.b16 %v493
    %v527 = vunpack.c.h.b16 %v493
    %v528 = vunpack.c.l.b16 %v494
    %v529 = vunpack.c.h.b16 %v494
    %v530 = vunpack.c.l.b16 %v495
    %v531 = vunpack.c.h.b16 %v495
    %v532 = vunpack.c.l.b16 %v496
    %v533 = vunpack.c.h.b16 %v496
    %v534 = vunpack.c.l.b16 %v497
    %v535 = vunpack.c.h.b16 %v497
    %v536 = vunpack.c.l.b16 %v498
    %v537 = vunpack.c.h.b16 %v498
    %v538 = vunpack.c.l.b16 %v499
    %v539 = vunpack.c.h.b16 %v499
    %v540 = vunpack.c.l.b16 %v500
    %v541 = vunpack.c.h.b16 %v500
    %v542 = vunpack.c.l.b16 %v501
    %v543 = vunpack.c.h.b16 %v501
    %v544 = vunpack.c.l.b16 %v502
    %v545 = vunpack.c.h.b16 %v502
    %v546 = vunpack.c.l.b16 %v503
    %v547 = vunpack.c.h.b16 %v503
    %v548 = vunpack.c.l.b16 %v504
    %v549 = vunpack.c.h.b16 %v504
    %v550 = vunpack.c.l.b16 %v505
    %v551 = vunpack.c.h.b16 %v505
    %v552 = vunpack.c.l.b16 %v506
    %v553 = vunpack.c.h.b16 %v506
    %v554 = vunpack.c.l.b16 %v507
    %v555 = vunpack.c.h.b16 %v507
    %v556 = vpack.c.b16 %v526, %v524
    %v557 = vpack.c.b16 %v527, %v525
    %v558 = vpack.c.b16 %v530, %v528
    %v559 = vpack.c.b16 %v531, %v529
    %v560 = vpack.c.b16 %v534, %v532
    %v561 = vpack.c.b16 %v535, %v533
    %v562 = vpack.c.b16 %v538, %v536
    %v563 = vpack.c.b16 %v539, %v537
    %v564 = vpack.c.b16 %v542, %v540
    %v565 = vpack.c.b16 %v543, %v541
    %v566 = vpack.c.b16 %v546, %v544
    %v567 = vpack.c.b16 %v547, %v545
    %v568 = vpack.c.b16 %v550, %v548
    %v569 = vpack.c.b16 %v551, %v549
    %v570 = vpack.c.b16 %v554, %v552
    %v571 = vpack.c.b16 %v555, %v553
    %588 = vmatprep.subr.bf16.mxu0 %v571
    %589 = vmatpush1.bf16.msra.mxu0 %v570
    %590 = vmatprep.subr.bf16.mxu0 %v569
    %591 = vmatpush1.bf16.msra.mxu0 %v568
    %592 = vmatprep.subr.bf16.mxu0 %v567
    %593 = vmatpush1.bf16.msra.mxu0 %v566
    %594 = vmatprep.subr.bf16.mxu0 %v565
    %595 = vmatpush1.bf16.msra.mxu0 %v564
    %596 = vmatprep.subr.bf16.mxu0 %v563
    %597 = vmatpush1.bf16.msra.mxu0 %v562
    %598 = vmatprep.subr.bf16.mxu0 %v561
    %599 = vmatpush1.bf16.msra.mxu0 %v560
    %600 = vmatprep.subr.bf16.mxu0 %v559
    %601 = vmatpush1.bf16.msra.mxu0 %v558
    %602 = vmatprep.subr.bf16.mxu0 %v557
    %603 = vmatpush1.bf16.msra.mxu0 %v556
    %604 = vmatprep.subr.bf16.mxu0 0
    %605 = vmatpush2.bf16.msra.mxu0 0
    %606 = vmatprep.subr.bf16.mxu0 0
    %607 = vmatpush2.bf16.msra.mxu0 0
    %608 = vmatprep.subr.bf16.mxu0 0
    %609 = vmatpush2.bf16.msra.mxu0 0
    %610 = vmatprep.subr.bf16.mxu0 0
    %611 = vmatpush2.bf16.msra.mxu0 0
    %612 = vmatprep.subr.bf16.mxu0 0
    %613 = vmatpush2.bf16.msra.mxu0 0
    %614 = vmatprep.subr.bf16.mxu0 0
    %615 = vmatpush2.bf16.msra.mxu0 0
    %616 = vmatprep.subr.bf16.mxu0 0
    %617 = vmatpush2.bf16.msra.mxu0 0
    %618 = vmatprep.subr.bf16.mxu0 0
    %619 = vmatpush2.bf16.msra.mxu0 0
    %620 = vmatprep.mubr.bf16.mxu0 0
    %621 = vmatmul.mubr.bf16.gmra.mxu0 %v491
    %v622 = vpop.f32.mrf.mxu0
    %v623 = vadd.f32 0.0, %v622
    %v624 = vpop.f32.mrf.mxu0
    %v625 = vadd.f32 0.0, %v624
    %v626 = vpop.f32.mrf.mxu0
    %v627 = vadd.f32 0.0, %v626
    %v628 = vpop.f32.mrf.mxu0
    %v629 = vadd.f32 0.0, %v628
    %630 = vdwg.mxu0
    %v631 = vadd.f32 %v623, %v483
    %v632 = vadd.f32 %v627, %v486
    %v633 = vxor.u32 %v631, 2147483648
    %v634 = vxor.u32 %v632, 2147483648
    %v635 = vmul.f32 %v633, 1.442695
    %v636 = vpow.pop %v635
    %v637 = vmul.f32 %v634, 1.442695
    %v638 = vpow.pop %v637
    %v639 = vadd.f32 %v636, 1.0
    %v640 = vadd.f32 %v638, 1.0
    %v641 = vrcp.pop %v639
    %v642 = vmul.f32 1.0, %v641
    %v643 = vrcp.pop %v640
    %v644 = vmul.f32 1.0, %v643
    %v645 = vadd.f32 %v625, %v484
    %v646 = vadd.f32 %v629, %v487
    %v647 = vxor.u32 %v645, 2147483648
    %v648 = vxor.u32 %v646, 2147483648
    %v649 = vmul.f32 %v647, 1.442695
    %v650 = vpow.pop %v649
    %v651 = vmul.f32 %v648, 1.442695
    %v652 = vpow.pop %v651
    %v653 = vadd.f32 %v650, 1.0
    %v654 = vadd.f32 %v652, 1.0
    %v655 = vrcp.pop %v653
    %v656 = vmul.f32 1.0, %v655
    %v657 = vrcp.pop %v654
    %v658 = vmul.f32 1.0, %v657
    %v659 = vmul.f32 %v656, %v489
    %v660 = vmul.f32 %v658, %v490
    %v661 = vpack.c.bf16 %v660, %v659
    %v662 = vld [vmem:[%s10] sm:$0xf]
    %v663 = vld [vmem:[%s10 + $0x4] sm:$0xf]
    %v664 = vld [vmem:[%s10 + $0x8] sm:$0xf]
    %v665 = vld [vmem:[%s10 + $0xc] sm:$0xf]
    %v666 = vld [vmem:[%s10 + $0x10] sm:$0xf]
    %v667 = vld [vmem:[%s10 + $0x14] sm:$0xf]
    %v668 = vld [vmem:[%s10 + $0x18] sm:$0xf]
    %v669 = vld [vmem:[%s10 + $0x1c] sm:$0xf]
    %v670 = vld [vmem:[%s10 + $0x20] sm:$0xf]
    %v671 = vld [vmem:[%s10 + $0x24] sm:$0xf]
    %v672 = vld [vmem:[%s10 + $0x28] sm:$0xf]
    %v673 = vld [vmem:[%s10 + $0x2c] sm:$0xf]
    %v674 = vld [vmem:[%s10 + $0x30] sm:$0xf]
    %v675 = vld [vmem:[%s10 + $0x34] sm:$0xf]
    %v676 = vld [vmem:[%s10 + $0x38] sm:$0xf]
    %v677 = vld [vmem:[%s10 + $0x3c] sm:$0xf]
    %v694 = vunpack.c.l.b16 %v662
    %v695 = vunpack.c.l.b16 %v663
    %v696 = vunpack.c.l.b16 %v664
    %v697 = vunpack.c.l.b16 %v665
    %v698 = vunpack.c.l.b16 %v666
    %v699 = vunpack.c.l.b16 %v667
    %v700 = vunpack.c.l.b16 %v668
    %v701 = vunpack.c.l.b16 %v669
    %v702 = vunpack.c.l.b16 %v670
    %v703 = vunpack.c.l.b16 %v671
    %v704 = vunpack.c.l.b16 %v672
    %v705 = vunpack.c.l.b16 %v673
    %v706 = vunpack.c.l.b16 %v674
    %v707 = vunpack.c.l.b16 %v675
    %v708 = vunpack.c.l.b16 %v676
    %v709 = vunpack.c.l.b16 %v677
    %v710 = vpack.c.b16 %v695, %v694
    %v711 = vpack.c.b16 %v697, %v696
    %v712 = vpack.c.b16 %v699, %v698
    %v713 = vpack.c.b16 %v701, %v700
    %v714 = vpack.c.b16 %v703, %v702
    %v715 = vpack.c.b16 %v705, %v704
    %v716 = vpack.c.b16 %v707, %v706
    %v717 = vpack.c.b16 %v709, %v708
    %726 = vmatprep.subr.bf16.mxu0 0
    %727 = vmatpush1.bf16.msra.mxu0 %v717
    %728 = vmatprep.subr.bf16.mxu0 0
    %729 = vmatpush1.bf16.msra.mxu0 %v716
    %730 = vmatprep.subr.bf16.mxu0 0
    %731 = vmatpush1.bf16.msra.mxu0 %v715
    %732 = vmatprep.subr.bf16.mxu0 0
    %733 = vmatpush1.bf16.msra.mxu0 %v714
    %734 = vmatprep.subr.bf16.mxu0 0
    %735 = vmatpush1.bf16.msra.mxu0 %v713
    %736 = vmatprep.subr.bf16.mxu0 0
    %737 = vmatpush1.bf16.msra.mxu0 %v712
    %738 = vmatprep.subr.bf16.mxu0 0
    %739 = vmatpush1.bf16.msra.mxu0 %v711
    %740 = vmatprep.subr.bf16.mxu0 0
    %741 = vmatpush1.bf16.msra.mxu0 %v710
    %742 = vmatprep.subr.bf16.mxu0 0
    %743 = vmatpush2.bf16.msra.mxu0 0
    %744 = vmatprep.subr.bf16.mxu0 0
    %745 = vmatpush2.bf16.msra.mxu0 0
    %746 = vmatprep.subr.bf16.mxu0 0
    %747 = vmatpush2.bf16.msra.mxu0 0
    %748 = vmatprep.subr.bf16.mxu0 0
    %749 = vmatpush2.bf16.msra.mxu0 0
    %750 = vmatprep.subr.bf16.mxu0 0
    %751 = vmatpush2.bf16.msra.mxu0 0
    %752 = vmatprep.subr.bf16.mxu0 0
    %753 = vmatpush2.bf16.msra.mxu0 0
    %754 = vmatprep.subr.bf16.mxu0 0
    %755 = vmatpush2.bf16.msra.mxu0 0
    %756 = vmatprep.subr.bf16.mxu0 0
    %757 = vmatpush2.bf16.msra.mxu0 0
    %758 = vmatprep.mubr.bf16.mxu0 0
    %759 = vmatmul.mubr.bf16.gmra.mxu0 %v661
    %v760 = vpop.f32.mrf.mxu0
    %v761 = vadd.f32 %v485, %v760
    %v762 = vpop.f32.mrf.mxu0
    %v763 = vpop.f32.mrf.mxu0
    %v764 = vadd.f32 %v488, %v763
    %v765 = vpop.f32.mrf.mxu0
    %766 = vdwg.mxu0
    %v767 = vtanh.pop %v761
    %v768 = vtanh.pop %v764
    %v769 = vsub.f32 1.0, %v642
    %v770 = vsub.f32 1.0, %v644
    %v771 = vmul.f32 %v769, %v489
    %v772 = vmul.f32 %v770, %v490
    %v773 = vmul.f32 %v642, %v767
    %v774 = vmul.f32 %v644, %v768
    %v775 = vadd.f32 %v771, %v773
    %v776 = vadd.f32 %v772, %v774
    %777 = vst [vmem:[#allocation3] sm:$0xff] %v775
    %778 = vst [vmem:[#allocation3 + $0x8] sm:$0xff] %v776
    %v779 = vpack.c.bf16 %v776, %v775
    %v780 = vld [vmem:[%s11] sm:$0xff]
    %v781 = vld [vmem:[%s11 + $0x8] sm:$0xff]
    %v782 = vld [vmem:[%s11 + $0x10] sm:$0xff]
    %v783 = vld [vmem:[%s11 + $0x18] sm:$0xff]
    %v784 = vld [vmem:[%s11 + $0x20] sm:$0xff]
    %v785 = vld [vmem:[%s11 + $0x28] sm:$0xff]
    %v786 = vld [vmem:[%s11 + $0x30] sm:$0xff]
    %v787 = vld [vmem:[%s11 + $0x38] sm:$0xff]
    %v788 = vld [vmem:[%s11 + $0x40] sm:$0xff]
    %v789 = vld [vmem:[%s11 + $0x48] sm:$0xff]
    %v790 = vld [vmem:[%s11 + $0x50] sm:$0xff]
    %v791 = vld [vmem:[%s11 + $0x58] sm:$0xff]
    %v792 = vld [vmem:[%s11 + $0x60] sm:$0xff]
    %v793 = vld [vmem:[%s11 + $0x68] sm:$0xff]
    %v794 = vld [vmem:[%s11 + $0x70] sm:$0xff]
    %v795 = vld [vmem:[%s11 + $0x78] sm:$0xff]
    %v796 = vld [vmem:[%s12] sm:$0x3]
    %v798 = vlaneseq
    %v799 = vshrl.u32 %v798, 7
    %v800 = vsub.s32 0, %v799
    %v801 = vrot.slane %v796, %v800
    %v802 = vlaneseq
    %v803 = vshrl.u32 %v802, 7
    %v804 = vsub.s32 1, %v803
    %v805 = vrot.slane %v796, %v804
    %v824 = vunpack.c.l.b16 %v780
    %v825 = vunpack.c.h.b16 %v780
    %v826 = vunpack.c.l.b16 %v781
    %v827 = vunpack.c.h.b16 %v781
    %v828 = vunpack.c.l.b16 %v782
    %v829 = vunpack.c.h.b16 %v782
    %v830 = vunpack.c.l.b16 %v783
    %v831 = vunpack.c.h.b16 %v783
    %v832 = vunpack.c.l.b16 %v784
    %v833 = vunpack.c.h.b16 %v784
    %v834 = vunpack.c.l.b16 %v785
    %v835 = vunpack.c.h.b16 %v785
    %v836 = vunpack.c.l.b16 %v786
    %v837 = vunpack.c.h.b16 %v786
    %v838 = vunpack.c.l.b16 %v787
    %v839 = vunpack.c.h.b16 %v787
    %v840 = vunpack.c.l.b16 %v788
    %v841 = vunpack.c.h.b16 %v788
    %v842 = vunpack.c.l.b16 %v789
    %v843 = vunpack.c.h.b16 %v789
    %v844 = vunpack.c.l.b16 %v790
    %v845 = vunpack.c.h.b16 %v790
    %v846 = vunpack.c.l.b16 %v791
    %v847 = vunpack.c.h.b16 %v791
    %v848 = vunpack.c.l.b16 %v792
    %v849 = vunpack.c.h.b16 %v792
    %v850 = vunpack.c.l.b16 %v793
    %v851 = vunpack.c.h.b16 %v793
    %v852 = vunpack.c.l.b16 %v794
    %v853 = vunpack.c.h.b16 %v794
    %v854 = vunpack.c.l.b16 %v795
    %v855 = vunpack.c.h.b16 %v795
    %v856 = vpack.c.b16 %v826, %v824
    %v857 = vpack.c.b16 %v827, %v825
    %v858 = vpack.c.b16 %v830, %v828
    %v859 = vpack.c.b16 %v831, %v829
    %v860 = vpack.c.b16 %v834, %v832
    %v861 = vpack.c.b16 %v835, %v833
    %v862 = vpack.c.b16 %v838, %v836
    %v863 = vpack.c.b16 %v839, %v837
    %v864 = vpack.c.b16 %v842, %v840
    %v865 = vpack.c.b16 %v843, %v841
    %v866 = vpack.c.b16 %v846, %v844
    %v867 = vpack.c.b16 %v847, %v845
    %v868 = vpack.c.b16 %v850, %v848
    %v869 = vpack.c.b16 %v851, %v849
    %v870 = vpack.c.b16 %v854, %v852
    %v871 = vpack.c.b16 %v855, %v853
    %888 = vmatprep.subr.bf16.mxu0 %v871
    %889 = vmatpush1.bf16.msra.mxu0 %v870
    %890 = vmatprep.subr.bf16.mxu0 %v869
    %891 = vmatpush1.bf16.msra.mxu0 %v868
    %892 = vmatprep.subr.bf16.mxu0 %v867
    %893 = vmatpush1.bf16.msra.mxu0 %v866
    %894 = vmatprep.subr.bf16.mxu0 %v865
    %895 = vmatpush1.bf16.msra.mxu0 %v864
    %896 = vmatprep.subr.bf16.mxu0 %v863
    %897 = vmatpush1.bf16.msra.mxu0 %v862
    %898 = vmatprep.subr.bf16.mxu0 %v861
    %899 = vmatpush1.bf16.msra.mxu0 %v860
    %900 = vmatprep.subr.bf16.mxu0 %v859
    %901 = vmatpush1.bf16.msra.mxu0 %v858
    %902 = vmatprep.subr.bf16.mxu0 %v857
    %903 = vmatpush1.bf16.msra.mxu0 %v856
    %904 = vmatprep.subr.bf16.mxu0 0
    %905 = vmatpush2.bf16.msra.mxu0 0
    %906 = vmatprep.subr.bf16.mxu0 0
    %907 = vmatpush2.bf16.msra.mxu0 0
    %908 = vmatprep.subr.bf16.mxu0 0
    %909 = vmatpush2.bf16.msra.mxu0 0
    %910 = vmatprep.subr.bf16.mxu0 0
    %911 = vmatpush2.bf16.msra.mxu0 0
    %912 = vmatprep.subr.bf16.mxu0 0
    %913 = vmatpush2.bf16.msra.mxu0 0
    %914 = vmatprep.subr.bf16.mxu0 0
    %915 = vmatpush2.bf16.msra.mxu0 0
    %916 = vmatprep.subr.bf16.mxu0 0
    %917 = vmatpush2.bf16.msra.mxu0 0
    %918 = vmatprep.subr.bf16.mxu0 0
    %919 = vmatpush2.bf16.msra.mxu0 0
    %920 = vmatprep.mubr.bf16.mxu0 0
    %921 = vmatmul.mubr.bf16.gmra.mxu0 %v779
    %v922 = vpop.f32.mrf.mxu0
    %v923 = vadd.f32 %v801, %v922
    %v924 = vpop.f32.mrf.mxu0
    %v925 = vadd.f32 %v805, %v924
    %v926 = vpop.f32.mrf.mxu0
    %v927 = vadd.f32 %v801, %v926
    %v928 = vpop.f32.mrf.mxu0
    %v929 = vadd.f32 %v805, %v928
    %930 = vdwg.mxu0
    %v931 = vmax.f32 %v923, 0.0
    %v932 = vmax.f32 %v925, 0.0
    %v933 = vmax.f32 %v927, 0.0
    %v934 = vmax.f32 %v929, 0.0
    %v935 = vpack.c.bf16 %v933, %v931
    %v936 = vld [vmem:[%s13] sm:$0xf]
    %v937 = vld [vmem:[%s13 + $0x4] sm:$0xf]
    %v938 = vld [vmem:[%s13 + $0x8] sm:$0xf]
    %v939 = vld [vmem:[%s13 + $0xc] sm:$0xf]
    %v940 = vld [vmem:[%s13 + $0x10] sm:$0xf]
    %v941 = vld [vmem:[%s13 + $0x14] sm:$0xf]
    %v942 = vld [vmem:[%s13 + $0x18] sm:$0xf]
    %v943 = vld [vmem:[%s13 + $0x1c] sm:$0xf]
    %v944 = vld [vmem:[%s13 + $0x20] sm:$0xf]
    %v945 = vld [vmem:[%s13 + $0x24] sm:$0xf]
    %v946 = vld [vmem:[%s13 + $0x28] sm:$0xf]
    %v947 = vld [vmem:[%s13 + $0x2c] sm:$0xf]
    %v948 = vld [vmem:[%s13 + $0x30] sm:$0xf]
    %v949 = vld [vmem:[%s13 + $0x34] sm:$0xf]
    %v950 = vld [vmem:[%s13 + $0x38] sm:$0xf]
    %v951 = vld [vmem:[%s13 + $0x3c] sm:$0xf]
    %v952 = vld [vmem:[#allocation2] sm:$0x1]
    %v954 = vlaneseq
    %v955 = vshrl.u32 %v954, 7
    %v956 = vsub.s32 0, %v955
    %v957 = vrot.slane %v952, %v956
    %v975 = vunpack.c.l.b16 %v936
    %v976 = vunpack.c.l.b16 %v937
    %v977 = vunpack.c.l.b16 %v938
    %v978 = vunpack.c.l.b16 %v939
    %v979 = vunpack.c.l.b16 %v940
    %v980 = vunpack.c.l.b16 %v941
    %v981 = vunpack.c.l.b16 %v942
    %v982 = vunpack.c.l.b16 %v943
    %v983 = vunpack.c.l.b16 %v944
    %v984 = vunpack.c.l.b16 %v945
    %v985 = vunpack.c.l.b16 %v946
    %v986 = vunpack.c.l.b16 %v947
    %v987 = vunpack.c.l.b16 %v948
    %v988 = vunpack.c.l.b16 %v949
    %v989 = vunpack.c.l.b16 %v950
    %v990 = vunpack.c.l.b16 %v951
    %v991 = vpack.c.b16 %v976, %v975
    %v992 = vpack.c.b16 %v978, %v977
    %v993 = vpack.c.b16 %v980, %v979
    %v994 = vpack.c.b16 %v982, %v981
    %v995 = vpack.c.b16 %v984, %v983
    %v996 = vpack.c.b16 %v986, %v985
    %v997 = vpack.c.b16 %v988, %v987
    %v998 = vpack.c.b16 %v990, %v989
    %1007 = vmatprep.subr.bf16.mxu0 0
    %1008 = vmatpush1.bf16.msra.mxu0 %v998
    %1009 = vmatprep.subr.bf16.mxu0 0
    %1010 = vmatpush1.bf16.msra.mxu0 %v997
    %1011 = vmatprep.subr.bf16.mxu0 0
    %1012 = vmatpush1.bf16.msra.mxu0 %v996
    %1013 = vmatprep.subr.bf16.mxu0 0
    %1014 = vmatpush1.bf16.msra.mxu0 %v995
    %1015 = vmatprep.subr.bf16.mxu0 0
    %1016 = vmatpush1.bf16.msra.mxu0 %v994
    %1017 = vmatprep.subr.bf16.mxu0 0
    %1018 = vmatpush1.bf16.msra.mxu0 %v993
    %1019 = vmatprep.subr.bf16.mxu0 0
    %1020 = vmatpush1.bf16.msra.mxu0 %v992
    %1021 = vmatprep.subr.bf16.mxu0 0
    %1022 = vmatpush1.bf16.msra.mxu0 %v991
    %1023 = vmatprep.subr.bf16.mxu0 0
    %1024 = vmatpush2.bf16.msra.mxu0 0
    %1025 = vmatprep.subr.bf16.mxu0 0
    %1026 = vmatpush2.bf16.msra.mxu0 0
    %1027 = vmatprep.subr.bf16.mxu0 0
    %1028 = vmatpush2.bf16.msra.mxu0 0
    %1029 = vmatprep.subr.bf16.mxu0 0
    %1030 = vmatpush2.bf16.msra.mxu0 0
    %1031 = vmatprep.subr.bf16.mxu0 0
    %1032 = vmatpush2.bf16.msra.mxu0 0
    %1033 = vmatprep.subr.bf16.mxu0 0
    %1034 = vmatpush2.bf16.msra.mxu0 0
    %1035 = vmatprep.subr.bf16.mxu0 0
    %1036 = vmatpush2.bf16.msra.mxu0 0
    %1037 = vmatprep.subr.bf16.mxu0 0
    %1038 = vmatpush2.bf16.msra.mxu0 0
    %1039 = vmatprep.mubr.bf16.mxu0 0
    %1040 = vmatmul.mubr.bf16.gmra.mxu0 %v935
    %v1041 = vpop.f32.mrf.mxu0
    %v1042 = vadd.f32 %v957, %v1041
    %v1043 = vpop.f32.mrf.mxu0
    %v1044 = vpop.f32.mrf.mxu0
    %v1045 = vadd.f32 %v957, %v1044
    %v1046 = vpop.f32.mrf.mxu0
    %1047 = vdwg.mxu0
    %v1048 = vld [vmem:[%s3] sm:$0xff]
    %v1049 = vld [vmem:[%s3 + $0x8] sm:$0xff]
    %v1050 = vadd.f32 %v1048, %v1042
    %v1051 = vadd.f32 %v1049, %v1045
    %v1052 = vmax.f32 %v1050, 0.001
    %v1053 = vmax.f32 %v1051, 0.001
    %v1054 = vmin.f32 %v1052, 1.0
    %v1055 = vmin.f32 %v1053, 1.0
    %vm1056 = vcmask 7168
    %1057 = vst.msk [vmem:[%s18] sm:$0xff] %vm1056, %v1054
    %1058 = vst.msk [vmem:[%s18 + $0x8] sm:$0xff] %vm1056, %v1055
    %v1059 = vpack.c.bf16 %v934, %v932
    %v1060 = vld [vmem:[%s15] sm:$0xff]
    %v1061 = vld [vmem:[%s15 + $0x8] sm:$0xff]
    %v1062 = vld [vmem:[%s15 + $0x10] sm:$0xf]
    %v1063 = vld [vmem:[%s15 + $0x14] sm:$0xff]
    %v1064 = vld [vmem:[%s15 + $0x1c] sm:$0xff]
    %v1065 = vld [vmem:[%s15 + $0x24] sm:$0xf]
    %v1066 = vld [vmem:[%s15 + $0x28] sm:$0xff]
    %v1067 = vld [vmem:[%s15 + $0x30] sm:$0xff]
    %v1068 = vld [vmem:[%s15 + $0x38] sm:$0xf]
    %v1069 = vld [vmem:[%s15 + $0x3c] sm:$0xff]
    %v1070 = vld [vmem:[%s15 + $0x44] sm:$0xff]
    %v1071 = vld [vmem:[%s15 + $0x4c] sm:$0xf]
    %v1072 = vld [vmem:[%s15 + $0x50] sm:$0xff]
    %v1073 = vld [vmem:[%s15 + $0x58] sm:$0xff]
    %v1074 = vld [vmem:[%s15 + $0x60] sm:$0xf]
    %v1075 = vld [vmem:[%s15 + $0x64] sm:$0xff]
    %v1076 = vld [vmem:[%s15 + $0x6c] sm:$0xff]
    %v1077 = vld [vmem:[%s15 + $0x74] sm:$0xf]
    %v1078 = vld [vmem:[%s15 + $0x78] sm:$0xff]
    %v1079 = vld [vmem:[%s15 + $0x80] sm:$0xff]
    %v1080 = vld [vmem:[%s15 + $0x88] sm:$0xf]
    %v1081 = vld [vmem:[%s15 + $0x8c] sm:$0xff]
    %v1082 = vld [vmem:[%s15 + $0x94] sm:$0xff]
    %v1083 = vld [vmem:[%s15 + $0x9c] sm:$0xf]
    %v1084 = vld [vmem:[%s15 + $0xa0] sm:$0xff]
    %v1085 = vld [vmem:[%s15 + $0xa8] sm:$0xff]
    %v1086 = vld [vmem:[%s15 + $0xb0] sm:$0xf]
    %v1087 = vld [vmem:[%s15 + $0xb4] sm:$0xff]
    %v1088 = vld [vmem:[%s15 + $0xbc] sm:$0xff]
    %v1089 = vld [vmem:[%s15 + $0xc4] sm:$0xf]
    %v1090 = vld [vmem:[%s15 + $0xc8] sm:$0xff]
    %v1091 = vld [vmem:[%s15 + $0xd0] sm:$0xff]
    %v1092 = vld [vmem:[%s15 + $0xd8] sm:$0xf]
    %v1093 = vld [vmem:[%s15 + $0xdc] sm:$0xff]
    %v1094 = vld [vmem:[%s15 + $0xe4] sm:$0xff]
    %v1095 = vld [vmem:[%s15 + $0xec] sm:$0xf]
    %v1096 = vld [vmem:[%s15 + $0xf0] sm:$0xff]
    %v1097 = vld [vmem:[%s15 + $0xf8] sm:$0xff]
    %v1098 = vld [vmem:[%s15 + $0x100] sm:$0xf]
    %v1099 = vld [vmem:[%s15 + $0x104] sm:$0xff]
    %v1100 = vld [vmem:[%s15 + $0x10c] sm:$0xff]
    %v1101 = vld [vmem:[%s15 + $0x114] sm:$0xf]
    %v1102 = vld [vmem:[%s15 + $0x118] sm:$0xff]
    %v1103 = vld [vmem:[%s15 + $0x120] sm:$0xff]
    %v1104 = vld [vmem:[%s15 + $0x128] sm:$0xf]
    %v1105 = vld [vmem:[%s15 + $0x12c] sm:$0xff]
    %v1106 = vld [vmem:[%s15 + $0x134] sm:$0xff]
    %v1107 = vld [vmem:[%s15 + $0x13c] sm:$0xf]
    %v1108 = vld [vmem:[%s16] sm:$0x1f]
    %v1110 = vlaneseq
    %v1111 = vshrl.u32 %v1110, 7
    %v1112 = vsub.s32 0, %v1111
    %v1113 = vrot.slane %v1108, %v1112
    %v1114 = vlaneseq
    %v1115 = vshrl.u32 %v1114, 7
    %v1116 = vsub.s32 1, %v1115
    %v1117 = vrot.slane %v1108, %v1116
    %v1118 = vlaneseq
    %v1119 = vshrl.u32 %v1118, 7
    %v1120 = vsub.s32 2, %v1119
    %v1121 = vrot.slane %v1108, %v1120
    %v1122 = vlaneseq
    %v1123 = vshrl.u32 %v1122, 7
    %v1124 = vsub.s32 3, %v1123
    %v1125 = vrot.slane %v1108, %v1124
    %v1126 = vlaneseq
    %v1127 = vshrl.u32 %v1126, 7
    %v1128 = vsub.s32 4, %v1127
    %v1129 = vrot.slane %v1108, %v1128
    %v1183 = vunpack.c.l.b16 %v1060
    %v1184 = vunpack.c.h.b16 %v1060
    %v1185 = vunpack.c.l.b16 %v1061
    %v1186 = vunpack.c.h.b16 %v1061
    %v1187 = vunpack.c.l.b16 %v1062
    %v1188 = vunpack.c.l.b16 %v1063
    %v1189 = vunpack.c.h.b16 %v1063
    %v1190 = vunpack.c.l.b16 %v1064
    %v1191 = vunpack.c.h.b16 %v1064
    %v1192 = vunpack.c.l.b16 %v1065
    %v1193 = vunpack.c.l.b16 %v1066
    %v1194 = vunpack.c.h.b16 %v1066
    %v1195 = vunpack.c.l.b16 %v1067
    %v1196 = vunpack.c.h.b16 %v1067
    %v1197 = vunpack.c.l.b16 %v1068
    %v1198 = vunpack.c.l.b16 %v1069
    %v1199 = vunpack.c.h.b16 %v1069
    %v1200 = vunpack.c.l.b16 %v1070
    %v1201 = vunpack.c.h.b16 %v1070
    %v1202 = vunpack.c.l.b16 %v1071
    %v1203 = vunpack.c.l.b16 %v1072
    %v1204 = vunpack.c.h.b16 %v1072
    %v1205 = vunpack.c.l.b16 %v1073
    %v1206 = vunpack.c.h.b16 %v1073
    %v1207 = vunpack.c.l.b16 %v1074
    %v1208 = vunpack.c.l.b16 %v1075
    %v1209 = vunpack.c.h.b16 %v1075
    %v1210 = vunpack.c.l.b16 %v1076
    %v1211 = vunpack.c.h.b16 %v1076
    %v1212 = vunpack.c.l.b16 %v1077
    %v1213 = vunpack.c.l.b16 %v1078
    %v1214 = vunpack.c.h.b16 %v1078
    %v1215 = vunpack.c.l.b16 %v1079
    %v1216 = vunpack.c.h.b16 %v1079
    %v1217 = vunpack.c.l.b16 %v1080
    %v1218 = vunpack.c.l.b16 %v1081
    %v1219 = vunpack.c.h.b16 %v1081
    %v1220 = vunpack.c.l.b16 %v1082
    %v1221 = vunpack.c.h.b16 %v1082
    %v1222 = vunpack.c.l.b16 %v1083
    %v1223 = vunpack.c.l.b16 %v1084
    %v1224 = vunpack.c.h.b16 %v1084
    %v1225 = vunpack.c.l.b16 %v1085
    %v1226 = vunpack.c.h.b16 %v1085
    %v1227 = vunpack.c.l.b16 %v1086
    %v1228 = vunpack.c.l.b16 %v1087
    %v1229 = vunpack.c.h.b16 %v1087
    %v1230 = vunpack.c.l.b16 %v1088
    %v1231 = vunpack.c.h.b16 %v1088
    %v1232 = vunpack.c.l.b16 %v1089
    %v1233 = vunpack.c.l.b16 %v1090
    %v1234 = vunpack.c.h.b16 %v1090
    %v1235 = vunpack.c.l.b16 %v1091
    %v1236 = vunpack.c.h.b16 %v1091
    %v1237 = vunpack.c.l.b16 %v1092
    %v1238 = vunpack.c.l.b16 %v1093
    %v1239 = vunpack.c.h.b16 %v1093
    %v1240 = vunpack.c.l.b16 %v1094
    %v1241 = vunpack.c.h.b16 %v1094
    %v1242 = vunpack.c.l.b16 %v1095
    %v1243 = vunpack.c.l.b16 %v1096
    %v1244 = vunpack.c.h.b16 %v1096
    %v1245 = vunpack.c.l.b16 %v1097
    %v1246 = vunpack.c.h.b16 %v1097
    %v1247 = vunpack.c.l.b16 %v1098
    %v1248 = vunpack.c.l.b16 %v1099
    %v1249 = vunpack.c.h.b16 %v1099
    %v1250 = vunpack.c.l.b16 %v1100
    %v1251 = vunpack.c.h.b16 %v1100
    %v1252 = vunpack.c.l.b16 %v1101
    %v1253 = vunpack.c.l.b16 %v1102
    %v1254 = vunpack.c.h.b16 %v1102
    %v1255 = vunpack.c.l.b16 %v1103
    %v1256 = vunpack.c.h.b16 %v1103
    %v1257 = vunpack.c.l.b16 %v1104
    %v1258 = vunpack.c.l.b16 %v1105
    %v1259 = vunpack.c.h.b16 %v1105
    %v1260 = vunpack.c.l.b16 %v1106
    %v1261 = vunpack.c.h.b16 %v1106
    %v1262 = vunpack.c.l.b16 %v1107
    %v1263 = vpack.c.b16 %v1188, %v1183
    %v1264 = vpack.c.b16 %v1189, %v1184
    %v1265 = vpack.c.b16 %v1190, %v1185
    %v1266 = vpack.c.b16 %v1191, %v1186
    %v1267 = vpack.c.b16 %v1192, %v1187
    %v1268 = vpack.c.b16 %v1198, %v1193
    %v1269 = vpack.c.b16 %v1199, %v1194
    %v1270 = vpack.c.b16 %v1200, %v1195
    %v1271 = vpack.c.b16 %v1201, %v1196
    %v1272 = vpack.c.b16 %v1202, %v1197
    %v1273 = vpack.c.b16 %v1208, %v1203
    %v1274 = vpack.c.b16 %v1209, %v1204
    %v1275 = vpack.c.b16 %v1210, %v1205
    %v1276 = vpack.c.b16 %v1211, %v1206
    %v1277 = vpack.c.b16 %v1212, %v1207
    %v1278 = vpack.c.b16 %v1218, %v1213
    %v1279 = vpack.c.b16 %v1219, %v1214
    %v1280 = vpack.c.b16 %v1220, %v1215
    %v1281 = vpack.c.b16 %v1221, %v1216
    %v1282 = vpack.c.b16 %v1222, %v1217
    %v1283 = vpack.c.b16 %v1228, %v1223
    %v1284 = vpack.c.b16 %v1229, %v1224
    %v1285 = vpack.c.b16 %v1230, %v1225
    %v1286 = vpack.c.b16 %v1231, %v1226
    %v1287 = vpack.c.b16 %v1232, %v1227
    %v1288 = vpack.c.b16 %v1238, %v1233
    %v1289 = vpack.c.b16 %v1239, %v1234
    %v1290 = vpack.c.b16 %v1240, %v1235
    %v1291 = vpack.c.b16 %v1241, %v1236
    %v1292 = vpack.c.b16 %v1242, %v1237
    %v1293 = vpack.c.b16 %v1248, %v1243
    %v1294 = vpack.c.b16 %v1249, %v1244
    %v1295 = vpack.c.b16 %v1250, %v1245
    %v1296 = vpack.c.b16 %v1251, %v1246
    %v1297 = vpack.c.b16 %v1252, %v1247
    %v1298 = vpack.c.b16 %v1258, %v1253
    %v1299 = vpack.c.b16 %v1259, %v1254
    %v1300 = vpack.c.b16 %v1260, %v1255
    %v1301 = vpack.c.b16 %v1261, %v1256
    %v1302 = vpack.c.b16 %v1262, %v1257
    %1343 = vmatprep.subr.bf16.mxu0 %v1299
    %1344 = vmatpush1.bf16.msra.mxu0 %v1298
    %1345 = vmatprep.subr.bf16.mxu0 %v1294
    %1346 = vmatpush1.bf16.msra.mxu0 %v1293
    %1347 = vmatprep.subr.bf16.mxu0 %v1289
    %1348 = vmatpush1.bf16.msra.mxu0 %v1288
    %1349 = vmatprep.subr.bf16.mxu0 %v1284
    %1350 = vmatpush1.bf16.msra.mxu0 %v1283
    %1351 = vmatprep.subr.bf16.mxu0 %v1279
    %1352 = vmatpush1.bf16.msra.mxu0 %v1278
    %1353 = vmatprep.subr.bf16.mxu0 %v1274
    %1354 = vmatpush1.bf16.msra.mxu0 %v1273
    %1355 = vmatprep.subr.bf16.mxu0 %v1269
    %1356 = vmatpush1.bf16.msra.mxu0 %v1268
    %1357 = vmatprep.subr.bf16.mxu0 %v1264
    %1358 = vmatpush1.bf16.msra.mxu0 %v1263
    %1359 = vmatprep.subr.bf16.mxu0 0
    %1360 = vmatpush2.bf16.msra.mxu0 0
    %1361 = vmatprep.subr.bf16.mxu0 0
    %1362 = vmatpush2.bf16.msra.mxu0 0
    %1363 = vmatprep.subr.bf16.mxu0 0
    %1364 = vmatpush2.bf16.msra.mxu0 0
    %1365 = vmatprep.subr.bf16.mxu0 0
    %1366 = vmatpush2.bf16.msra.mxu0 0
    %1367 = vmatprep.subr.bf16.mxu0 0
    %1368 = vmatpush2.bf16.msra.mxu0 0
    %1369 = vmatprep.subr.bf16.mxu0 0
    %1370 = vmatpush2.bf16.msra.mxu0 0
    %1371 = vmatprep.subr.bf16.mxu0 0
    %1372 = vmatpush2.bf16.msra.mxu0 0
    %1373 = vmatprep.subr.bf16.mxu0 0
    %1374 = vmatpush2.bf16.msra.mxu0 0
    %1375 = vmatprep.mubr.bf16.mxu0 0
    %1376 = vmatmul.mubr.bf16.gmra.mxu0 %v1059
    %v1377 = vpop.f32.mrf.mxu0
    %v1378 = vadd.f32 %v1113, %v1377
    %v1379 = vpop.f32.mrf.mxu0
    %v1380 = vadd.f32 %v1117, %v1379
    %v1381 = vpop.f32.mrf.mxu0
    %v1382 = vadd.f32 %v1113, %v1381
    %v1383 = vpop.f32.mrf.mxu0
    %v1384 = vadd.f32 %v1117, %v1383
    %1385 = vdwg.mxu0
    %1386 = vmatprep.subr.bf16.mxu0 %v1301
    %1387 = vmatpush1.bf16.msra.mxu0 %v1300
    %1388 = vmatprep.subr.bf16.mxu0 %v1296
    %1389 = vmatpush1.bf16.msra.mxu0 %v1295
    %1390 = vmatprep.subr.bf16.mxu0 %v1291
    %1391 = vmatpush1.bf16.msra.mxu0 %v1290
    %1392 = vmatprep.subr.bf16.mxu0 %v1286
    %1393 = vmatpush1.bf16.msra.mxu0 %v1285
    %1394 = vmatprep.subr.bf16.mxu0 %v1281
    %1395 = vmatpush1.bf16.msra.mxu0 %v1280
    %1396 = vmatprep.subr.bf16.mxu0 %v1276
    %1397 = vmatpush1.bf16.msra.mxu0 %v1275
    %1398 = vmatprep.subr.bf16.mxu0 %v1271
    %1399 = vmatpush1.bf16.msra.mxu0 %v1270
    %1400 = vmatprep.subr.bf16.mxu0 %v1266
    %1401 = vmatpush1.bf16.msra.mxu0 %v1265
    %1402 = vmatprep.subr.bf16.mxu0 0
    %1403 = vmatpush2.bf16.msra.mxu0 0
    %1404 = vmatprep.subr.bf16.mxu0 0
    %1405 = vmatpush2.bf16.msra.mxu0 0
    %1406 = vmatprep.subr.bf16.mxu0 0
    %1407 = vmatpush2.bf16.msra.mxu0 0
    %1408 = vmatprep.subr.bf16.mxu0 0
    %1409 = vmatpush2.bf16.msra.mxu0 0
    %1410 = vmatprep.subr.bf16.mxu0 0
    %1411 = vmatpush2.bf16.msra.mxu0 0
    %1412 = vmatprep.subr.bf16.mxu0 0
    %1413 = vmatpush2.bf16.msra.mxu0 0
    %1414 = vmatprep.subr.bf16.mxu0 0
    %1415 = vmatpush2.bf16.msra.mxu0 0
    %1416 = vmatprep.subr.bf16.mxu0 0
    %1417 = vmatpush2.bf16.msra.mxu0 0
    %1418 = vmatprep.mubr.bf16.mxu0 0
    %1419 = vmatmul.mubr.bf16.gmra.mxu0 %v1059
    %v1420 = vpop.f32.mrf.mxu0
    %v1421 = vadd.f32 %v1121, %v1420
    %v1422 = vpop.f32.mrf.mxu0
    %v1423 = vadd.f32 %v1125, %v1422
    %v1424 = vpop.f32.mrf.mxu0
    %v1425 = vadd.f32 %v1121, %v1424
    %v1426 = vpop.f32.mrf.mxu0
    %v1427 = vadd.f32 %v1125, %v1426
    %1428 = vdwg.mxu0
    %1429 = vmatprep.subr.bf16.mxu0 0
    %1430 = vmatpush1.bf16.msra.mxu0 %v1302
    %1431 = vmatprep.subr.bf16.mxu0 0
    %1432 = vmatpush1.bf16.msra.mxu0 %v1297
    %1433 = vmatprep.subr.bf16.mxu0 0
    %1434 = vmatpush1.bf16.msra.mxu0 %v1292
    %1435 = vmatprep.subr.bf16.mxu0 0
    %1436 = vmatpush1.bf16.msra.mxu0 %v1287
    %1437 = vmatprep.subr.bf16.mxu0 0
    %1438 = vmatpush1.bf16.msra.mxu0 %v1282
    %1439 = vmatprep.subr.bf16.mxu0 0
    %1440 = vmatpush1.bf16.msra.mxu0 %v1277
    %1441 = vmatprep.subr.bf16.mxu0 0
    %1442 = vmatpush1.bf16.msra.mxu0 %v1272
    %1443 = vmatprep.subr.bf16.mxu0 0
    %1444 = vmatpush1.bf16.msra.mxu0 %v1267
    %1445 = vmatprep.subr.bf16.mxu0 0
    %1446 = vmatpush2.bf16.msra.mxu0 0
    %1447 = vmatprep.subr.bf16.mxu0 0
    %1448 = vmatpush2.bf16.msra.mxu0 0
    %1449 = vmatprep.subr.bf16.mxu0 0
    %1450 = vmatpush2.bf16.msra.mxu0 0
    %1451 = vmatprep.subr.bf16.mxu0 0
    %1452 = vmatpush2.bf16.msra.mxu0 0
    %1453 = vmatprep.subr.bf16.mxu0 0
    %1454 = vmatpush2.bf16.msra.mxu0 0
    %1455 = vmatprep.subr.bf16.mxu0 0
    %1456 = vmatpush2.bf16.msra.mxu0 0
    %1457 = vmatprep.subr.bf16.mxu0 0
    %1458 = vmatpush2.bf16.msra.mxu0 0
    %1459 = vmatprep.subr.bf16.mxu0 0
    %1460 = vmatpush2.bf16.msra.mxu0 0
    %1461 = vmatprep.mubr.bf16.mxu0 0
    %1462 = vmatmul.mubr.bf16.gmra.mxu0 %v1059
    %v1463 = vpop.f32.mrf.mxu0
    %v1464 = vadd.f32 %v1129, %v1463
    %v1465 = vpop.f32.mrf.mxu0
    %v1466 = vpop.f32.mrf.mxu0
    %v1467 = vadd.f32 %v1129, %v1466
    %v1468 = vpop.f32.mrf.mxu0
    %1469 = vdwg.mxu0
    %v1470 = vmul.f32 %v1378, 0.25
    %v1471 = vmul.f32 %v1380, 0.25
    %v1472 = vmul.f32 %v1421, 0.25
    %v1473 = vmul.f32 %v1423, 0.25
    %v1474 = vmul.f32 %v1464, 0.25
    %v1475 = vmul.f32 %v1382, 0.25
    %v1476 = vmul.f32 %v1384, 0.25
    %v1477 = vmul.f32 %v1425, 0.25
    %v1478 = vmul.f32 %v1427, 0.25
    %v1479 = vmul.f32 %v1467, 0.25
    %1480 = vst [vmem:[%s19] sm:$0xff] %v1470
    %1481 = vst [vmem:[%s19 + $0x8] sm:$0xff] %v1471
    %1482 = vst [vmem:[%s19 + $0x10] sm:$0xff] %v1472
    %1483 = vst [vmem:[%s19 + $0x18] sm:$0xff] %v1473
    %vm1484 = vcmask 523264
    %1485 = vst.msk [vmem:[%s19 + $0x20] sm:$0xff] %vm1484, %v1474
    %1486 = vst [vmem:[%s19 + $0x28] sm:$0xff] %v1475
    %1487 = vst [vmem:[%s19 + $0x30] sm:$0xff] %v1476
    %1488 = vst [vmem:[%s19 + $0x38] sm:$0xff] %v1477
    %1489 = vst [vmem:[%s19 + $0x40] sm:$0xff] %v1478
    %1490 = vst.msk [vmem:[%s19 + $0x48] sm:$0xff] %vm1484, %v1479
    // Predicated region
    $region70: #{forward.58} parent=1 // pred_check
      _
    $region71: #{forward.58} parent=1 // pred_check_branch
      %1492 = sbr.rel (0) target = $region73
    $region72: #{forward.58} parent=1 // pred_region
      %s1494 = ssub.s32 256, 256
      %1495 = vsyncadd [#allocation4], %s1494
      %s1496 = sshll.u32 [#allocation3], 4
      %s1497 = int_to_ptr.vmem [resolvable:$true] %s1496
      %1502 = dma.vmem_to_hbm [thread:$0]  %s1497, 256, %s17, [#allocation4], 128, 128, 8
    $region73: #{forward.58} parent=1 // pred_fallthru
      _
    // Predicated region
    $region74: #{forward.58} parent=1 // pred_check
      _
    $region75: #{forward.58} parent=1 // pred_check_branch
      %1504 = sbr.rel (0) target = $region77
    $region76: #{forward.58} parent=1 // pred_region
      _
    $region77: #{forward.58} parent=1 // pred_fallthru
      _
    // Predicated region
    $region78: #{forward.58} parent=1 // pred_check
      _
    $region79: #{forward.58} parent=1 // pred_check_branch
      %1506 = sbr.rel (0) target = $region81
    $region80: #{forward.58} parent=1 // pred_region
      _
    $region81: #{forward.58} parent=1 // pred_fallthru
      _
    // Predicated region
    $region82: #{forward.58} parent=1 // pred_check
      _
    $region83: #{forward.58} parent=1 // pred_check_branch
      %1508 = sbr.rel (0) target = $region85
    $region84: #{forward.58} parent=1 // pred_region
      %1509 = dma.done [#allocation4], 256
    $region85: #{forward.58} parent=1 // pred_fallthru
      _
    // Predicated region
    $region86: #{forward.58} parent=1 // pred_check
      _
    $region87: #{forward.58} parent=1 // pred_check_branch
      %1511 = sbr.rel (0) target = $region89
    $region88: #{forward.58} parent=1 // pred_region
      _
    $region89: #{forward.58} parent=1 // pred_fallthru
      _
    // Predicated region
    $region90: #{forward.58} parent=1 // pred_check
      _
    $region91: #{forward.58} parent=1 // pred_check_branch
      %1513 = sbr.rel (0) target = $region93
    $region92: #{forward.58} parent=1 // pred_region
      _
    $region93: #{forward.58} parent=1 // pred_fallthru
      _
    %1514 = vsyncpa [#allocation4], 1

// kernel: forward.62
$region0: #{forward.62}
  #allocation0 [shape = 'u32[]', space=smem, size = 0x4, offset = 0x4, fixed_abs, tag = 'smem constant byte address 0x4 - core index']
  #allocation1 [shape = 'u32[144,128]{1,0:T(1,128)}', space=vmem, size = 0x12000, scoped, tag = 'internal scratch']
  %s0 = inlined_call_operand.vmem [shape: f32[16,128], index: 0, kind: input, shape index: {}]
  %s1 = inlined_call_operand.vmem [shape: f32[2,16,128], index: 1, kind: input, shape index: {}]
  %s2 = inlined_call_operand.vmem [shape: f32[32,128], index: 2, kind: input, shape index: {}]
  %s3 = inlined_call_operand.vmem [shape: f32[2,6], index: 3, kind: input, shape index: {}]
  %s4 = inlined_call_operand.vmem [shape: f32[32,384], index: 4, kind: input, shape index: {}]
  %s5 = inlined_call_operand.vmem [shape: bf16[128,128], index: 5, kind: input, shape index: {}]
  %s6 = inlined_call_operand.vmem [shape: f32[1,128], index: 6, kind: input, shape index: {}]
  %s7 = inlined_call_operand.vmem [shape: bf16[128,256], index: 7, kind: input, shape index: {}]
  %s8 = inlined_call_operand.vmem [shape: bf16[128,384], index: 8, kind: input, shape index: {}]
  %s9 = inlined_call_operand.vmem [shape: bf16[6,384], index: 9, kind: input, shape index: {}]
  %s10 = inlined_call_operand.vmem [shape: bf16[128,128], index: 10, kind: input, shape index: {}]
  %s11 = inlined_call_operand.vmem [shape: bf16[128,128], index: 11, kind: input, shape index: {}]
  %s12 = inlined_call_operand.vmem [shape: f32[1,128], index: 12, kind: input, shape index: {}]
  %s13 = inlined_call_operand.vmem [shape: bf16[128,6], index: 13, kind: input, shape index: {}]
  %s14 = inlined_call_operand.vmem [shape: f32[1,6], index: 14, kind: input, shape index: {}]
  %s15 = inlined_call_operand.hbm [shape: f32[32,128], index: 15, kind: output, shape index: {0}]
  %s16 = inlined_call_operand.hbm [shape: f32[2,6], index: 16, kind: output, shape index: {1}]
  %17 = xla_tuple %s15, %s16
  %s18 = sld [smem:[#allocation0]]
  $region78: #{forward.62} parent=0
    _
  %s20 = ssub.s32 1, %s18
  %s21 = scalar_select 0, %s20, %s18
  $region1: #{forward.62} parent=0
    #allocation2 [shape = 'u8[16384]{0}', space=vmem, size = 0x4000, scoped, tag = 'output window, operand 0, single buffered']
    #allocation3 [shape = 's32[1]{0}', space=sflag, size = 0x4, scoped, tag = 'scoped memory for forward.62']
    #allocation4 [shape = 'u8[1024]{0}', space=vmem, size = 0x400, scoped, tag = 'output window, operand 1, single buffered']
    #allocation5 [shape = 's32[1]{0}', space=sflag, size = 0x4, scoped, tag = 'scoped memory for forward.62']
    %22 = vsyncpa [#allocation3], 0
    %23 = vsyncpa [#allocation5], 0
    // Predicated region
    $region2: #{forward.62} parent=1 // pred_check
      _
    $region3: #{forward.62} parent=1 // pred_check_branch
      %25 = sbr.rel (0) target = $region5
    $region4: #{forward.62} parent=1 // pred_region
      _
    $region5: #{forward.62} parent=1 // pred_fallthru
      _
    // Predicated region
    $region6: #{forward.62} parent=1 // pred_check
      _
    $region7: #{forward.62} parent=1 // pred_check_branch
      %27 = sbr.rel (0) target = $region9
    $region8: #{forward.62} parent=1 // pred_region
      _
    $region9: #{forward.62} parent=1 // pred_fallthru
      _
    // Predicated region
    $region10: #{forward.62} parent=1 // pred_check
      _
    $region11: #{forward.62} parent=1 // pred_check_branch
      %29 = sbr.rel (0) target = $region13
    $region12: #{forward.62} parent=1 // pred_region
      _
    $region13: #{forward.62} parent=1 // pred_fallthru
      _
    // Predicated region
    $region14: #{forward.62} parent=1 // pred_check
      _
    $region15: #{forward.62} parent=1 // pred_check_branch
      %31 = sbr.rel (0) target = $region17
    $region16: #{forward.62} parent=1 // pred_region
      _
    $region17: #{forward.62} parent=1 // pred_fallthru
      _
    // Predicated region
    $region18: #{forward.62} parent=1 // pred_check
      _
    $region19: #{forward.62} parent=1 // pred_check_branch
      %33 = sbr.rel (0) target = $region21
    $region20: #{forward.62} parent=1 // pred_region
      _
    $region21: #{forward.62} parent=1 // pred_fallthru
      _
    // Predicated region
    $region22: #{forward.62} parent=1 // pred_check
      _
    $region23: #{forward.62} parent=1 // pred_check_branch
      %35 = sbr.rel (0) target = $region25
    $region24: #{forward.62} parent=1 // pred_region
      _
    $region25: #{forward.62} parent=1 // pred_fallthru
      _
    // Predicated region
    $region26: #{forward.62} parent=1 // pred_check
      _
    $region27: #{forward.62} parent=1 // pred_check_branch
      %37 = sbr.rel (0) target = $region29
    $region28: #{forward.62} parent=1 // pred_region
      _
    $region29: #{forward.62} parent=1 // pred_fallthru
      _
    // Predicated region
    $region30: #{forward.62} parent=1 // pred_check
      _
    $region31: #{forward.62} parent=1 // pred_check_branch
      %39 = sbr.rel (0) target = $region33
    $region32: #{forward.62} parent=1 // pred_region
      _
    $region33: #{forward.62} parent=1 // pred_fallthru
      _
    // Predicated region
    $region34: #{forward.62} parent=1 // pred_check
      _
    $region35: #{forward.62} parent=1 // pred_check_branch
      %41 = sbr.rel (0) target = $region37
    $region36: #{forward.62} parent=1 // pred_region
      _
    $region37: #{forward.62} parent=1 // pred_fallthru
      _
    // Predicated region
    $region38: #{forward.62} parent=1 // pred_check
      _
    $region39: #{forward.62} parent=1 // pred_check_branch
      %43 = sbr.rel (0) target = $region41
    $region40: #{forward.62} parent=1 // pred_region
      _
    $region41: #{forward.62} parent=1 // pred_fallthru
      _
    // Predicated region
    $region42: #{forward.62} parent=1 // pred_check
      _
    $region43: #{forward.62} parent=1 // pred_check_branch
      %45 = sbr.rel (0) target = $region45
    $region44: #{forward.62} parent=1 // pred_region
      _
    $region45: #{forward.62} parent=1 // pred_fallthru
      _
    // Predicated region
    $region46: #{forward.62} parent=1 // pred_check
      _
    $region47: #{forward.62} parent=1 // pred_check_branch
      %47 = sbr.rel (0) target = $region49
    $region48: #{forward.62} parent=1 // pred_region
      _
    $region49: #{forward.62} parent=1 // pred_fallthru
      _
    // Predicated region
    $region50: #{forward.62} parent=1 // pred_check
      _
    $region51: #{forward.62} parent=1 // pred_check_branch
      %49 = sbr.rel (0) target = $region53
    $region52: #{forward.62} parent=1 // pred_region
      _
    $region53: #{forward.62} parent=1 // pred_fallthru
      _
    // Predicated region
    $region54: #{forward.62} parent=1 // pred_check
      _
    $region55: #{forward.62} parent=1 // pred_check_branch
      %51 = sbr.rel (0) target = $region57
    $region56: #{forward.62} parent=1 // pred_region
      _
    $region57: #{forward.62} parent=1 // pred_fallthru
      _
    // Predicated region
    $region58: #{forward.62} parent=1 // pred_check
      _
    $region59: #{forward.62} parent=1 // pred_check_branch
      %53 = sbr.rel (0) target = $region61
    $region60: #{forward.62} parent=1 // pred_region
      _
    $region61: #{forward.62} parent=1 // pred_fallthru
      _
    %v55 = vld [vmem:[%s0] sm:$0xff]
    %v56 = vld [vmem:[%s0 + $0x8] sm:$0xff]
    %v57 = vld [vmem:[%s1] sm:$0xff]
    %v58 = vld [vmem:[%s1 + $0x8] sm:$0xff]
    %v59 = vsub.f32 %v57, %v55
    %v60 = vsub.f32 %v58, %v56
    %v61 = vmul.f32 %v59, %v59
    %v62 = vmul.f32 %v60, %v60
    %s63 = scalar_lea.vmem %s1, 16
    %v64 = vld [vmem:[%s63] sm:$0xff]
    %v65 = vld [vmem:[%s63 + $0x8] sm:$0xff]
    %v66 = vsub.f32 %v64, %v55
    %v67 = vsub.f32 %v65, %v56
    %v68 = vmul.f32 %v66, %v66
    %v69 = vmul.f32 %v67, %v67
    %v70 = vpack.c.bf16 %v62, %v61
    %v71 = vpack.c.bf16 %v69, %v68
    %v72 = vld [vmem:[%s5] sm:$0xf]
    %v73 = vld [vmem:[%s5 + $0x4] sm:$0xf]
    %v74 = vld [vmem:[%s5 + $0x8] sm:$0xf]
    %v75 = vld [vmem:[%s5 + $0xc] sm:$0xf]
    %v76 = vld [vmem:[%s5 + $0x10] sm:$0xf]
    %v77 = vld [vmem:[%s5 + $0x14] sm:$0xf]
    %v78 = vld [vmem:[%s5 + $0x18] sm:$0xf]
    %v79 = vld [vmem:[%s5 + $0x1c] sm:$0xf]
    %v80 = vld [vmem:[%s5 + $0x20] sm:$0xf]
    %v81 = vld [vmem:[%s5 + $0x24] sm:$0xf]
    %v82 = vld [vmem:[%s5 + $0x28] sm:$0xf]
    %v83 = vld [vmem:[%s5 + $0x2c] sm:$0xf]
    %v84 = vld [vmem:[%s5 + $0x30] sm:$0xf]
    %v85 = vld [vmem:[%s5 + $0x34] sm:$0xf]
    %v86 = vld [vmem:[%s5 + $0x38] sm:$0xf]
    %v87 = vld [vmem:[%s5 + $0x3c] sm:$0xf]
    %v88 = vld [vmem:[%s6] sm:$0x1]
    %v90 = vlaneseq
    %v91 = vshrl.u32 %v90, 7
    %v92 = vsub.s32 0, %v91
    %v93 = vrot.slane %v88, %v92
    %v111 = vunpack.c.l.b16 %v72
    %v112 = vunpack.c.l.b16 %v73
    %v113 = vunpack.c.l.b16 %v74
    %v114 = vunpack.c.l.b16 %v75
    %v115 = vunpack.c.l.b16 %v76
    %v116 = vunpack.c.l.b16 %v77
    %v117 = vunpack.c.l.b16 %v78
    %v118 = vunpack.c.l.b16 %v79
    %v119 = vunpack.c.l.b16 %v80
    %v120 = vunpack.c.l.b16 %v81
    %v121 = vunpack.c.l.b16 %v82
    %v122 = vunpack.c.l.b16 %v83
    %v123 = vunpack.c.l.b16 %v84
    %v124 = vunpack.c.l.b16 %v85
    %v125 = vunpack.c.l.b16 %v86
    %v126 = vunpack.c.l.b16 %v87
    %v127 = vpack.c.b16 %v112, %v111
    %v128 = vpack.c.b16 %v114, %v113
    %v129 = vpack.c.b16 %v116, %v115
    %v130 = vpack.c.b16 %v118, %v117
    %v131 = vpack.c.b16 %v120, %v119
    %v132 = vpack.c.b16 %v122, %v121
    %v133 = vpack.c.b16 %v124, %v123
    %v134 = vpack.c.b16 %v126, %v125
    %143 = vmatprep.subr.bf16.mxu0 0
    %144 = vmatpush1.bf16.msra.mxu0 %v134
    %145 = vmatprep.subr.bf16.mxu0 0
    %146 = vmatpush1.bf16.msra.mxu0 %v133
    %147 = vmatprep.subr.bf16.mxu0 0
    %148 = vmatpush1.bf16.msra.mxu0 %v132
    %149 = vmatprep.subr.bf16.mxu0 0
    %150 = vmatpush1.bf16.msra.mxu0 %v131
    %151 = vmatprep.subr.bf16.mxu0 0
    %152 = vmatpush1.bf16.msra.mxu0 %v130
    %153 = vmatprep.subr.bf16.mxu0 0
    %154 = vmatpush1.bf16.msra.mxu0 %v129
    %155 = vmatprep.subr.bf16.mxu0 0
    %156 = vmatpush1.bf16.msra.mxu0 %v128
    %157 = vmatprep.subr.bf16.mxu0 0
    %158 = vmatpush1.bf16.msra.mxu0 %v127
    %159 = vmatprep.subr.bf16.mxu0 0
    %160 = vmatpush2.bf16.msra.mxu0 0
    %161 = vmatprep.subr.bf16.mxu0 0
    %162 = vmatpush2.bf16.msra.mxu0 0
    %163 = vmatprep.subr.bf16.mxu0 0
    %164 = vmatpush2.bf16.msra.mxu0 0
    %165 = vmatprep.subr.bf16.mxu0 0
    %166 = vmatpush2.bf16.msra.mxu0 0
    %167 = vmatprep.subr.bf16.mxu0 0
    %168 = vmatpush2.bf16.msra.mxu0 0
    %169 = vmatprep.subr.bf16.mxu0 0
    %170 = vmatpush2.bf16.msra.mxu0 0
    %171 = vmatprep.subr.bf16.mxu0 0
    %172 = vmatpush2.bf16.msra.mxu0 0
    %173 = vmatprep.subr.bf16.mxu0 0
    %174 = vmatpush2.bf16.msra.mxu0 0
    %175 = vmatprep.mubr.bf16.mxu0 0
    %176 = vmatmul.mubr.bf16.gmra.mxu0 %v70
    %v177 = vpop.f32.mrf.mxu0
    %v178 = vadd.f32 %v93, %v177
    %v179 = vpop.f32.mrf.mxu0
    %v180 = vpop.f32.mrf.mxu0
    %v181 = vadd.f32 %v93, %v180
    %v182 = vpop.f32.mrf.mxu0
    %183 = vmatprep.mubr.bf16.mxu0 0
    %184 = vmatmul.mubr.bf16.gmra.mxu0 %v71
    %v185 = vpop.f32.mrf.mxu0
    %v186 = vadd.f32 %v93, %v185
    %v187 = vpop.f32.mrf.mxu0
    %v188 = vpop.f32.mrf.mxu0
    %v189 = vadd.f32 %v93, %v188
    %v190 = vpop.f32.mrf.mxu0
    %191 = vdwg.mxu0
    %v192 = vmax.f32 %v178, 0.0
    %v193 = vmax.f32 %v181, 0.0
    %v194 = vmax.f32 %v186, 0.0
    %v195 = vmax.f32 %v189, 0.0
    %v196 = vld [vmem:[%s3] sm:$0x3]
    %v197 = vpack.c.bf16 %v196, %v196
    %v198 = vld [vmem:[%s9] sm:$0x77]
    %v199 = vld [vmem:[%s9 + $0x8] sm:$0x7]
    %v202 = vunpack.c.l.b16 %v198
    %v203 = vunpack.c.h.b16 %v198
    %v204 = vunpack.c.l.b16 %v199
    %v205 = vpack.c.b16 %v202, %v202
    %v206 = vpack.c.b16 %v203, %v203
    %v207 = vpack.c.b16 %v204, %v204
    %vm208 = vcmask 48128
    %v210 = vsel %vm208, %v197, 0
    %vm212 = vcmask 1042432
    %v214 = vsel %vm212, %v205, 0
    %v217 = vsel %vm212, %v206, 0
    %v220 = vsel %vm212, %v207, 0
    %222 = vmatprep.subr.bf16.mxu0 0
    %223 = vmatpush1.bf16.msra.mxu0 0
    %224 = vmatprep.subr.bf16.mxu0 0
    %225 = vmatpush1.bf16.msra.mxu0 0
    %226 = vmatprep.subr.bf16.mxu0 0
    %227 = vmatpush1.bf16.msra.mxu0 0
    %228 = vmatprep.subr.bf16.mxu0 0
    %229 = vmatpush1.bf16.msra.mxu0 0
    %230 = vmatprep.subr.bf16.mxu0 0
    %231 = vmatpush1.bf16.msra.mxu0 0
    %232 = vmatprep.subr.bf16.mxu0 0
    %233 = vmatpush1.bf16.msra.mxu0 0
    %234 = vmatprep.subr.bf16.mxu0 0
    %235 = vmatpush1.bf16.msra.mxu0 0
    %236 = vmatprep.subr.bf16.mxu0 %v217
    %237 = vmatpush1.bf16.msra.mxu0 %v214
    %238 = vmatprep.subr.bf16.mxu0 0
    %239 = vmatpush2.bf16.msra.mxu0 0
    %240 = vmatprep.subr.bf16.mxu0 0
    %241 = vmatpush2.bf16.msra.mxu0 0
    %242 = vmatprep.subr.bf16.mxu0 0
    %243 = vmatpush2.bf16.msra.mxu0 0
    %244 = vmatprep.subr.bf16.mxu0 0
    %245 = vmatpush2.bf16.msra.mxu0 0
    %246 = vmatprep.subr.bf16.mxu0 0
    %247 = vmatpush2.bf16.msra.mxu0 0
    %248 = vmatprep.subr.bf16.mxu0 0
    %249 = vmatpush2.bf16.msra.mxu0 0
    %250 = vmatprep.subr.bf16.mxu0 0
    %251 = vmatpush2.bf16.msra.mxu0 0
    %252 = vmatprep.subr.bf16.mxu0 0
    %253 = vmatpush2.bf16.msra.mxu0 0
    %254 = vmatprep.mubr.bf16.mxu0 0
    %255 = vmatmul.mubr.bf16.gmra.mxu0 %v210
    %v256 = vpop.f32.mrf.mxu0
    %v257 = vadd.f32 0.0, %v256
    %v258 = vpop.f32.mrf.mxu0
    %v259 = vadd.f32 0.0, %v258
    %v260 = vpop.f32.mrf.mxu0
    %v261 = vpop.f32.mrf.mxu0
    %262 = vdwg.mxu0
    %263 = vmatprep.subr.bf16.mxu0 0
    %264 = vmatpush1.bf16.msra.mxu0 0
    %265 = vmatprep.subr.bf16.mxu0 0
    %266 = vmatpush1.bf16.msra.mxu0 0
    %267 = vmatprep.subr.bf16.mxu0 0
    %268 = vmatpush1.bf16.msra.mxu0 0
    %269 = vmatprep.subr.bf16.mxu0 0
    %270 = vmatpush1.bf16.msra.mxu0 0
    %271 = vmatprep.subr.bf16.mxu0 0
    %272 = vmatpush1.bf16.msra.mxu0 0
    %273 = vmatprep.subr.bf16.mxu0 0
    %274 = vmatpush1.bf16.msra.mxu0 0
    %275 = vmatprep.subr.bf16.mxu0 0
    %276 = vmatpush1.bf16.msra.mxu0 0
    %277 = vmatprep.subr.bf16.mxu0 0
    %278 = vmatpush1.bf16.msra.mxu0 %v220
    %279 = vmatprep.subr.bf16.mxu0 0
    %280 = vmatpush2.bf16.msra.mxu0 0
    %281 = vmatprep.subr.bf16.mxu0 0
    %282 = vmatpush2.bf16.msra.mxu0 0
    %283 = vmatprep.subr.bf16.mxu0 0
    %284 = vmatpush2.bf16.msra.mxu0 0
    %285 = vmatprep.subr.bf16.mxu0 0
    %286 = vmatpush2.bf16.msra.mxu0 0
    %287 = vmatprep.subr.bf16.mxu0 0
    %288 = vmatpush2.bf16.msra.mxu0 0
    %289 = vmatprep.subr.bf16.mxu0 0
    %290 = vmatpush2.bf16.msra.mxu0 0
    %291 = vmatprep.subr.bf16.mxu0 0
    %292 = vmatpush2.bf16.msra.mxu0 0
    %293 = vmatprep.subr.bf16.mxu0 0
    %294 = vmatpush2.bf16.msra.mxu0 0
    %295 = vmatprep.mubr.bf16.mxu0 0
    %296 = vmatmul.mubr.bf16.gmra.mxu0 %v210
    %v297 = vpop.f32.mrf.mxu0
    %v298 = vadd.f32 0.0, %v297
    %v299 = vpop.f32.mrf.mxu0
    %v300 = vpop.f32.mrf.mxu0
    %v301 = vpop.f32.mrf.mxu0
    %302 = vdwg.mxu0
    %v303 = vlaneseq
    %v304 = vshrl.u32 %v303, 7
    %v305 = vsub.s32 0, %v304
    %v306 = vrot.slane %v257, %v305
    %v307 = vlaneseq
    %v308 = vshrl.u32 %v307, 7
    %v309 = vsub.s32 0, %v308
    %v310 = vrot.slane %v259, %v309
    %v311 = vlaneseq
    %v312 = vshrl.u32 %v311, 7
    %v313 = vsub.s32 0, %v312
    %v314 = vrot.slane %v298, %v313
    %v315 = vlaneseq
    %v316 = vshrl.u32 %v315, 7
    %v317 = vsub.s32 1, %v316
    %v318 = vrot.slane %v257, %v317
    %v319 = vlaneseq
    %v320 = vshrl.u32 %v319, 7
    %v321 = vsub.s32 1, %v320
    %v322 = vrot.slane %v259, %v321
    %v323 = vlaneseq
    %v324 = vshrl.u32 %v323, 7
    %v325 = vsub.s32 1, %v324
    %v326 = vrot.slane %v298, %v325
    %v327 = vpack.c.bf16 %v193, %v192
    %v328 = vpack.c.bf16 %v195, %v194
    %v329 = vld [vmem:[%s8] sm:$0xff]
    %v330 = vld [vmem:[%s8 + $0x8] sm:$0xf]
    %v331 = vld [vmem:[%s8 + $0xc] sm:$0xff]
    %v332 = vld [vmem:[%s8 + $0x14] sm:$0xf]
    %v333 = vld [vmem:[%s8 + $0x18] sm:$0xff]
    %v334 = vld [vmem:[%s8 + $0x20] sm:$0xf]
    %v335 = vld [vmem:[%s8 + $0x24] sm:$0xff]
    %v336 = vld [vmem:[%s8 + $0x2c] sm:$0xf]
    %v337 = vld [vmem:[%s8 + $0x30] sm:$0xff]
    %v338 = vld [vmem:[%s8 + $0x38] sm:$0xf]
    %v339 = vld [vmem:[%s8 + $0x3c] sm:$0xff]
    %v340 = vld [vmem:[%s8 + $0x44] sm:$0xf]
    %v341 = vld [vmem:[%s8 + $0x48] sm:$0xff]
    %v342 = vld [vmem:[%s8 + $0x50] sm:$0xf]
    %v343 = vld [vmem:[%s8 + $0x54] sm:$0xff]
    %v344 = vld [vmem:[%s8 + $0x5c] sm:$0xf]
    %v345 = vld [vmem:[%s8 + $0x60] sm:$0xff]
    %v346 = vld [vmem:[%s8 + $0x68] sm:$0xf]
    %v347 = vld [vmem:[%s8 + $0x6c] sm:$0xff]
    %v348 = vld [vmem:[%s8 + $0x74] sm:$0xf]
    %v349 = vld [vmem:[%s8 + $0x78] sm:$0xff]
    %v350 = vld [vmem:[%s8 + $0x80] sm:$0xf]
    %v351 = vld [vmem:[%s8 + $0x84] sm:$0xff]
    %v352 = vld [vmem:[%s8 + $0x8c] sm:$0xf]
    %v353 = vld [vmem:[%s8 + $0x90] sm:$0xff]
    %v354 = vld [vmem:[%s8 + $0x98] sm:$0xf]
    %v355 = vld [vmem:[%s8 + $0x9c] sm:$0xff]
    %v356 = vld [vmem:[%s8 + $0xa4] sm:$0xf]
    %v357 = vld [vmem:[%s8 + $0xa8] sm:$0xff]
    %v358 = vld [vmem:[%s8 + $0xb0] sm:$0xf]
    %v359 = vld [vmem:[%s8 + $0xb4] sm:$0xff]
    %v360 = vld [vmem:[%s8 + $0xbc] sm:$0xf]
    %v361 = vld [vmem:[%s4] sm:$0xff]
    %v362 = vld [vmem:[%s4 + $0x8] sm:$0xff]
    %v363 = vld [vmem:[%s4 + $0x10] sm:$0xff]
    %v364 = vld [vmem:[%s4 + $0x18] sm:$0xff]
    %v365 = vld [vmem:[%s4 + $0x20] sm:$0xff]
    %v366 = vld [vmem:[%s4 + $0x28] sm:$0xff]
    %v367 = vld [vmem:[%s4 + $0x30] sm:$0xff]
    %v368 = vld [vmem:[%s4 + $0x38] sm:$0xff]
    %v369 = vld [vmem:[%s4 + $0x40] sm:$0xff]
    %v370 = vld [vmem:[%s4 + $0x48] sm:$0xff]
    %v371 = vld [vmem:[%s4 + $0x50] sm:$0xff]
    %v372 = vld [vmem:[%s4 + $0x58] sm:$0xff]
    %v405 = vunpack.c.l.b16 %v329
    %v406 = vunpack.c.h.b16 %v329
    %v407 = vunpack.c.l.b16 %v330
    %v408 = vunpack.c.l.b16 %v331
    %v409 = vunpack.c.h.b16 %v331
    %v410 = vunpack.c.l.b16 %v332
    %v411 = vunpack.c.l.b16 %v333
    %v412 = vunpack.c.h.b16 %v333
    %v413 = vunpack.c.l.b16 %v334
    %v414 = vunpack.c.l.b16 %v335
    %v415 = vunpack.c.h.b16 %v335
    %v416 = vunpack.c.l.b16 %v336
    %v417 = vunpack.c.l.b16 %v337
    %v418 = vunpack.c.h.b16 %v337
    %v419 = vunpack.c.l.b16 %v338
    %v420 = vunpack.c.l.b16 %v339
    %v421 = vunpack.c.h.b16 %v339
    %v422 = vunpack.c.l.b16 %v340
    %v423 = vunpack.c.l.b16 %v341
    %v424 = vunpack.c.h.b16 %v341
    %v425 = vunpack.c.l.b16 %v342
    %v426 = vunpack.c.l.b16 %v343
    %v427 = vunpack.c.h.b16 %v343
    %v428 = vunpack.c.l.b16 %v344
    %v429 = vunpack.c.l.b16 %v345
    %v430 = vunpack.c.h.b16 %v345
    %v431 = vunpack.c.l.b16 %v346
    %v432 = vunpack.c.l.b16 %v347
    %v433 = vunpack.c.h.b16 %v347
    %v434 = vunpack.c.l.b16 %v348
    %v435 = vunpack.c.l.b16 %v349
    %v436 = vunpack.c.h.b16 %v349
    %v437 = vunpack.c.l.b16 %v350
    %v438 = vunpack.c.l.b16 %v351
    %v439 = vunpack.c.h.b16 %v351
    %v440 = vunpack.c.l.b16 %v352
    %v441 = vunpack.c.l.b16 %v353
    %v442 = vunpack.c.h.b16 %v353
    %v443 = vunpack.c.l.b16 %v354
    %v444 = vunpack.c.l.b16 %v355
    %v445 = vunpack.c.h.b16 %v355
    %v446 = vunpack.c.l.b16 %v356
    %v447 = vunpack.c.l.b16 %v357
    %v448 = vunpack.c.h.b16 %v357
    %v449 = vunpack.c.l.b16 %v358
    %v450 = vunpack.c.l.b16 %v359
    %v451 = vunpack.c.h.b16 %v359
    %v452 = vunpack.c.l.b16 %v360
    %v453 = vpack.c.b16 %v408, %v405
    %v454 = vpack.c.b16 %v409, %v406
    %v455 = vpack.c.b16 %v410, %v407
    %v456 = vpack.c.b16 %v414, %v411
    %v457 = vpack.c.b16 %v415, %v412
    %v458 = vpack.c.b16 %v416, %v413
    %v459 = vpack.c.b16 %v420, %v417
    %v460 = vpack.c.b16 %v421, %v418
    %v461 = vpack.c.b16 %v422, %v419
    %v462 = vpack.c.b16 %v426, %v423
    %v463 = vpack.c.b16 %v427, %v424
    %v464 = vpack.c.b16 %v428, %v425
    %v465 = vpack.c.b16 %v432, %v429
    %v466 = vpack.c.b16 %v433, %v430
    %v467 = vpack.c.b16 %v434, %v431
    %v468 = vpack.c.b16 %v438, %v435
    %v469 = vpack.c.b16 %v439, %v436
    %v470 = vpack.c.b16 %v440, %v437
    %v471 = vpack.c.b16 %v444, %v441
    %v472 = vpack.c.b16 %v445, %v442
    %v473 = vpack.c.b16 %v446, %v443
    %v474 = vpack.c.b16 %v450, %v447
    %v475 = vpack.c.b16 %v451, %v448
    %v476 = vpack.c.b16 %v452, %v449
    %501 = vmatprep.subr.bf16.mxu0 %v475
    %502 = vmatpush1.bf16.msra.mxu0 %v474
    %503 = vmatprep.subr.bf16.mxu0 %v472
    %504 = vmatpush1.bf16.msra.mxu0 %v471
    %505 = vmatprep.subr.bf16.mxu0 %v469
    %506 = vmatpush1.bf16.msra.mxu0 %v468
    %507 = vmatprep.subr.bf16.mxu0 %v466
    %508 = vmatpush1.bf16.msra.mxu0 %v465
    %509 = vmatprep.subr.bf16.mxu0 %v463
    %510 = vmatpush1.bf16.msra.mxu0 %v462
    %511 = vmatprep.subr.bf16.mxu0 %v460
    %512 = vmatpush1.bf16.msra.mxu0 %v459
    %513 = vmatprep.subr.bf16.mxu0 %v457
    %514 = vmatpush1.bf16.msra.mxu0 %v456
    %515 = vmatprep.subr.bf16.mxu0 %v454
    %516 = vmatpush1.bf16.msra.mxu0 %v453
    %517 = vmatprep.subr.bf16.mxu0 0
    %518 = vmatpush2.bf16.msra.mxu0 0
    %519 = vmatprep.subr.bf16.mxu0 0
    %520 = vmatpush2.bf16.msra.mxu0 0
    %521 = vmatprep.subr.bf16.mxu0 0
    %522 = vmatpush2.bf16.msra.mxu0 0
    %523 = vmatprep.subr.bf16.mxu0 0
    %524 = vmatpush2.bf16.msra.mxu0 0
    %525 = vmatprep.subr.bf16.mxu0 0
    %526 = vmatpush2.bf16.msra.mxu0 0
    %527 = vmatprep.subr.bf16.mxu0 0
    %528 = vmatpush2.bf16.msra.mxu0 0
    %529 = vmatprep.subr.bf16.mxu0 0
    %530 = vmatpush2.bf16.msra.mxu0 0
    %531 = vmatprep.subr.bf16.mxu0 0
    %532 = vmatpush2.bf16.msra.mxu0 0
    %533 = vmatprep.mubr.bf16.mxu0 0
    %534 = vmatmul.mubr.bf16.gmra.mxu0 %v327
    %v535 = vpop.f32.mrf.mxu0
    %v536 = vadd.f32 %v361, %v535
    %v537 = vpop.f32.mrf.mxu0
    %v538 = vadd.f32 %v362, %v537
    %v539 = vpop.f32.mrf.mxu0
    %v540 = vadd.f32 %v364, %v539
    %v541 = vpop.f32.mrf.mxu0
    %v542 = vadd.f32 %v365, %v541
    %543 = vmatprep.mubr.bf16.mxu0 0
    %544 = vmatmul.mubr.bf16.gmra.mxu0 %v328
    %v545 = vpop.f32.mrf.mxu0
    %v546 = vadd.f32 %v367, %v545
    %v547 = vpop.f32.mrf.mxu0
    %v548 = vadd.f32 %v368, %v547
    %v549 = vpop.f32.mrf.mxu0
    %v550 = vadd.f32 %v370, %v549
    %v551 = vpop.f32.mrf.mxu0
    %v552 = vadd.f32 %v371, %v551
    %553 = vdwg.mxu0
    %554 = vmatprep.subr.bf16.mxu0 0
    %555 = vmatpush1.bf16.msra.mxu0 %v476
    %556 = vmatprep.subr.bf16.mxu0 0
    %557 = vmatpush1.bf16.msra.mxu0 %v473
    %558 = vmatprep.subr.bf16.mxu0 0
    %559 = vmatpush1.bf16.msra.mxu0 %v470
    %560 = vmatprep.subr.bf16.mxu0 0
    %561 = vmatpush1.bf16.msra.mxu0 %v467
    %562 = vmatprep.subr.bf16.mxu0 0
    %563 = vmatpush1.bf16.msra.mxu0 %v464
    %564 = vmatprep.subr.bf16.mxu0 0
    %565 = vmatpush1.bf16.msra.mxu0 %v461
    %566 = vmatprep.subr.bf16.mxu0 0
    %567 = vmatpush1.bf16.msra.mxu0 %v458
    %568 = vmatprep.subr.bf16.mxu0 0
    %569 = vmatpush1.bf16.msra.mxu0 %v455
    %570 = vmatprep.subr.bf16.mxu0 0
    %571 = vmatpush2.bf16.msra.mxu0 0
    %572 = vmatprep.subr.bf16.mxu0 0
    %573 = vmatpush2.bf16.msra.mxu0 0
    %574 = vmatprep.subr.bf16.mxu0 0
    %575 = vmatpush2.bf16.msra.mxu0 0
    %576 = vmatprep.subr.bf16.mxu0 0
    %577 = vmatpush2.bf16.msra.mxu0 0
    %578 = vmatprep.subr.bf16.mxu0 0
    %579 = vmatpush2.bf16.msra.mxu0 0
    %580 = vmatprep.subr.bf16.mxu0 0
    %581 = vmatpush2.bf16.msra.mxu0 0
    %582 = vmatprep.subr.bf16.mxu0 0
    %583 = vmatpush2.bf16.msra.mxu0 0
    %584 = vmatprep.subr.bf16.mxu0 0
    %585 = vmatpush2.bf16.msra.mxu0 0
    %586 = vmatprep.mubr.bf16.mxu0 0
    %587 = vmatmul.mubr.bf16.gmra.mxu0 %v327
    %v588 = vpop.f32.mrf.mxu0
    %v589 = vadd.f32 %v363, %v588
    %v590 = vpop.f32.mrf.mxu0
    %v591 = vpop.f32.mrf.mxu0
    %v592 = vadd.f32 %v366, %v591
    %v593 = vpop.f32.mrf.mxu0
    %594 = vmatprep.mubr.bf16.mxu0 0
    %595 = vmatmul.mubr.bf16.gmra.mxu0 %v328
    %v596 = vpop.f32.mrf.mxu0
    %v597 = vadd.f32 %v369, %v596
    %v598 = vpop.f32.mrf.mxu0
    %v599 = vpop.f32.mrf.mxu0
    %v600 = vadd.f32 %v372, %v599
    %v601 = vpop.f32.mrf.mxu0
    %602 = vdwg.mxu0
    %v603 = vadd.f32 %v536, %v306
    %v604 = vadd.f32 %v538, %v310
    %v605 = vadd.f32 %v589, %v314
    %v606 = vadd.f32 %v540, %v306
    %v607 = vadd.f32 %v542, %v310
    %v608 = vadd.f32 %v592, %v314
    %v609 = vadd.f32 %v546, %v318
    %v610 = vadd.f32 %v548, %v322
    %v611 = vadd.f32 %v597, %v326
    %v612 = vadd.f32 %v550, %v318
    %v613 = vadd.f32 %v552, %v322
    %v614 = vadd.f32 %v600, %v326
    %v615 = vld [vmem:[%s2] sm:$0xff]
    %v616 = vld [vmem:[%s2 + $0x8] sm:$0xff]
    %v617 = vld [vmem:[%s2 + $0x10] sm:$0xff]
    %v618 = vld [vmem:[%s2 + $0x18] sm:$0xff]
    %v619 = vpack.c.bf16 %v616, %v615
    %v620 = vpack.c.bf16 %v618, %v617
    %v621 = vld [vmem:[%s7] sm:$0xff]
    %v622 = vld [vmem:[%s7 + $0x8] sm:$0xff]
    %v623 = vld [vmem:[%s7 + $0x10] sm:$0xff]
    %v624 = vld [vmem:[%s7 + $0x18] sm:$0xff]
    %v625 = vld [vmem:[%s7 + $0x20] sm:$0xff]
    %v626 = vld [vmem:[%s7 + $0x28] sm:$0xff]
    %v627 = vld [vmem:[%s7 + $0x30] sm:$0xff]
    %v628 = vld [vmem:[%s7 + $0x38] sm:$0xff]
    %v629 = vld [vmem:[%s7 + $0x40] sm:$0xff]
    %v630 = vld [vmem:[%s7 + $0x48] sm:$0xff]
    %v631 = vld [vmem:[%s7 + $0x50] sm:$0xff]
    %v632 = vld [vmem:[%s7 + $0x58] sm:$0xff]
    %v633 = vld [vmem:[%s7 + $0x60] sm:$0xff]
    %v634 = vld [vmem:[%s7 + $0x68] sm:$0xff]
    %v635 = vld [vmem:[%s7 + $0x70] sm:$0xff]
    %v636 = vld [vmem:[%s7 + $0x78] sm:$0xff]
    %v653 = vunpack.c.l.b16 %v621
    %v654 = vunpack.c.h.b16 %v621
    %v655 = vunpack.c.l.b16 %v622
    %v656 = vunpack.c.h.b16 %v622
    %v657 = vunpack.c.l.b16 %v623
    %v658 = vunpack.c.h.b16 %v623
    %v659 = vunpack.c.l.b16 %v624
    %v660 = vunpack.c.h.b16 %v624
    %v661 = vunpack.c.l.b16 %v625
    %v662 = vunpack.c.h.b16 %v625
    %v663 = vunpack.c.l.b16 %v626
    %v664 = vunpack.c.h.b16 %v626
    %v665 = vunpack.c.l.b16 %v627
    %v666 = vunpack.c.h.b16 %v627
    %v667 = vunpack.c.l.b16 %v628
    %v668 = vunpack.c.h.b16 %v628
    %v669 = vunpack.c.l.b16 %v629
    %v670 = vunpack.c.h.b16 %v629
    %v671 = vunpack.c.l.b16 %v630
    %v672 = vunpack.c.h.b16 %v630
    %v673 = vunpack.c.l.b16 %v631
    %v674 = vunpack.c.h.b16 %v631
    %v675 = vunpack.c.l.b16 %v632
    %v676 = vunpack.c.h.b16 %v632
    %v677 = vunpack.c.l.b16 %v633
    %v678 = vunpack.c.h.b16 %v633
    %v679 = vunpack.c.l.b16 %v634
    %v680 = vunpack.c.h.b16 %v634
    %v681 = vunpack.c.l.b16 %v635
    %v682 = vunpack.c.h.b16 %v635
    %v683 = vunpack.c.l.b16 %v636
    %v684 = vunpack.c.h.b16 %v636
    %v685 = vpack.c.b16 %v655, %v653
    %v686 = vpack.c.b16 %v656, %v654
    %v687 = vpack.c.b16 %v659, %v657
    %v688 = vpack.c.b16 %v660, %v658
    %v689 = vpack.c.b16 %v663, %v661
    %v690 = vpack.c.b16 %v664, %v662
    %v691 = vpack.c.b16 %v667, %v665
    %v692 = vpack.c.b16 %v668, %v666
    %v693 = vpack.c.b16 %v671, %v669
    %v694 = vpack.c.b16 %v672, %v670
    %v695 = vpack.c.b16 %v675, %v673
    %v696 = vpack.c.b16 %v676, %v674
    %v697 = vpack.c.b16 %v679, %v677
    %v698 = vpack.c.b16 %v680, %v678
    %v699 = vpack.c.b16 %v683, %v681
    %v700 = vpack.c.b16 %v684, %v682
    %717 = vmatprep.subr.bf16.mxu0 %v700
    %718 = vmatpush1.bf16.msra.mxu0 %v699
    %719 = vmatprep.subr.bf16.mxu0 %v698
    %720 = vmatpush1.bf16.msra.mxu0 %v697
    %721 = vmatprep.subr.bf16.mxu0 %v696
    %722 = vmatpush1.bf16.msra.mxu0 %v695
    %723 = vmatprep.subr.bf16.mxu0 %v694
    %724 = vmatpush1.bf16.msra.mxu0 %v693
    %725 = vmatprep.subr.bf16.mxu0 %v692
    %726 = vmatpush1.bf16.msra.mxu0 %v691
    %727 = vmatprep.subr.bf16.mxu0 %v690
    %728 = vmatpush1.bf16.msra.mxu0 %v689
    %729 = vmatprep.subr.bf16.mxu0 %v688
    %730 = vmatpush1.bf16.msra.mxu0 %v687
    %731 = vmatprep.subr.bf16.mxu0 %v686
    %732 = vmatpush1.bf16.msra.mxu0 %v685
    %733 = vmatprep.subr.bf16.mxu0 0
    %734 = vmatpush2.bf16.msra.mxu0 0
    %735 = vmatprep.subr.bf16.mxu0 0
    %736 = vmatpush2.bf16.msra.mxu0 0
    %737 = vmatprep.subr.bf16.mxu0 0
    %738 = vmatpush2.bf16.msra.mxu0 0
    %739 = vmatprep.subr.bf16.mxu0 0
    %740 = vmatpush2.bf16.msra.mxu0 0
    %741 = vmatprep.subr.bf16.mxu0 0
    %742 = vmatpush2.bf16.msra.mxu0 0
    %743 = vmatprep.subr.bf16.mxu0 0
    %744 = vmatpush2.bf16.msra.mxu0 0
    %745 = vmatprep.subr.bf16.mxu0 0
    %746 = vmatpush2.bf16.msra.mxu0 0
    %747 = vmatprep.subr.bf16.mxu0 0
    %748 = vmatpush2.bf16.msra.mxu0 0
    %749 = vmatprep.mubr.bf16.mxu0 0
    %750 = vmatmul.mubr.bf16.gmra.mxu0 %v619
    %v751 = vpop.f32.mrf.mxu0
    %v752 = vadd.f32 0.0, %v751
    %v753 = vpop.f32.mrf.mxu0
    %v754 = vadd.f32 0.0, %v753
    %v755 = vpop.f32.mrf.mxu0
    %v756 = vadd.f32 0.0, %v755
    %v757 = vpop.f32.mrf.mxu0
    %v758 = vadd.f32 0.0, %v757
    %759 = vmatprep.mubr.bf16.mxu0 0
    %760 = vmatmul.mubr.bf16.gmra.mxu0 %v620
    %v761 = vpop.f32.mrf.mxu0
    %v762 = vadd.f32 0.0, %v761
    %v763 = vpop.f32.mrf.mxu0
    %v764 = vadd.f32 0.0, %v763
    %v765 = vpop.f32.mrf.mxu0
    %v766 = vadd.f32 0.0, %v765
    %v767 = vpop.f32.mrf.mxu0
    %v768 = vadd.f32 0.0, %v767
    %769 = vdwg.mxu0
    %v770 = vadd.f32 %v752, %v603
    %v771 = vadd.f32 %v756, %v606
    %v772 = vadd.f32 %v762, %v609
    %v773 = vadd.f32 %v766, %v612
    %v774 = vxor.u32 %v770, 2147483648
    %v775 = vxor.u32 %v771, 2147483648
    %v776 = vxor.u32 %v772, 2147483648
    %v777 = vxor.u32 %v773, 2147483648
    %v778 = vmul.f32 %v774, 1.442695
    %v779 = vpow.pop %v778
    %v780 = vmul.f32 %v775, 1.442695
    %v781 = vpow.pop %v780
    %v782 = vmul.f32 %v776, 1.442695
    %v783 = vpow.pop %v782
    %v784 = vmul.f32 %v777, 1.442695
    %v785 = vpow.pop %v784
    %v786 = vadd.f32 %v779, 1.0
    %v787 = vadd.f32 %v781, 1.0
    %v788 = vadd.f32 %v783, 1.0
    %v789 = vadd.f32 %v785, 1.0
    %v790 = vrcp.pop %v786
    %v791 = vmul.f32 1.0, %v790
    %v792 = vrcp.pop %v787
    %v793 = vmul.f32 1.0, %v792
    %v794 = vrcp.pop %v788
    %v795 = vmul.f32 1.0, %v794
    %v796 = vrcp.pop %v789
    %v797 = vmul.f32 1.0, %v796
    %v798 = vadd.f32 %v754, %v604
    %v799 = vadd.f32 %v758, %v607
    %v800 = vadd.f32 %v764, %v610
    %v801 = vadd.f32 %v768, %v613
    %v802 = vxor.u32 %v798, 2147483648
    %v803 = vxor.u32 %v799, 2147483648
    %v804 = vxor.u32 %v800, 2147483648
    %v805 = vxor.u32 %v801, 2147483648
    %v806 = vmul.f32 %v802, 1.442695
    %v807 = vpow.pop %v806
    %v808 = vmul.f32 %v803, 1.442695
    %v809 = vpow.pop %v808
    %v810 = vmul.f32 %v804, 1.442695
    %v811 = vpow.pop %v810
    %v812 = vmul.f32 %v805, 1.442695
    %v813 = vpow.pop %v812
    %v814 = vadd.f32 %v807, 1.0
    %v815 = vadd.f32 %v809, 1.0
    %v816 = vadd.f32 %v811, 1.0
    %v817 = vadd.f32 %v813, 1.0
    %v818 = vrcp.pop %v814
    %v819 = vmul.f32 1.0, %v818
    %v820 = vrcp.pop %v815
    %v821 = vmul.f32 1.0, %v820
    %v822 = vrcp.pop %v816
    %v823 = vmul.f32 1.0, %v822
    %v824 = vrcp.pop %v817
    %v825 = vmul.f32 1.0, %v824
    %v826 = vmul.f32 %v819, %v615
    %v827 = vmul.f32 %v821, %v616
    %v828 = vmul.f32 %v823, %v617
    %v829 = vmul.f32 %v825, %v618
    %v830 = vpack.c.bf16 %v827, %v826
    %v831 = vpack.c.bf16 %v829, %v828
    %v832 = vld [vmem:[%s10] sm:$0xf]
    %v833 = vld [vmem:[%s10 + $0x4] sm:$0xf]
    %v834 = vld [vmem:[%s10 + $0x8] sm:$0xf]
    %v835 = vld [vmem:[%s10 + $0xc] sm:$0xf]
    %v836 = vld [vmem:[%s10 + $0x10] sm:$0xf]
    %v837 = vld [vmem:[%s10 + $0x14] sm:$0xf]
    %v838 = vld [vmem:[%s10 + $0x18] sm:$0xf]
    %v839 = vld [vmem:[%s10 + $0x1c] sm:$0xf]
    %v840 = vld [vmem:[%s10 + $0x20] sm:$0xf]
    %v841 = vld [vmem:[%s10 + $0x24] sm:$0xf]
    %v842 = vld [vmem:[%s10 + $0x28] sm:$0xf]
    %v843 = vld [vmem:[%s10 + $0x2c] sm:$0xf]
    %v844 = vld [vmem:[%s10 + $0x30] sm:$0xf]
    %v845 = vld [vmem:[%s10 + $0x34] sm:$0xf]
    %v846 = vld [vmem:[%s10 + $0x38] sm:$0xf]
    %v847 = vld [vmem:[%s10 + $0x3c] sm:$0xf]
    %v864 = vunpack.c.l.b16 %v832
    %v865 = vunpack.c.l.b16 %v833
    %v866 = vunpack.c.l.b16 %v834
    %v867 = vunpack.c.l.b16 %v835
    %v868 = vunpack.c.l.b16 %v836
    %v869 = vunpack.c.l.b16 %v837
    %v870 = vunpack.c.l.b16 %v838
    %v871 = vunpack.c.l.b16 %v839
    %v872 = vunpack.c.l.b16 %v840
    %v873 = vunpack.c.l.b16 %v841
    %v874 = vunpack.c.l.b16 %v842
    %v875 = vunpack.c.l.b16 %v843
    %v876 = vunpack.c.l.b16 %v844
    %v877 = vunpack.c.l.b16 %v845
    %v878 = vunpack.c.l.b16 %v846
    %v879 = vunpack.c.l.b16 %v847
    %v880 = vpack.c.b16 %v865, %v864
    %v881 = vpack.c.b16 %v867, %v866
    %v882 = vpack.c.b16 %v869, %v868
    %v883 = vpack.c.b16 %v871, %v870
    %v884 = vpack.c.b16 %v873, %v872
    %v885 = vpack.c.b16 %v875, %v874
    %v886 = vpack.c.b16 %v877, %v876
    %v887 = vpack.c.b16 %v879, %v878
    %896 = vmatprep.subr.bf16.mxu0 0
    %897 = vmatpush1.bf16.msra.mxu0 %v887
    %898 = vmatprep.subr.bf16.mxu0 0
    %899 = vmatpush1.bf16.msra.mxu0 %v886
    %900 = vmatprep.subr.bf16.mxu0 0
    %901 = vmatpush1.bf16.msra.mxu0 %v885
    %902 = vmatprep.subr.bf16.mxu0 0
    %903 = vmatpush1.bf16.msra.mxu0 %v884
    %904 = vmatprep.subr.bf16.mxu0 0
    %905 = vmatpush1.bf16.msra.mxu0 %v883
    %906 = vmatprep.subr.bf16.mxu0 0
    %907 = vmatpush1.bf16.msra.mxu0 %v882
    %908 = vmatprep.subr.bf16.mxu0 0
    %909 = vmatpush1.bf16.msra.mxu0 %v881
    %910 = vmatprep.subr.bf16.mxu0 0
    %911 = vmatpush1.bf16.msra.mxu0 %v880
    %912 = vmatprep.subr.bf16.mxu0 0
    %913 = vmatpush2.bf16.msra.mxu0 0
    %914 = vmatprep.subr.bf16.mxu0 0
    %915 = vmatpush2.bf16.msra.mxu0 0
    %916 = vmatprep.subr.bf16.mxu0 0
    %917 = vmatpush2.bf16.msra.mxu0 0
    %918 = vmatprep.subr.bf16.mxu0 0
    %919 = vmatpush2.bf16.msra.mxu0 0
    %920 = vmatprep.subr.bf16.mxu0 0
    %921 = vmatpush2.bf16.msra.mxu0 0
    %922 = vmatprep.subr.bf16.mxu0 0
    %923 = vmatpush2.bf16.msra.mxu0 0
    %924 = vmatprep.subr.bf16.mxu0 0
    %925 = vmatpush2.bf16.msra.mxu0 0
    %926 = vmatprep.subr.bf16.mxu0 0
    %927 = vmatpush2.bf16.msra.mxu0 0
    %928 = vmatprep.mubr.bf16.mxu0 0
    %929 = vmatmul.mubr.bf16.gmra.mxu0 %v830
    %v930 = vpop.f32.mrf.mxu0
    %v931 = vadd.f32 %v605, %v930
    %v932 = vpop.f32.mrf.mxu0
    %v933 = vpop.f32.mrf.mxu0
    %v934 = vadd.f32 %v608, %v933
    %v935 = vpop.f32.mrf.mxu0
    %936 = vmatprep.mubr.bf16.mxu0 0
    %937 = vmatmul.mubr.bf16.gmra.mxu0 %v831
    %v938 = vpop.f32.mrf.mxu0
    %v939 = vadd.f32 %v611, %v938
    %v940 = vpop.f32.mrf.mxu0
    %v941 = vpop.f32.mrf.mxu0
    %v942 = vadd.f32 %v614, %v941
    %v943 = vpop.f32.mrf.mxu0
    %944 = vdwg.mxu0
    %v945 = vtanh.pop %v931
    %v946 = vtanh.pop %v934
    %v947 = vtanh.pop %v939
    %v948 = vtanh.pop %v942
    %v949 = vsub.f32 1.0, %v791
    %v950 = vsub.f32 1.0, %v793
    %v951 = vsub.f32 1.0, %v795
    %v952 = vsub.f32 1.0, %v797
    %v953 = vmul.f32 %v949, %v615
    %v954 = vmul.f32 %v950, %v616
    %v955 = vmul.f32 %v951, %v617
    %v956 = vmul.f32 %v952, %v618
    %v957 = vmul.f32 %v791, %v945
    %v958 = vmul.f32 %v793, %v946
    %v959 = vmul.f32 %v795, %v947
    %v960 = vmul.f32 %v797, %v948
    %v961 = vadd.f32 %v953, %v957
    %v962 = vadd.f32 %v954, %v958
    %v963 = vadd.f32 %v955, %v959
    %v964 = vadd.f32 %v956, %v960
    %965 = vst [vmem:[#allocation2] sm:$0xff] %v961
    %966 = vst [vmem:[#allocation2 + $0x8] sm:$0xff] %v962
    %967 = vst [vmem:[#allocation2 + $0x10] sm:$0xff] %v963
    %968 = vst [vmem:[#allocation2 + $0x18] sm:$0xff] %v964
    %v969 = vadd.f32 %v961, %v962
    %v970 = vrot.slane %v969, 4
    %v971 = vadd.f32 %v969, %v970
    %v972 = vrot.slane %v971, 2
    %v973 = vadd.f32 %v971, %v972
    %v974 = vrot.slane %v973, 1
    %v975 = vadd.f32 %v973, %v974
    %v976 = vrcp.pop 16.0
    %v977 = vmul.f32 %v975, %v976
    %v978 = vadd.f32 %v963, %v964
    %v979 = vrot.slane %v978, 4
    %v980 = vadd.f32 %v978, %v979
    %v981 = vrot.slane %v980, 2
    %v982 = vadd.f32 %v980, %v981
    %v983 = vrot.slane %v982, 1
    %v984 = vadd.f32 %v982, %v983
    %v985 = vmul.f32 %v984, %v976
    %vm986 = vcmask 1040384
    %v987 = vsel %vm986, %v977, %v985
    %v988 = vpack.c.bf16 %v987, %v987
    %v989 = vld [vmem:[%s11] sm:$0xf]
    %v990 = vld [vmem:[%s11 + $0x4] sm:$0xf]
    %v991 = vld [vmem:[%s11 + $0x8] sm:$0xf]
    %v992 = vld [vmem:[%s11 + $0xc] sm:$0xf]
    %v993 = vld [vmem:[%s11 + $0x10] sm:$0xf]
    %v994 = vld [vmem:[%s11 + $0x14] sm:$0xf]
    %v995 = vld [vmem:[%s11 + $0x18] sm:$0xf]
    %v996 = vld [vmem:[%s11 + $0x1c] sm:$0xf]
    %v997 = vld [vmem:[%s11 + $0x20] sm:$0xf]
    %v998 = vld [vmem:[%s11 + $0x24] sm:$0xf]
    %v999 = vld [vmem:[%s11 + $0x28] sm:$0xf]
    %v1000 = vld [vmem:[%s11 + $0x2c] sm:$0xf]
    %v1001 = vld [vmem:[%s11 + $0x30] sm:$0xf]
    %v1002 = vld [vmem:[%s11 + $0x34] sm:$0xf]
    %v1003 = vld [vmem:[%s11 + $0x38] sm:$0xf]
    %v1004 = vld [vmem:[%s11 + $0x3c] sm:$0xf]
    %v1005 = vld [vmem:[%s12] sm:$0x1]
    %v1007 = vlaneseq
    %v1008 = vshrl.u32 %v1007, 7
    %v1009 = vsub.s32 0, %v1008
    %v1010 = vrot.slane %v1005, %v1009
    %v1028 = vunpack.c.l.b16 %v989
    %v1029 = vunpack.c.l.b16 %v990
    %v1030 = vunpack.c.l.b16 %v991
    %v1031 = vunpack.c.l.b16 %v992
    %v1032 = vunpack.c.l.b16 %v993
    %v1033 = vunpack.c.l.b16 %v994
    %v1034 = vunpack.c.l.b16 %v995
    %v1035 = vunpack.c.l.b16 %v996
    %v1036 = vunpack.c.l.b16 %v997
    %v1037 = vunpack.c.l.b16 %v998
    %v1038 = vunpack.c.l.b16 %v999
    %v1039 = vunpack.c.l.b16 %v1000
    %v1040 = vunpack.c.l.b16 %v1001
    %v1041 = vunpack.c.l.b16 %v1002
    %v1042 = vunpack.c.l.b16 %v1003
    %v1043 = vunpack.c.l.b16 %v1004
    %v1044 = vpack.c.b16 %v1029, %v1028
    %v1045 = vpack.c.b16 %v1031, %v1030
    %v1046 = vpack.c.b16 %v1033, %v1032
    %v1047 = vpack.c.b16 %v1035, %v1034
    %v1048 = vpack.c.b16 %v1037, %v1036
    %v1049 = vpack.c.b16 %v1039, %v1038
    %v1050 = vpack.c.b16 %v1041, %v1040
    %v1051 = vpack.c.b16 %v1043, %v1042
    %1060 = vmatprep.subr.bf16.mxu0 0
    %1061 = vmatpush1.bf16.msra.mxu0 %v1051
    %1062 = vmatprep.subr.bf16.mxu0 0
    %1063 = vmatpush1.bf16.msra.mxu0 %v1050
    %1064 = vmatprep.subr.bf16.mxu0 0
    %1065 = vmatpush1.bf16.msra.mxu0 %v1049
    %1066 = vmatprep.subr.bf16.mxu0 0
    %1067 = vmatpush1.bf16.msra.mxu0 %v1048
    %1068 = vmatprep.subr.bf16.mxu0 0
    %1069 = vmatpush1.bf16.msra.mxu0 %v1047
    %1070 = vmatprep.subr.bf16.mxu0 0
    %1071 = vmatpush1.bf16.msra.mxu0 %v1046
    %1072 = vmatprep.subr.bf16.mxu0 0
    %1073 = vmatpush1.bf16.msra.mxu0 %v1045
    %1074 = vmatprep.subr.bf16.mxu0 0
    %1075 = vmatpush1.bf16.msra.mxu0 %v1044
    %1076 = vmatprep.subr.bf16.mxu0 0
    %1077 = vmatpush2.bf16.msra.mxu0 0
    %1078 = vmatprep.subr.bf16.mxu0 0
    %1079 = vmatpush2.bf16.msra.mxu0 0
    %1080 = vmatprep.subr.bf16.mxu0 0
    %1081 = vmatpush2.bf16.msra.mxu0 0
    %1082 = vmatprep.subr.bf16.mxu0 0
    %1083 = vmatpush2.bf16.msra.mxu0 0
    %1084 = vmatprep.subr.bf16.mxu0 0
    %1085 = vmatpush2.bf16.msra.mxu0 0
    %1086 = vmatprep.subr.bf16.mxu0 0
    %1087 = vmatpush2.bf16.msra.mxu0 0
    %1088 = vmatprep.subr.bf16.mxu0 0
    %1089 = vmatpush2.bf16.msra.mxu0 0
    %1090 = vmatprep.subr.bf16.mxu0 0
    %1091 = vmatpush2.bf16.msra.mxu0 0
    %1092 = vmatprep.mubr.bf16.mxu0 0
    %1093 = vmatmul.mubr.bf16.gmra.mxu0 %v988
    %v1094 = vpop.f32.mrf.mxu0
    %v1095 = vadd.f32 %v1010, %v1094
    %v1096 = vpop.f32.mrf.mxu0
    %v1097 = vpop.f32.mrf.mxu0
    %v1098 = vpop.f32.mrf.mxu0
    %1099 = vdwg.mxu0
    %v1100 = vmax.f32 %v1095, 0.0
    %v1101 = vpack.c.bf16 %v1100, %v1100
    %v1102 = vld [vmem:[%s13] sm:$0xf]
    %v1103 = vld [vmem:[%s13 + $0x4] sm:$0xf]
    %v1104 = vld [vmem:[%s13 + $0x8] sm:$0xf]
    %v1105 = vld [vmem:[%s13 + $0xc] sm:$0xf]
    %v1106 = vld [vmem:[%s13 + $0x10] sm:$0xf]
    %v1107 = vld [vmem:[%s13 + $0x14] sm:$0xf]
    %v1108 = vld [vmem:[%s13 + $0x18] sm:$0xf]
    %v1109 = vld [vmem:[%s13 + $0x1c] sm:$0xf]
    %v1110 = vld [vmem:[%s13 + $0x20] sm:$0xf]
    %v1111 = vld [vmem:[%s13 + $0x24] sm:$0xf]
    %v1112 = vld [vmem:[%s13 + $0x28] sm:$0xf]
    %v1113 = vld [vmem:[%s13 + $0x2c] sm:$0xf]
    %v1114 = vld [vmem:[%s13 + $0x30] sm:$0xf]
    %v1115 = vld [vmem:[%s13 + $0x34] sm:$0xf]
    %v1116 = vld [vmem:[%s13 + $0x38] sm:$0xf]
    %v1117 = vld [vmem:[%s13 + $0x3c] sm:$0xf]
    %v1118 = vld [vmem:[%s14] sm:$0x1]
    %v1120 = vlaneseq
    %v1121 = vshrl.u32 %v1120, 7
    %v1122 = vsub.s32 0, %v1121
    %v1123 = vrot.slane %v1118, %v1122
    %v1141 = vunpack.c.l.b16 %v1102
    %v1142 = vunpack.c.l.b16 %v1103
    %v1143 = vunpack.c.l.b16 %v1104
    %v1144 = vunpack.c.l.b16 %v1105
    %v1145 = vunpack.c.l.b16 %v1106
    %v1146 = vunpack.c.l.b16 %v1107
    %v1147 = vunpack.c.l.b16 %v1108
    %v1148 = vunpack.c.l.b16 %v1109
    %v1149 = vunpack.c.l.b16 %v1110
    %v1150 = vunpack.c.l.b16 %v1111
    %v1151 = vunpack.c.l.b16 %v1112
    %v1152 = vunpack.c.l.b16 %v1113
    %v1153 = vunpack.c.l.b16 %v1114
    %v1154 = vunpack.c.l.b16 %v1115
    %v1155 = vunpack.c.l.b16 %v1116
    %v1156 = vunpack.c.l.b16 %v1117
    %v1157 = vpack.c.b16 %v1142, %v1141
    %v1158 = vpack.c.b16 %v1144, %v1143
    %v1159 = vpack.c.b16 %v1146, %v1145
    %v1160 = vpack.c.b16 %v1148, %v1147
    %v1161 = vpack.c.b16 %v1150, %v1149
    %v1162 = vpack.c.b16 %v1152, %v1151
    %v1163 = vpack.c.b16 %v1154, %v1153
    %v1164 = vpack.c.b16 %v1156, %v1155
    %1173 = vmatprep.subr.bf16.mxu0 0
    %1174 = vmatpush1.bf16.msra.mxu0 %v1164
    %1175 = vmatprep.subr.bf16.mxu0 0
    %1176 = vmatpush1.bf16.msra.mxu0 %v1163
    %1177 = vmatprep.subr.bf16.mxu0 0
    %1178 = vmatpush1.bf16.msra.mxu0 %v1162
    %1179 = vmatprep.subr.bf16.mxu0 0
    %1180 = vmatpush1.bf16.msra.mxu0 %v1161
    %1181 = vmatprep.subr.bf16.mxu0 0
    %1182 = vmatpush1.bf16.msra.mxu0 %v1160
    %1183 = vmatprep.subr.bf16.mxu0 0
    %1184 = vmatpush1.bf16.msra.mxu0 %v1159
    %1185 = vmatprep.subr.bf16.mxu0 0
    %1186 = vmatpush1.bf16.msra.mxu0 %v1158
    %1187 = vmatprep.subr.bf16.mxu0 0
    %1188 = vmatpush1.bf16.msra.mxu0 %v1157
    %1189 = vmatprep.subr.bf16.mxu0 0
    %1190 = vmatpush2.bf16.msra.mxu0 0
    %1191 = vmatprep.subr.bf16.mxu0 0
    %1192 = vmatpush2.bf16.msra.mxu0 0
    %1193 = vmatprep.subr.bf16.mxu0 0
    %1194 = vmatpush2.bf16.msra.mxu0 0
    %1195 = vmatprep.subr.bf16.mxu0 0
    %1196 = vmatpush2.bf16.msra.mxu0 0
    %1197 = vmatprep.subr.bf16.mxu0 0
    %1198 = vmatpush2.bf16.msra.mxu0 0
    %1199 = vmatprep.subr.bf16.mxu0 0
    %1200 = vmatpush2.bf16.msra.mxu0 0
    %1201 = vmatprep.subr.bf16.mxu0 0
    %1202 = vmatpush2.bf16.msra.mxu0 0
    %1203 = vmatprep.subr.bf16.mxu0 0
    %1204 = vmatpush2.bf16.msra.mxu0 0
    %1205 = vmatprep.mubr.bf16.mxu0 0
    %1206 = vmatmul.mubr.bf16.gmra.mxu0 %v1101
    %v1207 = vpop.f32.mrf.mxu0
    %v1208 = vadd.f32 %v1123, %v1207
    %v1209 = vpop.f32.mrf.mxu0
    %v1210 = vpop.f32.mrf.mxu0
    %v1211 = vpop.f32.mrf.mxu0
    %1212 = vdwg.mxu0
    %v1213 = vmul.f32 %v1208, 0.01
    %v1214 = vld [vmem:[%s3] sm:$0x3]
    %v1215 = vadd.f32 %v1214, %v1213
    %vm1216 = vcmask 41984
    %1217 = vst.msk [vmem:[#allocation4] sm:$0x3] %vm1216, %v1215
    // Predicated region
    $region62: #{forward.62} parent=1 // pred_check
      _
    $region63: #{forward.62} parent=1 // pred_check_branch
      %1219 = sbr.rel (0) target = $region65
    $region64: #{forward.62} parent=1 // pred_region
      %s1221 = ssub.s32 512, 512
      %1222 = vsyncadd [#allocation3], %s1221
      %s1223 = sshll.u32 [#allocation2], 4
      %s1224 = int_to_ptr.vmem [resolvable:$true] %s1223
      %1229 = dma.vmem_to_hbm [thread:$0]  %s1224, 512, %s15, [#allocation3], 128, 128, 8
    $region65: #{forward.62} parent=1 // pred_fallthru
      _
    // Predicated region
    $region66: #{forward.62} parent=1 // pred_check
      _
    $region67: #{forward.62} parent=1 // pred_check_branch
      %1231 = sbr.rel (0) target = $region69
    $region68: #{forward.62} parent=1 // pred_region
      %s1233 = ssub.s32 32, 32
      %1234 = vsyncadd [#allocation5], %s1233
      %s1236 = sshll.u32 [#allocation4], 4
      %s1237 = int_to_ptr.vmem [resolvable:$true] %s1236
      %1239 = dma.vmem_to_hbm [thread:$0]  %s1237, 32, %s16, [#allocation5]
    $region69: #{forward.62} parent=1 // pred_fallthru
      _
    // Predicated region
    $region70: #{forward.62} parent=1 // pred_check
      _
    $region71: #{forward.62} parent=1 // pred_check_branch
      %1241 = sbr.rel (0) target = $region73
    $region72: #{forward.62} parent=1 // pred_region
      %1242 = dma.done [#allocation3], 512
    $region73: #{forward.62} parent=1 // pred_fallthru
      _
    // Predicated region
    $region74: #{forward.62} parent=1 // pred_check
      _
    $region75: #{forward.62} parent=1 // pred_check_branch
      %1244 = sbr.rel (0) target = $region77
    $region76: #{forward.62} parent=1 // pred_region
      %1245 = dma.done [#allocation5], 32
    $region77: #{forward.62} parent=1 // pred_fallthru
      _
    %1246 = vsyncpa [#allocation3], 1
    %1247 = vsyncpa [#allocation5], 1

</llo_original>
